<compile_context>
chip_gen: v7x
topology: tpu7x:2x2x1
jax: 0.10.0
libtpu: 0.0.40
codegen_flags: <defaults>
</compile_context>

<pallas_src>
import math
import jax
import jax.numpy as jnp
from jax.experimental import pallas as pl
from jax.experimental.pallas import tpu as pltpu

# ----------------------------- configuration ------------------------------
IMAGE_SIZE = 64
PATCH = 32
IN_CH = 3
HIDDEN = 128
HEADS = 4
HEAD_DIM = HIDDEN // HEADS
MLP_DIM = 256
NUM_LAYERS = 2
PROMPT_LEN = 10
N_CLASSES = 16
BATCH = 2
BATCH_BLOCK = BATCH                       # per-grid-step batch; set BATCH//2 on v7x
NUM_PATCHES = (IMAGE_SIZE // PATCH) ** 2
SEQ = NUM_PATCHES + 1                     # +1 class token
TOTAL = SEQ + PROMPT_LEN                  # encoder-block sequence length
PDIM = IN_CH * PATCH * PATCH              # flattened patch dimension
HEAD_PAD = 128                            # lane-dense padded head width
LN_EPS = 1e-6


# ----------------------------- in-kernel helpers --------------------------
def _erf(x):
    # TODO(synk): PyTorch exact GELU uses erf; Mosaic-safe Abramowitz&Stegun 7.1.26
    # approximation used instead of lax.erf (reciprocal + exp land on the EUP slot).
    p = 0.3275911
    a1, a2, a3, a4, a5 = 0.254829592, -0.284496736, 1.421413741, -1.453152027, 1.061405429
    z = jnp.abs(x)
    t = pl.reciprocal(1.0 + p * z, approx=True)     # EUP slot instead of VALU divide
    poly = ((((a5 * t + a4) * t + a3) * t + a2) * t + a1) * t
    y = 1.0 - poly * jnp.exp(-(z * z))              # exp -> EUP slot
    return jnp.where(x >= 0, y, -y)


def _gelu(x):
    return 0.5 * x * (1.0 + _erf(x * (1.0 / math.sqrt(2.0))))


def _layer_norm(x, g, b):
    mean = jnp.mean(x, axis=-1, keepdims=True)
    xc = x - mean
    var = jnp.mean(xc * xc, axis=-1, keepdims=True)
    return xc * jax.lax.rsqrt(var + LN_EPS) * g + b


# ----------------------------- fused forward kernel -----------------------
def vit_fused_kernel(patches_ref, conv_w_ref, conv_b_ref, cls_ref, pos_ref, prompts_ref,
                     ln1_g_ref, ln1_b_ref, wqkv_ref, bqkv_ref, wo_ref, bo_ref,
                     ln2_g_ref, ln2_b_ref, w1_ref, b1_ref, w2_ref, b2_ref,
                     lnf_g_ref, lnf_b_ref, head_w_ref, head_b_ref, out_ref, x_scr):
    f32, bf16 = jnp.float32, jnp.bfloat16
    BB, D, H, Hd = BATCH_BLOCK, HIDDEN, HEADS, HEAD_DIM

    # ---- patch embedding on merged (BB*NUM_PATCHES) rows (== strided conv) ----
    tok = jnp.dot(patches_ref[...], conv_w_ref[...],
                  preferred_element_type=f32) + conv_b_ref[...]            # (BB*P, D)

    # ---- class token + positional embedding into the persistent scratch ----
    pos = pos_ref[...]                                                     # (SEQ, D)
    cls_row = cls_ref[...] + pos[0:1, :]                                   # (1, D)
    for b in range(BB):
        r0 = b * TOTAL
        x_scr[r0:r0 + 1, :] = cls_row
        x_scr[r0 + 1:r0 + SEQ, :] = (tok[b * NUM_PATCHES:(b + 1) * NUM_PATCHES, :]
                                     + pos[1:SEQ, :])

    y = None
    for l in range(NUM_LAYERS):                  # unrolled; weights indexed statically
        # per-layer prompt rows overwritten in place (no concat/strip copies)
        for b in range(BB):
            r0 = b * TOTAL
            x_scr[r0 + SEQ:r0 + TOTAL, :] = prompts_ref[l]
        x = x_scr[...]                                                     # (BB*T, D)

        # --- multi-head self-attention ---
        h = _layer_norm(x, ln1_g_ref[l], ln1_b_ref[l])
        # single lane-dense QKV matmul; softmax scale pre-folded into the Q slab
        qkv = jnp.dot(h.astype(bf16), wqkv_ref[l],
                      preferred_element_type=f32) + bqkv_ref[l]            # (BB*T, 3D)

        q_parts, k_parts, v_parts = [], [], []
        for b in range(BB):
            r0 = b * TOTAL
            for hh in range(H):
                c0 = hh * Hd
                q_parts.append(qkv[r0:r0 + TOTAL, c0:c0 + Hd])
                k_parts.append(qkv[r0:r0 + TOTAL, D + c0:D + c0 + Hd])
                v_parts.append(qkv[r0:r0 + TOTAL, 2 * D + c0:2 * D + c0 + Hd])
        q = jnp.stack(q_parts, axis=0).astype(bf16)                        # (BB*H, T, Hd)
        k = jnp.stack(k_parts, axis=0).astype(bf16)
        v = jnp.stack(v_parts, axis=0).astype(bf16)

        s = jnp.einsum('nqd,nkd->nqk', q, k, preferred_element_type=f32)   # (BB*H, T, T)
        s = s - jnp.max(s, axis=-1, keepdims=True)
        e = jnp.exp(s)
        p = e * pl.reciprocal(jnp.sum(e, axis=-1, keepdims=True), approx=True)
        o = jnp.einsum('nqk,nkd->nqd', p.astype(bf16), v,
                       preferred_element_type=f32)                         # (BB*H, T, Hd)

        # fused output projection: lane-concat heads, sublane-concat batches, then one
        # full-depth (rows,128)@(128,128) matmul (no per-head matmuls / f32 head-sum)
        o_rows = jnp.concatenate(
            [jnp.concatenate([o[b * H + hh] for hh in range(H)], axis=-1)
             for b in range(BB)], axis=0)                                  # (BB*T, D)
        attn = jnp.dot(o_rows.astype(bf16), wo_ref[l],
                       preferred_element_type=f32) + bo_ref[l]
        x2 = x + attn                                  # residual 1 (dropout = identity)

        # --- MLP ---
        h2 = _layer_norm(x2, ln2_g_ref[l], ln2_b_ref[l])
        m = _gelu(jnp.dot(h2.astype(bf16), w1_ref[l],
                          preferred_element_type=f32) + b1_ref[l])
        m = jnp.dot(m.astype(bf16), w2_ref[l],
                    preferred_element_type=f32) + b2_ref[l]
        y = x2 + m                                     # residual 2
        if l + 1 < NUM_LAYERS:
            x_scr[...] = y           # prompt rows are refreshed at the next layer's top

    # ---- final LayerNorm on the class tokens + lane-dense (padded) linear head ----
    cls_rows = jnp.concatenate([y[b * TOTAL:b * TOTAL + 1, :] for b in range(BB)], axis=0)
    cls_final = _layer_norm(cls_rows, lnf_g_ref[...], lnf_b_ref[...])      # (BB, D)
    out_ref[...] = jnp.dot(cls_final.astype(bf16), head_w_ref[...],
                           preferred_element_type=f32) + head_b_ref[...]   # (BB, HEAD_PAD)


# ----------------------------- wrapper -------------------------------------
def _zero_map(n):
    zeros = (0,) * n
    return lambda g: zeros


def vit_prompt_forward(x_nhwc, kp):
    """x_nhwc: (B, H, W, C) float32 -> logits (B, N_CLASSES)."""
    B = x_nhwc.shape[0]
    assert B % BATCH_BLOCK == 0
    nh = nw = IMAGE_SIZE // PATCH

    # patchify ((ph, pw, C) flattening matches the prepared conv weight); the bf16
    # cast happens here so the patch DMA is half-width and the kernel needn't cast.
    patches = x_nhwc.reshape(B, nh, PATCH, nw, PATCH, IN_CH)
    patches = patches.transpose(0, 1, 3, 2, 4, 5).reshape(B * NUM_PATCHES, PDIM)
    patches = patches.astype(jnp.bfloat16)

    weights = [kp['conv_w'], kp['conv_b'], kp['class_token'], kp['pos_embedding'],
               kp['prompts'],
               kp['ln1_g'], kp['ln1_b'], kp['wqkv'], kp['bqkv'], kp['wo'], kp['bo'],
               kp['ln2_g'], kp['ln2_b'], kp['w1'], kp['b1'], kp['w2'], kp['b2'],
               kp['ln_g'], kp['ln_b'], kp['head_w'], kp['head_b']]

    # TODO(synk): at ViT-B scale add an "arbitrary" layer grid axis streaming the
    # stacked per-layer weights (pl.Buffered(2); pl.Buffered(1) on grid-invariant
    # blocks) instead of keeping all weights resident in VMEM.
    in_specs = [pl.BlockSpec((BATCH_BLOCK * NUM_PATCHES, PDIM), lambda g: (g, 0))] + [
        pl.BlockSpec(tuple(w.shape), _zero_map(w.ndim)) for w in weights
    ]

    logits_pad = pl.pallas_call(
        vit_fused_kernel,
        out_shape=jax.ShapeDtypeStruct((B, HEAD_PAD), jnp.float32),
        grid=(B // BATCH_BLOCK,),
        in_specs=in_specs,
        out_specs=pl.BlockSpec((BATCH_BLOCK, HEAD_PAD), lambda g: (g, 0)),
        scratch_shapes=[pltpu.VMEM((BATCH_BLOCK * TOTAL, HIDDEN), jnp.float32)],
        compiler_params=pltpu.CompilerParams(
            dimension_semantics=("parallel",),
            vmem_limit_bytes=32 * 1024 * 1024,
        ),
    )(patches, *weights)

    return logits_pad[:, :N_CLASSES]


# ----------------------------- parameters (torch-convention) ---------------
def init_params(key):
    keys = jax.random.split(key, 6)
    fan_in = IN_CH * PATCH * PATCH

    # conv_proj: Conv2d(3, D, kernel=patch, stride=patch); trunc_normal(std=sqrt(1/fan_in))
    conv_w = jax.random.normal(keys[0], (HIDDEN, IN_CH, PATCH, PATCH), jnp.float32) \
        * math.sqrt(1.0 / fan_in)
    conv_b = jnp.zeros((HIDDEN,), jnp.float32)

    class_token = jnp.zeros((1, 1, HIDDEN), jnp.float32)
    pos_embedding = jax.random.normal(keys[1], (1, SEQ, HIDDEN), jnp.float32) * 0.02

    # prompts: uniform(-v, v) with the module's literal formula v = (v_square**1)/2
    v_square = 6.0 / (HIDDEN + PROMPT_LEN)
    v = (v_square ** 1) / 2
    prompts = jax.random.uniform(keys[2], (1, NUM_LAYERS, PROMPT_LEN, HIDDEN),
                                 jnp.float32, minval=-v, maxval=v)

    def xavier(k, shape):  # torch (out, in) layout
        bound = math.sqrt(6.0 / (shape[0] + shape[1]))
        return jax.random.uniform(k, shape, jnp.float32, minval=-bound, maxval=bound)

    layers = []
    for lk in jax.random.split(keys[3], NUM_LAYERS):
        k = jax.random.split(lk, 6)
        layers.append(dict(
            ln1_g=jnp.ones((HIDDEN,), jnp.float32), ln1_b=jnp.zeros((HIDDEN,), jnp.float32),
            in_proj_w=xavier(k[0], (3 * HIDDEN, HIDDEN)),
            in_proj_b=jnp.zeros((3 * HIDDEN,), jnp.float32),
            out_proj_w=xavier(k[1], (HIDDEN, HIDDEN)),
            out_proj_b=jnp.zeros((HIDDEN,), jnp.float32),
            ln2_g=jnp.ones((HIDDEN,), jnp.float32), ln2_b=jnp.zeros((HIDDEN,), jnp.float32),
            mlp_w1=xavier(k[2], (MLP_DIM, HIDDEN)),
            mlp_b1=jax.random.normal(k[3], (MLP_DIM,), jnp.float32) * 1e-6,
            mlp_w2=xavier(k[4], (HIDDEN, MLP_DIM)),
            mlp_b2=jax.random.normal(k[5], (HIDDEN,), jnp.float32) * 1e-6,
        ))

    ln_g = jnp.ones((HIDDEN,), jnp.float32)
    ln_b = jnp.zeros((HIDDEN,), jnp.float32)

    bound = 1.0 / math.sqrt(HIDDEN)
    head_w = jax.random.uniform(keys[4], (N_CLASSES, HIDDEN), jnp.float32,
                                minval=-bound, maxval=bound)
    head_b = jax.random.uniform(keys[5], (N_CLASSES,), jnp.float32,
                                minval=-bound, maxval=bound)

    return dict(conv_w=conv_w, conv_b=conv_b, class_token=class_token,
                pos_embedding=pos_embedding, prompts=prompts, layers=layers,
                ln_g=ln_g, ln_b=ln_b, head_w=head_w, head_b=head_b)


def prepare_params(p):
    """One-time (plain-JAX) weight re-layout: stack layers, pack QKV into a single
    lane-dense (D, 3D) weight with the softmax scale folded into the Q slab,
    pre-transpose everything to x @ W form, cast matmul weights to bf16, and pad the
    classification head to a lane-dense 128-wide output."""
    bf16 = jnp.bfloat16
    D = HIDDEN
    scale = 1.0 / math.sqrt(HEAD_DIM)

    # conv weight: (D, C, ph, pw) -> flatten over (ph, pw, C) to match NHWC patchify
    conv_w = p['conv_w'].transpose(0, 2, 3, 1).reshape(D, PDIM).T.astype(bf16)   # (PDIM, D)

    def per_layer(lp):
        wqkv = lp['in_proj_w'].T                        # (D, 3D) packed [Wq | Wk | Wv]
        wqkv = wqkv.at[:, :D].multiply(scale)           # fold 1/sqrt(Hd) into Q slab
        bqkv = lp['in_proj_b'].reshape(1, 3 * D)
        bqkv = bqkv.at[:, :D].multiply(scale)
        return dict(
            ln1_g=lp['ln1_g'].reshape(1, D), ln1_b=lp['ln1_b'].reshape(1, D),
            wqkv=wqkv.astype(bf16), bqkv=bqkv,
            wo=lp['out_proj_w'].T.astype(bf16), bo=lp['out_proj_b'].reshape(1, D),
            ln2_g=lp['ln2_g'].reshape(1, D), ln2_b=lp['ln2_b'].reshape(1, D),
            w1=lp['mlp_w1'].T.astype(bf16), b1=lp['mlp_b1'].reshape(1, MLP_DIM),
            w2=lp['mlp_w2'].T.astype(bf16), b2=lp['mlp_b2'].reshape(1, D),
        )

    per = [per_layer(lp) for lp in p['layers']]
    stacked = {k: jnp.stack([lyr[k] for lyr in per], axis=0) for k in per[0]}

    head_w = jnp.zeros((D, HEAD_PAD), jnp.float32).at[:, :N_CLASSES].set(p['head_w'].T)
    head_b = jnp.zeros((1, HEAD_PAD), jnp.float32).at[0, :N_CLASSES].set(p['head_b'])

    kp = dict(
        conv_w=conv_w,
        conv_b=p['conv_b'].reshape(1, D),
        class_token=p['class_token'].reshape(1, D),
        pos_embedding=p['pos_embedding'].reshape(SEQ, D),
        prompts=p['prompts'].reshape(NUM_LAYERS, PROMPT_LEN, D),
        ln_g=p['ln_g'].reshape(1, D), ln_b=p['ln_b'].reshape(1, D),
        head_w=head_w.astype(bf16), head_b=head_b,
    )
    kp.update(stacked)
    return kp


# ----------------------------- main ----------------------------------------
if __name__ == "__main__":
    key = jax.random.PRNGKey(0)
    k_param, k_x = jax.random.split(key)
    params = prepare_params(init_params(k_param))

    # PyTorch-convention NCHW input; one-time layout change to NHWC at data-load time.
    x_nchw = jax.random.normal(k_x, (BATCH, IN_CH, IMAGE_SIZE, IMAGE_SIZE), jnp.float32)
    x_nhwc = jnp.transpose(x_nchw, (0, 2, 3, 1))

    fwd = jax.jit(vit_prompt_forward)
    y = jax.block_until_ready(fwd(x_nhwc, params))

    assert y.shape == (BATCH, N_CLASSES)
    assert bool(jnp.all(jnp.isfinite(y)))
    print("KERNEL_OK")
</pallas_src>

<mosaic_0001>
module attributes {stable_mosaic.version = 11 : i64} {
  func.func @vit_fused_kernel(%arg0: i32, %arg1: memref<8x3072xbf16, #tpu.memory_space<vmem>>, %arg2: memref<3072x128xbf16, #tpu.memory_space<vmem>>, %arg3: memref<1x128xf32, #tpu.memory_space<vmem>>, %arg4: memref<1x128xf32, #tpu.memory_space<vmem>>, %arg5: memref<5x128xf32, #tpu.memory_space<vmem>>, %arg6: memref<2x10x128xf32, #tpu.memory_space<vmem>>, %arg7: memref<2x1x128xf32, #tpu.memory_space<vmem>>, %arg8: memref<2x1x128xf32, #tpu.memory_space<vmem>>, %arg9: memref<2x128x384xbf16, #tpu.memory_space<vmem>>, %arg10: memref<2x1x384xf32, #tpu.memory_space<vmem>>, %arg11: memref<2x128x128xbf16, #tpu.memory_space<vmem>>, %arg12: memref<2x1x128xf32, #tpu.memory_space<vmem>>, %arg13: memref<2x1x128xf32, #tpu.memory_space<vmem>>, %arg14: memref<2x1x128xf32, #tpu.memory_space<vmem>>, %arg15: memref<2x128x256xbf16, #tpu.memory_space<vmem>>, %arg16: memref<2x1x256xf32, #tpu.memory_space<vmem>>, %arg17: memref<2x256x128xbf16, #tpu.memory_space<vmem>>, %arg18: memref<2x1x128xf32, #tpu.memory_space<vmem>>, %arg19: memref<1x128xf32, #tpu.memory_space<vmem>>, %arg20: memref<1x128xf32, #tpu.memory_space<vmem>>, %arg21: memref<128x128xbf16, #tpu.memory_space<vmem>>, %arg22: memref<1x128xf32, #tpu.memory_space<vmem>>, %arg23: memref<2x128xf32, #tpu.memory_space<vmem>>, %arg24: memref<30x128xf32, #tpu.memory_space<vmem>>) attributes {dimension_semantics = [#tpu.dimension_semantics<parallel>], iteration_bounds = array<i64: 1>, scalar_prefetch = 0 : i64, scratch_operands = 1 : i64, tpu.core_type = #tpu.core_type<tc>, window_params = [{transform_indices = @transform_0, window_bounds = array<i64: 8, 3072>}, {pipeline_mode = #tpu.pipeline_mode<synchronous>, transform_indices = @transform_1, window_bounds = array<i64: 3072, 128>}, {pipeline_mode = #tpu.pipeline_mode<synchronous>, transform_indices = @transform_2, window_bounds = array<i64: 1, 128>}, {pipeline_mode = #tpu.pipeline_mode<synchronous>, transform_indices = @transform_3, window_bounds = array<i64: 1, 128>}, {pipeline_mode = #tpu.pipeline_mode<synchronous>, transform_indices = @transform_4, window_bounds = array<i64: 5, 128>}, {pipeline_mode = #tpu.pipeline_mode<synchronous>, transform_indices = @transform_5, window_bounds = array<i64: 2, 10, 128>}, {pipeline_mode = #tpu.pipeline_mode<synchronous>, transform_indices = @transform_6, window_bounds = array<i64: 2, 1, 128>}, {pipeline_mode = #tpu.pipeline_mode<synchronous>, transform_indices = @transform_7, window_bounds = array<i64: 2, 1, 128>}, {pipeline_mode = #tpu.pipeline_mode<synchronous>, transform_indices = @transform_8, window_bounds = array<i64: 2, 128, 384>}, {pipeline_mode = #tpu.pipeline_mode<synchronous>, transform_indices = @transform_9, window_bounds = array<i64: 2, 1, 384>}, {pipeline_mode = #tpu.pipeline_mode<synchronous>, transform_indices = @transform_10, window_bounds = array<i64: 2, 128, 128>}, {pipeline_mode = #tpu.pipeline_mode<synchronous>, transform_indices = @transform_11, window_bounds = array<i64: 2, 1, 128>}, {pipeline_mode = #tpu.pipeline_mode<synchronous>, transform_indices = @transform_12, window_bounds = array<i64: 2, 1, 128>}, {pipeline_mode = #tpu.pipeline_mode<synchronous>, transform_indices = @transform_13, window_bounds = array<i64: 2, 1, 128>}, {pipeline_mode = #tpu.pipeline_mode<synchronous>, transform_indices = @transform_14, window_bounds = array<i64: 2, 128, 256>}, {pipeline_mode = #tpu.pipeline_mode<synchronous>, transform_indices = @transform_15, window_bounds = array<i64: 2, 1, 256>}, {pipeline_mode = #tpu.pipeline_mode<synchronous>, transform_indices = @transform_16, window_bounds = array<i64: 2, 256, 128>}, {pipeline_mode = #tpu.pipeline_mode<synchronous>, transform_indices = @transform_17, window_bounds = array<i64: 2, 1, 128>}, {pipeline_mode = #tpu.pipeline_mode<synchronous>, transform_indices = @transform_18, window_bounds = array<i64: 1, 128>}, {pipeline_mode = #tpu.pipeline_mode<synchronous>, transform_indices = @transform_19, window_bounds = array<i64: 1, 128>}, {pipeline_mode = #tpu.pipeline_mode<synchronous>, transform_indices = @transform_20, window_bounds = array<i64: 128, 128>}, {pipeline_mode = #tpu.pipeline_mode<synchronous>, transform_indices = @transform_21, window_bounds = array<i64: 1, 128>}, {transform_indices = @transform_22, window_bounds = array<i64: 2, 128>}]} {
    %c0 = arith.constant 0 : index
    %c0_0 = arith.constant 0 : index
    %0 = vector.load %arg1[%c0, %c0_0] : memref<8x3072xbf16, #tpu.memory_space<vmem>>, vector<8x3072xbf16>
    %c0_1 = arith.constant 0 : index
    %c0_2 = arith.constant 0 : index
    %1 = vector.load %arg2[%c0_1, %c0_2] : memref<3072x128xbf16, #tpu.memory_space<vmem>>, vector<3072x128xbf16>
    %cst = arith.constant dense<0.000000e+00> : vector<8x128xf32>
    %2 = tpu.matmul %0, %1, %cst {dimension_numbers = #tpu.dot_dimension_numbers<[1], [0], [0], [1], [0, 0, 1, 1], [], []>} : vector<8x3072xbf16>, vector<3072x128xbf16>, vector<8x128xf32> -> vector<8x128xf32>
    %c0_3 = arith.constant 0 : index
    %c0_4 = arith.constant 0 : index
    %3 = vector.load %arg3[%c0_3, %c0_4] : memref<1x128xf32, #tpu.memory_space<vmem>>, vector<1x128xf32>
    %4 = vector.broadcast %3 : vector<1x128xf32> to vector<8x128xf32>
    %5 = arith.addf %2, %4 : vector<8x128xf32>
    %c0_5 = arith.constant 0 : index
    %c0_6 = arith.constant 0 : index
    %6 = vector.load %arg5[%c0_5, %c0_6] : memref<5x128xf32, #tpu.memory_space<vmem>>, vector<5x128xf32>
    %c0_7 = arith.constant 0 : index
    %c0_8 = arith.constant 0 : index
    %7 = vector.load %arg4[%c0_7, %c0_8] : memref<1x128xf32, #tpu.memory_space<vmem>>, vector<1x128xf32>
    %8 = vector.extract_strided_slice %6 {offsets = [0, 0], sizes = [1, 128], strides = [1, 1]} : vector<5x128xf32> to vector<1x128xf32>
    %9 = arith.addf %7, %8 : vector<1x128xf32>
    %c0_9 = arith.constant 0 : index
    %c0_10 = arith.constant 0 : index
    %10 = vector.load %arg24[%c0_9, %c0_10] : memref<30x128xf32, #tpu.memory_space<vmem>>, vector<1x128xf32>
    tpu.vector_store %arg24[%c0_9, %c0_10], %9 {strides = array<i32>} : memref<30x128xf32, #tpu.memory_space<vmem>>, vector<1x128xf32>,
    %11 = vector.extract_strided_slice %5 {offsets = [0, 0], sizes = [4, 128], strides = [1, 1]} : vector<8x128xf32> to vector<4x128xf32>
    %12 = vector.extract_strided_slice %6 {offsets = [1, 0], sizes = [4, 128], strides = [1, 1]} : vector<5x128xf32> to vector<4x128xf32>
    %13 = arith.addf %11, %12 : vector<4x128xf32>
    %c1 = arith.constant 1 : index
    %c0_11 = arith.constant 0 : index
    %14 = vector.load %arg24[%c1, %c0_11] : memref<30x128xf32, #tpu.memory_space<vmem>>, vector<4x128xf32>
    tpu.vector_store %arg24[%c1, %c0_11], %13 {strides = array<i32>} : memref<30x128xf32, #tpu.memory_space<vmem>>, vector<4x128xf32>,
    %c15 = arith.constant 15 : index
    %c0_12 = arith.constant 0 : index
    %15 = vector.load %arg24[%c15, %c0_12] : memref<30x128xf32, #tpu.memory_space<vmem>>, vector<1x128xf32>
    tpu.vector_store %arg24[%c15, %c0_12], %9 {strides = array<i32>} : memref<30x128xf32, #tpu.memory_space<vmem>>, vector<1x128xf32>,
    %16 = vector.extract_strided_slice %5 {offsets = [4, 0], sizes = [4, 128], strides = [1, 1]} : vector<8x128xf32> to vector<4x128xf32>
    %17 = vector.extract_strided_slice %6 {offsets = [1, 0], sizes = [4, 128], strides = [1, 1]} : vector<5x128xf32> to vector<4x128xf32>
    %18 = arith.addf %16, %17 : vector<4x128xf32>
    %c16 = arith.constant 16 : index
    %c0_13 = arith.constant 0 : index
    %19 = vector.load %arg24[%c16, %c0_13] : memref<30x128xf32, #tpu.memory_space<vmem>>, vector<4x128xf32>
    tpu.vector_store %arg24[%c16, %c0_13], %18 {strides = array<i32>} : memref<30x128xf32, #tpu.memory_space<vmem>>, vector<4x128xf32>,
    %c0_14 = arith.constant 0 : index
    %c0_15 = arith.constant 0 : index
    %c0_16 = arith.constant 0 : index
    %20 = vector.load %arg6[%c0_14, %c0_15, %c0_16] : memref<2x10x128xf32, #tpu.memory_space<vmem>>, vector<1x10x128xf32>
    %21 = vector.shape_cast %20 : vector<1x10x128xf32> to vector<10x128xf32>
    %c5 = arith.constant 5 : index
    %c0_17 = arith.constant 0 : index
    %22 = vector.load %arg24[%c5, %c0_17] : memref<30x128xf32, #tpu.memory_space<vmem>>, vector<10x128xf32>
    tpu.vector_store %arg24[%c5, %c0_17], %21 {strides = array<i32>} : memref<30x128xf32, #tpu.memory_space<vmem>>, vector<10x128xf32>,
    %c0_18 = arith.constant 0 : index
    %c0_19 = arith.constant 0 : index
    %c0_20 = arith.constant 0 : index
    %23 = vector.load %arg6[%c0_18, %c0_19, %c0_20] : memref<2x10x128xf32, #tpu.memory_space<vmem>>, vector<1x10x128xf32>
    %24 = vector.shape_cast %23 : vector<1x10x128xf32> to vector<10x128xf32>
    %c20 = arith.constant 20 : index
    %c0_21 = arith.constant 0 : index
    %25 = vector.load %arg24[%c20, %c0_21] : memref<30x128xf32, #tpu.memory_space<vmem>>, vector<10x128xf32>
    tpu.vector_store %arg24[%c20, %c0_21], %24 {strides = array<i32>} : memref<30x128xf32, #tpu.memory_space<vmem>>, vector<10x128xf32>,
    %c0_22 = arith.constant 0 : index
    %c0_23 = arith.constant 0 : index
    %26 = vector.load %arg24[%c0_22, %c0_23] : memref<30x128xf32, #tpu.memory_space<vmem>>, vector<30x128xf32>
    %c0_24 = arith.constant 0 : index
    %c0_25 = arith.constant 0 : index
    %c0_26 = arith.constant 0 : index
    %27 = vector.load %arg7[%c0_24, %c0_25, %c0_26] : memref<2x1x128xf32, #tpu.memory_space<vmem>>, vector<1x1x128xf32>
    %28 = vector.shape_cast %27 : vector<1x1x128xf32> to vector<1x128xf32>
    %c0_27 = arith.constant 0 : index
    %c0_28 = arith.constant 0 : index
    %c0_29 = arith.constant 0 : index
    %29 = vector.load %arg8[%c0_27, %c0_28, %c0_29] : memref<2x1x128xf32, #tpu.memory_space<vmem>>, vector<1x1x128xf32>
    %30 = vector.shape_cast %29 : vector<1x1x128xf32> to vector<1x128xf32>
    %cst_30 = arith.constant dense<0.000000e+00> : vector<30xf32>
    %31 = vector.multi_reduction <add>, %26, %cst_30 [1] : vector<30x128xf32> to vector<30xf32>
    %32 = vector.shape_cast %31 : vector<30xf32> to vector<30x1xf32>
    %cst_31 = arith.constant 1.280000e+02 : f32
    %33 = vector.broadcast %cst_31 : f32 to vector<30x1xf32>
    %34 = arith.divf %32, %33 : vector<30x1xf32>
    %35 = vector.broadcast %34 : vector<30x1xf32> to vector<30x128xf32>
    %36 = arith.subf %26, %35 : vector<30x128xf32>
    %37 = arith.mulf %36, %36 : vector<30x128xf32>
    %cst_32 = arith.constant dense<0.000000e+00> : vector<30xf32>
    %38 = vector.multi_reduction <add>, %37, %cst_32 [1] : vector<30x128xf32> to vector<30xf32>
    %39 = vector.shape_cast %38 : vector<30xf32> to vector<30x1xf32>
    %cst_33 = arith.constant 1.280000e+02 : f32
    %40 = vector.broadcast %cst_33 : f32 to vector<30x1xf32>
    %41 = arith.divf %39, %40 : vector<30x1xf32>
    %cst_34 = arith.constant 9.99999997E-7 : f32
    %42 = vector.broadcast %cst_34 : f32 to vector<30x1xf32>
    %43 = arith.addf %41, %42 : vector<30x1xf32>
    %44 = math.rsqrt %43 : vector<30x1xf32>
    %45 = vector.broadcast %44 : vector<30x1xf32> to vector<30x128xf32>
    %46 = arith.mulf %36, %45 : vector<30x128xf32>
    %47 = vector.broadcast %28 : vector<1x128xf32> to vector<30x128xf32>
    %48 = arith.mulf %46, %47 : vector<30x128xf32>
    %49 = vector.broadcast %30 : vector<1x128xf32> to vector<30x128xf32>
    %50 = arith.addf %48, %49 : vector<30x128xf32>
    %51 = arith.truncf %50 : vector<30x128xf32> to vector<30x128xbf16>
    %c0_35 = arith.constant 0 : index
    %c0_36 = arith.constant 0 : index
    %c0_37 = arith.constant 0 : index
    %52 = vector.load %arg9[%c0_35, %c0_36, %c0_37] : memref<2x128x384xbf16, #tpu.memory_space<vmem>>, vector<1x128x384xbf16>
    %53 = vector.shape_cast %52 : vector<1x128x384xbf16> to vector<128x384xbf16>
    %cst_38 = arith.constant dense<0.000000e+00> : vector<30x384xf32>
    %54 = tpu.matmul %51, %53, %cst_38 {dimension_numbers = #tpu.dot_dimension_numbers<[1], [0], [0], [1], [0, 0, 1, 1], [], []>} : vector<30x128xbf16>, vector<128x384xbf16>, vector<30x384xf32> -> vector<30x384xf32>
    %c0_39 = arith.constant 0 : index
    %c0_40 = arith.constant 0 : index
    %c0_41 = arith.constant 0 : index
    %55 = vector.load %arg10[%c0_39, %c0_40, %c0_41] : memref<2x1x384xf32, #tpu.memory_space<vmem>>, vector<1x1x384xf32>
    %56 = vector.shape_cast %55 : vector<1x1x384xf32> to vector<1x384xf32>
    %57 = vector.broadcast %56 : vector<1x384xf32> to vector<30x384xf32>
    %58 = arith.addf %54, %57 : vector<30x384xf32>
    %59 = vector.extract_strided_slice %58 {offsets = [0, 0], sizes = [15, 32], strides = [1, 1]} : vector<30x384xf32> to vector<15x32xf32>
    %60 = vector.extract_strided_slice %58 {offsets = [0, 128], sizes = [15, 32], strides = [1, 1]} : vector<30x384xf32> to vector<15x32xf32>
    %61 = vector.extract_strided_slice %58 {offsets = [0, 256], sizes = [15, 32], strides = [1, 1]} : vector<30x384xf32> to vector<15x32xf32>
    %62 = vector.extract_strided_slice %58 {offsets = [0, 32], sizes = [15, 32], strides = [1, 1]} : vector<30x384xf32> to vector<15x32xf32>
    %63 = vector.extract_strided_slice %58 {offsets = [0, 160], sizes = [15, 32], strides = [1, 1]} : vector<30x384xf32> to vector<15x32xf32>
    %64 = vector.extract_strided_slice %58 {offsets = [0, 288], sizes = [15, 32], strides = [1, 1]} : vector<30x384xf32> to vector<15x32xf32>
    %65 = vector.extract_strided_slice %58 {offsets = [0, 64], sizes = [15, 32], strides = [1, 1]} : vector<30x384xf32> to vector<15x32xf32>
    %66 = vector.extract_strided_slice %58 {offsets = [0, 192], sizes = [15, 32], strides = [1, 1]} : vector<30x384xf32> to vector<15x32xf32>
    %67 = vector.extract_strided_slice %58 {offsets = [0, 320], sizes = [15, 32], strides = [1, 1]} : vector<30x384xf32> to vector<15x32xf32>
    %68 = vector.extract_strided_slice %58 {offsets = [0, 96], sizes = [15, 32], strides = [1, 1]} : vector<30x384xf32> to vector<15x32xf32>
    %69 = vector.extract_strided_slice %58 {offsets = [0, 224], sizes = [15, 32], strides = [1, 1]} : vector<30x384xf32> to vector<15x32xf32>
    %70 = vector.extract_strided_slice %58 {offsets = [0, 352], sizes = [15, 32], strides = [1, 1]} : vector<30x384xf32> to vector<15x32xf32>
    %71 = vector.extract_strided_slice %58 {offsets = [15, 0], sizes = [15, 32], strides = [1, 1]} : vector<30x384xf32> to vector<15x32xf32>
    %72 = vector.extract_strided_slice %58 {offsets = [15, 128], sizes = [15, 32], strides = [1, 1]} : vector<30x384xf32> to vector<15x32xf32>
    %73 = vector.extract_strided_slice %58 {offsets = [15, 256], sizes = [15, 32], strides = [1, 1]} : vector<30x384xf32> to vector<15x32xf32>
    %74 = vector.extract_strided_slice %58 {offsets = [15, 32], sizes = [15, 32], strides = [1, 1]} : vector<30x384xf32> to vector<15x32xf32>
    %75 = vector.extract_strided_slice %58 {offsets = [15, 160], sizes = [15, 32], strides = [1, 1]} : vector<30x384xf32> to vector<15x32xf32>
    %76 = vector.extract_strided_slice %58 {offsets = [15, 288], sizes = [15, 32], strides = [1, 1]} : vector<30x384xf32> to vector<15x32xf32>
    %77 = vector.extract_strided_slice %58 {offsets = [15, 64], sizes = [15, 32], strides = [1, 1]} : vector<30x384xf32> to vector<15x32xf32>
    %78 = vector.extract_strided_slice %58 {offsets = [15, 192], sizes = [15, 32], strides = [1, 1]} : vector<30x384xf32> to vector<15x32xf32>
    %79 = vector.extract_strided_slice %58 {offsets = [15, 320], sizes = [15, 32], strides = [1, 1]} : vector<30x384xf32> to vector<15x32xf32>
    %80 = vector.extract_strided_slice %58 {offsets = [15, 96], sizes = [15, 32], strides = [1, 1]} : vector<30x384xf32> to vector<15x32xf32>
    %81 = vector.extract_strided_slice %58 {offsets = [15, 224], sizes = [15, 32], strides = [1, 1]} : vector<30x384xf32> to vector<15x32xf32>
    %82 = vector.extract_strided_slice %58 {offsets = [15, 352], sizes = [15, 32], strides = [1, 1]} : vector<30x384xf32> to vector<15x32xf32>
    %83 = vector.shape_cast %59 : vector<15x32xf32> to vector<1x15x32xf32>
    %84 = vector.shape_cast %62 : vector<15x32xf32> to vector<1x15x32xf32>
    %85 = vector.shape_cast %65 : vector<15x32xf32> to vector<1x15x32xf32>
    %86 = vector.shape_cast %68 : vector<15x32xf32> to vector<1x15x32xf32>
    %87 = vector.shape_cast %71 : vector<15x32xf32> to vector<1x15x32xf32>
    %88 = vector.shape_cast %74 : vector<15x32xf32> to vector<1x15x32xf32>
    %89 = vector.shape_cast %77 : vector<15x32xf32> to vector<1x15x32xf32>
    %90 = vector.shape_cast %80 : vector<15x32xf32> to vector<1x15x32xf32>
    %91 = tpu.concatenate %83, %84, %85, %86, %87, %88, %89, %90 in 0 : vector<1x15x32xf32>, vector<1x15x32xf32>, vector<1x15x32xf32>, vector<1x15x32xf32>, vector<1x15x32xf32>, vector<1x15x32xf32>, vector<1x15x32xf32>, vector<1x15x32xf32> -> vector<8x15x32xf32>
    %92 = arith.truncf %91 : vector<8x15x32xf32> to vector<8x15x32xbf16>
    %93 = vector.shape_cast %60 : vector<15x32xf32> to vector<1x15x32xf32>
    %94 = vector.shape_cast %63 : vector<15x32xf32> to vector<1x15x32xf32>
    %95 = vector.shape_cast %66 : vector<15x32xf32> to vector<1x15x32xf32>
    %96 = vector.shape_cast %69 : vector<15x32xf32> to vector<1x15x32xf32>
    %97 = vector.shape_cast %72 : vector<15x32xf32> to vector<1x15x32xf32>
    %98 = vector.shape_cast %75 : vector<15x32xf32> to vector<1x15x32xf32>
    %99 = vector.shape_cast %78 : vector<15x32xf32> to vector<1x15x32xf32>
    %100 = vector.shape_cast %81 : vector<15x32xf32> to vector<1x15x32xf32>
    %101 = tpu.concatenate %93, %94, %95, %96, %97, %98, %99, %100 in 0 : vector<1x15x32xf32>, vector<1x15x32xf32>, vector<1x15x32xf32>, vector<1x15x32xf32>, vector<1x15x32xf32>, vector<1x15x32xf32>, vector<1x15x32xf32>, vector<1x15x32xf32> -> vector<8x15x32xf32>
    %102 = arith.truncf %101 : vector<8x15x32xf32> to vector<8x15x32xbf16>
    %103 = vector.shape_cast %61 : vector<15x32xf32> to vector<1x15x32xf32>
    %104 = vector.shape_cast %64 : vector<15x32xf32> to vector<1x15x32xf32>
    %105 = vector.shape_cast %67 : vector<15x32xf32> to vector<1x15x32xf32>
    %106 = vector.shape_cast %70 : vector<15x32xf32> to vector<1x15x32xf32>
    %107 = vector.shape_cast %73 : vector<15x32xf32> to vector<1x15x32xf32>
    %108 = vector.shape_cast %76 : vector<15x32xf32> to vector<1x15x32xf32>
    %109 = vector.shape_cast %79 : vector<15x32xf32> to vector<1x15x32xf32>
    %110 = vector.shape_cast %82 : vector<15x32xf32> to vector<1x15x32xf32>
    %111 = tpu.concatenate %103, %104, %105, %106, %107, %108, %109, %110 in 0 : vector<1x15x32xf32>, vector<1x15x32xf32>, vector<1x15x32xf32>, vector<1x15x32xf32>, vector<1x15x32xf32>, vector<1x15x32xf32>, vector<1x15x32xf32>, vector<1x15x32xf32> -> vector<8x15x32xf32>
    %112 = arith.truncf %111 : vector<8x15x32xf32> to vector<8x15x32xbf16>
    "tpu.trace_start"() <{level = 10 : i32, message = "nqd,nkd->nqk"}> : () -> ()
    %cst_42 = arith.constant dense<0.000000e+00> : vector<8x15x15xf32>
    %113 = tpu.matmul %92, %102, %cst_42 {dimension_numbers = #tpu.dot_dimension_numbers<[2], [2], [1], [1], [0, 0, 0, 1, 1, 1], [0], [0]>} : vector<8x15x32xbf16>, vector<8x15x32xbf16>, vector<8x15x15xf32> -> vector<8x15x15xf32>
    "tpu.trace_stop"() : () -> ()
    %cst_43 = arith.constant dense<0xFF800000> : vector<8x15xf32>
    %114 = vector.multi_reduction <maximumf>, %113, %cst_43 [2] : vector<8x15x15xf32> to vector<8x15xf32>
    %115 = vector.shape_cast %114 : vector<8x15xf32> to vector<8x15x1xf32>
    %116 = vector.broadcast %115 : vector<8x15x1xf32> to vector<8x15x15xf32>
    %117 = arith.subf %113, %116 : vector<8x15x15xf32>
    %118 = math.exp %117 : vector<8x15x15xf32>
    %cst_44 = arith.constant dense<0.000000e+00> : vector<8x15xf32>
    %119 = vector.multi_reduction <add>, %118, %cst_44 [2] : vector<8x15x15xf32> to vector<8x15xf32>
    %120 = vector.shape_cast %119 : vector<8x15xf32> to vector<8x15x1xf32>
    %121 = tpu.reciprocal %120 {approx = true} : vector<8x15x1xf32> -> vector<8x15x1xf32>
    %122 = vector.broadcast %121 : vector<8x15x1xf32> to vector<8x15x15xf32>
    %123 = arith.mulf %118, %122 : vector<8x15x15xf32>
    %124 = arith.truncf %123 : vector<8x15x15xf32> to vector<8x15x15xbf16>
    "tpu.trace_start"() <{level = 10 : i32, message = "nqk,nkd->nqd"}> : () -> ()
    %cst_45 = arith.constant dense<0.000000e+00> : vector<8x15x32xf32>
    %125 = tpu.matmul %124, %112, %cst_45 {dimension_numbers = #tpu.dot_dimension_numbers<[2], [1], [1], [2], [0, 0, 0, 1, 1, 2], [0], [0]>} : vector<8x15x15xbf16>, vector<8x15x32xbf16>, vector<8x15x32xf32> -> vector<8x15x32xf32>
    "tpu.trace_stop"() : () -> ()
    %126 = vector.extract_strided_slice %125 {offsets = [0, 0, 0], sizes = [1, 15, 32], strides = [1, 1, 1]} : vector<8x15x32xf32> to vector<1x15x32xf32>
    %127 = vector.shape_cast %126 : vector<1x15x32xf32> to vector<15x32xf32>
    %128 = vector.extract_strided_slice %125 {offsets = [1, 0, 0], sizes = [1, 15, 32], strides = [1, 1, 1]} : vector<8x15x32xf32> to vector<1x15x32xf32>
    %129 = vector.shape_cast %128 : vector<1x15x32xf32> to vector<15x32xf32>
    %130 = vector.extract_strided_slice %125 {offsets = [2, 0, 0], sizes = [1, 15, 32], strides = [1, 1, 1]} : vector<8x15x32xf32> to vector<1x15x32xf32>
    %131 = vector.shape_cast %130 : vector<1x15x32xf32> to vector<15x32xf32>
    %132 = vector.extract_strided_slice %125 {offsets = [3, 0, 0], sizes = [1, 15, 32], strides = [1, 1, 1]} : vector<8x15x32xf32> to vector<1x15x32xf32>
    %133 = vector.shape_cast %132 : vector<1x15x32xf32> to vector<15x32xf32>
    %134 = tpu.concatenate %127, %129, %131, %133 in 1 : vector<15x32xf32>, vector<15x32xf32>, vector<15x32xf32>, vector<15x32xf32> -> vector<15x128xf32>
    %135 = vector.extract_strided_slice %125 {offsets = [4, 0, 0], sizes = [1, 15, 32], strides = [1, 1, 1]} : vector<8x15x32xf32> to vector<1x15x32xf32>
    %136 = vector.shape_cast %135 : vector<1x15x32xf32> to vector<15x32xf32>
    %137 = vector.extract_strided_slice %125 {offsets = [5, 0, 0], sizes = [1, 15, 32], strides = [1, 1, 1]} : vector<8x15x32xf32> to vector<1x15x32xf32>
    %138 = vector.shape_cast %137 : vector<1x15x32xf32> to vector<15x32xf32>
    %139 = vector.extract_strided_slice %125 {offsets = [6, 0, 0], sizes = [1, 15, 32], strides = [1, 1, 1]} : vector<8x15x32xf32> to vector<1x15x32xf32>
    %140 = vector.shape_cast %139 : vector<1x15x32xf32> to vector<15x32xf32>
    %141 = vector.extract_strided_slice %125 {offsets = [7, 0, 0], sizes = [1, 15, 32], strides = [1, 1, 1]} : vector<8x15x32xf32> to vector<1x15x32xf32>
    %142 = vector.shape_cast %141 : vector<1x15x32xf32> to vector<15x32xf32>
    %143 = tpu.concatenate %136, %138, %140, %142 in 1 : vector<15x32xf32>, vector<15x32xf32>, vector<15x32xf32>, vector<15x32xf32> -> vector<15x128xf32>
    %144 = tpu.concatenate %134, %143 in 0 : vector<15x128xf32>, vector<15x128xf32> -> vector<30x128xf32>
    %145 = arith.truncf %144 : vector<30x128xf32> to vector<30x128xbf16>
    %c0_46 = arith.constant 0 : index
    %c0_47 = arith.constant 0 : index
    %c0_48 = arith.constant 0 : index
    %146 = vector.load %arg11[%c0_46, %c0_47, %c0_48] : memref<2x128x128xbf16, #tpu.memory_space<vmem>>, vector<1x128x128xbf16>
    %147 = vector.shape_cast %146 : vector<1x128x128xbf16> to vector<128x128xbf16>
    %cst_49 = arith.constant dense<0.000000e+00> : vector<30x128xf32>
    %148 = tpu.matmul %145, %147, %cst_49 {dimension_numbers = #tpu.dot_dimension_numbers<[1], [0], [0], [1], [0, 0, 1, 1], [], []>} : vector<30x128xbf16>, vector<128x128xbf16>, vector<30x128xf32> -> vector<30x128xf32>
    %c0_50 = arith.constant 0 : index
    %c0_51 = arith.constant 0 : index
    %c0_52 = arith.constant 0 : index
    %149 = vector.load %arg12[%c0_50, %c0_51, %c0_52] : memref<2x1x128xf32, #tpu.memory_space<vmem>>, vector<1x1x128xf32>
    %150 = vector.shape_cast %149 : vector<1x1x128xf32> to vector<1x128xf32>
    %151 = vector.broadcast %150 : vector<1x128xf32> to vector<30x128xf32>
    %152 = arith.addf %148, %151 : vector<30x128xf32>
    %153 = arith.addf %26, %152 : vector<30x128xf32>
    %c0_53 = arith.constant 0 : index
    %c0_54 = arith.constant 0 : index
    %c0_55 = arith.constant 0 : index
    %154 = vector.load %arg13[%c0_53, %c0_54, %c0_55] : memref<2x1x128xf32, #tpu.memory_space<vmem>>, vector<1x1x128xf32>
    %155 = vector.shape_cast %154 : vector<1x1x128xf32> to vector<1x128xf32>
    %c0_56 = arith.constant 0 : index
    %c0_57 = arith.constant 0 : index
    %c0_58 = arith.constant 0 : index
    %156 = vector.load %arg14[%c0_56, %c0_57, %c0_58] : memref<2x1x128xf32, #tpu.memory_space<vmem>>, vector<1x1x128xf32>
    %157 = vector.shape_cast %156 : vector<1x1x128xf32> to vector<1x128xf32>
    %cst_59 = arith.constant dense<0.000000e+00> : vector<30xf32>
    %158 = vector.multi_reduction <add>, %153, %cst_59 [1] : vector<30x128xf32> to vector<30xf32>
    %159 = vector.shape_cast %158 : vector<30xf32> to vector<30x1xf32>
    %cst_60 = arith.constant 1.280000e+02 : f32
    %160 = vector.broadcast %cst_60 : f32 to vector<30x1xf32>
    %161 = arith.divf %159, %160 : vector<30x1xf32>
    %162 = vector.broadcast %161 : vector<30x1xf32> to vector<30x128xf32>
    %163 = arith.subf %153, %162 : vector<30x128xf32>
    %164 = arith.mulf %163, %163 : vector<30x128xf32>
    %cst_61 = arith.constant dense<0.000000e+00> : vector<30xf32>
    %165 = vector.multi_reduction <add>, %164, %cst_61 [1] : vector<30x128xf32> to vector<30xf32>
    %166 = vector.shape_cast %165 : vector<30xf32> to vector<30x1xf32>
    %cst_62 = arith.constant 1.280000e+02 : f32
    %167 = vector.broadcast %cst_62 : f32 to vector<30x1xf32>
    %168 = arith.divf %166, %167 : vector<30x1xf32>
    %cst_63 = arith.constant 9.99999997E-7 : f32
    %169 = vector.broadcast %cst_63 : f32 to vector<30x1xf32>
    %170 = arith.addf %168, %169 : vector<30x1xf32>
    %171 = math.rsqrt %170 : vector<30x1xf32>
    %172 = vector.broadcast %171 : vector<30x1xf32> to vector<30x128xf32>
    %173 = arith.mulf %163, %172 : vector<30x128xf32>
    %174 = vector.broadcast %155 : vector<1x128xf32> to vector<30x128xf32>
    %175 = arith.mulf %173, %174 : vector<30x128xf32>
    %176 = vector.broadcast %157 : vector<1x128xf32> to vector<30x128xf32>
    %177 = arith.addf %175, %176 : vector<30x128xf32>
    %178 = arith.truncf %177 : vector<30x128xf32> to vector<30x128xbf16>
    %c0_64 = arith.constant 0 : index
    %c0_65 = arith.constant 0 : index
    %c0_66 = arith.constant 0 : index
    %179 = vector.load %arg15[%c0_64, %c0_65, %c0_66] : memref<2x128x256xbf16, #tpu.memory_space<vmem>>, vector<1x128x256xbf16>
    %180 = vector.shape_cast %179 : vector<1x128x256xbf16> to vector<128x256xbf16>
    %cst_67 = arith.constant dense<0.000000e+00> : vector<30x256xf32>
    %181 = tpu.matmul %178, %180, %cst_67 {dimension_numbers = #tpu.dot_dimension_numbers<[1], [0], [0], [1], [0, 0, 1, 1], [], []>} : vector<30x128xbf16>, vector<128x256xbf16>, vector<30x256xf32> -> vector<30x256xf32>
    %c0_68 = arith.constant 0 : index
    %c0_69 = arith.constant 0 : index
    %c0_70 = arith.constant 0 : index
    %182 = vector.load %arg16[%c0_68, %c0_69, %c0_70] : memref<2x1x256xf32, #tpu.memory_space<vmem>>, vector<1x1x256xf32>
    %183 = vector.shape_cast %182 : vector<1x1x256xf32> to vector<1x256xf32>
    %184 = vector.broadcast %183 : vector<1x256xf32> to vector<30x256xf32>
    %185 = arith.addf %181, %184 : vector<30x256xf32>
    %cst_71 = arith.constant 5.000000e-01 : f32
    %186 = vector.broadcast %cst_71 : f32 to vector<30x256xf32>
    %187 = arith.mulf %186, %185 : vector<30x256xf32>
    %cst_72 = arith.constant 0.707106769 : f32
    %188 = vector.broadcast %cst_72 : f32 to vector<30x256xf32>
    %189 = arith.mulf %185, %188 : vector<30x256xf32>
    %190 = math.absf %189 : vector<30x256xf32>
    %cst_73 = arith.constant 0.327591091 : f32
    %191 = vector.broadcast %cst_73 : f32 to vector<30x256xf32>
    %192 = arith.mulf %191, %190 : vector<30x256xf32>
    %cst_74 = arith.constant 1.000000e+00 : f32
    %193 = vector.broadcast %cst_74 : f32 to vector<30x256xf32>
    %194 = arith.addf %193, %192 : vector<30x256xf32>
    %195 = tpu.reciprocal %194 {approx = true} : vector<30x256xf32> -> vector<30x256xf32>
    %cst_75 = arith.constant 1.06140542 : f32
    %196 = vector.broadcast %cst_75 : f32 to vector<30x256xf32>
    %197 = arith.mulf %196, %195 : vector<30x256xf32>
    %cst_76 = arith.constant -1.45315206 : f32
    %198 = vector.broadcast %cst_76 : f32 to vector<30x256xf32>
    %199 = arith.addf %197, %198 : vector<30x256xf32>
    %200 = arith.mulf %199, %195 : vector<30x256xf32>
    %cst_77 = arith.constant 1.42141378 : f32
    %201 = vector.broadcast %cst_77 : f32 to vector<30x256xf32>
    %202 = arith.addf %200, %201 : vector<30x256xf32>
    %203 = arith.mulf %202, %195 : vector<30x256xf32>
    %cst_78 = arith.constant -0.284496725 : f32
    %204 = vector.broadcast %cst_78 : f32 to vector<30x256xf32>
    %205 = arith.addf %203, %204 : vector<30x256xf32>
    %206 = arith.mulf %205, %195 : vector<30x256xf32>
    %cst_79 = arith.constant 0.254829586 : f32
    %207 = vector.broadcast %cst_79 : f32 to vector<30x256xf32>
    %208 = arith.addf %206, %207 : vector<30x256xf32>
    %209 = arith.mulf %208, %195 : vector<30x256xf32>
    %210 = arith.mulf %190, %190 : vector<30x256xf32>
    %cst_80 = arith.constant 0.000000e+00 : f32
    %211 = vector.broadcast %cst_80 : f32 to vector<30x256xf32>
    %212 = arith.subf %211, %210 : vector<30x256xf32>
    %213 = math.exp %212 : vector<30x256xf32>
    %214 = arith.mulf %209, %213 : vector<30x256xf32>
    %cst_81 = arith.constant 1.000000e+00 : f32
    %215 = vector.broadcast %cst_81 : f32 to vector<30x256xf32>
    %216 = arith.subf %215, %214 : vector<30x256xf32>
    %cst_82 = arith.constant 0.000000e+00 : f32
    %217 = vector.broadcast %cst_82 : f32 to vector<30x256xf32>
    %218 = arith.cmpf oge, %189, %217 : vector<30x256xf32>
    %cst_83 = arith.constant 0.000000e+00 : f32
    %219 = vector.broadcast %cst_83 : f32 to vector<30x256xf32>
    %220 = arith.subf %219, %216 : vector<30x256xf32>
    %221 = arith.select %218, %216, %220 : vector<30x256xi1>, vector<30x256xf32>
    %cst_84 = arith.constant 1.000000e+00 : f32
    %222 = vector.broadcast %cst_84 : f32 to vector<30x256xf32>
    %223 = arith.addf %222, %221 : vector<30x256xf32>
    %224 = arith.mulf %187, %223 : vector<30x256xf32>
    %225 = arith.truncf %224 : vector<30x256xf32> to vector<30x256xbf16>
    %c0_85 = arith.constant 0 : index
    %c0_86 = arith.constant 0 : index
    %c0_87 = arith.constant 0 : index
    %226 = vector.load %arg17[%c0_85, %c0_86, %c0_87] : memref<2x256x128xbf16, #tpu.memory_space<vmem>>, vector<1x256x128xbf16>
    %227 = vector.shape_cast %226 : vector<1x256x128xbf16> to vector<256x128xbf16>
    %cst_88 = arith.constant dense<0.000000e+00> : vector<30x128xf32>
    %228 = tpu.matmul %225, %227, %cst_88 {dimension_numbers = #tpu.dot_dimension_numbers<[1], [0], [0], [1], [0, 0, 1, 1], [], []>} : vector<30x256xbf16>, vector<256x128xbf16>, vector<30x128xf32> -> vector<30x128xf32>
    %c0_89 = arith.constant 0 : index
    %c0_90 = arith.constant 0 : index
    %c0_91 = arith.constant 0 : index
    %229 = vector.load %arg18[%c0_89, %c0_90, %c0_91] : memref<2x1x128xf32, #tpu.memory_space<vmem>>, vector<1x1x128xf32>
    %230 = vector.shape_cast %229 : vector<1x1x128xf32> to vector<1x128xf32>
    %231 = vector.broadcast %230 : vector<1x128xf32> to vector<30x128xf32>
    %232 = arith.addf %228, %231 : vector<30x128xf32>
    %233 = arith.addf %153, %232 : vector<30x128xf32>
    %c0_92 = arith.constant 0 : index
    %c0_93 = arith.constant 0 : index
    %234 = vector.load %arg24[%c0_92, %c0_93] : memref<30x128xf32, #tpu.memory_space<vmem>>, vector<30x128xf32>
    tpu.vector_store %arg24[%c0_92, %c0_93], %233 {strides = array<i32>} : memref<30x128xf32, #tpu.memory_space<vmem>>, vector<30x128xf32>,
    %c1_94 = arith.constant 1 : index
    %c0_95 = arith.constant 0 : index
    %c0_96 = arith.constant 0 : index
    %235 = vector.load %arg6[%c1_94, %c0_95, %c0_96] : memref<2x10x128xf32, #tpu.memory_space<vmem>>, vector<1x10x128xf32>
    %236 = vector.shape_cast %235 : vector<1x10x128xf32> to vector<10x128xf32>
    %c5_97 = arith.constant 5 : index
    %c0_98 = arith.constant 0 : index
    %237 = vector.load %arg24[%c5_97, %c0_98] : memref<30x128xf32, #tpu.memory_space<vmem>>, vector<10x128xf32>
    tpu.vector_store %arg24[%c5_97, %c0_98], %236 {strides = array<i32>} : memref<30x128xf32, #tpu.memory_space<vmem>>, vector<10x128xf32>,
    %c1_99 = arith.constant 1 : index
    %c0_100 = arith.constant 0 : index
    %c0_101 = arith.constant 0 : index
    %238 = vector.load %arg6[%c1_99, %c0_100, %c0_101] : memref<2x10x128xf32, #tpu.memory_space<vmem>>, vector<1x10x128xf32>
    %239 = vector.shape_cast %238 : vector<1x10x128xf32> to vector<10x128xf32>
    %c20_102 = arith.constant 20 : index
    %c0_103 = arith.constant 0 : index
    %240 = vector.load %arg24[%c20_102, %c0_103] : memref<30x128xf32, #tpu.memory_space<vmem>>, vector<10x128xf32>
    tpu.vector_store %arg24[%c20_102, %c0_103], %239 {strides = array<i32>} : memref<30x128xf32, #tpu.memory_space<vmem>>, vector<10x128xf32>,
    %c0_104 = arith.constant 0 : index
    %c0_105 = arith.constant 0 : index
    %241 = vector.load %arg24[%c0_104, %c0_105] : memref<30x128xf32, #tpu.memory_space<vmem>>, vector<30x128xf32>
    %c1_106 = arith.constant 1 : index
    %c0_107 = arith.constant 0 : index
    %c0_108 = arith.constant 0 : index
    %242 = vector.load %arg7[%c1_106, %c0_107, %c0_108] : memref<2x1x128xf32, #tpu.memory_space<vmem>>, vector<1x1x128xf32>
    %243 = vector.shape_cast %242 : vector<1x1x128xf32> to vector<1x128xf32>
    %c1_109 = arith.constant 1 : index
    %c0_110 = arith.constant 0 : index
    %c0_111 = arith.constant 0 : index
    %244 = vector.load %arg8[%c1_109, %c0_110, %c0_111] : memref<2x1x128xf32, #tpu.memory_space<vmem>>, vector<1x1x128xf32>
    %245 = vector.shape_cast %244 : vector<1x1x128xf32> to vector<1x128xf32>
    %cst_112 = arith.constant dense<0.000000e+00> : vector<30xf32>
    %246 = vector.multi_reduction <add>, %241, %cst_112 [1] : vector<30x128xf32> to vector<30xf32>
    %247 = vector.shape_cast %246 : vector<30xf32> to vector<30x1xf32>
    %cst_113 = arith.constant 1.280000e+02 : f32
    %248 = vector.broadcast %cst_113 : f32 to vector<30x1xf32>
    %249 = arith.divf %247, %248 : vector<30x1xf32>
    %250 = vector.broadcast %249 : vector<30x1xf32> to vector<30x128xf32>
    %251 = arith.subf %241, %250 : vector<30x128xf32>
    %252 = arith.mulf %251, %251 : vector<30x128xf32>
    %cst_114 = arith.constant dense<0.000000e+00> : vector<30xf32>
    %253 = vector.multi_reduction <add>, %252, %cst_114 [1] : vector<30x128xf32> to vector<30xf32>
    %254 = vector.shape_cast %253 : vector<30xf32> to vector<30x1xf32>
    %cst_115 = arith.constant 1.280000e+02 : f32
    %255 = vector.broadcast %cst_115 : f32 to vector<30x1xf32>
    %256 = arith.divf %254, %255 : vector<30x1xf32>
    %cst_116 = arith.constant 9.99999997E-7 : f32
    %257 = vector.broadcast %cst_116 : f32 to vector<30x1xf32>
    %258 = arith.addf %256, %257 : vector<30x1xf32>
    %259 = math.rsqrt %258 : vector<30x1xf32>
    %260 = vector.broadcast %259 : vector<30x1xf32> to vector<30x128xf32>
    %261 = arith.mulf %251, %260 : vector<30x128xf32>
    %262 = vector.broadcast %243 : vector<1x128xf32> to vector<30x128xf32>
    %263 = arith.mulf %261, %262 : vector<30x128xf32>
    %264 = vector.broadcast %245 : vector<1x128xf32> to vector<30x128xf32>
    %265 = arith.addf %263, %264 : vector<30x128xf32>
    %266 = arith.truncf %265 : vector<30x128xf32> to vector<30x128xbf16>
    %c1_117 = arith.constant 1 : index
    %c0_118 = arith.constant 0 : index
    %c0_119 = arith.constant 0 : index
    %267 = vector.load %arg9[%c1_117, %c0_118, %c0_119] : memref<2x128x384xbf16, #tpu.memory_space<vmem>>, vector<1x128x384xbf16>
    %268 = vector.shape_cast %267 : vector<1x128x384xbf16> to vector<128x384xbf16>
    %cst_120 = arith.constant dense<0.000000e+00> : vector<30x384xf32>
    %269 = tpu.matmul %266, %268, %cst_120 {dimension_numbers = #tpu.dot_dimension_numbers<[1], [0], [0], [1], [0, 0, 1, 1], [], []>} : vector<30x128xbf16>, vector<128x384xbf16>, vector<30x384xf32> -> vector<30x384xf32>
    %c1_121 = arith.constant 1 : index
    %c0_122 = arith.constant 0 : index
    %c0_123 = arith.constant 0 : index
    %270 = vector.load %arg10[%c1_121, %c0_122, %c0_123] : memref<2x1x384xf32, #tpu.memory_space<vmem>>, vector<1x1x384xf32>
    %271 = vector.shape_cast %270 : vector<1x1x384xf32> to vector<1x384xf32>
    %272 = vector.broadcast %271 : vector<1x384xf32> to vector<30x384xf32>
    %273 = arith.addf %269, %272 : vector<30x384xf32>
    %274 = vector.extract_strided_slice %273 {offsets = [0, 0], sizes = [15, 32], strides = [1, 1]} : vector<30x384xf32> to vector<15x32xf32>
    %275 = vector.extract_strided_slice %273 {offsets = [0, 128], sizes = [15, 32], strides = [1, 1]} : vector<30x384xf32> to vector<15x32xf32>
    %276 = vector.extract_strided_slice %273 {offsets = [0, 256], sizes = [15, 32], strides = [1, 1]} : vector<30x384xf32> to vector<15x32xf32>
    %277 = vector.extract_strided_slice %273 {offsets = [0, 32], sizes = [15, 32], strides = [1, 1]} : vector<30x384xf32> to vector<15x32xf32>
    %278 = vector.extract_strided_slice %273 {offsets = [0, 160], sizes = [15, 32], strides = [1, 1]} : vector<30x384xf32> to vector<15x32xf32>
    %279 = vector.extract_strided_slice %273 {offsets = [0, 288], sizes = [15, 32], strides = [1, 1]} : vector<30x384xf32> to vector<15x32xf32>
    %280 = vector.extract_strided_slice %273 {offsets = [0, 64], sizes = [15, 32], strides = [1, 1]} : vector<30x384xf32> to vector<15x32xf32>
    %281 = vector.extract_strided_slice %273 {offsets = [0, 192], sizes = [15, 32], strides = [1, 1]} : vector<30x384xf32> to vector<15x32xf32>
    %282 = vector.extract_strided_slice %273 {offsets = [0, 320], sizes = [15, 32], strides = [1, 1]} : vector<30x384xf32> to vector<15x32xf32>
    %283 = vector.extract_strided_slice %273 {offsets = [0, 96], sizes = [15, 32], strides = [1, 1]} : vector<30x384xf32> to vector<15x32xf32>
    %284 = vector.extract_strided_slice %273 {offsets = [0, 224], sizes = [15, 32], strides = [1, 1]} : vector<30x384xf32> to vector<15x32xf32>
    %285 = vector.extract_strided_slice %273 {offsets = [0, 352], sizes = [15, 32], strides = [1, 1]} : vector<30x384xf32> to vector<15x32xf32>
    %286 = vector.extract_strided_slice %273 {offsets = [15, 0], sizes = [15, 32], strides = [1, 1]} : vector<30x384xf32> to vector<15x32xf32>
    %287 = vector.extract_strided_slice %273 {offsets = [15, 128], sizes = [15, 32], strides = [1, 1]} : vector<30x384xf32> to vector<15x32xf32>
    %288 = vector.extract_strided_slice %273 {offsets = [15, 256], sizes = [15, 32], strides = [1, 1]} : vector<30x384xf32> to vector<15x32xf32>
    %289 = vector.extract_strided_slice %273 {offsets = [15, 32], sizes = [15, 32], strides = [1, 1]} : vector<30x384xf32> to vector<15x32xf32>
    %290 = vector.extract_strided_slice %273 {offsets = [15, 160], sizes = [15, 32], strides = [1, 1]} : vector<30x384xf32> to vector<15x32xf32>
    %291 = vector.extract_strided_slice %273 {offsets = [15, 288], sizes = [15, 32], strides = [1, 1]} : vector<30x384xf32> to vector<15x32xf32>
    %292 = vector.extract_strided_slice %273 {offsets = [15, 64], sizes = [15, 32], strides = [1, 1]} : vector<30x384xf32> to vector<15x32xf32>
    %293 = vector.extract_strided_slice %273 {offsets = [15, 192], sizes = [15, 32], strides = [1, 1]} : vector<30x384xf32> to vector<15x32xf32>
    %294 = vector.extract_strided_slice %273 {offsets = [15, 320], sizes = [15, 32], strides = [1, 1]} : vector<30x384xf32> to vector<15x32xf32>
    %295 = vector.extract_strided_slice %273 {offsets = [15, 96], sizes = [15, 32], strides = [1, 1]} : vector<30x384xf32> to vector<15x32xf32>
    %296 = vector.extract_strided_slice %273 {offsets = [15, 224], sizes = [15, 32], strides = [1, 1]} : vector<30x384xf32> to vector<15x32xf32>
    %297 = vector.extract_strided_slice %273 {offsets = [15, 352], sizes = [15, 32], strides = [1, 1]} : vector<30x384xf32> to vector<15x32xf32>
    %298 = vector.shape_cast %274 : vector<15x32xf32> to vector<1x15x32xf32>
    %299 = vector.shape_cast %277 : vector<15x32xf32> to vector<1x15x32xf32>
    %300 = vector.shape_cast %280 : vector<15x32xf32> to vector<1x15x32xf32>
    %301 = vector.shape_cast %283 : vector<15x32xf32> to vector<1x15x32xf32>
    %302 = vector.shape_cast %286 : vector<15x32xf32> to vector<1x15x32xf32>
    %303 = vector.shape_cast %289 : vector<15x32xf32> to vector<1x15x32xf32>
    %304 = vector.shape_cast %292 : vector<15x32xf32> to vector<1x15x32xf32>
    %305 = vector.shape_cast %295 : vector<15x32xf32> to vector<1x15x32xf32>
    %306 = tpu.concatenate %298, %299, %300, %301, %302, %303, %304, %305 in 0 : vector<1x15x32xf32>, vector<1x15x32xf32>, vector<1x15x32xf32>, vector<1x15x32xf32>, vector<1x15x32xf32>, vector<1x15x32xf32>, vector<1x15x32xf32>, vector<1x15x32xf32> -> vector<8x15x32xf32>
    %307 = arith.truncf %306 : vector<8x15x32xf32> to vector<8x15x32xbf16>
    %308 = vector.shape_cast %275 : vector<15x32xf32> to vector<1x15x32xf32>
    %309 = vector.shape_cast %278 : vector<15x32xf32> to vector<1x15x32xf32>
    %310 = vector.shape_cast %281 : vector<15x32xf32> to vector<1x15x32xf32>
    %311 = vector.shape_cast %284 : vector<15x32xf32> to vector<1x15x32xf32>
    %312 = vector.shape_cast %287 : vector<15x32xf32> to vector<1x15x32xf32>
    %313 = vector.shape_cast %290 : vector<15x32xf32> to vector<1x15x32xf32>
    %314 = vector.shape_cast %293 : vector<15x32xf32> to vector<1x15x32xf32>
    %315 = vector.shape_cast %296 : vector<15x32xf32> to vector<1x15x32xf32>
    %316 = tpu.concatenate %308, %309, %310, %311, %312, %313, %314, %315 in 0 : vector<1x15x32xf32>, vector<1x15x32xf32>, vector<1x15x32xf32>, vector<1x15x32xf32>, vector<1x15x32xf32>, vector<1x15x32xf32>, vector<1x15x32xf32>, vector<1x15x32xf32> -> vector<8x15x32xf32>
    %317 = arith.truncf %316 : vector<8x15x32xf32> to vector<8x15x32xbf16>
    %318 = vector.shape_cast %276 : vector<15x32xf32> to vector<1x15x32xf32>
    %319 = vector.shape_cast %279 : vector<15x32xf32> to vector<1x15x32xf32>
    %320 = vector.shape_cast %282 : vector<15x32xf32> to vector<1x15x32xf32>
    %321 = vector.shape_cast %285 : vector<15x32xf32> to vector<1x15x32xf32>
    %322 = vector.shape_cast %288 : vector<15x32xf32> to vector<1x15x32xf32>
    %323 = vector.shape_cast %291 : vector<15x32xf32> to vector<1x15x32xf32>
    %324 = vector.shape_cast %294 : vector<15x32xf32> to vector<1x15x32xf32>
    %325 = vector.shape_cast %297 : vector<15x32xf32> to vector<1x15x32xf32>
    %326 = tpu.concatenate %318, %319, %320, %321, %322, %323, %324, %325 in 0 : vector<1x15x32xf32>, vector<1x15x32xf32>, vector<1x15x32xf32>, vector<1x15x32xf32>, vector<1x15x32xf32>, vector<1x15x32xf32>, vector<1x15x32xf32>, vector<1x15x32xf32> -> vector<8x15x32xf32>
    %327 = arith.truncf %326 : vector<8x15x32xf32> to vector<8x15x32xbf16>
    "tpu.trace_start"() <{level = 10 : i32, message = "nqd,nkd->nqk"}> : () -> ()
    %cst_124 = arith.constant dense<0.000000e+00> : vector<8x15x15xf32>
    %328 = tpu.matmul %307, %317, %cst_124 {dimension_numbers = #tpu.dot_dimension_numbers<[2], [2], [1], [1], [0, 0, 0, 1, 1, 1], [0], [0]>} : vector<8x15x32xbf16>, vector<8x15x32xbf16>, vector<8x15x15xf32> -> vector<8x15x15xf32>
    "tpu.trace_stop"() : () -> ()
    %cst_125 = arith.constant dense<0xFF800000> : vector<8x15xf32>
    %329 = vector.multi_reduction <maximumf>, %328, %cst_125 [2] : vector<8x15x15xf32> to vector<8x15xf32>
    %330 = vector.shape_cast %329 : vector<8x15xf32> to vector<8x15x1xf32>
    %331 = vector.broadcast %330 : vector<8x15x1xf32> to vector<8x15x15xf32>
    %332 = arith.subf %328, %331 : vector<8x15x15xf32>
    %333 = math.exp %332 : vector<8x15x15xf32>
    %cst_126 = arith.constant dense<0.000000e+00> : vector<8x15xf32>
    %334 = vector.multi_reduction <add>, %333, %cst_126 [2] : vector<8x15x15xf32> to vector<8x15xf32>
    %335 = vector.shape_cast %334 : vector<8x15xf32> to vector<8x15x1xf32>
    %336 = tpu.reciprocal %335 {approx = true} : vector<8x15x1xf32> -> vector<8x15x1xf32>
    %337 = vector.broadcast %336 : vector<8x15x1xf32> to vector<8x15x15xf32>
    %338 = arith.mulf %333, %337 : vector<8x15x15xf32>
    %339 = arith.truncf %338 : vector<8x15x15xf32> to vector<8x15x15xbf16>
    "tpu.trace_start"() <{level = 10 : i32, message = "nqk,nkd->nqd"}> : () -> ()
    %cst_127 = arith.constant dense<0.000000e+00> : vector<8x15x32xf32>
    %340 = tpu.matmul %339, %327, %cst_127 {dimension_numbers = #tpu.dot_dimension_numbers<[2], [1], [1], [2], [0, 0, 0, 1, 1, 2], [0], [0]>} : vector<8x15x15xbf16>, vector<8x15x32xbf16>, vector<8x15x32xf32> -> vector<8x15x32xf32>
    "tpu.trace_stop"() : () -> ()
    %341 = vector.extract_strided_slice %340 {offsets = [0, 0, 0], sizes = [1, 15, 32], strides = [1, 1, 1]} : vector<8x15x32xf32> to vector<1x15x32xf32>
    %342 = vector.shape_cast %341 : vector<1x15x32xf32> to vector<15x32xf32>
    %343 = vector.extract_strided_slice %340 {offsets = [1, 0, 0], sizes = [1, 15, 32], strides = [1, 1, 1]} : vector<8x15x32xf32> to vector<1x15x32xf32>
    %344 = vector.shape_cast %343 : vector<1x15x32xf32> to vector<15x32xf32>
    %345 = vector.extract_strided_slice %340 {offsets = [2, 0, 0], sizes = [1, 15, 32], strides = [1, 1, 1]} : vector<8x15x32xf32> to vector<1x15x32xf32>
    %346 = vector.shape_cast %345 : vector<1x15x32xf32> to vector<15x32xf32>
    %347 = vector.extract_strided_slice %340 {offsets = [3, 0, 0], sizes = [1, 15, 32], strides = [1, 1, 1]} : vector<8x15x32xf32> to vector<1x15x32xf32>
    %348 = vector.shape_cast %347 : vector<1x15x32xf32> to vector<15x32xf32>
    %349 = tpu.concatenate %342, %344, %346, %348 in 1 : vector<15x32xf32>, vector<15x32xf32>, vector<15x32xf32>, vector<15x32xf32> -> vector<15x128xf32>
    %350 = vector.extract_strided_slice %340 {offsets = [4, 0, 0], sizes = [1, 15, 32], strides = [1, 1, 1]} : vector<8x15x32xf32> to vector<1x15x32xf32>
    %351 = vector.shape_cast %350 : vector<1x15x32xf32> to vector<15x32xf32>
    %352 = vector.extract_strided_slice %340 {offsets = [5, 0, 0], sizes = [1, 15, 32], strides = [1, 1, 1]} : vector<8x15x32xf32> to vector<1x15x32xf32>
    %353 = vector.shape_cast %352 : vector<1x15x32xf32> to vector<15x32xf32>
    %354 = vector.extract_strided_slice %340 {offsets = [6, 0, 0], sizes = [1, 15, 32], strides = [1, 1, 1]} : vector<8x15x32xf32> to vector<1x15x32xf32>
    %355 = vector.shape_cast %354 : vector<1x15x32xf32> to vector<15x32xf32>
    %356 = vector.extract_strided_slice %340 {offsets = [7, 0, 0], sizes = [1, 15, 32], strides = [1, 1, 1]} : vector<8x15x32xf32> to vector<1x15x32xf32>
    %357 = vector.shape_cast %356 : vector<1x15x32xf32> to vector<15x32xf32>
    %358 = tpu.concatenate %351, %353, %355, %357 in 1 : vector<15x32xf32>, vector<15x32xf32>, vector<15x32xf32>, vector<15x32xf32> -> vector<15x128xf32>
    %359 = tpu.concatenate %349, %358 in 0 : vector<15x128xf32>, vector<15x128xf32> -> vector<30x128xf32>
    %360 = arith.truncf %359 : vector<30x128xf32> to vector<30x128xbf16>
    %c1_128 = arith.constant 1 : index
    %c0_129 = arith.constant 0 : index
    %c0_130 = arith.constant 0 : index
    %361 = vector.load %arg11[%c1_128, %c0_129, %c0_130] : memref<2x128x128xbf16, #tpu.memory_space<vmem>>, vector<1x128x128xbf16>
    %362 = vector.shape_cast %361 : vector<1x128x128xbf16> to vector<128x128xbf16>
    %cst_131 = arith.constant dense<0.000000e+00> : vector<30x128xf32>
    %363 = tpu.matmul %360, %362, %cst_131 {dimension_numbers = #tpu.dot_dimension_numbers<[1], [0], [0], [1], [0, 0, 1, 1], [], []>} : vector<30x128xbf16>, vector<128x128xbf16>, vector<30x128xf32> -> vector<30x128xf32>
    %c1_132 = arith.constant 1 : index
    %c0_133 = arith.constant 0 : index
    %c0_134 = arith.constant 0 : index
    %364 = vector.load %arg12[%c1_132, %c0_133, %c0_134] : memref<2x1x128xf32, #tpu.memory_space<vmem>>, vector<1x1x128xf32>
    %365 = vector.shape_cast %364 : vector<1x1x128xf32> to vector<1x128xf32>
    %366 = vector.broadcast %365 : vector<1x128xf32> to vector<30x128xf32>
    %367 = arith.addf %363, %366 : vector<30x128xf32>
    %368 = arith.addf %241, %367 : vector<30x128xf32>
    %c1_135 = arith.constant 1 : index
    %c0_136 = arith.constant 0 : index
    %c0_137 = arith.constant 0 : index
    %369 = vector.load %arg13[%c1_135, %c0_136, %c0_137] : memref<2x1x128xf32, #tpu.memory_space<vmem>>, vector<1x1x128xf32>
    %370 = vector.shape_cast %369 : vector<1x1x128xf32> to vector<1x128xf32>
    %c1_138 = arith.constant 1 : index
    %c0_139 = arith.constant 0 : index
    %c0_140 = arith.constant 0 : index
    %371 = vector.load %arg14[%c1_138, %c0_139, %c0_140] : memref<2x1x128xf32, #tpu.memory_space<vmem>>, vector<1x1x128xf32>
    %372 = vector.shape_cast %371 : vector<1x1x128xf32> to vector<1x128xf32>
    %cst_141 = arith.constant dense<0.000000e+00> : vector<30xf32>
    %373 = vector.multi_reduction <add>, %368, %cst_141 [1] : vector<30x128xf32> to vector<30xf32>
    %374 = vector.shape_cast %373 : vector<30xf32> to vector<30x1xf32>
    %cst_142 = arith.constant 1.280000e+02 : f32
    %375 = vector.broadcast %cst_142 : f32 to vector<30x1xf32>
    %376 = arith.divf %374, %375 : vector<30x1xf32>
    %377 = vector.broadcast %376 : vector<30x1xf32> to vector<30x128xf32>
    %378 = arith.subf %368, %377 : vector<30x128xf32>
    %379 = arith.mulf %378, %378 : vector<30x128xf32>
    %cst_143 = arith.constant dense<0.000000e+00> : vector<30xf32>
    %380 = vector.multi_reduction <add>, %379, %cst_143 [1] : vector<30x128xf32> to vector<30xf32>
    %381 = vector.shape_cast %380 : vector<30xf32> to vector<30x1xf32>
    %cst_144 = arith.constant 1.280000e+02 : f32
    %382 = vector.broadcast %cst_144 : f32 to vector<30x1xf32>
    %383 = arith.divf %381, %382 : vector<30x1xf32>
    %cst_145 = arith.constant 9.99999997E-7 : f32
    %384 = vector.broadcast %cst_145 : f32 to vector<30x1xf32>
    %385 = arith.addf %383, %384 : vector<30x1xf32>
    %386 = math.rsqrt %385 : vector<30x1xf32>
    %387 = vector.broadcast %386 : vector<30x1xf32> to vector<30x128xf32>
    %388 = arith.mulf %378, %387 : vector<30x128xf32>
    %389 = vector.broadcast %370 : vector<1x128xf32> to vector<30x128xf32>
    %390 = arith.mulf %388, %389 : vector<30x128xf32>
    %391 = vector.broadcast %372 : vector<1x128xf32> to vector<30x128xf32>
    %392 = arith.addf %390, %391 : vector<30x128xf32>
    %393 = arith.truncf %392 : vector<30x128xf32> to vector<30x128xbf16>
    %c1_146 = arith.constant 1 : index
    %c0_147 = arith.constant 0 : index
    %c0_148 = arith.constant 0 : index
    %394 = vector.load %arg15[%c1_146, %c0_147, %c0_148] : memref<2x128x256xbf16, #tpu.memory_space<vmem>>, vector<1x128x256xbf16>
    %395 = vector.shape_cast %394 : vector<1x128x256xbf16> to vector<128x256xbf16>
    %cst_149 = arith.constant dense<0.000000e+00> : vector<30x256xf32>
    %396 = tpu.matmul %393, %395, %cst_149 {dimension_numbers = #tpu.dot_dimension_numbers<[1], [0], [0], [1], [0, 0, 1, 1], [], []>} : vector<30x128xbf16>, vector<128x256xbf16>, vector<30x256xf32> -> vector<30x256xf32>
    %c1_150 = arith.constant 1 : index
    %c0_151 = arith.constant 0 : index
    %c0_152 = arith.constant 0 : index
    %397 = vector.load %arg16[%c1_150, %c0_151, %c0_152] : memref<2x1x256xf32, #tpu.memory_space<vmem>>, vector<1x1x256xf32>
    %398 = vector.shape_cast %397 : vector<1x1x256xf32> to vector<1x256xf32>
    %399 = vector.broadcast %398 : vector<1x256xf32> to vector<30x256xf32>
    %400 = arith.addf %396, %399 : vector<30x256xf32>
    %cst_153 = arith.constant 5.000000e-01 : f32
    %401 = vector.broadcast %cst_153 : f32 to vector<30x256xf32>
    %402 = arith.mulf %401, %400 : vector<30x256xf32>
    %cst_154 = arith.constant 0.707106769 : f32
    %403 = vector.broadcast %cst_154 : f32 to vector<30x256xf32>
    %404 = arith.mulf %400, %403 : vector<30x256xf32>
    %405 = math.absf %404 : vector<30x256xf32>
    %cst_155 = arith.constant 0.327591091 : f32
    %406 = vector.broadcast %cst_155 : f32 to vector<30x256xf32>
    %407 = arith.mulf %406, %405 : vector<30x256xf32>
    %cst_156 = arith.constant 1.000000e+00 : f32
    %408 = vector.broadcast %cst_156 : f32 to vector<30x256xf32>
    %409 = arith.addf %408, %407 : vector<30x256xf32>
    %410 = tpu.reciprocal %409 {approx = true} : vector<30x256xf32> -> vector<30x256xf32>
    %cst_157 = arith.constant 1.06140542 : f32
    %411 = vector.broadcast %cst_157 : f32 to vector<30x256xf32>
    %412 = arith.mulf %411, %410 : vector<30x256xf32>
    %cst_158 = arith.constant -1.45315206 : f32
    %413 = vector.broadcast %cst_158 : f32 to vector<30x256xf32>
    %414 = arith.addf %412, %413 : vector<30x256xf32>
    %415 = arith.mulf %414, %410 : vector<30x256xf32>
    %cst_159 = arith.constant 1.42141378 : f32
    %416 = vector.broadcast %cst_159 : f32 to vector<30x256xf32>
    %417 = arith.addf %415, %416 : vector<30x256xf32>
    %418 = arith.mulf %417, %410 : vector<30x256xf32>
    %cst_160 = arith.constant -0.284496725 : f32
    %419 = vector.broadcast %cst_160 : f32 to vector<30x256xf32>
    %420 = arith.addf %418, %419 : vector<30x256xf32>
    %421 = arith.mulf %420, %410 : vector<30x256xf32>
    %cst_161 = arith.constant 0.254829586 : f32
    %422 = vector.broadcast %cst_161 : f32 to vector<30x256xf32>
    %423 = arith.addf %421, %422 : vector<30x256xf32>
    %424 = arith.mulf %423, %410 : vector<30x256xf32>
    %425 = arith.mulf %405, %405 : vector<30x256xf32>
    %cst_162 = arith.constant 0.000000e+00 : f32
    %426 = vector.broadcast %cst_162 : f32 to vector<30x256xf32>
    %427 = arith.subf %426, %425 : vector<30x256xf32>
    %428 = math.exp %427 : vector<30x256xf32>
    %429 = arith.mulf %424, %428 : vector<30x256xf32>
    %cst_163 = arith.constant 1.000000e+00 : f32
    %430 = vector.broadcast %cst_163 : f32 to vector<30x256xf32>
    %431 = arith.subf %430, %429 : vector<30x256xf32>
    %cst_164 = arith.constant 0.000000e+00 : f32
    %432 = vector.broadcast %cst_164 : f32 to vector<30x256xf32>
    %433 = arith.cmpf oge, %404, %432 : vector<30x256xf32>
    %cst_165 = arith.constant 0.000000e+00 : f32
    %434 = vector.broadcast %cst_165 : f32 to vector<30x256xf32>
    %435 = arith.subf %434, %431 : vector<30x256xf32>
    %436 = arith.select %433, %431, %435 : vector<30x256xi1>, vector<30x256xf32>
    %cst_166 = arith.constant 1.000000e+00 : f32
    %437 = vector.broadcast %cst_166 : f32 to vector<30x256xf32>
    %438 = arith.addf %437, %436 : vector<30x256xf32>
    %439 = arith.mulf %402, %438 : vector<30x256xf32>
    %440 = arith.truncf %439 : vector<30x256xf32> to vector<30x256xbf16>
    %c1_167 = arith.constant 1 : index
    %c0_168 = arith.constant 0 : index
    %c0_169 = arith.constant 0 : index
    %441 = vector.load %arg17[%c1_167, %c0_168, %c0_169] : memref<2x256x128xbf16, #tpu.memory_space<vmem>>, vector<1x256x128xbf16>
    %442 = vector.shape_cast %441 : vector<1x256x128xbf16> to vector<256x128xbf16>
    %cst_170 = arith.constant dense<0.000000e+00> : vector<30x128xf32>
    %443 = tpu.matmul %440, %442, %cst_170 {dimension_numbers = #tpu.dot_dimension_numbers<[1], [0], [0], [1], [0, 0, 1, 1], [], []>} : vector<30x256xbf16>, vector<256x128xbf16>, vector<30x128xf32> -> vector<30x128xf32>
    %c1_171 = arith.constant 1 : index
    %c0_172 = arith.constant 0 : index
    %c0_173 = arith.constant 0 : index
    %444 = vector.load %arg18[%c1_171, %c0_172, %c0_173] : memref<2x1x128xf32, #tpu.memory_space<vmem>>, vector<1x1x128xf32>
    %445 = vector.shape_cast %444 : vector<1x1x128xf32> to vector<1x128xf32>
    %446 = vector.broadcast %445 : vector<1x128xf32> to vector<30x128xf32>
    %447 = arith.addf %443, %446 : vector<30x128xf32>
    %448 = arith.addf %368, %447 : vector<30x128xf32>
    %449 = vector.extract_strided_slice %448 {offsets = [0, 0], sizes = [1, 128], strides = [1, 1]} : vector<30x128xf32> to vector<1x128xf32>
    %450 = vector.extract_strided_slice %448 {offsets = [15, 0], sizes = [1, 128], strides = [1, 1]} : vector<30x128xf32> to vector<1x128xf32>
    %451 = tpu.concatenate %449, %450 in 0 : vector<1x128xf32>, vector<1x128xf32> -> vector<2x128xf32>
    %c0_174 = arith.constant 0 : index
    %c0_175 = arith.constant 0 : index
    %452 = vector.load %arg19[%c0_174, %c0_175] : memref<1x128xf32, #tpu.memory_space<vmem>>, vector<1x128xf32>
    %c0_176 = arith.constant 0 : index
    %c0_177 = arith.constant 0 : index
    %453 = vector.load %arg20[%c0_176, %c0_177] : memref<1x128xf32, #tpu.memory_space<vmem>>, vector<1x128xf32>
    %cst_178 = arith.constant dense<0.000000e+00> : vector<2xf32>
    %454 = vector.multi_reduction <add>, %451, %cst_178 [1] : vector<2x128xf32> to vector<2xf32>
    %455 = vector.shape_cast %454 : vector<2xf32> to vector<2x1xf32>
    %cst_179 = arith.constant 1.280000e+02 : f32
    %456 = vector.broadcast %cst_179 : f32 to vector<2x1xf32>
    %457 = arith.divf %455, %456 : vector<2x1xf32>
    %458 = vector.broadcast %457 : vector<2x1xf32> to vector<2x128xf32>
    %459 = arith.subf %451, %458 : vector<2x128xf32>
    %460 = arith.mulf %459, %459 : vector<2x128xf32>
    %cst_180 = arith.constant dense<0.000000e+00> : vector<2xf32>
    %461 = vector.multi_reduction <add>, %460, %cst_180 [1] : vector<2x128xf32> to vector<2xf32>
    %462 = vector.shape_cast %461 : vector<2xf32> to vector<2x1xf32>
    %cst_181 = arith.constant 1.280000e+02 : f32
    %463 = vector.broadcast %cst_181 : f32 to vector<2x1xf32>
    %464 = arith.divf %462, %463 : vector<2x1xf32>
    %cst_182 = arith.constant 9.99999997E-7 : f32
    %465 = vector.broadcast %cst_182 : f32 to vector<2x1xf32>
    %466 = arith.addf %464, %465 : vector<2x1xf32>
    %467 = math.rsqrt %466 : vector<2x1xf32>
    %468 = vector.broadcast %467 : vector<2x1xf32> to vector<2x128xf32>
    %469 = arith.mulf %459, %468 : vector<2x128xf32>
    %470 = vector.broadcast %452 : vector<1x128xf32> to vector<2x128xf32>
    %471 = arith.mulf %469, %470 : vector<2x128xf32>
    %472 = vector.broadcast %453 : vector<1x128xf32> to vector<2x128xf32>
    %473 = arith.addf %471, %472 : vector<2x128xf32>
    %474 = arith.truncf %473 : vector<2x128xf32> to vector<2x128xbf16>
    %c0_183 = arith.constant 0 : index
    %c0_184 = arith.constant 0 : index
    %475 = vector.load %arg21[%c0_183, %c0_184] : memref<128x128xbf16, #tpu.memory_space<vmem>>, vector<128x128xbf16>
    %cst_185 = arith.constant dense<0.000000e+00> : vector<2x128xf32>
    %476 = tpu.matmul %474, %475, %cst_185 {dimension_numbers = #tpu.dot_dimension_numbers<[1], [0], [0], [1], [0, 0, 1, 1], [], []>} : vector<2x128xbf16>, vector<128x128xbf16>, vector<2x128xf32> -> vector<2x128xf32>
    %c0_186 = arith.constant 0 : index
    %c0_187 = arith.constant 0 : index
    %477 = vector.load %arg22[%c0_186, %c0_187] : memref<1x128xf32, #tpu.memory_space<vmem>>, vector<1x128xf32>
    %478 = vector.broadcast %477 : vector<1x128xf32> to vector<2x128xf32>
    %479 = arith.addf %476, %478 : vector<2x128xf32>
    %c0_188 = arith.constant 0 : index
    %c0_189 = arith.constant 0 : index
    %480 = vector.load %arg23[%c0_188, %c0_189] : memref<2x128xf32, #tpu.memory_space<vmem>>, vector<2x128xf32>
    tpu.vector_store %arg23[%c0_188, %c0_189], %479 {strides = array<i32>} : memref<2x128xf32, #tpu.memory_space<vmem>>, vector<2x128xf32>,
    return
  }
  func.func @transform_0(%arg0: i32) -> (i32, i32) {
    %c0_i32 = arith.constant 0 : i32
    %c0_i32_0 = arith.constant 0 : i32
    return %arg0, %c0_i32 : i32, i32
  }
  func.func @transform_1(%arg0: i32) -> (i32, i32) {
    %c0_i32 = arith.constant 0 : i32
    %c0_i32_0 = arith.constant 0 : i32
    %c0_i32_1 = arith.constant 0 : i32
    return %c0_i32, %c0_i32_0 : i32, i32
  }
  func.func @transform_2(%arg0: i32) -> (i32, i32) {
    %c0_i32 = arith.constant 0 : i32
    %c0_i32_0 = arith.constant 0 : i32
    %c0_i32_1 = arith.constant 0 : i32
    return %c0_i32, %c0_i32_0 : i32, i32
  }
  func.func @transform_3(%arg0: i32) -> (i32, i32) {
    %c0_i32 = arith.constant 0 : i32
    %c0_i32_0 = arith.constant 0 : i32
    %c0_i32_1 = arith.constant 0 : i32
    return %c0_i32, %c0_i32_0 : i32, i32
  }
  func.func @transform_4(%arg0: i32) -> (i32, i32) {
    %c0_i32 = arith.constant 0 : i32
    %c0_i32_0 = arith.constant 0 : i32
    %c0_i32_1 = arith.constant 0 : i32
    return %c0_i32, %c0_i32_0 : i32, i32
  }
  func.func @transform_5(%arg0: i32) -> (i32, i32, i32) {
    %c0_i32 = arith.constant 0 : i32
    %c0_i32_0 = arith.constant 0 : i32
    %c0_i32_1 = arith.constant 0 : i32
    %c0_i32_2 = arith.constant 0 : i32
    return %c0_i32, %c0_i32_0, %c0_i32_1 : i32, i32, i32
  }
  func.func @transform_6(%arg0: i32) -> (i32, i32, i32) {
    %c0_i32 = arith.constant 0 : i32
    %c0_i32_0 = arith.constant 0 : i32
    %c0_i32_1 = arith.constant 0 : i32
    %c0_i32_2 = arith.constant 0 : i32
    return %c0_i32, %c0_i32_0, %c0_i32_1 : i32, i32, i32
  }
  func.func @transform_7(%arg0: i32) -> (i32, i32, i32) {
    %c0_i32 = arith.constant 0 : i32
    %c0_i32_0 = arith.constant 0 : i32
    %c0_i32_1 = arith.constant 0 : i32
    %c0_i32_2 = arith.constant 0 : i32
    return %c0_i32, %c0_i32_0, %c0_i32_1 : i32, i32, i32
  }
  func.func @transform_8(%arg0: i32) -> (i32, i32, i32) {
    %c0_i32 = arith.constant 0 : i32
    %c0_i32_0 = arith.constant 0 : i32
    %c0_i32_1 = arith.constant 0 : i32
    %c0_i32_2 = arith.constant 0 : i32
    return %c0_i32, %c0_i32_0, %c0_i32_1 : i32, i32, i32
  }
  func.func @transform_9(%arg0: i32) -> (i32, i32, i32) {
    %c0_i32 = arith.constant 0 : i32
    %c0_i32_0 = arith.constant 0 : i32
    %c0_i32_1 = arith.constant 0 : i32
    %c0_i32_2 = arith.constant 0 : i32
    return %c0_i32, %c0_i32_0, %c0_i32_1 : i32, i32, i32
  }
  func.func @transform_10(%arg0: i32) -> (i32, i32, i32) {
    %c0_i32 = arith.constant 0 : i32
    %c0_i32_0 = arith.constant 0 : i32
    %c0_i32_1 = arith.constant 0 : i32
    %c0_i32_2 = arith.constant 0 : i32
    return %c0_i32, %c0_i32_0, %c0_i32_1 : i32, i32, i32
  }
  func.func @transform_11(%arg0: i32) -> (i32, i32, i32) {
    %c0_i32 = arith.constant 0 : i32
    %c0_i32_0 = arith.constant 0 : i32
    %c0_i32_1 = arith.constant 0 : i32
    %c0_i32_2 = arith.constant 0 : i32
    return %c0_i32, %c0_i32_0, %c0_i32_1 : i32, i32, i32
  }
  func.func @transform_12(%arg0: i32) -> (i32, i32, i32) {
    %c0_i32 = arith.constant 0 : i32
    %c0_i32_0 = arith.constant 0 : i32
    %c0_i32_1 = arith.constant 0 : i32
    %c0_i32_2 = arith.constant 0 : i32
    return %c0_i32, %c0_i32_0, %c0_i32_1 : i32, i32, i32
  }
  func.func @transform_13(%arg0: i32) -> (i32, i32, i32) {
    %c0_i32 = arith.constant 0 : i32
    %c0_i32_0 = arith.constant 0 : i32
    %c0_i32_1 = arith.constant 0 : i32
    %c0_i32_2 = arith.constant 0 : i32
    return %c0_i32, %c0_i32_0, %c0_i32_1 : i32, i32, i32
  }
  func.func @transform_14(%arg0: i32) -> (i32, i32, i32) {
    %c0_i32 = arith.constant 0 : i32
    %c0_i32_0 = arith.constant 0 : i32
    %c0_i32_1 = arith.constant 0 : i32
    %c0_i32_2 = arith.constant 0 : i32
    return %c0_i32, %c0_i32_0, %c0_i32_1 : i32, i32, i32
  }
  func.func @transform_15(%arg0: i32) -> (i32, i32, i32) {
    %c0_i32 = arith.constant 0 : i32
    %c0_i32_0 = arith.constant 0 : i32
    %c0_i32_1 = arith.constant 0 : i32
    %c0_i32_2 = arith.constant 0 : i32
    return %c0_i32, %c0_i32_0, %c0_i32_1 : i32, i32, i32
  }
  func.func @transform_16(%arg0: i32) -> (i32, i32, i32) {
    %c0_i32 = arith.constant 0 : i32
    %c0_i32_0 = arith.constant 0 : i32
    %c0_i32_1 = arith.constant 0 : i32
    %c0_i32_2 = arith.constant 0 : i32
    return %c0_i32, %c0_i32_0, %c0_i32_1 : i32, i32, i32
  }
  func.func @transform_17(%arg0: i32) -> (i32, i32, i32) {
    %c0_i32 = arith.constant 0 : i32
    %c0_i32_0 = arith.constant 0 : i32
    %c0_i32_1 = arith.constant 0 : i32
    %c0_i32_2 = arith.constant 0 : i32
    return %c0_i32, %c0_i32_0, %c0_i32_1 : i32, i32, i32
  }
  func.func @transform_18(%arg0: i32) -> (i32, i32) {
    %c0_i32 = arith.constant 0 : i32
    %c0_i32_0 = arith.constant 0 : i32
    %c0_i32_1 = arith.constant 0 : i32
    return %c0_i32, %c0_i32_0 : i32, i32
  }
  func.func @transform_19(%arg0: i32) -> (i32, i32) {
    %c0_i32 = arith.constant 0 : i32
    %c0_i32_0 = arith.constant 0 : i32
    %c0_i32_1 = arith.constant 0 : i32
    return %c0_i32, %c0_i32_0 : i32, i32
  }
  func.func @transform_20(%arg0: i32) -> (i32, i32) {
    %c0_i32 = arith.constant 0 : i32
    %c0_i32_0 = arith.constant 0 : i32
    %c0_i32_1 = arith.constant 0 : i32
    return %c0_i32, %c0_i32_0 : i32, i32
  }
  func.func @transform_21(%arg0: i32) -> (i32, i32) {
    %c0_i32 = arith.constant 0 : i32
    %c0_i32_0 = arith.constant 0 : i32
    %c0_i32_1 = arith.constant 0 : i32
    return %c0_i32, %c0_i32_0 : i32, i32
  }
  func.func @transform_22(%arg0: i32) -> (i32, i32) {
    %c0_i32 = arith.constant 0 : i32
    %c0_i32_0 = arith.constant 0 : i32
    return %arg0, %c0_i32 : i32, i32
  }
}

</mosaic_0001>

<llo_original>
// kernel: vit_prompt_forward.1
$region0: #{vit_prompt_forward.1}
  #allocation0 [shape = 'u32[]', space=smem, size = 0x4, offset = 0x4, fixed_abs, tag = 'smem constant byte address 0x4 - core index']
  #allocation1 [shape = 'u32[144,128]{1,0:T(1,128)}', space=vmem, size = 0x12000, scoped, tag = 'internal scratch']
  #allocation2 [shape = 'f32[30,128]{1,0:T(8,128)}', space=vmem, size = 0x4000, scoped, tag = 'scratch operand']
  %s0 = inlined_call_operand.vmem [shape: bf16[8,3072], index: 0, kind: input, shape index: {}]
  %s1 = inlined_call_operand.vmem [shape: bf16[3072,128], index: 1, kind: input, shape index: {}]
  %s2 = inlined_call_operand.vmem [shape: f32[1,128], index: 2, kind: input, shape index: {}]
  %s3 = inlined_call_operand.vmem [shape: f32[1,128], index: 3, kind: input, shape index: {}]
  %s4 = inlined_call_operand.vmem [shape: f32[5,128], index: 4, kind: input, shape index: {}]
  %s5 = inlined_call_operand.vmem [shape: f32[2,10,128], index: 5, kind: input, shape index: {}]
  %s6 = inlined_call_operand.vmem [shape: f32[2,1,128], index: 6, kind: input, shape index: {}]
  %s7 = inlined_call_operand.vmem [shape: f32[2,1,128], index: 7, kind: input, shape index: {}]
  %s8 = inlined_call_operand.vmem [shape: bf16[2,128,384], index: 8, kind: input, shape index: {}]
  %s9 = inlined_call_operand.vmem [shape: f32[2,1,384], index: 9, kind: input, shape index: {}]
  %s10 = inlined_call_operand.vmem [shape: bf16[2,128,128], index: 10, kind: input, shape index: {}]
  %s11 = inlined_call_operand.vmem [shape: f32[2,1,128], index: 11, kind: input, shape index: {}]
  %s12 = inlined_call_operand.vmem [shape: f32[2,1,128], index: 12, kind: input, shape index: {}]
  %s13 = inlined_call_operand.vmem [shape: f32[2,1,128], index: 13, kind: input, shape index: {}]
  %s14 = inlined_call_operand.vmem [shape: bf16[2,128,256], index: 14, kind: input, shape index: {}]
  %s15 = inlined_call_operand.vmem [shape: f32[2,1,256], index: 15, kind: input, shape index: {}]
  %s16 = inlined_call_operand.vmem [shape: bf16[2,256,128], index: 16, kind: input, shape index: {}]
  %s17 = inlined_call_operand.vmem [shape: f32[2,1,128], index: 17, kind: input, shape index: {}]
  %s18 = inlined_call_operand.vmem [shape: f32[1,128], index: 18, kind: input, shape index: {}]
  %s19 = inlined_call_operand.vmem [shape: f32[1,128], index: 19, kind: input, shape index: {}]
  %s20 = inlined_call_operand.vmem [shape: bf16[128,128], index: 20, kind: input, shape index: {}]
  %s21 = inlined_call_operand.vmem [shape: f32[1,128], index: 21, kind: input, shape index: {}]
  %s22 = inlined_call_operand.hbm [shape: f32[2,128], index: 22, kind: output, shape index: {}]
  %s23 = sld [smem:[#allocation0]]
  $region98: #{vit_prompt_forward.1} parent=0
    _
  %s25 = ssub.s32 1, %s23
  %s26 = scalar_select 0, %s25, %s23
  $region1: #{vit_prompt_forward.1} parent=0
    #allocation3 [shape = 'u8[1024]{0}', space=vmem, size = 0x400, scoped, tag = 'output window, operand 0, single buffered']
    #allocation4 [shape = 's32[1]{0}', space=sflag, size = 0x4, scoped, tag = 'scoped memory for vit_prompt_forward.1']
    %27 = vsyncpa [#allocation4], 0
    // Predicated region
    $region2: #{vit_prompt_forward.1} parent=1 // pred_check
      _
    $region3: #{vit_prompt_forward.1} parent=1 // pred_check_branch
      %29 = sbr.rel (0) target = $region5
    $region4: #{vit_prompt_forward.1} parent=1 // pred_region
      _
    $region5: #{vit_prompt_forward.1} parent=1 // pred_fallthru
      _
    // Predicated region
    $region6: #{vit_prompt_forward.1} parent=1 // pred_check
      _
    $region7: #{vit_prompt_forward.1} parent=1 // pred_check_branch
      %31 = sbr.rel (0) target = $region9
    $region8: #{vit_prompt_forward.1} parent=1 // pred_region
      _
    $region9: #{vit_prompt_forward.1} parent=1 // pred_fallthru
      _
    // Predicated region
    $region10: #{vit_prompt_forward.1} parent=1 // pred_check
      _
    $region11: #{vit_prompt_forward.1} parent=1 // pred_check_branch
      %33 = sbr.rel (0) target = $region13
    $region12: #{vit_prompt_forward.1} parent=1 // pred_region
      _
    $region13: #{vit_prompt_forward.1} parent=1 // pred_fallthru
      _
    // Predicated region
    $region14: #{vit_prompt_forward.1} parent=1 // pred_check
      _
    $region15: #{vit_prompt_forward.1} parent=1 // pred_check_branch
      %35 = sbr.rel (0) target = $region17
    $region16: #{vit_prompt_forward.1} parent=1 // pred_region
      _
    $region17: #{vit_prompt_forward.1} parent=1 // pred_fallthru
      _
    // Predicated region
    $region18: #{vit_prompt_forward.1} parent=1 // pred_check
      _
    $region19: #{vit_prompt_forward.1} parent=1 // pred_check_branch
      %37 = sbr.rel (0) target = $region21
    $region20: #{vit_prompt_forward.1} parent=1 // pred_region
      _
    $region21: #{vit_prompt_forward.1} parent=1 // pred_fallthru
      _
    // Predicated region
    $region22: #{vit_prompt_forward.1} parent=1 // pred_check
      _
    $region23: #{vit_prompt_forward.1} parent=1 // pred_check_branch
      %39 = sbr.rel (0) target = $region25
    $region24: #{vit_prompt_forward.1} parent=1 // pred_region
      _
    $region25: #{vit_prompt_forward.1} parent=1 // pred_fallthru
      _
    // Predicated region
    $region26: #{vit_prompt_forward.1} parent=1 // pred_check
      _
    $region27: #{vit_prompt_forward.1} parent=1 // pred_check_branch
      %41 = sbr.rel (0) target = $region29
    $region28: #{vit_prompt_forward.1} parent=1 // pred_region
      _
    $region29: #{vit_prompt_forward.1} parent=1 // pred_fallthru
      _
    // Predicated region
    $region30: #{vit_prompt_forward.1} parent=1 // pred_check
      _
    $region31: #{vit_prompt_forward.1} parent=1 // pred_check_branch
      %43 = sbr.rel (0) target = $region33
    $region32: #{vit_prompt_forward.1} parent=1 // pred_region
      _
    $region33: #{vit_prompt_forward.1} parent=1 // pred_fallthru
      _
    // Predicated region
    $region34: #{vit_prompt_forward.1} parent=1 // pred_check
      _
    $region35: #{vit_prompt_forward.1} parent=1 // pred_check_branch
      %45 = sbr.rel (0) target = $region37
    $region36: #{vit_prompt_forward.1} parent=1 // pred_region
      _
    $region37: #{vit_prompt_forward.1} parent=1 // pred_fallthru
      _
    // Predicated region
    $region38: #{vit_prompt_forward.1} parent=1 // pred_check
      _
    $region39: #{vit_prompt_forward.1} parent=1 // pred_check_branch
      %47 = sbr.rel (0) target = $region41
    $region40: #{vit_prompt_forward.1} parent=1 // pred_region
      _
    $region41: #{vit_prompt_forward.1} parent=1 // pred_fallthru
      _
    // Predicated region
    $region42: #{vit_prompt_forward.1} parent=1 // pred_check
      _
    $region43: #{vit_prompt_forward.1} parent=1 // pred_check_branch
      %49 = sbr.rel (0) target = $region45
    $region44: #{vit_prompt_forward.1} parent=1 // pred_region
      _
    $region45: #{vit_prompt_forward.1} parent=1 // pred_fallthru
      _
    // Predicated region
    $region46: #{vit_prompt_forward.1} parent=1 // pred_check
      _
    $region47: #{vit_prompt_forward.1} parent=1 // pred_check_branch
      %51 = sbr.rel (0) target = $region49
    $region48: #{vit_prompt_forward.1} parent=1 // pred_region
      _
    $region49: #{vit_prompt_forward.1} parent=1 // pred_fallthru
      _
    // Predicated region
    $region50: #{vit_prompt_forward.1} parent=1 // pred_check
      _
    $region51: #{vit_prompt_forward.1} parent=1 // pred_check_branch
      %53 = sbr.rel (0) target = $region53
    $region52: #{vit_prompt_forward.1} parent=1 // pred_region
      _
    $region53: #{vit_prompt_forward.1} parent=1 // pred_fallthru
      _
    // Predicated region
    $region54: #{vit_prompt_forward.1} parent=1 // pred_check
      _
    $region55: #{vit_prompt_forward.1} parent=1 // pred_check_branch
      %55 = sbr.rel (0) target = $region57
    $region56: #{vit_prompt_forward.1} parent=1 // pred_region
      _
    $region57: #{vit_prompt_forward.1} parent=1 // pred_fallthru
      _
    // Predicated region
    $region58: #{vit_prompt_forward.1} parent=1 // pred_check
      _
    $region59: #{vit_prompt_forward.1} parent=1 // pred_check_branch
      %57 = sbr.rel (0) target = $region61
    $region60: #{vit_prompt_forward.1} parent=1 // pred_region
      _
    $region61: #{vit_prompt_forward.1} parent=1 // pred_fallthru
      _
    // Predicated region
    $region62: #{vit_prompt_forward.1} parent=1 // pred_check
      _
    $region63: #{vit_prompt_forward.1} parent=1 // pred_check_branch
      %59 = sbr.rel (0) target = $region65
    $region64: #{vit_prompt_forward.1} parent=1 // pred_region
      _
    $region65: #{vit_prompt_forward.1} parent=1 // pred_fallthru
      _
    // Predicated region
    $region66: #{vit_prompt_forward.1} parent=1 // pred_check
      _
    $region67: #{vit_prompt_forward.1} parent=1 // pred_check_branch
      %61 = sbr.rel (0) target = $region69
    $region68: #{vit_prompt_forward.1} parent=1 // pred_region
      _
    $region69: #{vit_prompt_forward.1} parent=1 // pred_fallthru
      _
    // Predicated region
    $region70: #{vit_prompt_forward.1} parent=1 // pred_check
      _
    $region71: #{vit_prompt_forward.1} parent=1 // pred_check_branch
      %63 = sbr.rel (0) target = $region73
    $region72: #{vit_prompt_forward.1} parent=1 // pred_region
      _
    $region73: #{vit_prompt_forward.1} parent=1 // pred_fallthru
      _
    // Predicated region
    $region74: #{vit_prompt_forward.1} parent=1 // pred_check
      _
    $region75: #{vit_prompt_forward.1} parent=1 // pred_check_branch
      %65 = sbr.rel (0) target = $region77
    $region76: #{vit_prompt_forward.1} parent=1 // pred_region
      _
    $region77: #{vit_prompt_forward.1} parent=1 // pred_fallthru
      _
    // Predicated region
    $region78: #{vit_prompt_forward.1} parent=1 // pred_check
      _
    $region79: #{vit_prompt_forward.1} parent=1 // pred_check_branch
      %67 = sbr.rel (0) target = $region81
    $region80: #{vit_prompt_forward.1} parent=1 // pred_region
      _
    $region81: #{vit_prompt_forward.1} parent=1 // pred_fallthru
      _
    // Predicated region
    $region82: #{vit_prompt_forward.1} parent=1 // pred_check
      _
    $region83: #{vit_prompt_forward.1} parent=1 // pred_check_branch
      %69 = sbr.rel (0) target = $region85
    $region84: #{vit_prompt_forward.1} parent=1 // pred_region
      _
    $region85: #{vit_prompt_forward.1} parent=1 // pred_fallthru
      _
    // Predicated region
    $region86: #{vit_prompt_forward.1} parent=1 // pred_check
      _
    $region87: #{vit_prompt_forward.1} parent=1 // pred_check_branch
      %71 = sbr.rel (0) target = $region89
    $region88: #{vit_prompt_forward.1} parent=1 // pred_region
      _
    $region89: #{vit_prompt_forward.1} parent=1 // pred_fallthru
      _
    %v73 = vld [vmem:[%s0] sm:$0xff]
    %v74 = vld [vmem:[%s0 + $0x8] sm:$0xff]
    %v75 = vld [vmem:[%s0 + $0x10] sm:$0xff]
    %v76 = vld [vmem:[%s0 + $0x18] sm:$0xff]
    %v77 = vld [vmem:[%s0 + $0x20] sm:$0xff]
    %v78 = vld [vmem:[%s0 + $0x28] sm:$0xff]
    %v79 = vld [vmem:[%s0 + $0x30] sm:$0xff]
    %v80 = vld [vmem:[%s0 + $0x38] sm:$0xff]
    %v81 = vld [vmem:[%s0 + $0x40] sm:$0xff]
    %v82 = vld [vmem:[%s0 + $0x48] sm:$0xff]
    %v83 = vld [vmem:[%s0 + $0x50] sm:$0xff]
    %v84 = vld [vmem:[%s0 + $0x58] sm:$0xff]
    %v85 = vld [vmem:[%s1] sm:$0xf]
    %v86 = vld [vmem:[%s1 + $0x4] sm:$0xf]
    %v87 = vld [vmem:[%s1 + $0x8] sm:$0xf]
    %v88 = vld [vmem:[%s1 + $0xc] sm:$0xf]
    %v89 = vld [vmem:[%s1 + $0x10] sm:$0xf]
    %v90 = vld [vmem:[%s1 + $0x14] sm:$0xf]
    %v91 = vld [vmem:[%s1 + $0x18] sm:$0xf]
    %v92 = vld [vmem:[%s1 + $0x1c] sm:$0xf]
    %v93 = vld [vmem:[%s1 + $0x20] sm:$0xf]
    %v94 = vld [vmem:[%s1 + $0x24] sm:$0xf]
    %v95 = vld [vmem:[%s1 + $0x28] sm:$0xf]
    %v96 = vld [vmem:[%s1 + $0x2c] sm:$0xf]
    %v97 = vld [vmem:[%s1 + $0x30] sm:$0xf]
    %v98 = vld [vmem:[%s1 + $0x34] sm:$0xf]
    %v99 = vld [vmem:[%s1 + $0x38] sm:$0xf]
    %v100 = vld [vmem:[%s1 + $0x3c] sm:$0xf]
    %v101 = vld [vmem:[%s1 + $0x40] sm:$0xf]
    %v102 = vld [vmem:[%s1 + $0x44] sm:$0xf]
    %v103 = vld [vmem:[%s1 + $0x48] sm:$0xf]
    %v104 = vld [vmem:[%s1 + $0x4c] sm:$0xf]
    %v105 = vld [vmem:[%s1 + $0x50] sm:$0xf]
    %v106 = vld [vmem:[%s1 + $0x54] sm:$0xf]
    %v107 = vld [vmem:[%s1 + $0x58] sm:$0xf]
    %v108 = vld [vmem:[%s1 + $0x5c] sm:$0xf]
    %v109 = vld [vmem:[%s1 + $0x60] sm:$0xf]
    %v110 = vld [vmem:[%s1 + $0x64] sm:$0xf]
    %v111 = vld [vmem:[%s1 + $0x68] sm:$0xf]
    %v112 = vld [vmem:[%s1 + $0x6c] sm:$0xf]
    %v113 = vld [vmem:[%s1 + $0x70] sm:$0xf]
    %v114 = vld [vmem:[%s1 + $0x74] sm:$0xf]
    %v115 = vld [vmem:[%s1 + $0x78] sm:$0xf]
    %v116 = vld [vmem:[%s1 + $0x7c] sm:$0xf]
    %v117 = vld [vmem:[%s1 + $0x80] sm:$0xf]
    %v118 = vld [vmem:[%s1 + $0x84] sm:$0xf]
    %v119 = vld [vmem:[%s1 + $0x88] sm:$0xf]
    %v120 = vld [vmem:[%s1 + $0x8c] sm:$0xf]
    %v121 = vld [vmem:[%s1 + $0x90] sm:$0xf]
    %v122 = vld [vmem:[%s1 + $0x94] sm:$0xf]
    %v123 = vld [vmem:[%s1 + $0x98] sm:$0xf]
    %v124 = vld [vmem:[%s1 + $0x9c] sm:$0xf]
    %v125 = vld [vmem:[%s1 + $0xa0] sm:$0xf]
    %v126 = vld [vmem:[%s1 + $0xa4] sm:$0xf]
    %v127 = vld [vmem:[%s1 + $0xa8] sm:$0xf]
    %v128 = vld [vmem:[%s1 + $0xac] sm:$0xf]
    %v129 = vld [vmem:[%s1 + $0xb0] sm:$0xf]
    %v130 = vld [vmem:[%s1 + $0xb4] sm:$0xf]
    %v131 = vld [vmem:[%s1 + $0xb8] sm:$0xf]
    %v132 = vld [vmem:[%s1 + $0xbc] sm:$0xf]
    %v133 = vld [vmem:[%s1 + $0xc0] sm:$0xf]
    %v134 = vld [vmem:[%s1 + $0xc4] sm:$0xf]
    %v135 = vld [vmem:[%s1 + $0xc8] sm:$0xf]
    %v136 = vld [vmem:[%s1 + $0xcc] sm:$0xf]
    %v137 = vld [vmem:[%s1 + $0xd0] sm:$0xf]
    %v138 = vld [vmem:[%s1 + $0xd4] sm:$0xf]
    %v139 = vld [vmem:[%s1 + $0xd8] sm:$0xf]
    %v140 = vld [vmem:[%s1 + $0xdc] sm:$0xf]
    %v141 = vld [vmem:[%s1 + $0xe0] sm:$0xf]
    %v142 = vld [vmem:[%s1 + $0xe4] sm:$0xf]
    %v143 = vld [vmem:[%s1 + $0xe8] sm:$0xf]
    %v144 = vld [vmem:[%s1 + $0xec] sm:$0xf]
    %v145 = vld [vmem:[%s1 + $0xf0] sm:$0xf]
    %v146 = vld [vmem:[%s1 + $0xf4] sm:$0xf]
    %v147 = vld [vmem:[%s1 + $0xf8] sm:$0xf]
    %v148 = vld [vmem:[%s1 + $0xfc] sm:$0xf]
    %v149 = vld [vmem:[%s1 + $0x100] sm:$0xf]
    %v150 = vld [vmem:[%s1 + $0x104] sm:$0xf]
    %v151 = vld [vmem:[%s1 + $0x108] sm:$0xf]
    %v152 = vld [vmem:[%s1 + $0x10c] sm:$0xf]
    %v153 = vld [vmem:[%s1 + $0x110] sm:$0xf]
    %v154 = vld [vmem:[%s1 + $0x114] sm:$0xf]
    %v155 = vld [vmem:[%s1 + $0x118] sm:$0xf]
    %v156 = vld [vmem:[%s1 + $0x11c] sm:$0xf]
    %v157 = vld [vmem:[%s1 + $0x120] sm:$0xf]
    %v158 = vld [vmem:[%s1 + $0x124] sm:$0xf]
    %v159 = vld [vmem:[%s1 + $0x128] sm:$0xf]
    %v160 = vld [vmem:[%s1 + $0x12c] sm:$0xf]
    %v161 = vld [vmem:[%s1 + $0x130] sm:$0xf]
    %v162 = vld [vmem:[%s1 + $0x134] sm:$0xf]
    %v163 = vld [vmem:[%s1 + $0x138] sm:$0xf]
    %v164 = vld [vmem:[%s1 + $0x13c] sm:$0xf]
    %v165 = vld [vmem:[%s1 + $0x140] sm:$0xf]
    %v166 = vld [vmem:[%s1 + $0x144] sm:$0xf]
    %v167 = vld [vmem:[%s1 + $0x148] sm:$0xf]
    %v168 = vld [vmem:[%s1 + $0x14c] sm:$0xf]
    %v169 = vld [vmem:[%s1 + $0x150] sm:$0xf]
    %v170 = vld [vmem:[%s1 + $0x154] sm:$0xf]
    %v171 = vld [vmem:[%s1 + $0x158] sm:$0xf]
    %v172 = vld [vmem:[%s1 + $0x15c] sm:$0xf]
    %v173 = vld [vmem:[%s1 + $0x160] sm:$0xf]
    %v174 = vld [vmem:[%s1 + $0x164] sm:$0xf]
    %v175 = vld [vmem:[%s1 + $0x168] sm:$0xf]
    %v176 = vld [vmem:[%s1 + $0x16c] sm:$0xf]
    %v177 = vld [vmem:[%s1 + $0x170] sm:$0xf]
    %v178 = vld [vmem:[%s1 + $0x174] sm:$0xf]
    %v179 = vld [vmem:[%s1 + $0x178] sm:$0xf]
    %v180 = vld [vmem:[%s1 + $0x17c] sm:$0xf]
    %v181 = vld [vmem:[%s1 + $0x180] sm:$0xf]
    %v182 = vld [vmem:[%s1 + $0x184] sm:$0xf]
    %v183 = vld [vmem:[%s1 + $0x188] sm:$0xf]
    %v184 = vld [vmem:[%s1 + $0x18c] sm:$0xf]
    %v185 = vld [vmem:[%s1 + $0x190] sm:$0xf]
    %v186 = vld [vmem:[%s1 + $0x194] sm:$0xf]
    %v187 = vld [vmem:[%s1 + $0x198] sm:$0xf]
    %v188 = vld [vmem:[%s1 + $0x19c] sm:$0xf]
    %v189 = vld [vmem:[%s1 + $0x1a0] sm:$0xf]
    %v190 = vld [vmem:[%s1 + $0x1a4] sm:$0xf]
    %v191 = vld [vmem:[%s1 + $0x1a8] sm:$0xf]
    %v192 = vld [vmem:[%s1 + $0x1ac] sm:$0xf]
    %v193 = vld [vmem:[%s1 + $0x1b0] sm:$0xf]
    %v194 = vld [vmem:[%s1 + $0x1b4] sm:$0xf]
    %v195 = vld [vmem:[%s1 + $0x1b8] sm:$0xf]
    %v196 = vld [vmem:[%s1 + $0x1bc] sm:$0xf]
    %v197 = vld [vmem:[%s1 + $0x1c0] sm:$0xf]
    %v198 = vld [vmem:[%s1 + $0x1c4] sm:$0xf]
    %v199 = vld [vmem:[%s1 + $0x1c8] sm:$0xf]
    %v200 = vld [vmem:[%s1 + $0x1cc] sm:$0xf]
    %v201 = vld [vmem:[%s1 + $0x1d0] sm:$0xf]
    %v202 = vld [vmem:[%s1 + $0x1d4] sm:$0xf]
    %v203 = vld [vmem:[%s1 + $0x1d8] sm:$0xf]
    %v204 = vld [vmem:[%s1 + $0x1dc] sm:$0xf]
    %v205 = vld [vmem:[%s1 + $0x1e0] sm:$0xf]
    %v206 = vld [vmem:[%s1 + $0x1e4] sm:$0xf]
    %v207 = vld [vmem:[%s1 + $0x1e8] sm:$0xf]
    %v208 = vld [vmem:[%s1 + $0x1ec] sm:$0xf]
    %v209 = vld [vmem:[%s1 + $0x1f0] sm:$0xf]
    %v210 = vld [vmem:[%s1 + $0x1f4] sm:$0xf]
    %v211 = vld [vmem:[%s1 + $0x1f8] sm:$0xf]
    %v212 = vld [vmem:[%s1 + $0x1fc] sm:$0xf]
    %v213 = vld [vmem:[%s1 + $0x200] sm:$0xf]
    %v214 = vld [vmem:[%s1 + $0x204] sm:$0xf]
    %v215 = vld [vmem:[%s1 + $0x208] sm:$0xf]
    %v216 = vld [vmem:[%s1 + $0x20c] sm:$0xf]
    %v217 = vld [vmem:[%s1 + $0x210] sm:$0xf]
    %v218 = vld [vmem:[%s1 + $0x214] sm:$0xf]
    %v219 = vld [vmem:[%s1 + $0x218] sm:$0xf]
    %v220 = vld [vmem:[%s1 + $0x21c] sm:$0xf]
    %v221 = vld [vmem:[%s1 + $0x220] sm:$0xf]
    %v222 = vld [vmem:[%s1 + $0x224] sm:$0xf]
    %v223 = vld [vmem:[%s1 + $0x228] sm:$0xf]
    %v224 = vld [vmem:[%s1 + $0x22c] sm:$0xf]
    %v225 = vld [vmem:[%s1 + $0x230] sm:$0xf]
    %v226 = vld [vmem:[%s1 + $0x234] sm:$0xf]
    %v227 = vld [vmem:[%s1 + $0x238] sm:$0xf]
    %v228 = vld [vmem:[%s1 + $0x23c] sm:$0xf]
    %v229 = vld [vmem:[%s1 + $0x240] sm:$0xf]
    %v230 = vld [vmem:[%s1 + $0x244] sm:$0xf]
    %v231 = vld [vmem:[%s1 + $0x248] sm:$0xf]
    %v232 = vld [vmem:[%s1 + $0x24c] sm:$0xf]
    %v233 = vld [vmem:[%s1 + $0x250] sm:$0xf]
    %v234 = vld [vmem:[%s1 + $0x254] sm:$0xf]
    %v235 = vld [vmem:[%s1 + $0x258] sm:$0xf]
    %v236 = vld [vmem:[%s1 + $0x25c] sm:$0xf]
    %v237 = vld [vmem:[%s1 + $0x260] sm:$0xf]
    %v238 = vld [vmem:[%s1 + $0x264] sm:$0xf]
    %v239 = vld [vmem:[%s1 + $0x268] sm:$0xf]
    %v240 = vld [vmem:[%s1 + $0x26c] sm:$0xf]
    %v241 = vld [vmem:[%s1 + $0x270] sm:$0xf]
    %v242 = vld [vmem:[%s1 + $0x274] sm:$0xf]
    %v243 = vld [vmem:[%s1 + $0x278] sm:$0xf]
    %v244 = vld [vmem:[%s1 + $0x27c] sm:$0xf]
    %v245 = vld [vmem:[%s1 + $0x280] sm:$0xf]
    %v246 = vld [vmem:[%s1 + $0x284] sm:$0xf]
    %v247 = vld [vmem:[%s1 + $0x288] sm:$0xf]
    %v248 = vld [vmem:[%s1 + $0x28c] sm:$0xf]
    %v249 = vld [vmem:[%s1 + $0x290] sm:$0xf]
    %v250 = vld [vmem:[%s1 + $0x294] sm:$0xf]
    %v251 = vld [vmem:[%s1 + $0x298] sm:$0xf]
    %v252 = vld [vmem:[%s1 + $0x29c] sm:$0xf]
    %v253 = vld [vmem:[%s1 + $0x2a0] sm:$0xf]
    %v254 = vld [vmem:[%s1 + $0x2a4] sm:$0xf]
    %v255 = vld [vmem:[%s1 + $0x2a8] sm:$0xf]
    %v256 = vld [vmem:[%s1 + $0x2ac] sm:$0xf]
    %v257 = vld [vmem:[%s1 + $0x2b0] sm:$0xf]
    %v258 = vld [vmem:[%s1 + $0x2b4] sm:$0xf]
    %v259 = vld [vmem:[%s1 + $0x2b8] sm:$0xf]
    %v260 = vld [vmem:[%s1 + $0x2bc] sm:$0xf]
    %v261 = vld [vmem:[%s1 + $0x2c0] sm:$0xf]
    %v262 = vld [vmem:[%s1 + $0x2c4] sm:$0xf]
    %v263 = vld [vmem:[%s1 + $0x2c8] sm:$0xf]
    %v264 = vld [vmem:[%s1 + $0x2cc] sm:$0xf]
    %v265 = vld [vmem:[%s1 + $0x2d0] sm:$0xf]
    %v266 = vld [vmem:[%s1 + $0x2d4] sm:$0xf]
    %v267 = vld [vmem:[%s1 + $0x2d8] sm:$0xf]
    %v268 = vld [vmem:[%s1 + $0x2dc] sm:$0xf]
    %v269 = vld [vmem:[%s1 + $0x2e0] sm:$0xf]
    %v270 = vld [vmem:[%s1 + $0x2e4] sm:$0xf]
    %v271 = vld [vmem:[%s1 + $0x2e8] sm:$0xf]
    %v272 = vld [vmem:[%s1 + $0x2ec] sm:$0xf]
    %v273 = vld [vmem:[%s1 + $0x2f0] sm:$0xf]
    %v274 = vld [vmem:[%s1 + $0x2f4] sm:$0xf]
    %v275 = vld [vmem:[%s1 + $0x2f8] sm:$0xf]
    %v276 = vld [vmem:[%s1 + $0x2fc] sm:$0xf]
    %v277 = vld [vmem:[%s1 + $0x300] sm:$0xf]
    %v278 = vld [vmem:[%s1 + $0x304] sm:$0xf]
    %v279 = vld [vmem:[%s1 + $0x308] sm:$0xf]
    %v280 = vld [vmem:[%s1 + $0x30c] sm:$0xf]
    %v281 = vld [vmem:[%s1 + $0x310] sm:$0xf]
    %v282 = vld [vmem:[%s1 + $0x314] sm:$0xf]
    %v283 = vld [vmem:[%s1 + $0x318] sm:$0xf]
    %v284 = vld [vmem:[%s1 + $0x31c] sm:$0xf]
    %v285 = vld [vmem:[%s1 + $0x320] sm:$0xf]
    %v286 = vld [vmem:[%s1 + $0x324] sm:$0xf]
    %v287 = vld [vmem:[%s1 + $0x328] sm:$0xf]
    %v288 = vld [vmem:[%s1 + $0x32c] sm:$0xf]
    %v289 = vld [vmem:[%s1 + $0x330] sm:$0xf]
    %v290 = vld [vmem:[%s1 + $0x334] sm:$0xf]
    %v291 = vld [vmem:[%s1 + $0x338] sm:$0xf]
    %v292 = vld [vmem:[%s1 + $0x33c] sm:$0xf]
    %v293 = vld [vmem:[%s1 + $0x340] sm:$0xf]
    %v294 = vld [vmem:[%s1 + $0x344] sm:$0xf]
    %v295 = vld [vmem:[%s1 + $0x348] sm:$0xf]
    %v296 = vld [vmem:[%s1 + $0x34c] sm:$0xf]
    %v297 = vld [vmem:[%s1 + $0x350] sm:$0xf]
    %v298 = vld [vmem:[%s1 + $0x354] sm:$0xf]
    %v299 = vld [vmem:[%s1 + $0x358] sm:$0xf]
    %v300 = vld [vmem:[%s1 + $0x35c] sm:$0xf]
    %v301 = vld [vmem:[%s1 + $0x360] sm:$0xf]
    %v302 = vld [vmem:[%s1 + $0x364] sm:$0xf]
    %v303 = vld [vmem:[%s1 + $0x368] sm:$0xf]
    %v304 = vld [vmem:[%s1 + $0x36c] sm:$0xf]
    %v305 = vld [vmem:[%s1 + $0x370] sm:$0xf]
    %v306 = vld [vmem:[%s1 + $0x374] sm:$0xf]
    %v307 = vld [vmem:[%s1 + $0x378] sm:$0xf]
    %v308 = vld [vmem:[%s1 + $0x37c] sm:$0xf]
    %v309 = vld [vmem:[%s1 + $0x380] sm:$0xf]
    %v310 = vld [vmem:[%s1 + $0x384] sm:$0xf]
    %v311 = vld [vmem:[%s1 + $0x388] sm:$0xf]
    %v312 = vld [vmem:[%s1 + $0x38c] sm:$0xf]
    %v313 = vld [vmem:[%s1 + $0x390] sm:$0xf]
    %v314 = vld [vmem:[%s1 + $0x394] sm:$0xf]
    %v315 = vld [vmem:[%s1 + $0x398] sm:$0xf]
    %v316 = vld [vmem:[%s1 + $0x39c] sm:$0xf]
    %v317 = vld [vmem:[%s1 + $0x3a0] sm:$0xf]
    %v318 = vld [vmem:[%s1 + $0x3a4] sm:$0xf]
    %v319 = vld [vmem:[%s1 + $0x3a8] sm:$0xf]
    %v320 = vld [vmem:[%s1 + $0x3ac] sm:$0xf]
    %v321 = vld [vmem:[%s1 + $0x3b0] sm:$0xf]
    %v322 = vld [vmem:[%s1 + $0x3b4] sm:$0xf]
    %v323 = vld [vmem:[%s1 + $0x3b8] sm:$0xf]
    %v324 = vld [vmem:[%s1 + $0x3bc] sm:$0xf]
    %v325 = vld [vmem:[%s1 + $0x3c0] sm:$0xf]
    %v326 = vld [vmem:[%s1 + $0x3c4] sm:$0xf]
    %v327 = vld [vmem:[%s1 + $0x3c8] sm:$0xf]
    %v328 = vld [vmem:[%s1 + $0x3cc] sm:$0xf]
    %v329 = vld [vmem:[%s1 + $0x3d0] sm:$0xf]
    %v330 = vld [vmem:[%s1 + $0x3d4] sm:$0xf]
    %v331 = vld [vmem:[%s1 + $0x3d8] sm:$0xf]
    %v332 = vld [vmem:[%s1 + $0x3dc] sm:$0xf]
    %v333 = vld [vmem:[%s1 + $0x3e0] sm:$0xf]
    %v334 = vld [vmem:[%s1 + $0x3e4] sm:$0xf]
    %v335 = vld [vmem:[%s1 + $0x3e8] sm:$0xf]
    %v336 = vld [vmem:[%s1 + $0x3ec] sm:$0xf]
    %v337 = vld [vmem:[%s1 + $0x3f0] sm:$0xf]
    %v338 = vld [vmem:[%s1 + $0x3f4] sm:$0xf]
    %v339 = vld [vmem:[%s1 + $0x3f8] sm:$0xf]
    %v340 = vld [vmem:[%s1 + $0x3fc] sm:$0xf]
    %v341 = vld [vmem:[%s1 + $0x400] sm:$0xf]
    %v342 = vld [vmem:[%s1 + $0x404] sm:$0xf]
    %v343 = vld [vmem:[%s1 + $0x408] sm:$0xf]
    %v344 = vld [vmem:[%s1 + $0x40c] sm:$0xf]
    %v345 = vld [vmem:[%s1 + $0x410] sm:$0xf]
    %v346 = vld [vmem:[%s1 + $0x414] sm:$0xf]
    %v347 = vld [vmem:[%s1 + $0x418] sm:$0xf]
    %v348 = vld [vmem:[%s1 + $0x41c] sm:$0xf]
    %v349 = vld [vmem:[%s1 + $0x420] sm:$0xf]
    %v350 = vld [vmem:[%s1 + $0x424] sm:$0xf]
    %v351 = vld [vmem:[%s1 + $0x428] sm:$0xf]
    %v352 = vld [vmem:[%s1 + $0x42c] sm:$0xf]
    %v353 = vld [vmem:[%s1 + $0x430] sm:$0xf]
    %v354 = vld [vmem:[%s1 + $0x434] sm:$0xf]
    %v355 = vld [vmem:[%s1 + $0x438] sm:$0xf]
    %v356 = vld [vmem:[%s1 + $0x43c] sm:$0xf]
    %v357 = vld [vmem:[%s1 + $0x440] sm:$0xf]
    %v358 = vld [vmem:[%s1 + $0x444] sm:$0xf]
    %v359 = vld [vmem:[%s1 + $0x448] sm:$0xf]
    %v360 = vld [vmem:[%s1 + $0x44c] sm:$0xf]
    %v361 = vld [vmem:[%s1 + $0x450] sm:$0xf]
    %v362 = vld [vmem:[%s1 + $0x454] sm:$0xf]
    %v363 = vld [vmem:[%s1 + $0x458] sm:$0xf]
    %v364 = vld [vmem:[%s1 + $0x45c] sm:$0xf]
    %v365 = vld [vmem:[%s1 + $0x460] sm:$0xf]
    %v366 = vld [vmem:[%s1 + $0x464] sm:$0xf]
    %v367 = vld [vmem:[%s1 + $0x468] sm:$0xf]
    %v368 = vld [vmem:[%s1 + $0x46c] sm:$0xf]
    %v369 = vld [vmem:[%s1 + $0x470] sm:$0xf]
    %v370 = vld [vmem:[%s1 + $0x474] sm:$0xf]
    %v371 = vld [vmem:[%s1 + $0x478] sm:$0xf]
    %v372 = vld [vmem:[%s1 + $0x47c] sm:$0xf]
    %v373 = vld [vmem:[%s1 + $0x480] sm:$0xf]
    %v374 = vld [vmem:[%s1 + $0x484] sm:$0xf]
    %v375 = vld [vmem:[%s1 + $0x488] sm:$0xf]
    %v376 = vld [vmem:[%s1 + $0x48c] sm:$0xf]
    %v377 = vld [vmem:[%s1 + $0x490] sm:$0xf]
    %v378 = vld [vmem:[%s1 + $0x494] sm:$0xf]
    %v379 = vld [vmem:[%s1 + $0x498] sm:$0xf]
    %v380 = vld [vmem:[%s1 + $0x49c] sm:$0xf]
    %v381 = vld [vmem:[%s1 + $0x4a0] sm:$0xf]
    %v382 = vld [vmem:[%s1 + $0x4a4] sm:$0xf]
    %v383 = vld [vmem:[%s1 + $0x4a8] sm:$0xf]
    %v384 = vld [vmem:[%s1 + $0x4ac] sm:$0xf]
    %v385 = vld [vmem:[%s1 + $0x4b0] sm:$0xf]
    %v386 = vld [vmem:[%s1 + $0x4b4] sm:$0xf]
    %v387 = vld [vmem:[%s1 + $0x4b8] sm:$0xf]
    %v388 = vld [vmem:[%s1 + $0x4bc] sm:$0xf]
    %v389 = vld [vmem:[%s1 + $0x4c0] sm:$0xf]
    %v390 = vld [vmem:[%s1 + $0x4c4] sm:$0xf]
    %v391 = vld [vmem:[%s1 + $0x4c8] sm:$0xf]
    %v392 = vld [vmem:[%s1 + $0x4cc] sm:$0xf]
    %v393 = vld [vmem:[%s1 + $0x4d0] sm:$0xf]
    %v394 = vld [vmem:[%s1 + $0x4d4] sm:$0xf]
    %v395 = vld [vmem:[%s1 + $0x4d8] sm:$0xf]
    %v396 = vld [vmem:[%s1 + $0x4dc] sm:$0xf]
    %v397 = vld [vmem:[%s1 + $0x4e0] sm:$0xf]
    %v398 = vld [vmem:[%s1 + $0x4e4] sm:$0xf]
    %v399 = vld [vmem:[%s1 + $0x4e8] sm:$0xf]
    %v400 = vld [vmem:[%s1 + $0x4ec] sm:$0xf]
    %v401 = vld [vmem:[%s1 + $0x4f0] sm:$0xf]
    %v402 = vld [vmem:[%s1 + $0x4f4] sm:$0xf]
    %v403 = vld [vmem:[%s1 + $0x4f8] sm:$0xf]
    %v404 = vld [vmem:[%s1 + $0x4fc] sm:$0xf]
    %v405 = vld [vmem:[%s1 + $0x500] sm:$0xf]
    %v406 = vld [vmem:[%s1 + $0x504] sm:$0xf]
    %v407 = vld [vmem:[%s1 + $0x508] sm:$0xf]
    %v408 = vld [vmem:[%s1 + $0x50c] sm:$0xf]
    %v409 = vld [vmem:[%s1 + $0x510] sm:$0xf]
    %v410 = vld [vmem:[%s1 + $0x514] sm:$0xf]
    %v411 = vld [vmem:[%s1 + $0x518] sm:$0xf]
    %v412 = vld [vmem:[%s1 + $0x51c] sm:$0xf]
    %v413 = vld [vmem:[%s1 + $0x520] sm:$0xf]
    %v414 = vld [vmem:[%s1 + $0x524] sm:$0xf]
    %v415 = vld [vmem:[%s1 + $0x528] sm:$0xf]
    %v416 = vld [vmem:[%s1 + $0x52c] sm:$0xf]
    %v417 = vld [vmem:[%s1 + $0x530] sm:$0xf]
    %v418 = vld [vmem:[%s1 + $0x534] sm:$0xf]
    %v419 = vld [vmem:[%s1 + $0x538] sm:$0xf]
    %v420 = vld [vmem:[%s1 + $0x53c] sm:$0xf]
    %v421 = vld [vmem:[%s1 + $0x540] sm:$0xf]
    %v422 = vld [vmem:[%s1 + $0x544] sm:$0xf]
    %v423 = vld [vmem:[%s1 + $0x548] sm:$0xf]
    %v424 = vld [vmem:[%s1 + $0x54c] sm:$0xf]
    %v425 = vld [vmem:[%s1 + $0x550] sm:$0xf]
    %v426 = vld [vmem:[%s1 + $0x554] sm:$0xf]
    %v427 = vld [vmem:[%s1 + $0x558] sm:$0xf]
    %v428 = vld [vmem:[%s1 + $0x55c] sm:$0xf]
    %v429 = vld [vmem:[%s1 + $0x560] sm:$0xf]
    %v430 = vld [vmem:[%s1 + $0x564] sm:$0xf]
    %v431 = vld [vmem:[%s1 + $0x568] sm:$0xf]
    %v432 = vld [vmem:[%s1 + $0x56c] sm:$0xf]
    %v433 = vld [vmem:[%s1 + $0x570] sm:$0xf]
    %v434 = vld [vmem:[%s1 + $0x574] sm:$0xf]
    %v435 = vld [vmem:[%s1 + $0x578] sm:$0xf]
    %v436 = vld [vmem:[%s1 + $0x57c] sm:$0xf]
    %v437 = vld [vmem:[%s1 + $0x580] sm:$0xf]
    %v438 = vld [vmem:[%s1 + $0x584] sm:$0xf]
    %v439 = vld [vmem:[%s1 + $0x588] sm:$0xf]
    %v440 = vld [vmem:[%s1 + $0x58c] sm:$0xf]
    %v441 = vld [vmem:[%s1 + $0x590] sm:$0xf]
    %v442 = vld [vmem:[%s1 + $0x594] sm:$0xf]
    %v443 = vld [vmem:[%s1 + $0x598] sm:$0xf]
    %v444 = vld [vmem:[%s1 + $0x59c] sm:$0xf]
    %v445 = vld [vmem:[%s1 + $0x5a0] sm:$0xf]
    %v446 = vld [vmem:[%s1 + $0x5a4] sm:$0xf]
    %v447 = vld [vmem:[%s1 + $0x5a8] sm:$0xf]
    %v448 = vld [vmem:[%s1 + $0x5ac] sm:$0xf]
    %v449 = vld [vmem:[%s1 + $0x5b0] sm:$0xf]
    %v450 = vld [vmem:[%s1 + $0x5b4] sm:$0xf]
    %v451 = vld [vmem:[%s1 + $0x5b8] sm:$0xf]
    %v452 = vld [vmem:[%s1 + $0x5bc] sm:$0xf]
    %v453 = vld [vmem:[%s1 + $0x5c0] sm:$0xf]
    %v454 = vld [vmem:[%s1 + $0x5c4] sm:$0xf]
    %v455 = vld [vmem:[%s1 + $0x5c8] sm:$0xf]
    %v456 = vld [vmem:[%s1 + $0x5cc] sm:$0xf]
    %v457 = vld [vmem:[%s1 + $0x5d0] sm:$0xf]
    %v458 = vld [vmem:[%s1 + $0x5d4] sm:$0xf]
    %v459 = vld [vmem:[%s1 + $0x5d8] sm:$0xf]
    %v460 = vld [vmem:[%s1 + $0x5dc] sm:$0xf]
    %v461 = vld [vmem:[%s1 + $0x5e0] sm:$0xf]
    %v462 = vld [vmem:[%s1 + $0x5e4] sm:$0xf]
    %v463 = vld [vmem:[%s1 + $0x5e8] sm:$0xf]
    %v464 = vld [vmem:[%s1 + $0x5ec] sm:$0xf]
    %v465 = vld [vmem:[%s1 + $0x5f0] sm:$0xf]
    %v466 = vld [vmem:[%s1 + $0x5f4] sm:$0xf]
    %v467 = vld [vmem:[%s1 + $0x5f8] sm:$0xf]
    %v468 = vld [vmem:[%s1 + $0x5fc] sm:$0xf]
    %v469 = vld [vmem:[%s2] sm:$0x1]
    %v471 = vlaneseq
    %v472 = vshrl.u32 %v471, 7
    %v473 = vsub.s32 0, %v472
    %v474 = vrot.slane %v469, %v473
    %v488 = vunpack.c.l.b16 %v73
    %v489 = vunpack.c.h.b16 %v73
    %v490 = vunpack.c.l.b16 %v74
    %v491 = vunpack.c.h.b16 %v74
    %v492 = vunpack.c.l.b16 %v75
    %v493 = vunpack.c.h.b16 %v75
    %v494 = vunpack.c.l.b16 %v76
    %v495 = vunpack.c.h.b16 %v76
    %v496 = vunpack.c.l.b16 %v77
    %v497 = vunpack.c.h.b16 %v77
    %v498 = vunpack.c.l.b16 %v78
    %v499 = vunpack.c.h.b16 %v78
    %v500 = vunpack.c.l.b16 %v79
    %v501 = vunpack.c.h.b16 %v79
    %v502 = vunpack.c.l.b16 %v80
    %v503 = vunpack.c.h.b16 %v80
    %v504 = vunpack.c.l.b16 %v81
    %v505 = vunpack.c.h.b16 %v81
    %v506 = vunpack.c.l.b16 %v82
    %v507 = vunpack.c.h.b16 %v82
    %v508 = vunpack.c.l.b16 %v83
    %v509 = vunpack.c.h.b16 %v83
    %v510 = vunpack.c.l.b16 %v84
    %v511 = vunpack.c.h.b16 %v84
    %v512 = vpack.c.b16 %v488, %v488
    %v513 = vpack.c.b16 %v489, %v489
    %v514 = vpack.c.b16 %v490, %v490
    %v515 = vpack.c.b16 %v491, %v491
    %v516 = vpack.c.b16 %v492, %v492
    %v517 = vpack.c.b16 %v493, %v493
    %v518 = vpack.c.b16 %v494, %v494
    %v519 = vpack.c.b16 %v495, %v495
    %v520 = vpack.c.b16 %v496, %v496
    %v521 = vpack.c.b16 %v497, %v497
    %v522 = vpack.c.b16 %v498, %v498
    %v523 = vpack.c.b16 %v499, %v499
    %v524 = vpack.c.b16 %v500, %v500
    %v525 = vpack.c.b16 %v501, %v501
    %v526 = vpack.c.b16 %v502, %v502
    %v527 = vpack.c.b16 %v503, %v503
    %v528 = vpack.c.b16 %v504, %v504
    %v529 = vpack.c.b16 %v505, %v505
    %v530 = vpack.c.b16 %v506, %v506
    %v531 = vpack.c.b16 %v507, %v507
    %v532 = vpack.c.b16 %v508, %v508
    %v533 = vpack.c.b16 %v509, %v509
    %v534 = vpack.c.b16 %v510, %v510
    %v535 = vpack.c.b16 %v511, %v511
    %v944 = vunpack.c.l.b16 %v85
    %v945 = vunpack.c.l.b16 %v86
    %v946 = vunpack.c.l.b16 %v87
    %v947 = vunpack.c.l.b16 %v88
    %v948 = vunpack.c.l.b16 %v89
    %v949 = vunpack.c.l.b16 %v90
    %v950 = vunpack.c.l.b16 %v91
    %v951 = vunpack.c.l.b16 %v92
    %v952 = vunpack.c.l.b16 %v93
    %v953 = vunpack.c.l.b16 %v94
    %v954 = vunpack.c.l.b16 %v95
    %v955 = vunpack.c.l.b16 %v96
    %v956 = vunpack.c.l.b16 %v97
    %v957 = vunpack.c.l.b16 %v98
    %v958 = vunpack.c.l.b16 %v99
    %v959 = vunpack.c.l.b16 %v100
    %v960 = vunpack.c.l.b16 %v101
    %v961 = vunpack.c.l.b16 %v102
    %v962 = vunpack.c.l.b16 %v103
    %v963 = vunpack.c.l.b16 %v104
    %v964 = vunpack.c.l.b16 %v105
    %v965 = vunpack.c.l.b16 %v106
    %v966 = vunpack.c.l.b16 %v107
    %v967 = vunpack.c.l.b16 %v108
    %v968 = vunpack.c.l.b16 %v109
    %v969 = vunpack.c.l.b16 %v110
    %v970 = vunpack.c.l.b16 %v111
    %v971 = vunpack.c.l.b16 %v112
    %v972 = vunpack.c.l.b16 %v113
    %v973 = vunpack.c.l.b16 %v114
    %v974 = vunpack.c.l.b16 %v115
    %v975 = vunpack.c.l.b16 %v116
    %v976 = vunpack.c.l.b16 %v117
    %v977 = vunpack.c.l.b16 %v118
    %v978 = vunpack.c.l.b16 %v119
    %v979 = vunpack.c.l.b16 %v120
    %v980 = vunpack.c.l.b16 %v121
    %v981 = vunpack.c.l.b16 %v122
    %v982 = vunpack.c.l.b16 %v123
    %v983 = vunpack.c.l.b16 %v124
    %v984 = vunpack.c.l.b16 %v125
    %v985 = vunpack.c.l.b16 %v126
    %v986 = vunpack.c.l.b16 %v127
    %v987 = vunpack.c.l.b16 %v128
    %v988 = vunpack.c.l.b16 %v129
    %v989 = vunpack.c.l.b16 %v130
    %v990 = vunpack.c.l.b16 %v131
    %v991 = vunpack.c.l.b16 %v132
    %v992 = vunpack.c.l.b16 %v133
    %v993 = vunpack.c.l.b16 %v134
    %v994 = vunpack.c.l.b16 %v135
    %v995 = vunpack.c.l.b16 %v136
    %v996 = vunpack.c.l.b16 %v137
    %v997 = vunpack.c.l.b16 %v138
    %v998 = vunpack.c.l.b16 %v139
    %v999 = vunpack.c.l.b16 %v140
    %v1000 = vunpack.c.l.b16 %v141
    %v1001 = vunpack.c.l.b16 %v142
    %v1002 = vunpack.c.l.b16 %v143
    %v1003 = vunpack.c.l.b16 %v144
    %v1004 = vunpack.c.l.b16 %v145
    %v1005 = vunpack.c.l.b16 %v146
    %v1006 = vunpack.c.l.b16 %v147
    %v1007 = vunpack.c.l.b16 %v148
    %v1008 = vunpack.c.l.b16 %v149
    %v1009 = vunpack.c.l.b16 %v150
    %v1010 = vunpack.c.l.b16 %v151
    %v1011 = vunpack.c.l.b16 %v152
    %v1012 = vunpack.c.l.b16 %v153
    %v1013 = vunpack.c.l.b16 %v154
    %v1014 = vunpack.c.l.b16 %v155
    %v1015 = vunpack.c.l.b16 %v156
    %v1016 = vunpack.c.l.b16 %v157
    %v1017 = vunpack.c.l.b16 %v158
    %v1018 = vunpack.c.l.b16 %v159
    %v1019 = vunpack.c.l.b16 %v160
    %v1020 = vunpack.c.l.b16 %v161
    %v1021 = vunpack.c.l.b16 %v162
    %v1022 = vunpack.c.l.b16 %v163
    %v1023 = vunpack.c.l.b16 %v164
    %v1024 = vunpack.c.l.b16 %v165
    %v1025 = vunpack.c.l.b16 %v166
    %v1026 = vunpack.c.l.b16 %v167
    %v1027 = vunpack.c.l.b16 %v168
    %v1028 = vunpack.c.l.b16 %v169
    %v1029 = vunpack.c.l.b16 %v170
    %v1030 = vunpack.c.l.b16 %v171
    %v1031 = vunpack.c.l.b16 %v172
    %v1032 = vunpack.c.l.b16 %v173
    %v1033 = vunpack.c.l.b16 %v174
    %v1034 = vunpack.c.l.b16 %v175
    %v1035 = vunpack.c.l.b16 %v176
    %v1036 = vunpack.c.l.b16 %v177
    %v1037 = vunpack.c.l.b16 %v178
    %v1038 = vunpack.c.l.b16 %v179
    %v1039 = vunpack.c.l.b16 %v180
    %v1040 = vunpack.c.l.b16 %v181
    %v1041 = vunpack.c.l.b16 %v182
    %v1042 = vunpack.c.l.b16 %v183
    %v1043 = vunpack.c.l.b16 %v184
    %v1044 = vunpack.c.l.b16 %v185
    %v1045 = vunpack.c.l.b16 %v186
    %v1046 = vunpack.c.l.b16 %v187
    %v1047 = vunpack.c.l.b16 %v188
    %v1048 = vunpack.c.l.b16 %v189
    %v1049 = vunpack.c.l.b16 %v190
    %v1050 = vunpack.c.l.b16 %v191
    %v1051 = vunpack.c.l.b16 %v192
    %v1052 = vunpack.c.l.b16 %v193
    %v1053 = vunpack.c.l.b16 %v194
    %v1054 = vunpack.c.l.b16 %v195
    %v1055 = vunpack.c.l.b16 %v196
    %v1056 = vunpack.c.l.b16 %v197
    %v1057 = vunpack.c.l.b16 %v198
    %v1058 = vunpack.c.l.b16 %v199
    %v1059 = vunpack.c.l.b16 %v200
    %v1060 = vunpack.c.l.b16 %v201
    %v1061 = vunpack.c.l.b16 %v202
    %v1062 = vunpack.c.l.b16 %v203
    %v1063 = vunpack.c.l.b16 %v204
    %v1064 = vunpack.c.l.b16 %v205
    %v1065 = vunpack.c.l.b16 %v206
    %v1066 = vunpack.c.l.b16 %v207
    %v1067 = vunpack.c.l.b16 %v208
    %v1068 = vunpack.c.l.b16 %v209
    %v1069 = vunpack.c.l.b16 %v210
    %v1070 = vunpack.c.l.b16 %v211
    %v1071 = vunpack.c.l.b16 %v212
    %v1072 = vunpack.c.l.b16 %v213
    %v1073 = vunpack.c.l.b16 %v214
    %v1074 = vunpack.c.l.b16 %v215
    %v1075 = vunpack.c.l.b16 %v216
    %v1076 = vunpack.c.l.b16 %v217
    %v1077 = vunpack.c.l.b16 %v218
    %v1078 = vunpack.c.l.b16 %v219
    %v1079 = vunpack.c.l.b16 %v220
    %v1080 = vunpack.c.l.b16 %v221
    %v1081 = vunpack.c.l.b16 %v222
    %v1082 = vunpack.c.l.b16 %v223
    %v1083 = vunpack.c.l.b16 %v224
    %v1084 = vunpack.c.l.b16 %v225
    %v1085 = vunpack.c.l.b16 %v226
    %v1086 = vunpack.c.l.b16 %v227
    %v1087 = vunpack.c.l.b16 %v228
    %v1088 = vunpack.c.l.b16 %v229
    %v1089 = vunpack.c.l.b16 %v230
    %v1090 = vunpack.c.l.b16 %v231
    %v1091 = vunpack.c.l.b16 %v232
    %v1092 = vunpack.c.l.b16 %v233
    %v1093 = vunpack.c.l.b16 %v234
    %v1094 = vunpack.c.l.b16 %v235
    %v1095 = vunpack.c.l.b16 %v236
    %v1096 = vunpack.c.l.b16 %v237
    %v1097 = vunpack.c.l.b16 %v238
    %v1098 = vunpack.c.l.b16 %v239
    %v1099 = vunpack.c.l.b16 %v240
    %v1100 = vunpack.c.l.b16 %v241
    %v1101 = vunpack.c.l.b16 %v242
    %v1102 = vunpack.c.l.b16 %v243
    %v1103 = vunpack.c.l.b16 %v244
    %v1104 = vunpack.c.l.b16 %v245
    %v1105 = vunpack.c.l.b16 %v246
    %v1106 = vunpack.c.l.b16 %v247
    %v1107 = vunpack.c.l.b16 %v248
    %v1108 = vunpack.c.l.b16 %v249
    %v1109 = vunpack.c.l.b16 %v250
    %v1110 = vunpack.c.l.b16 %v251
    %v1111 = vunpack.c.l.b16 %v252
    %v1112 = vunpack.c.l.b16 %v253
    %v1113 = vunpack.c.l.b16 %v254
    %v1114 = vunpack.c.l.b16 %v255
    %v1115 = vunpack.c.l.b16 %v256
    %v1116 = vunpack.c.l.b16 %v257
    %v1117 = vunpack.c.l.b16 %v258
    %v1118 = vunpack.c.l.b16 %v259
    %v1119 = vunpack.c.l.b16 %v260
    %v1120 = vunpack.c.l.b16 %v261
    %v1121 = vunpack.c.l.b16 %v262
    %v1122 = vunpack.c.l.b16 %v263
    %v1123 = vunpack.c.l.b16 %v264
    %v1124 = vunpack.c.l.b16 %v265
    %v1125 = vunpack.c.l.b16 %v266
    %v1126 = vunpack.c.l.b16 %v267
    %v1127 = vunpack.c.l.b16 %v268
    %v1128 = vunpack.c.l.b16 %v269
    %v1129 = vunpack.c.l.b16 %v270
    %v1130 = vunpack.c.l.b16 %v271
    %v1131 = vunpack.c.l.b16 %v272
    %v1132 = vunpack.c.l.b16 %v273
    %v1133 = vunpack.c.l.b16 %v274
    %v1134 = vunpack.c.l.b16 %v275
    %v1135 = vunpack.c.l.b16 %v276
    %v1136 = vunpack.c.l.b16 %v277
    %v1137 = vunpack.c.l.b16 %v278
    %v1138 = vunpack.c.l.b16 %v279
    %v1139 = vunpack.c.l.b16 %v280
    %v1140 = vunpack.c.l.b16 %v281
    %v1141 = vunpack.c.l.b16 %v282
    %v1142 = vunpack.c.l.b16 %v283
    %v1143 = vunpack.c.l.b16 %v284
    %v1144 = vunpack.c.l.b16 %v285
    %v1145 = vunpack.c.l.b16 %v286
    %v1146 = vunpack.c.l.b16 %v287
    %v1147 = vunpack.c.l.b16 %v288
    %v1148 = vunpack.c.l.b16 %v289
    %v1149 = vunpack.c.l.b16 %v290
    %v1150 = vunpack.c.l.b16 %v291
    %v1151 = vunpack.c.l.b16 %v292
    %v1152 = vunpack.c.l.b16 %v293
    %v1153 = vunpack.c.l.b16 %v294
    %v1154 = vunpack.c.l.b16 %v295
    %v1155 = vunpack.c.l.b16 %v296
    %v1156 = vunpack.c.l.b16 %v297
    %v1157 = vunpack.c.l.b16 %v298
    %v1158 = vunpack.c.l.b16 %v299
    %v1159 = vunpack.c.l.b16 %v300
    %v1160 = vunpack.c.l.b16 %v301
    %v1161 = vunpack.c.l.b16 %v302
    %v1162 = vunpack.c.l.b16 %v303
    %v1163 = vunpack.c.l.b16 %v304
    %v1164 = vunpack.c.l.b16 %v305
    %v1165 = vunpack.c.l.b16 %v306
    %v1166 = vunpack.c.l.b16 %v307
    %v1167 = vunpack.c.l.b16 %v308
    %v1168 = vunpack.c.l.b16 %v309
    %v1169 = vunpack.c.l.b16 %v310
    %v1170 = vunpack.c.l.b16 %v311
    %v1171 = vunpack.c.l.b16 %v312
    %v1172 = vunpack.c.l.b16 %v313
    %v1173 = vunpack.c.l.b16 %v314
    %v1174 = vunpack.c.l.b16 %v315
    %v1175 = vunpack.c.l.b16 %v316
    %v1176 = vunpack.c.l.b16 %v317
    %v1177 = vunpack.c.l.b16 %v318
    %v1178 = vunpack.c.l.b16 %v319
    %v1179 = vunpack.c.l.b16 %v320
    %v1180 = vunpack.c.l.b16 %v321
    %v1181 = vunpack.c.l.b16 %v322
    %v1182 = vunpack.c.l.b16 %v323
    %v1183 = vunpack.c.l.b16 %v324
    %v1184 = vunpack.c.l.b16 %v325
    %v1185 = vunpack.c.l.b16 %v326
    %v1186 = vunpack.c.l.b16 %v327
    %v1187 = vunpack.c.l.b16 %v328
    %v1188 = vunpack.c.l.b16 %v329
    %v1189 = vunpack.c.l.b16 %v330
    %v1190 = vunpack.c.l.b16 %v331
    %v1191 = vunpack.c.l.b16 %v332
    %v1192 = vunpack.c.l.b16 %v333
    %v1193 = vunpack.c.l.b16 %v334
    %v1194 = vunpack.c.l.b16 %v335
    %v1195 = vunpack.c.l.b16 %v336
    %v1196 = vunpack.c.l.b16 %v337
    %v1197 = vunpack.c.l.b16 %v338
    %v1198 = vunpack.c.l.b16 %v339
    %v1199 = vunpack.c.l.b16 %v340
    %v1200 = vunpack.c.l.b16 %v341
    %v1201 = vunpack.c.l.b16 %v342
    %v1202 = vunpack.c.l.b16 %v343
    %v1203 = vunpack.c.l.b16 %v344
    %v1204 = vunpack.c.l.b16 %v345
    %v1205 = vunpack.c.l.b16 %v346
    %v1206 = vunpack.c.l.b16 %v347
    %v1207 = vunpack.c.l.b16 %v348
    %v1208 = vunpack.c.l.b16 %v349
    %v1209 = vunpack.c.l.b16 %v350
    %v1210 = vunpack.c.l.b16 %v351
    %v1211 = vunpack.c.l.b16 %v352
    %v1212 = vunpack.c.l.b16 %v353
    %v1213 = vunpack.c.l.b16 %v354
    %v1214 = vunpack.c.l.b16 %v355
    %v1215 = vunpack.c.l.b16 %v356
    %v1216 = vunpack.c.l.b16 %v357
    %v1217 = vunpack.c.l.b16 %v358
    %v1218 = vunpack.c.l.b16 %v359
    %v1219 = vunpack.c.l.b16 %v360
    %v1220 = vunpack.c.l.b16 %v361
    %v1221 = vunpack.c.l.b16 %v362
    %v1222 = vunpack.c.l.b16 %v363
    %v1223 = vunpack.c.l.b16 %v364
    %v1224 = vunpack.c.l.b16 %v365
    %v1225 = vunpack.c.l.b16 %v366
    %v1226 = vunpack.c.l.b16 %v367
    %v1227 = vunpack.c.l.b16 %v368
    %v1228 = vunpack.c.l.b16 %v369
    %v1229 = vunpack.c.l.b16 %v370
    %v1230 = vunpack.c.l.b16 %v371
    %v1231 = vunpack.c.l.b16 %v372
    %v1232 = vunpack.c.l.b16 %v373
    %v1233 = vunpack.c.l.b16 %v374
    %v1234 = vunpack.c.l.b16 %v375
    %v1235 = vunpack.c.l.b16 %v376
    %v1236 = vunpack.c.l.b16 %v377
    %v1237 = vunpack.c.l.b16 %v378
    %v1238 = vunpack.c.l.b16 %v379
    %v1239 = vunpack.c.l.b16 %v380
    %v1240 = vunpack.c.l.b16 %v381
    %v1241 = vunpack.c.l.b16 %v382
    %v1242 = vunpack.c.l.b16 %v383
    %v1243 = vunpack.c.l.b16 %v384
    %v1244 = vunpack.c.l.b16 %v385
    %v1245 = vunpack.c.l.b16 %v386
    %v1246 = vunpack.c.l.b16 %v387
    %v1247 = vunpack.c.l.b16 %v388
    %v1248 = vunpack.c.l.b16 %v389
    %v1249 = vunpack.c.l.b16 %v390
    %v1250 = vunpack.c.l.b16 %v391
    %v1251 = vunpack.c.l.b16 %v392
    %v1252 = vunpack.c.l.b16 %v393
    %v1253 = vunpack.c.l.b16 %v394
    %v1254 = vunpack.c.l.b16 %v395
    %v1255 = vunpack.c.l.b16 %v396
    %v1256 = vunpack.c.l.b16 %v397
    %v1257 = vunpack.c.l.b16 %v398
    %v1258 = vunpack.c.l.b16 %v399
    %v1259 = vunpack.c.l.b16 %v400
    %v1260 = vunpack.c.l.b16 %v401
    %v1261 = vunpack.c.l.b16 %v402
    %v1262 = vunpack.c.l.b16 %v403
    %v1263 = vunpack.c.l.b16 %v404
    %v1264 = vunpack.c.l.b16 %v405
    %v1265 = vunpack.c.l.b16 %v406
    %v1266 = vunpack.c.l.b16 %v407
    %v1267 = vunpack.c.l.b16 %v408
    %v1268 = vunpack.c.l.b16 %v409
    %v1269 = vunpack.c.l.b16 %v410
    %v1270 = vunpack.c.l.b16 %v411
    %v1271 = vunpack.c.l.b16 %v412
    %v1272 = vunpack.c.l.b16 %v413
    %v1273 = vunpack.c.l.b16 %v414
    %v1274 = vunpack.c.l.b16 %v415
    %v1275 = vunpack.c.l.b16 %v416
    %v1276 = vunpack.c.l.b16 %v417
    %v1277 = vunpack.c.l.b16 %v418
    %v1278 = vunpack.c.l.b16 %v419
    %v1279 = vunpack.c.l.b16 %v420
    %v1280 = vunpack.c.l.b16 %v421
    %v1281 = vunpack.c.l.b16 %v422
    %v1282 = vunpack.c.l.b16 %v423
    %v1283 = vunpack.c.l.b16 %v424
    %v1284 = vunpack.c.l.b16 %v425
    %v1285 = vunpack.c.l.b16 %v426
    %v1286 = vunpack.c.l.b16 %v427
    %v1287 = vunpack.c.l.b16 %v428
    %v1288 = vunpack.c.l.b16 %v429
    %v1289 = vunpack.c.l.b16 %v430
    %v1290 = vunpack.c.l.b16 %v431
    %v1291 = vunpack.c.l.b16 %v432
    %v1292 = vunpack.c.l.b16 %v433
    %v1293 = vunpack.c.l.b16 %v434
    %v1294 = vunpack.c.l.b16 %v435
    %v1295 = vunpack.c.l.b16 %v436
    %v1296 = vunpack.c.l.b16 %v437
    %v1297 = vunpack.c.l.b16 %v438
    %v1298 = vunpack.c.l.b16 %v439
    %v1299 = vunpack.c.l.b16 %v440
    %v1300 = vunpack.c.l.b16 %v441
    %v1301 = vunpack.c.l.b16 %v442
    %v1302 = vunpack.c.l.b16 %v443
    %v1303 = vunpack.c.l.b16 %v444
    %v1304 = vunpack.c.l.b16 %v445
    %v1305 = vunpack.c.l.b16 %v446
    %v1306 = vunpack.c.l.b16 %v447
    %v1307 = vunpack.c.l.b16 %v448
    %v1308 = vunpack.c.l.b16 %v449
    %v1309 = vunpack.c.l.b16 %v450
    %v1310 = vunpack.c.l.b16 %v451
    %v1311 = vunpack.c.l.b16 %v452
    %v1312 = vunpack.c.l.b16 %v453
    %v1313 = vunpack.c.l.b16 %v454
    %v1314 = vunpack.c.l.b16 %v455
    %v1315 = vunpack.c.l.b16 %v456
    %v1316 = vunpack.c.l.b16 %v457
    %v1317 = vunpack.c.l.b16 %v458
    %v1318 = vunpack.c.l.b16 %v459
    %v1319 = vunpack.c.l.b16 %v460
    %v1320 = vunpack.c.l.b16 %v461
    %v1321 = vunpack.c.l.b16 %v462
    %v1322 = vunpack.c.l.b16 %v463
    %v1323 = vunpack.c.l.b16 %v464
    %v1324 = vunpack.c.l.b16 %v465
    %v1325 = vunpack.c.l.b16 %v466
    %v1326 = vunpack.c.l.b16 %v467
    %v1327 = vunpack.c.l.b16 %v468
    %v1328 = vpack.c.b16 %v945, %v944
    %v1329 = vpack.c.b16 %v947, %v946
    %v1330 = vpack.c.b16 %v949, %v948
    %v1331 = vpack.c.b16 %v951, %v950
    %v1332 = vpack.c.b16 %v953, %v952
    %v1333 = vpack.c.b16 %v955, %v954
    %v1334 = vpack.c.b16 %v957, %v956
    %v1335 = vpack.c.b16 %v959, %v958
    %v1336 = vpack.c.b16 %v961, %v960
    %v1337 = vpack.c.b16 %v963, %v962
    %v1338 = vpack.c.b16 %v965, %v964
    %v1339 = vpack.c.b16 %v967, %v966
    %v1340 = vpack.c.b16 %v969, %v968
    %v1341 = vpack.c.b16 %v971, %v970
    %v1342 = vpack.c.b16 %v973, %v972
    %v1343 = vpack.c.b16 %v975, %v974
    %v1344 = vpack.c.b16 %v977, %v976
    %v1345 = vpack.c.b16 %v979, %v978
    %v1346 = vpack.c.b16 %v981, %v980
    %v1347 = vpack.c.b16 %v983, %v982
    %v1348 = vpack.c.b16 %v985, %v984
    %v1349 = vpack.c.b16 %v987, %v986
    %v1350 = vpack.c.b16 %v989, %v988
    %v1351 = vpack.c.b16 %v991, %v990
    %v1352 = vpack.c.b16 %v993, %v992
    %v1353 = vpack.c.b16 %v995, %v994
    %v1354 = vpack.c.b16 %v997, %v996
    %v1355 = vpack.c.b16 %v999, %v998
    %v1356 = vpack.c.b16 %v1001, %v1000
    %v1357 = vpack.c.b16 %v1003, %v1002
    %v1358 = vpack.c.b16 %v1005, %v1004
    %v1359 = vpack.c.b16 %v1007, %v1006
    %v1360 = vpack.c.b16 %v1009, %v1008
    %v1361 = vpack.c.b16 %v1011, %v1010
    %v1362 = vpack.c.b16 %v1013, %v1012
    %v1363 = vpack.c.b16 %v1015, %v1014
    %v1364 = vpack.c.b16 %v1017, %v1016
    %v1365 = vpack.c.b16 %v1019, %v1018
    %v1366 = vpack.c.b16 %v1021, %v1020
    %v1367 = vpack.c.b16 %v1023, %v1022
    %v1368 = vpack.c.b16 %v1025, %v1024
    %v1369 = vpack.c.b16 %v1027, %v1026
    %v1370 = vpack.c.b16 %v1029, %v1028
    %v1371 = vpack.c.b16 %v1031, %v1030
    %v1372 = vpack.c.b16 %v1033, %v1032
    %v1373 = vpack.c.b16 %v1035, %v1034
    %v1374 = vpack.c.b16 %v1037, %v1036
    %v1375 = vpack.c.b16 %v1039, %v1038
    %v1376 = vpack.c.b16 %v1041, %v1040
    %v1377 = vpack.c.b16 %v1043, %v1042
    %v1378 = vpack.c.b16 %v1045, %v1044
    %v1379 = vpack.c.b16 %v1047, %v1046
    %v1380 = vpack.c.b16 %v1049, %v1048
    %v1381 = vpack.c.b16 %v1051, %v1050
    %v1382 = vpack.c.b16 %v1053, %v1052
    %v1383 = vpack.c.b16 %v1055, %v1054
    %v1384 = vpack.c.b16 %v1057, %v1056
    %v1385 = vpack.c.b16 %v1059, %v1058
    %v1386 = vpack.c.b16 %v1061, %v1060
    %v1387 = vpack.c.b16 %v1063, %v1062
    %v1388 = vpack.c.b16 %v1065, %v1064
    %v1389 = vpack.c.b16 %v1067, %v1066
    %v1390 = vpack.c.b16 %v1069, %v1068
    %v1391 = vpack.c.b16 %v1071, %v1070
    %v1392 = vpack.c.b16 %v1073, %v1072
    %v1393 = vpack.c.b16 %v1075, %v1074
    %v1394 = vpack.c.b16 %v1077, %v1076
    %v1395 = vpack.c.b16 %v1079, %v1078
    %v1396 = vpack.c.b16 %v1081, %v1080
    %v1397 = vpack.c.b16 %v1083, %v1082
    %v1398 = vpack.c.b16 %v1085, %v1084
    %v1399 = vpack.c.b16 %v1087, %v1086
    %v1400 = vpack.c.b16 %v1089, %v1088
    %v1401 = vpack.c.b16 %v1091, %v1090
    %v1402 = vpack.c.b16 %v1093, %v1092
    %v1403 = vpack.c.b16 %v1095, %v1094
    %v1404 = vpack.c.b16 %v1097, %v1096
    %v1405 = vpack.c.b16 %v1099, %v1098
    %v1406 = vpack.c.b16 %v1101, %v1100
    %v1407 = vpack.c.b16 %v1103, %v1102
    %v1408 = vpack.c.b16 %v1105, %v1104
    %v1409 = vpack.c.b16 %v1107, %v1106
    %v1410 = vpack.c.b16 %v1109, %v1108
    %v1411 = vpack.c.b16 %v1111, %v1110
    %v1412 = vpack.c.b16 %v1113, %v1112
    %v1413 = vpack.c.b16 %v1115, %v1114
    %v1414 = vpack.c.b16 %v1117, %v1116
    %v1415 = vpack.c.b16 %v1119, %v1118
    %v1416 = vpack.c.b16 %v1121, %v1120
    %v1417 = vpack.c.b16 %v1123, %v1122
    %v1418 = vpack.c.b16 %v1125, %v1124
    %v1419 = vpack.c.b16 %v1127, %v1126
    %v1420 = vpack.c.b16 %v1129, %v1128
    %v1421 = vpack.c.b16 %v1131, %v1130
    %v1422 = vpack.c.b16 %v1133, %v1132
    %v1423 = vpack.c.b16 %v1135, %v1134
    %v1424 = vpack.c.b16 %v1137, %v1136
    %v1425 = vpack.c.b16 %v1139, %v1138
    %v1426 = vpack.c.b16 %v1141, %v1140
    %v1427 = vpack.c.b16 %v1143, %v1142
    %v1428 = vpack.c.b16 %v1145, %v1144
    %v1429 = vpack.c.b16 %v1147, %v1146
    %v1430 = vpack.c.b16 %v1149, %v1148
    %v1431 = vpack.c.b16 %v1151, %v1150
    %v1432 = vpack.c.b16 %v1153, %v1152
    %v1433 = vpack.c.b16 %v1155, %v1154
    %v1434 = vpack.c.b16 %v1157, %v1156
    %v1435 = vpack.c.b16 %v1159, %v1158
    %v1436 = vpack.c.b16 %v1161, %v1160
    %v1437 = vpack.c.b16 %v1163, %v1162
    %v1438 = vpack.c.b16 %v1165, %v1164
    %v1439 = vpack.c.b16 %v1167, %v1166
    %v1440 = vpack.c.b16 %v1169, %v1168
    %v1441 = vpack.c.b16 %v1171, %v1170
    %v1442 = vpack.c.b16 %v1173, %v1172
    %v1443 = vpack.c.b16 %v1175, %v1174
    %v1444 = vpack.c.b16 %v1177, %v1176
    %v1445 = vpack.c.b16 %v1179, %v1178
    %v1446 = vpack.c.b16 %v1181, %v1180
    %v1447 = vpack.c.b16 %v1183, %v1182
    %v1448 = vpack.c.b16 %v1185, %v1184
    %v1449 = vpack.c.b16 %v1187, %v1186
    %v1450 = vpack.c.b16 %v1189, %v1188
    %v1451 = vpack.c.b16 %v1191, %v1190
    %v1452 = vpack.c.b16 %v1193, %v1192
    %v1453 = vpack.c.b16 %v1195, %v1194
    %v1454 = vpack.c.b16 %v1197, %v1196
    %v1455 = vpack.c.b16 %v1199, %v1198
    %v1456 = vpack.c.b16 %v1201, %v1200
    %v1457 = vpack.c.b16 %v1203, %v1202
    %v1458 = vpack.c.b16 %v1205, %v1204
    %v1459 = vpack.c.b16 %v1207, %v1206
    %v1460 = vpack.c.b16 %v1209, %v1208
    %v1461 = vpack.c.b16 %v1211, %v1210
    %v1462 = vpack.c.b16 %v1213, %v1212
    %v1463 = vpack.c.b16 %v1215, %v1214
    %v1464 = vpack.c.b16 %v1217, %v1216
    %v1465 = vpack.c.b16 %v1219, %v1218
    %v1466 = vpack.c.b16 %v1221, %v1220
    %v1467 = vpack.c.b16 %v1223, %v1222
    %v1468 = vpack.c.b16 %v1225, %v1224
    %v1469 = vpack.c.b16 %v1227, %v1226
    %v1470 = vpack.c.b16 %v1229, %v1228
    %v1471 = vpack.c.b16 %v1231, %v1230
    %v1472 = vpack.c.b16 %v1233, %v1232
    %v1473 = vpack.c.b16 %v1235, %v1234
    %v1474 = vpack.c.b16 %v1237, %v1236
    %v1475 = vpack.c.b16 %v1239, %v1238
    %v1476 = vpack.c.b16 %v1241, %v1240
    %v1477 = vpack.c.b16 %v1243, %v1242
    %v1478 = vpack.c.b16 %v1245, %v1244
    %v1479 = vpack.c.b16 %v1247, %v1246
    %v1480 = vpack.c.b16 %v1249, %v1248
    %v1481 = vpack.c.b16 %v1251, %v1250
    %v1482 = vpack.c.b16 %v1253, %v1252
    %v1483 = vpack.c.b16 %v1255, %v1254
    %v1484 = vpack.c.b16 %v1257, %v1256
    %v1485 = vpack.c.b16 %v1259, %v1258
    %v1486 = vpack.c.b16 %v1261, %v1260
    %v1487 = vpack.c.b16 %v1263, %v1262
    %v1488 = vpack.c.b16 %v1265, %v1264
    %v1489 = vpack.c.b16 %v1267, %v1266
    %v1490 = vpack.c.b16 %v1269, %v1268
    %v1491 = vpack.c.b16 %v1271, %v1270
    %v1492 = vpack.c.b16 %v1273, %v1272
    %v1493 = vpack.c.b16 %v1275, %v1274
    %v1494 = vpack.c.b16 %v1277, %v1276
    %v1495 = vpack.c.b16 %v1279, %v1278
    %v1496 = vpack.c.b16 %v1281, %v1280
    %v1497 = vpack.c.b16 %v1283, %v1282
    %v1498 = vpack.c.b16 %v1285, %v1284
    %v1499 = vpack.c.b16 %v1287, %v1286
    %v1500 = vpack.c.b16 %v1289, %v1288
    %v1501 = vpack.c.b16 %v1291, %v1290
    %v1502 = vpack.c.b16 %v1293, %v1292
    %v1503 = vpack.c.b16 %v1295, %v1294
    %v1504 = vpack.c.b16 %v1297, %v1296
    %v1505 = vpack.c.b16 %v1299, %v1298
    %v1506 = vpack.c.b16 %v1301, %v1300
    %v1507 = vpack.c.b16 %v1303, %v1302
    %v1508 = vpack.c.b16 %v1305, %v1304
    %v1509 = vpack.c.b16 %v1307, %v1306
    %v1510 = vpack.c.b16 %v1309, %v1308
    %v1511 = vpack.c.b16 %v1311, %v1310
    %v1512 = vpack.c.b16 %v1313, %v1312
    %v1513 = vpack.c.b16 %v1315, %v1314
    %v1514 = vpack.c.b16 %v1317, %v1316
    %v1515 = vpack.c.b16 %v1319, %v1318
    %v1516 = vpack.c.b16 %v1321, %v1320
    %v1517 = vpack.c.b16 %v1323, %v1322
    %v1518 = vpack.c.b16 %v1325, %v1324
    %v1519 = vpack.c.b16 %v1327, %v1326
    %1712 = vmatprep.subr.bf16.mxu0 0
    %1713 = vmatpush1.bf16.msra.mxu0 %v1328
    %1714 = vmatprep.subr.bf16.mxu0 0
    %1715 = vmatpush1.bf16.msra.mxu0 %v1329
    %1716 = vmatprep.subr.bf16.mxu0 0
    %1717 = vmatpush1.bf16.msra.mxu0 %v1330
    %1718 = vmatprep.subr.bf16.mxu0 0
    %1719 = vmatpush1.bf16.msra.mxu0 %v1331
    %1720 = vmatprep.subr.bf16.mxu0 0
    %1721 = vmatpush1.bf16.msra.mxu0 %v1332
    %1722 = vmatprep.subr.bf16.mxu0 0
    %1723 = vmatpush1.bf16.msra.mxu0 %v1333
    %1724 = vmatprep.subr.bf16.mxu0 0
    %1725 = vmatpush1.bf16.msra.mxu0 %v1334
    %1726 = vmatprep.subr.bf16.mxu0 0
    %1727 = vmatpush1.bf16.msra.mxu0 %v1335
    %1728 = vmatprep.subr.bf16.mxu0 0
    %1729 = vmatpush1.bf16.msra.mxu0 %v1336
    %1730 = vmatprep.subr.bf16.mxu0 0
    %1731 = vmatpush1.bf16.msra.mxu0 %v1337
    %1732 = vmatprep.subr.bf16.mxu0 0
    %1733 = vmatpush1.bf16.msra.mxu0 %v1338
    %1734 = vmatprep.subr.bf16.mxu0 0
    %1735 = vmatpush1.bf16.msra.mxu0 %v1339
    %1736 = vmatprep.subr.bf16.mxu0 0
    %1737 = vmatpush1.bf16.msra.mxu0 %v1340
    %1738 = vmatprep.subr.bf16.mxu0 0
    %1739 = vmatpush1.bf16.msra.mxu0 %v1341
    %1740 = vmatprep.subr.bf16.mxu0 0
    %1741 = vmatpush1.bf16.msra.mxu0 %v1342
    %1742 = vmatprep.subr.bf16.mxu0 0
    %1743 = vmatpush1.bf16.msra.mxu0 %v1343
    %1744 = vmatprep.mubr.bf16.mxu0 %v513
    %1745 = vmatmul.mubr.bf16.gmra.mrb[0].mxu0 %v512
    %v1746 = vpop.f32.mrb[0].mxu0
    %v1747 = vadd.f32 %v474, %v1746
    %v1748 = vpop.f32.mrb[0].mxu0
    %v1749 = vpop.f32.mrb[0].mxu0
    %v1750 = vpop.f32.mrb[0].mxu0
    %1751 = vdwg.mxu0
    %1752 = vmatprep.subr.bf16.mxu0 0
    %1753 = vmatpush1.bf16.msra.mxu0 %v1344
    %1754 = vmatprep.subr.bf16.mxu0 0
    %1755 = vmatpush1.bf16.msra.mxu0 %v1345
    %1756 = vmatprep.subr.bf16.mxu0 0
    %1757 = vmatpush1.bf16.msra.mxu0 %v1346
    %1758 = vmatprep.subr.bf16.mxu0 0
    %1759 = vmatpush1.bf16.msra.mxu0 %v1347
    %1760 = vmatprep.subr.bf16.mxu0 0
    %1761 = vmatpush1.bf16.msra.mxu0 %v1348
    %1762 = vmatprep.subr.bf16.mxu0 0
    %1763 = vmatpush1.bf16.msra.mxu0 %v1349
    %1764 = vmatprep.subr.bf16.mxu0 0
    %1765 = vmatpush1.bf16.msra.mxu0 %v1350
    %1766 = vmatprep.subr.bf16.mxu0 0
    %1767 = vmatpush1.bf16.msra.mxu0 %v1351
    %1768 = vmatprep.subr.bf16.mxu0 0
    %1769 = vmatpush1.bf16.msra.mxu0 %v1352
    %1770 = vmatprep.subr.bf16.mxu0 0
    %1771 = vmatpush1.bf16.msra.mxu0 %v1353
    %1772 = vmatprep.subr.bf16.mxu0 0
    %1773 = vmatpush1.bf16.msra.mxu0 %v1354
    %1774 = vmatprep.subr.bf16.mxu0 0
    %1775 = vmatpush1.bf16.msra.mxu0 %v1355
    %1776 = vmatprep.subr.bf16.mxu0 0
    %1777 = vmatpush1.bf16.msra.mxu0 %v1356
    %1778 = vmatprep.subr.bf16.mxu0 0
    %1779 = vmatpush1.bf16.msra.mxu0 %v1357
    %1780 = vmatprep.subr.bf16.mxu0 0
    %1781 = vmatpush1.bf16.msra.mxu0 %v1358
    %1782 = vmatprep.subr.bf16.mxu0 0
    %1783 = vmatpush1.bf16.msra.mxu0 %v1359
    %1784 = vmatprep.mubr.bf16.mxu0 %v515
    %1785 = vmatmul.mubr.bf16.gmra.mrb[0].mxu0 %v514
    %v1786 = vpop.f32.mrb[0].mxu0
    %v1787 = vadd.f32 %v1747, %v1786
    %v1788 = vpop.f32.mrb[0].mxu0
    %v1789 = vpop.f32.mrb[0].mxu0
    %v1790 = vpop.f32.mrb[0].mxu0
    %1791 = vdwg.mxu0
    %1792 = vmatprep.subr.bf16.mxu0 0
    %1793 = vmatpush1.bf16.msra.mxu0 %v1360
    %1794 = vmatprep.subr.bf16.mxu0 0
    %1795 = vmatpush1.bf16.msra.mxu0 %v1361
    %1796 = vmatprep.subr.bf16.mxu0 0
    %1797 = vmatpush1.bf16.msra.mxu0 %v1362
    %1798 = vmatprep.subr.bf16.mxu0 0
    %1799 = vmatpush1.bf16.msra.mxu0 %v1363
    %1800 = vmatprep.subr.bf16.mxu0 0
    %1801 = vmatpush1.bf16.msra.mxu0 %v1364
    %1802 = vmatprep.subr.bf16.mxu0 0
    %1803 = vmatpush1.bf16.msra.mxu0 %v1365
    %1804 = vmatprep.subr.bf16.mxu0 0
    %1805 = vmatpush1.bf16.msra.mxu0 %v1366
    %1806 = vmatprep.subr.bf16.mxu0 0
    %1807 = vmatpush1.bf16.msra.mxu0 %v1367
    %1808 = vmatprep.subr.bf16.mxu0 0
    %1809 = vmatpush1.bf16.msra.mxu0 %v1368
    %1810 = vmatprep.subr.bf16.mxu0 0
    %1811 = vmatpush1.bf16.msra.mxu0 %v1369
    %1812 = vmatprep.subr.bf16.mxu0 0
    %1813 = vmatpush1.bf16.msra.mxu0 %v1370
    %1814 = vmatprep.subr.bf16.mxu0 0
    %1815 = vmatpush1.bf16.msra.mxu0 %v1371
    %1816 = vmatprep.subr.bf16.mxu0 0
    %1817 = vmatpush1.bf16.msra.mxu0 %v1372
    %1818 = vmatprep.subr.bf16.mxu0 0
    %1819 = vmatpush1.bf16.msra.mxu0 %v1373
    %1820 = vmatprep.subr.bf16.mxu0 0
    %1821 = vmatpush1.bf16.msra.mxu0 %v1374
    %1822 = vmatprep.subr.bf16.mxu0 0
    %1823 = vmatpush1.bf16.msra.mxu0 %v1375
    %1824 = vmatprep.mubr.bf16.mxu0 %v517
    %1825 = vmatmul.mubr.bf16.gmra.mrb[0].mxu0 %v516
    %v1826 = vpop.f32.mrb[0].mxu0
    %v1827 = vadd.f32 %v1787, %v1826
    %v1828 = vpop.f32.mrb[0].mxu0
    %v1829 = vpop.f32.mrb[0].mxu0
    %v1830 = vpop.f32.mrb[0].mxu0
    %1831 = vdwg.mxu0
    %1832 = vmatprep.subr.bf16.mxu0 0
    %1833 = vmatpush1.bf16.msra.mxu0 %v1376
    %1834 = vmatprep.subr.bf16.mxu0 0
    %1835 = vmatpush1.bf16.msra.mxu0 %v1377
    %1836 = vmatprep.subr.bf16.mxu0 0
    %1837 = vmatpush1.bf16.msra.mxu0 %v1378
    %1838 = vmatprep.subr.bf16.mxu0 0
    %1839 = vmatpush1.bf16.msra.mxu0 %v1379
    %1840 = vmatprep.subr.bf16.mxu0 0
    %1841 = vmatpush1.bf16.msra.mxu0 %v1380
    %1842 = vmatprep.subr.bf16.mxu0 0
    %1843 = vmatpush1.bf16.msra.mxu0 %v1381
    %1844 = vmatprep.subr.bf16.mxu0 0
    %1845 = vmatpush1.bf16.msra.mxu0 %v1382
    %1846 = vmatprep.subr.bf16.mxu0 0
    %1847 = vmatpush1.bf16.msra.mxu0 %v1383
    %1848 = vmatprep.subr.bf16.mxu0 0
    %1849 = vmatpush1.bf16.msra.mxu0 %v1384
    %1850 = vmatprep.subr.bf16.mxu0 0
    %1851 = vmatpush1.bf16.msra.mxu0 %v1385
    %1852 = vmatprep.subr.bf16.mxu0 0
    %1853 = vmatpush1.bf16.msra.mxu0 %v1386
    %1854 = vmatprep.subr.bf16.mxu0 0
    %1855 = vmatpush1.bf16.msra.mxu0 %v1387
    %1856 = vmatprep.subr.bf16.mxu0 0
    %1857 = vmatpush1.bf16.msra.mxu0 %v1388
    %1858 = vmatprep.subr.bf16.mxu0 0
    %1859 = vmatpush1.bf16.msra.mxu0 %v1389
    %1860 = vmatprep.subr.bf16.mxu0 0
    %1861 = vmatpush1.bf16.msra.mxu0 %v1390
    %1862 = vmatprep.subr.bf16.mxu0 0
    %1863 = vmatpush1.bf16.msra.mxu0 %v1391
    %1864 = vmatprep.mubr.bf16.mxu0 %v519
    %1865 = vmatmul.mubr.bf16.gmra.mrb[0].mxu0 %v518
    %v1866 = vpop.f32.mrb[0].mxu0
    %v1867 = vadd.f32 %v1827, %v1866
    %v1868 = vpop.f32.mrb[0].mxu0
    %v1869 = vpop.f32.mrb[0].mxu0
    %v1870 = vpop.f32.mrb[0].mxu0
    %1871 = vdwg.mxu0
    %1872 = vmatprep.subr.bf16.mxu0 0
    %1873 = vmatpush1.bf16.msra.mxu0 %v1392
    %1874 = vmatprep.subr.bf16.mxu0 0
    %1875 = vmatpush1.bf16.msra.mxu0 %v1393
    %1876 = vmatprep.subr.bf16.mxu0 0
    %1877 = vmatpush1.bf16.msra.mxu0 %v1394
    %1878 = vmatprep.subr.bf16.mxu0 0
    %1879 = vmatpush1.bf16.msra.mxu0 %v1395
    %1880 = vmatprep.subr.bf16.mxu0 0
    %1881 = vmatpush1.bf16.msra.mxu0 %v1396
    %1882 = vmatprep.subr.bf16.mxu0 0
    %1883 = vmatpush1.bf16.msra.mxu0 %v1397
    %1884 = vmatprep.subr.bf16.mxu0 0
    %1885 = vmatpush1.bf16.msra.mxu0 %v1398
    %1886 = vmatprep.subr.bf16.mxu0 0
    %1887 = vmatpush1.bf16.msra.mxu0 %v1399
    %1888 = vmatprep.subr.bf16.mxu0 0
    %1889 = vmatpush1.bf16.msra.mxu0 %v1400
    %1890 = vmatprep.subr.bf16.mxu0 0
    %1891 = vmatpush1.bf16.msra.mxu0 %v1401
    %1892 = vmatprep.subr.bf16.mxu0 0
    %1893 = vmatpush1.bf16.msra.mxu0 %v1402
    %1894 = vmatprep.subr.bf16.mxu0 0
    %1895 = vmatpush1.bf16.msra.mxu0 %v1403
    %1896 = vmatprep.subr.bf16.mxu0 0
    %1897 = vmatpush1.bf16.msra.mxu0 %v1404
    %1898 = vmatprep.subr.bf16.mxu0 0
    %1899 = vmatpush1.bf16.msra.mxu0 %v1405
    %1900 = vmatprep.subr.bf16.mxu0 0
    %1901 = vmatpush1.bf16.msra.mxu0 %v1406
    %1902 = vmatprep.subr.bf16.mxu0 0
    %1903 = vmatpush1.bf16.msra.mxu0 %v1407
    %1904 = vmatprep.mubr.bf16.mxu0 %v521
    %1905 = vmatmul.mubr.bf16.gmra.mrb[0].mxu0 %v520
    %v1906 = vpop.f32.mrb[0].mxu0
    %v1907 = vadd.f32 %v1867, %v1906
    %v1908 = vpop.f32.mrb[0].mxu0
    %v1909 = vpop.f32.mrb[0].mxu0
    %v1910 = vpop.f32.mrb[0].mxu0
    %1911 = vdwg.mxu0
    %1912 = vmatprep.subr.bf16.mxu0 0
    %1913 = vmatpush1.bf16.msra.mxu0 %v1408
    %1914 = vmatprep.subr.bf16.mxu0 0
    %1915 = vmatpush1.bf16.msra.mxu0 %v1409
    %1916 = vmatprep.subr.bf16.mxu0 0
    %1917 = vmatpush1.bf16.msra.mxu0 %v1410
    %1918 = vmatprep.subr.bf16.mxu0 0
    %1919 = vmatpush1.bf16.msra.mxu0 %v1411
    %1920 = vmatprep.subr.bf16.mxu0 0
    %1921 = vmatpush1.bf16.msra.mxu0 %v1412
    %1922 = vmatprep.subr.bf16.mxu0 0
    %1923 = vmatpush1.bf16.msra.mxu0 %v1413
    %1924 = vmatprep.subr.bf16.mxu0 0
    %1925 = vmatpush1.bf16.msra.mxu0 %v1414
    %1926 = vmatprep.subr.bf16.mxu0 0
    %1927 = vmatpush1.bf16.msra.mxu0 %v1415
    %1928 = vmatprep.subr.bf16.mxu0 0
    %1929 = vmatpush1.bf16.msra.mxu0 %v1416
    %1930 = vmatprep.subr.bf16.mxu0 0
    %1931 = vmatpush1.bf16.msra.mxu0 %v1417
    %1932 = vmatprep.subr.bf16.mxu0 0
    %1933 = vmatpush1.bf16.msra.mxu0 %v1418
    %1934 = vmatprep.subr.bf16.mxu0 0
    %1935 = vmatpush1.bf16.msra.mxu0 %v1419
    %1936 = vmatprep.subr.bf16.mxu0 0
    %1937 = vmatpush1.bf16.msra.mxu0 %v1420
    %1938 = vmatprep.subr.bf16.mxu0 0
    %1939 = vmatpush1.bf16.msra.mxu0 %v1421
    %1940 = vmatprep.subr.bf16.mxu0 0
    %1941 = vmatpush1.bf16.msra.mxu0 %v1422
    %1942 = vmatprep.subr.bf16.mxu0 0
    %1943 = vmatpush1.bf16.msra.mxu0 %v1423
    %1944 = vmatprep.mubr.bf16.mxu0 %v523
    %1945 = vmatmul.mubr.bf16.gmra.mrb[0].mxu0 %v522
    %v1946 = vpop.f32.mrb[0].mxu0
    %v1947 = vadd.f32 %v1907, %v1946
    %v1948 = vpop.f32.mrb[0].mxu0
    %v1949 = vpop.f32.mrb[0].mxu0
    %v1950 = vpop.f32.mrb[0].mxu0
    %1951 = vdwg.mxu0
    %1952 = vmatprep.subr.bf16.mxu0 0
    %1953 = vmatpush1.bf16.msra.mxu0 %v1424
    %1954 = vmatprep.subr.bf16.mxu0 0
    %1955 = vmatpush1.bf16.msra.mxu0 %v1425
    %1956 = vmatprep.subr.bf16.mxu0 0
    %1957 = vmatpush1.bf16.msra.mxu0 %v1426
    %1958 = vmatprep.subr.bf16.mxu0 0
    %1959 = vmatpush1.bf16.msra.mxu0 %v1427
    %1960 = vmatprep.subr.bf16.mxu0 0
    %1961 = vmatpush1.bf16.msra.mxu0 %v1428
    %1962 = vmatprep.subr.bf16.mxu0 0
    %1963 = vmatpush1.bf16.msra.mxu0 %v1429
    %1964 = vmatprep.subr.bf16.mxu0 0
    %1965 = vmatpush1.bf16.msra.mxu0 %v1430
    %1966 = vmatprep.subr.bf16.mxu0 0
    %1967 = vmatpush1.bf16.msra.mxu0 %v1431
    %1968 = vmatprep.subr.bf16.mxu0 0
    %1969 = vmatpush1.bf16.msra.mxu0 %v1432
    %1970 = vmatprep.subr.bf16.mxu0 0
    %1971 = vmatpush1.bf16.msra.mxu0 %v1433
    %1972 = vmatprep.subr.bf16.mxu0 0
    %1973 = vmatpush1.bf16.msra.mxu0 %v1434
    %1974 = vmatprep.subr.bf16.mxu0 0
    %1975 = vmatpush1.bf16.msra.mxu0 %v1435
    %1976 = vmatprep.subr.bf16.mxu0 0
    %1977 = vmatpush1.bf16.msra.mxu0 %v1436
    %1978 = vmatprep.subr.bf16.mxu0 0
    %1979 = vmatpush1.bf16.msra.mxu0 %v1437
    %1980 = vmatprep.subr.bf16.mxu0 0
    %1981 = vmatpush1.bf16.msra.mxu0 %v1438
    %1982 = vmatprep.subr.bf16.mxu0 0
    %1983 = vmatpush1.bf16.msra.mxu0 %v1439
    %1984 = vmatprep.mubr.bf16.mxu0 %v525
    %1985 = vmatmul.mubr.bf16.gmra.mrb[0].mxu0 %v524
    %v1986 = vpop.f32.mrb[0].mxu0
    %v1987 = vadd.f32 %v1947, %v1986
    %v1988 = vpop.f32.mrb[0].mxu0
    %v1989 = vpop.f32.mrb[0].mxu0
    %v1990 = vpop.f32.mrb[0].mxu0
    %1991 = vdwg.mxu0
    %1992 = vmatprep.subr.bf16.mxu0 0
    %1993 = vmatpush1.bf16.msra.mxu0 %v1440
    %1994 = vmatprep.subr.bf16.mxu0 0
    %1995 = vmatpush1.bf16.msra.mxu0 %v1441
    %1996 = vmatprep.subr.bf16.mxu0 0
    %1997 = vmatpush1.bf16.msra.mxu0 %v1442
    %1998 = vmatprep.subr.bf16.mxu0 0
    %1999 = vmatpush1.bf16.msra.mxu0 %v1443
    %2000 = vmatprep.subr.bf16.mxu0 0
    %2001 = vmatpush1.bf16.msra.mxu0 %v1444
    %2002 = vmatprep.subr.bf16.mxu0 0
    %2003 = vmatpush1.bf16.msra.mxu0 %v1445
    %2004 = vmatprep.subr.bf16.mxu0 0
    %2005 = vmatpush1.bf16.msra.mxu0 %v1446
    %2006 = vmatprep.subr.bf16.mxu0 0
    %2007 = vmatpush1.bf16.msra.mxu0 %v1447
    %2008 = vmatprep.subr.bf16.mxu0 0
    %2009 = vmatpush1.bf16.msra.mxu0 %v1448
    %2010 = vmatprep.subr.bf16.mxu0 0
    %2011 = vmatpush1.bf16.msra.mxu0 %v1449
    %2012 = vmatprep.subr.bf16.mxu0 0
    %2013 = vmatpush1.bf16.msra.mxu0 %v1450
    %2014 = vmatprep.subr.bf16.mxu0 0
    %2015 = vmatpush1.bf16.msra.mxu0 %v1451
    %2016 = vmatprep.subr.bf16.mxu0 0
    %2017 = vmatpush1.bf16.msra.mxu0 %v1452
    %2018 = vmatprep.subr.bf16.mxu0 0
    %2019 = vmatpush1.bf16.msra.mxu0 %v1453
    %2020 = vmatprep.subr.bf16.mxu0 0
    %2021 = vmatpush1.bf16.msra.mxu0 %v1454
    %2022 = vmatprep.subr.bf16.mxu0 0
    %2023 = vmatpush1.bf16.msra.mxu0 %v1455
    %2024 = vmatprep.mubr.bf16.mxu0 %v527
    %2025 = vmatmul.mubr.bf16.gmra.mrb[0].mxu0 %v526
    %v2026 = vpop.f32.mrb[0].mxu0
    %v2027 = vadd.f32 %v1987, %v2026
    %v2028 = vpop.f32.mrb[0].mxu0
    %v2029 = vpop.f32.mrb[0].mxu0
    %v2030 = vpop.f32.mrb[0].mxu0
    %2031 = vdwg.mxu0
    %2032 = vmatprep.subr.bf16.mxu0 0
    %2033 = vmatpush1.bf16.msra.mxu0 %v1456
    %2034 = vmatprep.subr.bf16.mxu0 0
    %2035 = vmatpush1.bf16.msra.mxu0 %v1457
    %2036 = vmatprep.subr.bf16.mxu0 0
    %2037 = vmatpush1.bf16.msra.mxu0 %v1458
    %2038 = vmatprep.subr.bf16.mxu0 0
    %2039 = vmatpush1.bf16.msra.mxu0 %v1459
    %2040 = vmatprep.subr.bf16.mxu0 0
    %2041 = vmatpush1.bf16.msra.mxu0 %v1460
    %2042 = vmatprep.subr.bf16.mxu0 0
    %2043 = vmatpush1.bf16.msra.mxu0 %v1461
    %2044 = vmatprep.subr.bf16.mxu0 0
    %2045 = vmatpush1.bf16.msra.mxu0 %v1462
    %2046 = vmatprep.subr.bf16.mxu0 0
    %2047 = vmatpush1.bf16.msra.mxu0 %v1463
    %2048 = vmatprep.subr.bf16.mxu0 0
    %2049 = vmatpush1.bf16.msra.mxu0 %v1464
    %2050 = vmatprep.subr.bf16.mxu0 0
    %2051 = vmatpush1.bf16.msra.mxu0 %v1465
    %2052 = vmatprep.subr.bf16.mxu0 0
    %2053 = vmatpush1.bf16.msra.mxu0 %v1466
    %2054 = vmatprep.subr.bf16.mxu0 0
    %2055 = vmatpush1.bf16.msra.mxu0 %v1467
    %2056 = vmatprep.subr.bf16.mxu0 0
    %2057 = vmatpush1.bf16.msra.mxu0 %v1468
    %2058 = vmatprep.subr.bf16.mxu0 0
    %2059 = vmatpush1.bf16.msra.mxu0 %v1469
    %2060 = vmatprep.subr.bf16.mxu0 0
    %2061 = vmatpush1.bf16.msra.mxu0 %v1470
    %2062 = vmatprep.subr.bf16.mxu0 0
    %2063 = vmatpush1.bf16.msra.mxu0 %v1471
    %2064 = vmatprep.mubr.bf16.mxu0 %v529
    %2065 = vmatmul.mubr.bf16.gmra.mrb[0].mxu0 %v528
    %v2066 = vpop.f32.mrb[0].mxu0
    %v2067 = vadd.f32 %v2027, %v2066
    %v2068 = vpop.f32.mrb[0].mxu0
    %v2069 = vpop.f32.mrb[0].mxu0
    %v2070 = vpop.f32.mrb[0].mxu0
    %2071 = vdwg.mxu0
    %2072 = vmatprep.subr.bf16.mxu0 0
    %2073 = vmatpush1.bf16.msra.mxu0 %v1472
    %2074 = vmatprep.subr.bf16.mxu0 0
    %2075 = vmatpush1.bf16.msra.mxu0 %v1473
    %2076 = vmatprep.subr.bf16.mxu0 0
    %2077 = vmatpush1.bf16.msra.mxu0 %v1474
    %2078 = vmatprep.subr.bf16.mxu0 0
    %2079 = vmatpush1.bf16.msra.mxu0 %v1475
    %2080 = vmatprep.subr.bf16.mxu0 0
    %2081 = vmatpush1.bf16.msra.mxu0 %v1476
    %2082 = vmatprep.subr.bf16.mxu0 0
    %2083 = vmatpush1.bf16.msra.mxu0 %v1477
    %2084 = vmatprep.subr.bf16.mxu0 0
    %2085 = vmatpush1.bf16.msra.mxu0 %v1478
    %2086 = vmatprep.subr.bf16.mxu0 0
    %2087 = vmatpush1.bf16.msra.mxu0 %v1479
    %2088 = vmatprep.subr.bf16.mxu0 0
    %2089 = vmatpush1.bf16.msra.mxu0 %v1480
    %2090 = vmatprep.subr.bf16.mxu0 0
    %2091 = vmatpush1.bf16.msra.mxu0 %v1481
    %2092 = vmatprep.subr.bf16.mxu0 0
    %2093 = vmatpush1.bf16.msra.mxu0 %v1482
    %2094 = vmatprep.subr.bf16.mxu0 0
    %2095 = vmatpush1.bf16.msra.mxu0 %v1483
    %2096 = vmatprep.subr.bf16.mxu0 0
    %2097 = vmatpush1.bf16.msra.mxu0 %v1484
    %2098 = vmatprep.subr.bf16.mxu0 0
    %2099 = vmatpush1.bf16.msra.mxu0 %v1485
    %2100 = vmatprep.subr.bf16.mxu0 0
    %2101 = vmatpush1.bf16.msra.mxu0 %v1486
    %2102 = vmatprep.subr.bf16.mxu0 0
    %2103 = vmatpush1.bf16.msra.mxu0 %v1487
    %2104 = vmatprep.mubr.bf16.mxu0 %v531
    %2105 = vmatmul.mubr.bf16.gmra.mrb[0].mxu0 %v530
    %v2106 = vpop.f32.mrb[0].mxu0
    %v2107 = vadd.f32 %v2067, %v2106
    %v2108 = vpop.f32.mrb[0].mxu0
    %v2109 = vpop.f32.mrb[0].mxu0
    %v2110 = vpop.f32.mrb[0].mxu0
    %2111 = vdwg.mxu0
    %2112 = vmatprep.subr.bf16.mxu0 0
    %2113 = vmatpush1.bf16.msra.mxu0 %v1488
    %2114 = vmatprep.subr.bf16.mxu0 0
    %2115 = vmatpush1.bf16.msra.mxu0 %v1489
    %2116 = vmatprep.subr.bf16.mxu0 0
    %2117 = vmatpush1.bf16.msra.mxu0 %v1490
    %2118 = vmatprep.subr.bf16.mxu0 0
    %2119 = vmatpush1.bf16.msra.mxu0 %v1491
    %2120 = vmatprep.subr.bf16.mxu0 0
    %2121 = vmatpush1.bf16.msra.mxu0 %v1492
    %2122 = vmatprep.subr.bf16.mxu0 0
    %2123 = vmatpush1.bf16.msra.mxu0 %v1493
    %2124 = vmatprep.subr.bf16.mxu0 0
    %2125 = vmatpush1.bf16.msra.mxu0 %v1494
    %2126 = vmatprep.subr.bf16.mxu0 0
    %2127 = vmatpush1.bf16.msra.mxu0 %v1495
    %2128 = vmatprep.subr.bf16.mxu0 0
    %2129 = vmatpush1.bf16.msra.mxu0 %v1496
    %2130 = vmatprep.subr.bf16.mxu0 0
    %2131 = vmatpush1.bf16.msra.mxu0 %v1497
    %2132 = vmatprep.subr.bf16.mxu0 0
    %2133 = vmatpush1.bf16.msra.mxu0 %v1498
    %2134 = vmatprep.subr.bf16.mxu0 0
    %2135 = vmatpush1.bf16.msra.mxu0 %v1499
    %2136 = vmatprep.subr.bf16.mxu0 0
    %2137 = vmatpush1.bf16.msra.mxu0 %v1500
    %2138 = vmatprep.subr.bf16.mxu0 0
    %2139 = vmatpush1.bf16.msra.mxu0 %v1501
    %2140 = vmatprep.subr.bf16.mxu0 0
    %2141 = vmatpush1.bf16.msra.mxu0 %v1502
    %2142 = vmatprep.subr.bf16.mxu0 0
    %2143 = vmatpush1.bf16.msra.mxu0 %v1503
    %2144 = vmatprep.mubr.bf16.mxu0 %v533
    %2145 = vmatmul.mubr.bf16.gmra.mrb[0].mxu0 %v532
    %v2146 = vpop.f32.mrb[0].mxu0
    %v2147 = vadd.f32 %v2107, %v2146
    %v2148 = vpop.f32.mrb[0].mxu0
    %v2149 = vpop.f32.mrb[0].mxu0
    %v2150 = vpop.f32.mrb[0].mxu0
    %2151 = vdwg.mxu0
    %2152 = vmatprep.subr.bf16.mxu0 0
    %2153 = vmatpush1.bf16.msra.mxu0 %v1504
    %2154 = vmatprep.subr.bf16.mxu0 0
    %2155 = vmatpush1.bf16.msra.mxu0 %v1505
    %2156 = vmatprep.subr.bf16.mxu0 0
    %2157 = vmatpush1.bf16.msra.mxu0 %v1506
    %2158 = vmatprep.subr.bf16.mxu0 0
    %2159 = vmatpush1.bf16.msra.mxu0 %v1507
    %2160 = vmatprep.subr.bf16.mxu0 0
    %2161 = vmatpush1.bf16.msra.mxu0 %v1508
    %2162 = vmatprep.subr.bf16.mxu0 0
    %2163 = vmatpush1.bf16.msra.mxu0 %v1509
    %2164 = vmatprep.subr.bf16.mxu0 0
    %2165 = vmatpush1.bf16.msra.mxu0 %v1510
    %2166 = vmatprep.subr.bf16.mxu0 0
    %2167 = vmatpush1.bf16.msra.mxu0 %v1511
    %2168 = vmatprep.subr.bf16.mxu0 0
    %2169 = vmatpush1.bf16.msra.mxu0 %v1512
    %2170 = vmatprep.subr.bf16.mxu0 0
    %2171 = vmatpush1.bf16.msra.mxu0 %v1513
    %2172 = vmatprep.subr.bf16.mxu0 0
    %2173 = vmatpush1.bf16.msra.mxu0 %v1514
    %2174 = vmatprep.subr.bf16.mxu0 0
    %2175 = vmatpush1.bf16.msra.mxu0 %v1515
    %2176 = vmatprep.subr.bf16.mxu0 0
    %2177 = vmatpush1.bf16.msra.mxu0 %v1516
    %2178 = vmatprep.subr.bf16.mxu0 0
    %2179 = vmatpush1.bf16.msra.mxu0 %v1517
    %2180 = vmatprep.subr.bf16.mxu0 0
    %2181 = vmatpush1.bf16.msra.mxu0 %v1518
    %2182 = vmatprep.subr.bf16.mxu0 0
    %2183 = vmatpush1.bf16.msra.mxu0 %v1519
    %2184 = vmatprep.mubr.bf16.mxu0 %v535
    %2185 = vmatmul.mubr.bf16.gmra.mrb[0].mxu0 %v534
    %v2186 = vpop.f32.mrb[0].mxu0
    %v2187 = vadd.f32 %v2147, %v2186
    %v2188 = vpop.f32.mrb[0].mxu0
    %v2189 = vpop.f32.mrb[0].mxu0
    %v2190 = vpop.f32.mrb[0].mxu0
    %2191 = vdwg.mxu0
    %v2192 = vld [vmem:[%s4] sm:$0x1f]
    %v2193 = vld [vmem:[%s3] sm:$0x1]
    %v2194 = vadd.f32 %v2193, %v2192
    %2195 = vst [vmem:[#allocation2] sm:$0x1] %v2194
    %v2197 = vrot.slane %v2192, 1
    %v2199 = vadd.f32 %v2187, %v2197
    %2200 = vst [vmem:[#allocation2 + $0x1] sm:$0xf] %v2199
    %2201 = vst [vmem:[#allocation2 + $0xf] sm:$0x1] %v2194
    %v2202 = vrot.slane %v2192, 5
    %v2204 = vadd.f32 %v2187, %v2202
    %2205 = vst [vmem:[#allocation2 + $0xc] sm:$0xf0] %v2204
    %v2206 = vld [vmem:[%s5] sm:$0xff]
    %v2207 = vld [vmem:[%s5 + $0x8] sm:$0x3]
    %2208 = vst [vmem:[#allocation2 + $0x5] sm:$0xff] %v2206
    %2209 = vst [vmem:[#allocation2 + $0xd] sm:$0x3] %v2207
    %v2210 = vld [vmem:[%s5] sm:$0xff]
    %v2211 = vld [vmem:[%s5 + $0x8] sm:$0x3]
    %2212 = vst [vmem:[#allocation2 + $0x14] sm:$0xff] %v2210
    %2213 = vst [vmem:[#allocation2 + $0x1c] sm:$0x3] %v2211
    %v2214 = vld [vmem:[#allocation2] sm:$0xff]
    %v2215 = vld [vmem:[#allocation2 + $0x8] sm:$0xff]
    %v2216 = vld [vmem:[#allocation2 + $0x10] sm:$0xff]
    %v2217 = vld [vmem:[#allocation2 + $0x18] sm:$0x3f]
    %v2218 = vld [vmem:[%s6] sm:$0x1]
    %v2219 = vld [vmem:[%s7] sm:$0x1]
    %2220 = vadd.xlane.f32.xlu0 %v2214
    %v2221 = vpop.xlane.xlu0 %2220
    %2222 = vadd.xlane.f32.xlu0 %v2215
    %v2223 = vpop.xlane.xlu0 %2222
    %2224 = vadd.xlane.f32.xlu0 %v2216
    %v2225 = vpop.xlane.xlu0 %2224
    %vm2226 = vcmask 1045504
    %v2227 = vsel %vm2226, %v2217, 0.0
    %2228 = vadd.xlane.f32.xlu0 %v2227
    %v2229 = vpop.xlane.xlu0 %2228
    %v2230 = vrcp.pop 128.0
    %v2231 = vmul.f32 %v2221, %v2230
    %v2232 = vmul.f32 %v2223, %v2230
    %v2233 = vmul.f32 %v2225, %v2230
    %v2234 = vmul.f32 %v2229, %v2230
    %v2235 = vsub.f32 %v2214, %v2231
    %v2236 = vsub.f32 %v2215, %v2232
    %v2237 = vsub.f32 %v2216, %v2233
    %v2238 = vsub.f32 %v2217, %v2234
    %v2239 = vmul.f32 %v2235, %v2235
    %v2240 = vmul.f32 %v2236, %v2236
    %v2241 = vmul.f32 %v2237, %v2237
    %v2242 = vmul.f32 %v2238, %v2238
    %2243 = vadd.xlane.f32.xlu0 %v2239
    %v2244 = vpop.xlane.xlu0 %2243
    %2245 = vadd.xlane.f32.xlu0 %v2240
    %v2246 = vpop.xlane.xlu0 %2245
    %2247 = vadd.xlane.f32.xlu0 %v2241
    %v2248 = vpop.xlane.xlu0 %2247
    %v2249 = vsel %vm2226, %v2242, 0.0
    %2250 = vadd.xlane.f32.xlu0 %v2249
    %v2251 = vpop.xlane.xlu0 %2250
    %v2252 = vmul.f32 %v2244, %v2230
    %v2253 = vmul.f32 %v2246, %v2230
    %v2254 = vmul.f32 %v2248, %v2230
    %v2255 = vmul.f32 %v2251, %v2230
    %v2256 = vadd.f32 %v2252, 1e-06
    %v2257 = vadd.f32 %v2253, 1e-06
    %v2258 = vadd.f32 %v2254, 1e-06
    %v2259 = vadd.f32 %v2255, 1e-06
    %v2260 = vrsqrt.pop %v2256
    %v2261 = vrsqrt.pop %v2257
    %v2262 = vrsqrt.pop %v2258
    %v2263 = vrsqrt.pop %v2259
    %v2264 = vmul.f32 %v2235, %v2260
    %v2265 = vmul.f32 %v2236, %v2261
    %v2266 = vmul.f32 %v2237, %v2262
    %v2267 = vmul.f32 %v2238, %v2263
    %v2269 = vlaneseq
    %v2270 = vshrl.u32 %v2269, 7
    %v2271 = vsub.s32 0, %v2270
    %v2272 = vrot.slane %v2218, %v2271
    %v2274 = vmul.f32 %v2264, %v2272
    %v2275 = vmul.f32 %v2265, %v2272
    %v2276 = vmul.f32 %v2266, %v2272
    %v2277 = vmul.f32 %v2267, %v2272
    %v2279 = vlaneseq
    %v2280 = vshrl.u32 %v2279, 7
    %v2281 = vsub.s32 0, %v2280
    %v2282 = vrot.slane %v2219, %v2281
    %v2284 = vadd.f32 %v2274, %v2282
    %v2285 = vadd.f32 %v2275, %v2282
    %v2286 = vadd.f32 %v2276, %v2282
    %v2287 = vadd.f32 %v2277, %v2282
    %v2288 = vpack.c.bf16 %v2285, %v2284
    %v2289 = vpack.c.bf16 %v2287, %v2286
    %v2290 = vld [vmem:[%s8] sm:$0xff]
    %v2291 = vld [vmem:[%s8 + $0x8] sm:$0xf]
    %v2292 = vld [vmem:[%s8 + $0xc] sm:$0xff]
    %v2293 = vld [vmem:[%s8 + $0x14] sm:$0xf]
    %v2294 = vld [vmem:[%s8 + $0x18] sm:$0xff]
    %v2295 = vld [vmem:[%s8 + $0x20] sm:$0xf]
    %v2296 = vld [vmem:[%s8 + $0x24] sm:$0xff]
    %v2297 = vld [vmem:[%s8 + $0x2c] sm:$0xf]
    %v2298 = vld [vmem:[%s8 + $0x30] sm:$0xff]
    %v2299 = vld [vmem:[%s8 + $0x38] sm:$0xf]
    %v2300 = vld [vmem:[%s8 + $0x3c] sm:$0xff]
    %v2301 = vld [vmem:[%s8 + $0x44] sm:$0xf]
    %v2302 = vld [vmem:[%s8 + $0x48] sm:$0xff]
    %v2303 = vld [vmem:[%s8 + $0x50] sm:$0xf]
    %v2304 = vld [vmem:[%s8 + $0x54] sm:$0xff]
    %v2305 = vld [vmem:[%s8 + $0x5c] sm:$0xf]
    %v2306 = vld [vmem:[%s8 + $0x60] sm:$0xff]
    %v2307 = vld [vmem:[%s8 + $0x68] sm:$0xf]
    %v2308 = vld [vmem:[%s8 + $0x6c] sm:$0xff]
    %v2309 = vld [vmem:[%s8 + $0x74] sm:$0xf]
    %v2310 = vld [vmem:[%s8 + $0x78] sm:$0xff]
    %v2311 = vld [vmem:[%s8 + $0x80] sm:$0xf]
    %v2312 = vld [vmem:[%s8 + $0x84] sm:$0xff]
    %v2313 = vld [vmem:[%s8 + $0x8c] sm:$0xf]
    %v2314 = vld [vmem:[%s8 + $0x90] sm:$0xff]
    %v2315 = vld [vmem:[%s8 + $0x98] sm:$0xf]
    %v2316 = vld [vmem:[%s8 + $0x9c] sm:$0xff]
    %v2317 = vld [vmem:[%s8 + $0xa4] sm:$0xf]
    %v2318 = vld [vmem:[%s8 + $0xa8] sm:$0xff]
    %v2319 = vld [vmem:[%s8 + $0xb0] sm:$0xf]
    %v2320 = vld [vmem:[%s8 + $0xb4] sm:$0xff]
    %v2321 = vld [vmem:[%s8 + $0xbc] sm:$0xf]
    %v2322 = vld [vmem:[%s9] sm:$0x7]
    %v2324 = vlaneseq
    %v2325 = vshrl.u32 %v2324, 7
    %v2326 = vsub.s32 0, %v2325
    %v2327 = vrot.slane %v2322, %v2326
    %v2328 = vlaneseq
    %v2329 = vshrl.u32 %v2328, 7
    %v2330 = vsub.s32 1, %v2329
    %v2331 = vrot.slane %v2322, %v2330
    %v2332 = vlaneseq
    %v2333 = vshrl.u32 %v2332, 7
    %v2334 = vsub.s32 2, %v2333
    %v2335 = vrot.slane %v2322, %v2334
    %v2371 = vunpack.c.l.b16 %v2290
    %v2372 = vunpack.c.h.b16 %v2290
    %v2373 = vunpack.c.l.b16 %v2291
    %v2374 = vunpack.c.l.b16 %v2292
    %v2375 = vunpack.c.h.b16 %v2292
    %v2376 = vunpack.c.l.b16 %v2293
    %v2377 = vunpack.c.l.b16 %v2294
    %v2378 = vunpack.c.h.b16 %v2294
    %v2379 = vunpack.c.l.b16 %v2295
    %v2380 = vunpack.c.l.b16 %v2296
    %v2381 = vunpack.c.h.b16 %v2296
    %v2382 = vunpack.c.l.b16 %v2297
    %v2383 = vunpack.c.l.b16 %v2298
    %v2384 = vunpack.c.h.b16 %v2298
    %v2385 = vunpack.c.l.b16 %v2299
    %v2386 = vunpack.c.l.b16 %v2300
    %v2387 = vunpack.c.h.b16 %v2300
    %v2388 = vunpack.c.l.b16 %v2301
    %v2389 = vunpack.c.l.b16 %v2302
    %v2390 = vunpack.c.h.b16 %v2302
    %v2391 = vunpack.c.l.b16 %v2303
    %v2392 = vunpack.c.l.b16 %v2304
    %v2393 = vunpack.c.h.b16 %v2304
    %v2394 = vunpack.c.l.b16 %v2305
    %v2395 = vunpack.c.l.b16 %v2306
    %v2396 = vunpack.c.h.b16 %v2306
    %v2397 = vunpack.c.l.b16 %v2307
    %v2398 = vunpack.c.l.b16 %v2308
    %v2399 = vunpack.c.h.b16 %v2308
    %v2400 = vunpack.c.l.b16 %v2309
    %v2401 = vunpack.c.l.b16 %v2310
    %v2402 = vunpack.c.h.b16 %v2310
    %v2403 = vunpack.c.l.b16 %v2311
    %v2404 = vunpack.c.l.b16 %v2312
    %v2405 = vunpack.c.h.b16 %v2312
    %v2406 = vunpack.c.l.b16 %v2313
    %v2407 = vunpack.c.l.b16 %v2314
    %v2408 = vunpack.c.h.b16 %v2314
    %v2409 = vunpack.c.l.b16 %v2315
    %v2410 = vunpack.c.l.b16 %v2316
    %v2411 = vunpack.c.h.b16 %v2316
    %v2412 = vunpack.c.l.b16 %v2317
    %v2413 = vunpack.c.l.b16 %v2318
    %v2414 = vunpack.c.h.b16 %v2318
    %v2415 = vunpack.c.l.b16 %v2319
    %v2416 = vunpack.c.l.b16 %v2320
    %v2417 = vunpack.c.h.b16 %v2320
    %v2418 = vunpack.c.l.b16 %v2321
    %v2419 = vpack.c.b16 %v2374, %v2371
    %v2420 = vpack.c.b16 %v2375, %v2372
    %v2421 = vpack.c.b16 %v2376, %v2373
    %v2422 = vpack.c.b16 %v2380, %v2377
    %v2423 = vpack.c.b16 %v2381, %v2378
    %v2424 = vpack.c.b16 %v2382, %v2379
    %v2425 = vpack.c.b16 %v2386, %v2383
    %v2426 = vpack.c.b16 %v2387, %v2384
    %v2427 = vpack.c.b16 %v2388, %v2385
    %v2428 = vpack.c.b16 %v2392, %v2389
    %v2429 = vpack.c.b16 %v2393, %v2390
    %v2430 = vpack.c.b16 %v2394, %v2391
    %v2431 = vpack.c.b16 %v2398, %v2395
    %v2432 = vpack.c.b16 %v2399, %v2396
    %v2433 = vpack.c.b16 %v2400, %v2397
    %v2434 = vpack.c.b16 %v2404, %v2401
    %v2435 = vpack.c.b16 %v2405, %v2402
    %v2436 = vpack.c.b16 %v2406, %v2403
    %v2437 = vpack.c.b16 %v2410, %v2407
    %v2438 = vpack.c.b16 %v2411, %v2408
    %v2439 = vpack.c.b16 %v2412, %v2409
    %v2440 = vpack.c.b16 %v2416, %v2413
    %v2441 = vpack.c.b16 %v2417, %v2414
    %v2442 = vpack.c.b16 %v2418, %v2415
    %2467 = vmatprep.subr.bf16.mxu0 %v2420
    %2468 = vmatpush1.bf16.msra.mxu0 %v2419
    %2469 = vmatprep.subr.bf16.mxu0 %v2423
    %2470 = vmatpush1.bf16.msra.mxu0 %v2422
    %2471 = vmatprep.subr.bf16.mxu0 %v2426
    %2472 = vmatpush1.bf16.msra.mxu0 %v2425
    %2473 = vmatprep.subr.bf16.mxu0 %v2429
    %2474 = vmatpush1.bf16.msra.mxu0 %v2428
    %2475 = vmatprep.subr.bf16.mxu0 %v2432
    %2476 = vmatpush1.bf16.msra.mxu0 %v2431
    %2477 = vmatprep.subr.bf16.mxu0 %v2435
    %2478 = vmatpush1.bf16.msra.mxu0 %v2434
    %2479 = vmatprep.subr.bf16.mxu0 %v2438
    %2480 = vmatpush1.bf16.msra.mxu0 %v2437
    %2481 = vmatprep.subr.bf16.mxu0 %v2441
    %2482 = vmatpush1.bf16.msra.mxu0 %v2440
    %2483 = vmatprep.subr.bf16.mxu0 0
    %2484 = vmatpush1.bf16.msra.mxu0 0
    %2485 = vmatprep.subr.bf16.mxu0 0
    %2486 = vmatpush1.bf16.msra.mxu0 0
    %2487 = vmatprep.subr.bf16.mxu0 0
    %2488 = vmatpush1.bf16.msra.mxu0 0
    %2489 = vmatprep.subr.bf16.mxu0 0
    %2490 = vmatpush1.bf16.msra.mxu0 0
    %2491 = vmatprep.subr.bf16.mxu0 0
    %2492 = vmatpush1.bf16.msra.mxu0 0
    %2493 = vmatprep.subr.bf16.mxu0 0
    %2494 = vmatpush1.bf16.msra.mxu0 0
    %2495 = vmatprep.subr.bf16.mxu0 0
    %2496 = vmatpush1.bf16.msra.mxu0 0
    %2497 = vmatprep.subr.bf16.mxu0 0
    %2498 = vmatpush1.bf16.msra.mxu0 0
    %2499 = vmatprep.mubr.bf16.mxu0 0
    %2500 = vmatmul.mubr.bf16.gmra.mrb[0].mxu0 %v2288
    %v2501 = vpop.f32.mrb[0].mxu0
    %v2502 = vadd.f32 %v2327, %v2501
    %v2503 = vpop.f32.mrb[0].mxu0
    %v2504 = vadd.f32 %v2331, %v2503
    %v2505 = vpop.f32.mrb[0].mxu0
    %v2506 = vadd.f32 %v2327, %v2505
    %v2507 = vpop.f32.mrb[0].mxu0
    %v2508 = vadd.f32 %v2331, %v2507
    %2509 = vmatprep.mubr.bf16.mxu0 0
    %2510 = vmatmul.mubr.bf16.gmra.mrb[0].mxu0 %v2289
    %v2511 = vpop.f32.mrb[0].mxu0
    %v2512 = vadd.f32 %v2327, %v2511
    %v2513 = vpop.f32.mrb[0].mxu0
    %v2514 = vadd.f32 %v2331, %v2513
    %v2515 = vpop.f32.mrb[0].mxu0
    %v2516 = vadd.f32 %v2327, %v2515
    %v2517 = vpop.f32.mrb[0].mxu0
    %v2518 = vadd.f32 %v2331, %v2517
    %2519 = vdwg.mxu0
    %2520 = vmatprep.subr.bf16.mxu0 0
    %2521 = vmatpush1.bf16.msra.mxu0 %v2421
    %2522 = vmatprep.subr.bf16.mxu0 0
    %2523 = vmatpush1.bf16.msra.mxu0 %v2424
    %2524 = vmatprep.subr.bf16.mxu0 0
    %2525 = vmatpush1.bf16.msra.mxu0 %v2427
    %2526 = vmatprep.subr.bf16.mxu0 0
    %2527 = vmatpush1.bf16.msra.mxu0 %v2430
    %2528 = vmatprep.subr.bf16.mxu0 0
    %2529 = vmatpush1.bf16.msra.mxu0 %v2433
    %2530 = vmatprep.subr.bf16.mxu0 0
    %2531 = vmatpush1.bf16.msra.mxu0 %v2436
    %2532 = vmatprep.subr.bf16.mxu0 0
    %2533 = vmatpush1.bf16.msra.mxu0 %v2439
    %2534 = vmatprep.subr.bf16.mxu0 0
    %2535 = vmatpush1.bf16.msra.mxu0 %v2442
    %2536 = vmatprep.subr.bf16.mxu0 0
    %2537 = vmatpush1.bf16.msra.mxu0 0
    %2538 = vmatprep.subr.bf16.mxu0 0
    %2539 = vmatpush1.bf16.msra.mxu0 0
    %2540 = vmatprep.subr.bf16.mxu0 0
    %2541 = vmatpush1.bf16.msra.mxu0 0
    %2542 = vmatprep.subr.bf16.mxu0 0
    %2543 = vmatpush1.bf16.msra.mxu0 0
    %2544 = vmatprep.subr.bf16.mxu0 0
    %2545 = vmatpush1.bf16.msra.mxu0 0
    %2546 = vmatprep.subr.bf16.mxu0 0
    %2547 = vmatpush1.bf16.msra.mxu0 0
    %2548 = vmatprep.subr.bf16.mxu0 0
    %2549 = vmatpush1.bf16.msra.mxu0 0
    %2550 = vmatprep.subr.bf16.mxu0 0
    %2551 = vmatpush1.bf16.msra.mxu0 0
    %2552 = vmatprep.mubr.bf16.mxu0 0
    %2553 = vmatmul.mubr.bf16.gmra.mrb[0].mxu0 %v2288
    %v2554 = vpop.f32.mrb[0].mxu0
    %v2555 = vadd.f32 %v2335, %v2554
    %v2556 = vpop.f32.mrb[0].mxu0
    %v2557 = vpop.f32.mrb[0].mxu0
    %v2558 = vadd.f32 %v2335, %v2557
    %v2559 = vpop.f32.mrb[0].mxu0
    %2560 = vmatprep.mubr.bf16.mxu0 0
    %2561 = vmatmul.mubr.bf16.gmra.mrb[0].mxu0 %v2289
    %v2562 = vpop.f32.mrb[0].mxu0
    %v2563 = vadd.f32 %v2335, %v2562
    %v2564 = vpop.f32.mrb[0].mxu0
    %v2565 = vpop.f32.mrb[0].mxu0
    %v2566 = vadd.f32 %v2335, %v2565
    %v2567 = vpop.f32.mrb[0].mxu0
    %2568 = vdwg.mxu0
    %2571 = vrot.lane.b32.xlu0 %v2502, 96
    %v2572 = vpop.permute.xlu0 %2571
    %2573 = vrot.lane.b32.xlu0 %v2506, 96
    %v2574 = vpop.permute.xlu0 %2573
    %2577 = vrot.lane.b32.xlu0 %v2502, 64
    %v2578 = vpop.permute.xlu0 %2577
    %2579 = vrot.lane.b32.xlu0 %v2506, 64
    %v2580 = vpop.permute.xlu0 %2579
    %2583 = vrot.lane.b32.xlu0 %v2502, 32
    %v2584 = vpop.permute.xlu0 %2583
    %2585 = vrot.lane.b32.xlu0 %v2506, 32
    %v2586 = vpop.permute.xlu0 %2585
    %vm2591 = vcmask 1040384
    %v2592 = vrot.slane %v2506, 7
    %v2593 = vrot.slane %v2512, 7
    %v2594 = vsel %vm2591, %v2592, %v2593
    %v2595 = vrot.slane %v2516, 7
    %v2596 = vsel %vm2591, %v2593, %v2595
    %2599 = vrot.lane.b32.xlu0 %v2594, 96
    %v2600 = vpop.permute.xlu0 %2599
    %2601 = vrot.lane.b32.xlu0 %v2596, 96
    %v2602 = vpop.permute.xlu0 %2601
    %2605 = vrot.lane.b32.xlu0 %v2594, 64
    %v2606 = vpop.permute.xlu0 %2605
    %2607 = vrot.lane.b32.xlu0 %v2596, 64
    %v2608 = vpop.permute.xlu0 %2607
    %2611 = vrot.lane.b32.xlu0 %v2594, 32
    %v2612 = vpop.permute.xlu0 %2611
    %2613 = vrot.lane.b32.xlu0 %v2596, 32
    %v2614 = vpop.permute.xlu0 %2613
    %v2617 = vpack.c.bf16 %v2506, %v2502
    %v2618 = vpack.c.bf16 %v2574, %v2572
    %v2619 = vpack.c.bf16 %v2580, %v2578
    %v2620 = vpack.c.bf16 %v2586, %v2584
    %v2621 = vpack.c.bf16 %v2596, %v2594
    %v2622 = vpack.c.bf16 %v2602, %v2600
    %v2623 = vpack.c.bf16 %v2608, %v2606
    %v2624 = vpack.c.bf16 %v2614, %v2612
    %2627 = vrot.lane.b32.xlu0 %v2504, 96
    %v2628 = vpop.permute.xlu0 %2627
    %2629 = vrot.lane.b32.xlu0 %v2508, 96
    %v2630 = vpop.permute.xlu0 %2629
    %2633 = vrot.lane.b32.xlu0 %v2504, 64
    %v2634 = vpop.permute.xlu0 %2633
    %2635 = vrot.lane.b32.xlu0 %v2508, 64
    %v2636 = vpop.permute.xlu0 %2635
    %2639 = vrot.lane.b32.xlu0 %v2504, 32
    %v2640 = vpop.permute.xlu0 %2639
    %2641 = vrot.lane.b32.xlu0 %v2508, 32
    %v2642 = vpop.permute.xlu0 %2641
    %v2647 = vrot.slane %v2508, 7
    %v2648 = vrot.slane %v2514, 7
    %v2649 = vsel %vm2591, %v2647, %v2648
    %v2650 = vrot.slane %v2518, 7
    %v2651 = vsel %vm2591, %v2648, %v2650
    %2654 = vrot.lane.b32.xlu0 %v2649, 96
    %v2655 = vpop.permute.xlu0 %2654
    %2656 = vrot.lane.b32.xlu0 %v2651, 96
    %v2657 = vpop.permute.xlu0 %2656
    %2660 = vrot.lane.b32.xlu0 %v2649, 64
    %v2661 = vpop.permute.xlu0 %2660
    %2662 = vrot.lane.b32.xlu0 %v2651, 64
    %v2663 = vpop.permute.xlu0 %2662
    %2666 = vrot.lane.b32.xlu0 %v2649, 32
    %v2667 = vpop.permute.xlu0 %2666
    %2668 = vrot.lane.b32.xlu0 %v2651, 32
    %v2669 = vpop.permute.xlu0 %2668
    %v2672 = vpack.c.bf16 %v2508, %v2504
    %v2673 = vpack.c.bf16 %v2630, %v2628
    %v2674 = vpack.c.bf16 %v2636, %v2634
    %v2675 = vpack.c.bf16 %v2642, %v2640
    %v2676 = vpack.c.bf16 %v2651, %v2649
    %v2677 = vpack.c.bf16 %v2657, %v2655
    %v2678 = vpack.c.bf16 %v2663, %v2661
    %v2679 = vpack.c.bf16 %v2669, %v2667
    %2682 = vrot.lane.b32.xlu0 %v2555, 96
    %v2683 = vpop.permute.xlu0 %2682
    %2684 = vrot.lane.b32.xlu0 %v2558, 96
    %v2685 = vpop.permute.xlu0 %2684
    %2688 = vrot.lane.b32.xlu0 %v2555, 64
    %v2689 = vpop.permute.xlu0 %2688
    %2690 = vrot.lane.b32.xlu0 %v2558, 64
    %v2691 = vpop.permute.xlu0 %2690
    %2694 = vrot.lane.b32.xlu0 %v2555, 32
    %v2695 = vpop.permute.xlu0 %2694
    %2696 = vrot.lane.b32.xlu0 %v2558, 32
    %v2697 = vpop.permute.xlu0 %2696
    %v2702 = vrot.slane %v2558, 7
    %v2703 = vrot.slane %v2563, 7
    %v2704 = vsel %vm2591, %v2702, %v2703
    %v2705 = vrot.slane %v2566, 7
    %v2706 = vsel %vm2591, %v2703, %v2705
    %2709 = vrot.lane.b32.xlu0 %v2704, 96
    %v2710 = vpop.permute.xlu0 %2709
    %2711 = vrot.lane.b32.xlu0 %v2706, 96
    %v2712 = vpop.permute.xlu0 %2711
    %2715 = vrot.lane.b32.xlu0 %v2704, 64
    %v2716 = vpop.permute.xlu0 %2715
    %2717 = vrot.lane.b32.xlu0 %v2706, 64
    %v2718 = vpop.permute.xlu0 %2717
    %2721 = vrot.lane.b32.xlu0 %v2704, 32
    %v2722 = vpop.permute.xlu0 %2721
    %2723 = vrot.lane.b32.xlu0 %v2706, 32
    %v2724 = vpop.permute.xlu0 %2723
    %v2727 = vpack.c.bf16 %v2558, %v2555
    %v2728 = vpack.c.bf16 %v2685, %v2683
    %v2729 = vpack.c.bf16 %v2691, %v2689
    %v2730 = vpack.c.bf16 %v2697, %v2695
    %v2731 = vpack.c.bf16 %v2706, %v2704
    %v2732 = vpack.c.bf16 %v2712, %v2710
    %v2733 = vpack.c.bf16 %v2718, %v2716
    %v2734 = vpack.c.bf16 %v2724, %v2722
    %vm2735 = vcmask 261120
    %v2737 = vsel %vm2735, %v2617, 0
    %v2740 = vsel %vm2735, %v2672, 0
    %2742 = vmatprep.subr.bf16.mxu0 0
    %2743 = vmatpush1.bf16.xpose.msra.mxu0 %v2740
    %2744 = vmatprep.subr.bf16.mxu0 0
    %2745 = vmatpush1.bf16.xpose.msra.mxu0 0
    %2746 = vmatprep.subr.bf16.mxu0 0
    %2747 = vmatpush1.bf16.xpose.msra.mxu0 0
    %2748 = vmatprep.subr.bf16.mxu0 0
    %2749 = vmatpush1.bf16.xpose.msra.mxu0 0
    %2750 = vmatprep.subr.bf16.mxu0 0
    %2751 = vmatpush1.bf16.xpose.msra.mxu0 0
    %2752 = vmatprep.subr.bf16.mxu0 0
    %2753 = vmatpush1.bf16.xpose.msra.mxu0 0
    %2754 = vmatprep.subr.bf16.mxu0 0
    %2755 = vmatpush1.bf16.xpose.msra.mxu0 0
    %2756 = vmatprep.subr.bf16.mxu0 0
    %2757 = vmatpush1.bf16.xpose.msra.mxu0 0
    %2758 = vmatprep.subr.bf16.mxu0 0
    %2759 = vmatpush1.bf16.xpose.msra.mxu0 0
    %2760 = vmatprep.subr.bf16.mxu0 0
    %2761 = vmatpush1.bf16.xpose.msra.mxu0 0
    %2762 = vmatprep.subr.bf16.mxu0 0
    %2763 = vmatpush1.bf16.xpose.msra.mxu0 0
    %2764 = vmatprep.subr.bf16.mxu0 0
    %2765 = vmatpush1.bf16.xpose.msra.mxu0 0
    %2766 = vmatprep.subr.bf16.mxu0 0
    %2767 = vmatpush1.bf16.xpose.msra.mxu0 0
    %2768 = vmatprep.subr.bf16.mxu0 0
    %2769 = vmatpush1.bf16.xpose.msra.mxu0 0
    %2770 = vmatprep.subr.bf16.mxu0 0
    %2771 = vmatpush1.bf16.xpose.msra.mxu0 0
    %2772 = vmatprep.subr.bf16.mxu0 0
    %2773 = vmatpush1.bf16.xpose.msra.mxu0 0
    %2774 = vmatprep.mubr.bf16.mxu0 0
    %2775 = vmatmul.mubr.bf16.gmra.mrb[0].mxu0 %v2737
    %v2776 = vpop.f32.mrb[0].mxu0
    %v2777 = vadd.f32 0.0, %v2776
    %v2778 = vpop.f32.mrb[0].mxu0
    %v2779 = vpop.f32.mrb[0].mxu0
    %v2780 = vadd.f32 0.0, %v2779
    %v2781 = vpop.f32.mrb[0].mxu0
    %2782 = vdwg.mxu0
    %v2784 = vsel %vm2735, %v2618, 0
    %v2787 = vsel %vm2735, %v2673, 0
    %2789 = vmatprep.subr.bf16.mxu0 0
    %2790 = vmatpush1.bf16.xpose.msra.mxu0 %v2787
    %2791 = vmatprep.subr.bf16.mxu0 0
    %2792 = vmatpush1.bf16.xpose.msra.mxu0 0
    %2793 = vmatprep.subr.bf16.mxu0 0
    %2794 = vmatpush1.bf16.xpose.msra.mxu0 0
    %2795 = vmatprep.subr.bf16.mxu0 0
    %2796 = vmatpush1.bf16.xpose.msra.mxu0 0
    %2797 = vmatprep.subr.bf16.mxu0 0
    %2798 = vmatpush1.bf16.xpose.msra.mxu0 0
    %2799 = vmatprep.subr.bf16.mxu0 0
    %2800 = vmatpush1.bf16.xpose.msra.mxu0 0
    %2801 = vmatprep.subr.bf16.mxu0 0
    %2802 = vmatpush1.bf16.xpose.msra.mxu0 0
    %2803 = vmatprep.subr.bf16.mxu0 0
    %2804 = vmatpush1.bf16.xpose.msra.mxu0 0
    %2805 = vmatprep.subr.bf16.mxu0 0
    %2806 = vmatpush1.bf16.xpose.msra.mxu0 0
    %2807 = vmatprep.subr.bf16.mxu0 0
    %2808 = vmatpush1.bf16.xpose.msra.mxu0 0
    %2809 = vmatprep.subr.bf16.mxu0 0
    %2810 = vmatpush1.bf16.xpose.msra.mxu0 0
    %2811 = vmatprep.subr.bf16.mxu0 0
    %2812 = vmatpush1.bf16.xpose.msra.mxu0 0
    %2813 = vmatprep.subr.bf16.mxu0 0
    %2814 = vmatpush1.bf16.xpose.msra.mxu0 0
    %2815 = vmatprep.subr.bf16.mxu0 0
    %2816 = vmatpush1.bf16.xpose.msra.mxu0 0
    %2817 = vmatprep.subr.bf16.mxu0 0
    %2818 = vmatpush1.bf16.xpose.msra.mxu0 0
    %2819 = vmatprep.subr.bf16.mxu0 0
    %2820 = vmatpush1.bf16.xpose.msra.mxu0 0
    %2821 = vmatprep.mubr.bf16.mxu0 0
    %2822 = vmatmul.mubr.bf16.gmra.mrb[0].mxu0 %v2784
    %v2823 = vpop.f32.mrb[0].mxu0
    %v2824 = vadd.f32 0.0, %v2823
    %v2825 = vpop.f32.mrb[0].mxu0
    %v2826 = vpop.f32.mrb[0].mxu0
    %v2827 = vadd.f32 0.0, %v2826
    %v2828 = vpop.f32.mrb[0].mxu0
    %2829 = vdwg.mxu0
    %v2831 = vsel %vm2735, %v2619, 0
    %v2834 = vsel %vm2735, %v2674, 0
    %2836 = vmatprep.subr.bf16.mxu0 0
    %2837 = vmatpush1.bf16.xpose.msra.mxu0 %v2834
    %2838 = vmatprep.subr.bf16.mxu0 0
    %2839 = vmatpush1.bf16.xpose.msra.mxu0 0
    %2840 = vmatprep.subr.bf16.mxu0 0
    %2841 = vmatpush1.bf16.xpose.msra.mxu0 0
    %2842 = vmatprep.subr.bf16.mxu0 0
    %2843 = vmatpush1.bf16.xpose.msra.mxu0 0
    %2844 = vmatprep.subr.bf16.mxu0 0
    %2845 = vmatpush1.bf16.xpose.msra.mxu0 0
    %2846 = vmatprep.subr.bf16.mxu0 0
    %2847 = vmatpush1.bf16.xpose.msra.mxu0 0
    %2848 = vmatprep.subr.bf16.mxu0 0
    %2849 = vmatpush1.bf16.xpose.msra.mxu0 0
    %2850 = vmatprep.subr.bf16.mxu0 0
    %2851 = vmatpush1.bf16.xpose.msra.mxu0 0
    %2852 = vmatprep.subr.bf16.mxu0 0
    %2853 = vmatpush1.bf16.xpose.msra.mxu0 0
    %2854 = vmatprep.subr.bf16.mxu0 0
    %2855 = vmatpush1.bf16.xpose.msra.mxu0 0
    %2856 = vmatprep.subr.bf16.mxu0 0
    %2857 = vmatpush1.bf16.xpose.msra.mxu0 0
    %2858 = vmatprep.subr.bf16.mxu0 0
    %2859 = vmatpush1.bf16.xpose.msra.mxu0 0
    %2860 = vmatprep.subr.bf16.mxu0 0
    %2861 = vmatpush1.bf16.xpose.msra.mxu0 0
    %2862 = vmatprep.subr.bf16.mxu0 0
    %2863 = vmatpush1.bf16.xpose.msra.mxu0 0
    %2864 = vmatprep.subr.bf16.mxu0 0
    %2865 = vmatpush1.bf16.xpose.msra.mxu0 0
    %2866 = vmatprep.subr.bf16.mxu0 0
    %2867 = vmatpush1.bf16.xpose.msra.mxu0 0
    %2868 = vmatprep.mubr.bf16.mxu0 0
    %2869 = vmatmul.mubr.bf16.gmra.mrb[0].mxu0 %v2831
    %v2870 = vpop.f32.mrb[0].mxu0
    %v2871 = vadd.f32 0.0, %v2870
    %v2872 = vpop.f32.mrb[0].mxu0
    %v2873 = vpop.f32.mrb[0].mxu0
    %v2874 = vadd.f32 0.0, %v2873
    %v2875 = vpop.f32.mrb[0].mxu0
    %2876 = vdwg.mxu0
    %v2878 = vsel %vm2735, %v2620, 0
    %v2881 = vsel %vm2735, %v2675, 0
    %2883 = vmatprep.subr.bf16.mxu0 0
    %2884 = vmatpush1.bf16.xpose.msra.mxu0 %v2881
    %2885 = vmatprep.subr.bf16.mxu0 0
    %2886 = vmatpush1.bf16.xpose.msra.mxu0 0
    %2887 = vmatprep.subr.bf16.mxu0 0
    %2888 = vmatpush1.bf16.xpose.msra.mxu0 0
    %2889 = vmatprep.subr.bf16.mxu0 0
    %2890 = vmatpush1.bf16.xpose.msra.mxu0 0
    %2891 = vmatprep.subr.bf16.mxu0 0
    %2892 = vmatpush1.bf16.xpose.msra.mxu0 0
    %2893 = vmatprep.subr.bf16.mxu0 0
    %2894 = vmatpush1.bf16.xpose.msra.mxu0 0
    %2895 = vmatprep.subr.bf16.mxu0 0
    %2896 = vmatpush1.bf16.xpose.msra.mxu0 0
    %2897 = vmatprep.subr.bf16.mxu0 0
    %2898 = vmatpush1.bf16.xpose.msra.mxu0 0
    %2899 = vmatprep.subr.bf16.mxu0 0
    %2900 = vmatpush1.bf16.xpose.msra.mxu0 0
    %2901 = vmatprep.subr.bf16.mxu0 0
    %2902 = vmatpush1.bf16.xpose.msra.mxu0 0
    %2903 = vmatprep.subr.bf16.mxu0 0
    %2904 = vmatpush1.bf16.xpose.msra.mxu0 0
    %2905 = vmatprep.subr.bf16.mxu0 0
    %2906 = vmatpush1.bf16.xpose.msra.mxu0 0
    %2907 = vmatprep.subr.bf16.mxu0 0
    %2908 = vmatpush1.bf16.xpose.msra.mxu0 0
    %2909 = vmatprep.subr.bf16.mxu0 0
    %2910 = vmatpush1.bf16.xpose.msra.mxu0 0
    %2911 = vmatprep.subr.bf16.mxu0 0
    %2912 = vmatpush1.bf16.xpose.msra.mxu0 0
    %2913 = vmatprep.subr.bf16.mxu0 0
    %2914 = vmatpush1.bf16.xpose.msra.mxu0 0
    %2915 = vmatprep.mubr.bf16.mxu0 0
    %2916 = vmatmul.mubr.bf16.gmra.mrb[0].mxu0 %v2878
    %v2917 = vpop.f32.mrb[0].mxu0
    %v2918 = vadd.f32 0.0, %v2917
    %v2919 = vpop.f32.mrb[0].mxu0
    %v2920 = vpop.f32.mrb[0].mxu0
    %v2921 = vadd.f32 0.0, %v2920
    %v2922 = vpop.f32.mrb[0].mxu0
    %2923 = vdwg.mxu0
    %v2925 = vsel %vm2735, %v2621, 0
    %v2928 = vsel %vm2735, %v2676, 0
    %2930 = vmatprep.subr.bf16.mxu0 0
    %2931 = vmatpush1.bf16.xpose.msra.mxu0 %v2928
    %2932 = vmatprep.subr.bf16.mxu0 0
    %2933 = vmatpush1.bf16.xpose.msra.mxu0 0
    %2934 = vmatprep.subr.bf16.mxu0 0
    %2935 = vmatpush1.bf16.xpose.msra.mxu0 0
    %2936 = vmatprep.subr.bf16.mxu0 0
    %2937 = vmatpush1.bf16.xpose.msra.mxu0 0
    %2938 = vmatprep.subr.bf16.mxu0 0
    %2939 = vmatpush1.bf16.xpose.msra.mxu0 0
    %2940 = vmatprep.subr.bf16.mxu0 0
    %2941 = vmatpush1.bf16.xpose.msra.mxu0 0
    %2942 = vmatprep.subr.bf16.mxu0 0
    %2943 = vmatpush1.bf16.xpose.msra.mxu0 0
    %2944 = vmatprep.subr.bf16.mxu0 0
    %2945 = vmatpush1.bf16.xpose.msra.mxu0 0
    %2946 = vmatprep.subr.bf16.mxu0 0
    %2947 = vmatpush1.bf16.xpose.msra.mxu0 0
    %2948 = vmatprep.subr.bf16.mxu0 0
    %2949 = vmatpush1.bf16.xpose.msra.mxu0 0
    %2950 = vmatprep.subr.bf16.mxu0 0
    %2951 = vmatpush1.bf16.xpose.msra.mxu0 0
    %2952 = vmatprep.subr.bf16.mxu0 0
    %2953 = vmatpush1.bf16.xpose.msra.mxu0 0
    %2954 = vmatprep.subr.bf16.mxu0 0
    %2955 = vmatpush1.bf16.xpose.msra.mxu0 0
    %2956 = vmatprep.subr.bf16.mxu0 0
    %2957 = vmatpush1.bf16.xpose.msra.mxu0 0
    %2958 = vmatprep.subr.bf16.mxu0 0
    %2959 = vmatpush1.bf16.xpose.msra.mxu0 0
    %2960 = vmatprep.subr.bf16.mxu0 0
    %2961 = vmatpush1.bf16.xpose.msra.mxu0 0
    %2962 = vmatprep.mubr.bf16.mxu0 0
    %2963 = vmatmul.mubr.bf16.gmra.mrb[0].mxu0 %v2925
    %v2964 = vpop.f32.mrb[0].mxu0
    %v2965 = vadd.f32 0.0, %v2964
    %v2966 = vpop.f32.mrb[0].mxu0
    %v2967 = vpop.f32.mrb[0].mxu0
    %v2968 = vadd.f32 0.0, %v2967
    %v2969 = vpop.f32.mrb[0].mxu0
    %2970 = vdwg.mxu0
    %v2972 = vsel %vm2735, %v2622, 0
    %v2975 = vsel %vm2735, %v2677, 0
    %2977 = vmatprep.subr.bf16.mxu0 0
    %2978 = vmatpush1.bf16.xpose.msra.mxu0 %v2975
    %2979 = vmatprep.subr.bf16.mxu0 0
    %2980 = vmatpush1.bf16.xpose.msra.mxu0 0
    %2981 = vmatprep.subr.bf16.mxu0 0
    %2982 = vmatpush1.bf16.xpose.msra.mxu0 0
    %2983 = vmatprep.subr.bf16.mxu0 0
    %2984 = vmatpush1.bf16.xpose.msra.mxu0 0
    %2985 = vmatprep.subr.bf16.mxu0 0
    %2986 = vmatpush1.bf16.xpose.msra.mxu0 0
    %2987 = vmatprep.subr.bf16.mxu0 0
    %2988 = vmatpush1.bf16.xpose.msra.mxu0 0
    %2989 = vmatprep.subr.bf16.mxu0 0
    %2990 = vmatpush1.bf16.xpose.msra.mxu0 0
    %2991 = vmatprep.subr.bf16.mxu0 0
    %2992 = vmatpush1.bf16.xpose.msra.mxu0 0
    %2993 = vmatprep.subr.bf16.mxu0 0
    %2994 = vmatpush1.bf16.xpose.msra.mxu0 0
    %2995 = vmatprep.subr.bf16.mxu0 0
    %2996 = vmatpush1.bf16.xpose.msra.mxu0 0
    %2997 = vmatprep.subr.bf16.mxu0 0
    %2998 = vmatpush1.bf16.xpose.msra.mxu0 0
    %2999 = vmatprep.subr.bf16.mxu0 0
    %3000 = vmatpush1.bf16.xpose.msra.mxu0 0
    %3001 = vmatprep.subr.bf16.mxu0 0
    %3002 = vmatpush1.bf16.xpose.msra.mxu0 0
    %3003 = vmatprep.subr.bf16.mxu0 0
    %3004 = vmatpush1.bf16.xpose.msra.mxu0 0
    %3005 = vmatprep.subr.bf16.mxu0 0
    %3006 = vmatpush1.bf16.xpose.msra.mxu0 0
    %3007 = vmatprep.subr.bf16.mxu0 0
    %3008 = vmatpush1.bf16.xpose.msra.mxu0 0
    %3009 = vmatprep.mubr.bf16.mxu0 0
    %3010 = vmatmul.mubr.bf16.gmra.mrb[0].mxu0 %v2972
    %v3011 = vpop.f32.mrb[0].mxu0
    %v3012 = vadd.f32 0.0, %v3011
    %v3013 = vpop.f32.mrb[0].mxu0
    %v3014 = vpop.f32.mrb[0].mxu0
    %v3015 = vadd.f32 0.0, %v3014
    %v3016 = vpop.f32.mrb[0].mxu0
    %3017 = vdwg.mxu0
    %v3019 = vsel %vm2735, %v2623, 0
    %v3022 = vsel %vm2735, %v2678, 0
    %3024 = vmatprep.subr.bf16.mxu0 0
    %3025 = vmatpush1.bf16.xpose.msra.mxu0 %v3022
    %3026 = vmatprep.subr.bf16.mxu0 0
    %3027 = vmatpush1.bf16.xpose.msra.mxu0 0
    %3028 = vmatprep.subr.bf16.mxu0 0
    %3029 = vmatpush1.bf16.xpose.msra.mxu0 0
    %3030 = vmatprep.subr.bf16.mxu0 0
    %3031 = vmatpush1.bf16.xpose.msra.mxu0 0
    %3032 = vmatprep.subr.bf16.mxu0 0
    %3033 = vmatpush1.bf16.xpose.msra.mxu0 0
    %3034 = vmatprep.subr.bf16.mxu0 0
    %3035 = vmatpush1.bf16.xpose.msra.mxu0 0
    %3036 = vmatprep.subr.bf16.mxu0 0
    %3037 = vmatpush1.bf16.xpose.msra.mxu0 0
    %3038 = vmatprep.subr.bf16.mxu0 0
    %3039 = vmatpush1.bf16.xpose.msra.mxu0 0
    %3040 = vmatprep.subr.bf16.mxu0 0
    %3041 = vmatpush1.bf16.xpose.msra.mxu0 0
    %3042 = vmatprep.subr.bf16.mxu0 0
    %3043 = vmatpush1.bf16.xpose.msra.mxu0 0
    %3044 = vmatprep.subr.bf16.mxu0 0
    %3045 = vmatpush1.bf16.xpose.msra.mxu0 0
    %3046 = vmatprep.subr.bf16.mxu0 0
    %3047 = vmatpush1.bf16.xpose.msra.mxu0 0
    %3048 = vmatprep.subr.bf16.mxu0 0
    %3049 = vmatpush1.bf16.xpose.msra.mxu0 0
    %3050 = vmatprep.subr.bf16.mxu0 0
    %3051 = vmatpush1.bf16.xpose.msra.mxu0 0
    %3052 = vmatprep.subr.bf16.mxu0 0
    %3053 = vmatpush1.bf16.xpose.msra.mxu0 0
    %3054 = vmatprep.subr.bf16.mxu0 0
    %3055 = vmatpush1.bf16.xpose.msra.mxu0 0
    %3056 = vmatprep.mubr.bf16.mxu0 0
    %3057 = vmatmul.mubr.bf16.gmra.mrb[0].mxu0 %v3019
    %v3058 = vpop.f32.mrb[0].mxu0
    %v3059 = vadd.f32 0.0, %v3058
    %v3060 = vpop.f32.mrb[0].mxu0
    %v3061 = vpop.f32.mrb[0].mxu0
    %v3062 = vadd.f32 0.0, %v3061
    %v3063 = vpop.f32.mrb[0].mxu0
    %3064 = vdwg.mxu0
    %v3066 = vsel %vm2735, %v2624, 0
    %v3069 = vsel %vm2735, %v2679, 0
    %3071 = vmatprep.subr.bf16.mxu0 0
    %3072 = vmatpush1.bf16.xpose.msra.mxu0 %v3069
    %3073 = vmatprep.subr.bf16.mxu0 0
    %3074 = vmatpush1.bf16.xpose.msra.mxu0 0
    %3075 = vmatprep.subr.bf16.mxu0 0
    %3076 = vmatpush1.bf16.xpose.msra.mxu0 0
    %3077 = vmatprep.subr.bf16.mxu0 0
    %3078 = vmatpush1.bf16.xpose.msra.mxu0 0
    %3079 = vmatprep.subr.bf16.mxu0 0
    %3080 = vmatpush1.bf16.xpose.msra.mxu0 0
    %3081 = vmatprep.subr.bf16.mxu0 0
    %3082 = vmatpush1.bf16.xpose.msra.mxu0 0
    %3083 = vmatprep.subr.bf16.mxu0 0
    %3084 = vmatpush1.bf16.xpose.msra.mxu0 0
    %3085 = vmatprep.subr.bf16.mxu0 0
    %3086 = vmatpush1.bf16.xpose.msra.mxu0 0
    %3087 = vmatprep.subr.bf16.mxu0 0
    %3088 = vmatpush1.bf16.xpose.msra.mxu0 0
    %3089 = vmatprep.subr.bf16.mxu0 0
    %3090 = vmatpush1.bf16.xpose.msra.mxu0 0
    %3091 = vmatprep.subr.bf16.mxu0 0
    %3092 = vmatpush1.bf16.xpose.msra.mxu0 0
    %3093 = vmatprep.subr.bf16.mxu0 0
    %3094 = vmatpush1.bf16.xpose.msra.mxu0 0
    %3095 = vmatprep.subr.bf16.mxu0 0
    %3096 = vmatpush1.bf16.xpose.msra.mxu0 0
    %3097 = vmatprep.subr.bf16.mxu0 0
    %3098 = vmatpush1.bf16.xpose.msra.mxu0 0
    %3099 = vmatprep.subr.bf16.mxu0 0
    %3100 = vmatpush1.bf16.xpose.msra.mxu0 0
    %3101 = vmatprep.subr.bf16.mxu0 0
    %3102 = vmatpush1.bf16.xpose.msra.mxu0 0
    %3103 = vmatprep.mubr.bf16.mxu0 0
    %3104 = vmatmul.mubr.bf16.gmra.mrb[0].mxu0 %v3066
    %v3105 = vpop.f32.mrb[0].mxu0
    %v3106 = vadd.f32 0.0, %v3105
    %v3107 = vpop.f32.mrb[0].mxu0
    %v3108 = vpop.f32.mrb[0].mxu0
    %v3109 = vadd.f32 0.0, %v3108
    %v3110 = vpop.f32.mrb[0].mxu0
    %3111 = vdwg.mxu0
    %vm3112 = vcmask 121856
    %v3113 = vsel %vm3112, %v2777, -inf
    %3114 = vmax.xlane.f32.xlu0 %v3113
    %v3115 = vpop.xlane.xlu0 %3114
    %vm3116 = vcmask 120832
    %v3117 = vsel %vm3116, %v2780, -inf
    %3118 = vmax.xlane.f32.xlu0 %v3117
    %v3119 = vpop.xlane.xlu0 %3118
    %v3120 = vsel %vm3112, %v2824, -inf
    %3121 = vmax.xlane.f32.xlu0 %v3120
    %v3122 = vpop.xlane.xlu0 %3121
    %v3123 = vsel %vm3116, %v2827, -inf
    %3124 = vmax.xlane.f32.xlu0 %v3123
    %v3125 = vpop.xlane.xlu0 %3124
    %v3126 = vsel %vm3112, %v2871, -inf
    %3127 = vmax.xlane.f32.xlu0 %v3126
    %v3128 = vpop.xlane.xlu0 %3127
    %v3129 = vsel %vm3116, %v2874, -inf
    %3130 = vmax.xlane.f32.xlu0 %v3129
    %v3131 = vpop.xlane.xlu0 %3130
    %v3132 = vsel %vm3112, %v2918, -inf
    %3133 = vmax.xlane.f32.xlu0 %v3132
    %v3134 = vpop.xlane.xlu0 %3133
    %v3135 = vsel %vm3116, %v2921, -inf
    %3136 = vmax.xlane.f32.xlu0 %v3135
    %v3137 = vpop.xlane.xlu0 %3136
    %v3138 = vsel %vm3112, %v2965, -inf
    %3139 = vmax.xlane.f32.xlu0 %v3138
    %v3140 = vpop.xlane.xlu0 %3139
    %v3141 = vsel %vm3116, %v2968, -inf
    %3142 = vmax.xlane.f32.xlu0 %v3141
    %v3143 = vpop.xlane.xlu0 %3142
    %v3144 = vsel %vm3112, %v3012, -inf
    %3145 = vmax.xlane.f32.xlu0 %v3144
    %v3146 = vpop.xlane.xlu0 %3145
    %v3147 = vsel %vm3116, %v3015, -inf
    %3148 = vmax.xlane.f32.xlu0 %v3147
    %v3149 = vpop.xlane.xlu0 %3148
    %v3150 = vsel %vm3112, %v3059, -inf
    %3151 = vmax.xlane.f32.xlu0 %v3150
    %v3152 = vpop.xlane.xlu0 %3151
    %v3153 = vsel %vm3116, %v3062, -inf
    %3154 = vmax.xlane.f32.xlu0 %v3153
    %v3155 = vpop.xlane.xlu0 %3154
    %v3156 = vsel %vm3112, %v3106, -inf
    %3157 = vmax.xlane.f32.xlu0 %v3156
    %v3158 = vpop.xlane.xlu0 %3157
    %v3159 = vsel %vm3116, %v3109, -inf
    %3160 = vmax.xlane.f32.xlu0 %v3159
    %v3161 = vpop.xlane.xlu0 %3160
    %v3162 = vsub.f32 %v2777, %v3115
    %v3163 = vsub.f32 %v2780, %v3119
    %v3164 = vsub.f32 %v2824, %v3122
    %v3165 = vsub.f32 %v2827, %v3125
    %v3166 = vsub.f32 %v2871, %v3128
    %v3167 = vsub.f32 %v2874, %v3131
    %v3168 = vsub.f32 %v2918, %v3134
    %v3169 = vsub.f32 %v2921, %v3137
    %v3170 = vsub.f32 %v2965, %v3140
    %v3171 = vsub.f32 %v2968, %v3143
    %v3172 = vsub.f32 %v3012, %v3146
    %v3173 = vsub.f32 %v3015, %v3149
    %v3174 = vsub.f32 %v3059, %v3152
    %v3175 = vsub.f32 %v3062, %v3155
    %v3176 = vsub.f32 %v3106, %v3158
    %v3177 = vsub.f32 %v3109, %v3161
    %v3178 = vmul.f32 %v3162, 1.442695
    %v3179 = vpow.pop %v3178
    %v3180 = vmul.f32 %v3163, 1.442695
    %v3181 = vpow.pop %v3180
    %v3182 = vmul.f32 %v3164, 1.442695
    %v3183 = vpow.pop %v3182
    %v3184 = vmul.f32 %v3165, 1.442695
    %v3185 = vpow.pop %v3184
    %v3186 = vmul.f32 %v3166, 1.442695
    %v3187 = vpow.pop %v3186
    %v3188 = vmul.f32 %v3167, 1.442695
    %v3189 = vpow.pop %v3188
    %v3190 = vmul.f32 %v3168, 1.442695
    %v3191 = vpow.pop %v3190
    %v3192 = vmul.f32 %v3169, 1.442695
    %v3193 = vpow.pop %v3192
    %v3194 = vmul.f32 %v3170, 1.442695
    %v3195 = vpow.pop %v3194
    %v3196 = vmul.f32 %v3171, 1.442695
    %v3197 = vpow.pop %v3196
    %v3198 = vmul.f32 %v3172, 1.442695
    %v3199 = vpow.pop %v3198
    %v3200 = vmul.f32 %v3173, 1.442695
    %v3201 = vpow.pop %v3200
    %v3202 = vmul.f32 %v3174, 1.442695
    %v3203 = vpow.pop %v3202
    %v3204 = vmul.f32 %v3175, 1.442695
    %v3205 = vpow.pop %v3204
    %v3206 = vmul.f32 %v3176, 1.442695
    %v3207 = vpow.pop %v3206
    %v3208 = vmul.f32 %v3177, 1.442695
    %v3209 = vpow.pop %v3208
    %v3210 = vsel %vm3112, %v3179, 0.0
    %3211 = vadd.xlane.f32.xlu0 %v3210
    %v3212 = vpop.xlane.xlu0 %3211
    %v3213 = vsel %vm3116, %v3181, 0.0
    %3214 = vadd.xlane.f32.xlu0 %v3213
    %v3215 = vpop.xlane.xlu0 %3214
    %v3216 = vsel %vm3112, %v3183, 0.0
    %3217 = vadd.xlane.f32.xlu0 %v3216
    %v3218 = vpop.xlane.xlu0 %3217
    %v3219 = vsel %vm3116, %v3185, 0.0
    %3220 = vadd.xlane.f32.xlu0 %v3219
    %v3221 = vpop.xlane.xlu0 %3220
    %v3222 = vsel %vm3112, %v3187, 0.0
    %3223 = vadd.xlane.f32.xlu0 %v3222
    %v3224 = vpop.xlane.xlu0 %3223
    %v3225 = vsel %vm3116, %v3189, 0.0
    %3226 = vadd.xlane.f32.xlu0 %v3225
    %v3227 = vpop.xlane.xlu0 %3226
    %v3228 = vsel %vm3112, %v3191, 0.0
    %3229 = vadd.xlane.f32.xlu0 %v3228
    %v3230 = vpop.xlane.xlu0 %3229
    %v3231 = vsel %vm3116, %v3193, 0.0
    %3232 = vadd.xlane.f32.xlu0 %v3231
    %v3233 = vpop.xlane.xlu0 %3232
    %v3234 = vsel %vm3112, %v3195, 0.0
    %3235 = vadd.xlane.f32.xlu0 %v3234
    %v3236 = vpop.xlane.xlu0 %3235
    %v3237 = vsel %vm3116, %v3197, 0.0
    %3238 = vadd.xlane.f32.xlu0 %v3237
    %v3239 = vpop.xlane.xlu0 %3238
    %v3240 = vsel %vm3112, %v3199, 0.0
    %3241 = vadd.xlane.f32.xlu0 %v3240
    %v3242 = vpop.xlane.xlu0 %3241
    %v3243 = vsel %vm3116, %v3201, 0.0
    %3244 = vadd.xlane.f32.xlu0 %v3243
    %v3245 = vpop.xlane.xlu0 %3244
    %v3246 = vsel %vm3112, %v3203, 0.0
    %3247 = vadd.xlane.f32.xlu0 %v3246
    %v3248 = vpop.xlane.xlu0 %3247
    %v3249 = vsel %vm3116, %v3205, 0.0
    %3250 = vadd.xlane.f32.xlu0 %v3249
    %v3251 = vpop.xlane.xlu0 %3250
    %v3252 = vsel %vm3112, %v3207, 0.0
    %3253 = vadd.xlane.f32.xlu0 %v3252
    %v3254 = vpop.xlane.xlu0 %3253
    %v3255 = vsel %vm3116, %v3209, 0.0
    %3256 = vadd.xlane.f32.xlu0 %v3255
    %v3257 = vpop.xlane.xlu0 %3256
    %v3258 = vrcp.pop %v3212
    %v3259 = vrcp.pop %v3215
    %v3260 = vrcp.pop %v3218
    %v3261 = vrcp.pop %v3221
    %v3262 = vrcp.pop %v3224
    %v3263 = vrcp.pop %v3227
    %v3264 = vrcp.pop %v3230
    %v3265 = vrcp.pop %v3233
    %v3266 = vrcp.pop %v3236
    %v3267 = vrcp.pop %v3239
    %v3268 = vrcp.pop %v3242
    %v3269 = vrcp.pop %v3245
    %v3270 = vrcp.pop %v3248
    %v3271 = vrcp.pop %v3251
    %v3272 = vrcp.pop %v3254
    %v3273 = vrcp.pop %v3257
    %v3274 = vmul.f32 %v3179, %v3258
    %v3275 = vmul.f32 %v3181, %v3259
    %v3276 = vmul.f32 %v3183, %v3260
    %v3277 = vmul.f32 %v3185, %v3261
    %v3278 = vmul.f32 %v3187, %v3262
    %v3279 = vmul.f32 %v3189, %v3263
    %v3280 = vmul.f32 %v3191, %v3264
    %v3281 = vmul.f32 %v3193, %v3265
    %v3282 = vmul.f32 %v3195, %v3266
    %v3283 = vmul.f32 %v3197, %v3267
    %v3284 = vmul.f32 %v3199, %v3268
    %v3285 = vmul.f32 %v3201, %v3269
    %v3286 = vmul.f32 %v3203, %v3270
    %v3287 = vmul.f32 %v3205, %v3271
    %v3288 = vmul.f32 %v3207, %v3272
    %v3289 = vmul.f32 %v3209, %v3273
    %v3290 = vpack.c.bf16 %v3275, %v3274
    %v3291 = vpack.c.bf16 %v3277, %v3276
    %v3292 = vpack.c.bf16 %v3279, %v3278
    %v3293 = vpack.c.bf16 %v3281, %v3280
    %v3294 = vpack.c.bf16 %v3283, %v3282
    %v3295 = vpack.c.bf16 %v3285, %v3284
    %v3296 = vpack.c.bf16 %v3287, %v3286
    %v3297 = vpack.c.bf16 %v3289, %v3288
    %v3299 = vsel %vm3112, %v3290, 0
    %vm3301 = vcmask 1046528
    %vm3302 = vcmask 1047552
    %v3303 = vsel %vm3301, 4294967295, 65535
    %v3304 = vsel %vm3302, %v3303, 0
    %v3306 = vand.u32 %v2727, %v3304
    %3308 = vmatprep.subr.bf16.mxu0 0
    %3309 = vmatpush1.bf16.msra.mxu0 %v3306
    %3310 = vmatprep.subr.bf16.mxu0 0
    %3311 = vmatpush1.bf16.msra.mxu0 0
    %3312 = vmatprep.subr.bf16.mxu0 0
    %3313 = vmatpush1.bf16.msra.mxu0 0
    %3314 = vmatprep.subr.bf16.mxu0 0
    %3315 = vmatpush1.bf16.msra.mxu0 0
    %3316 = vmatprep.subr.bf16.mxu0 0
    %3317 = vmatpush1.bf16.msra.mxu0 0
    %3318 = vmatprep.subr.bf16.mxu0 0
    %3319 = vmatpush1.bf16.msra.mxu0 0
    %3320 = vmatprep.subr.bf16.mxu0 0
    %3321 = vmatpush1.bf16.msra.mxu0 0
    %3322 = vmatprep.subr.bf16.mxu0 0
    %3323 = vmatpush1.bf16.msra.mxu0 0
    %3324 = vmatprep.subr.bf16.mxu0 0
    %3325 = vmatpush1.bf16.msra.mxu0 0
    %3326 = vmatprep.subr.bf16.mxu0 0
    %3327 = vmatpush1.bf16.msra.mxu0 0
    %3328 = vmatprep.subr.bf16.mxu0 0
    %3329 = vmatpush1.bf16.msra.mxu0 0
    %3330 = vmatprep.subr.bf16.mxu0 0
    %3331 = vmatpush1.bf16.msra.mxu0 0
    %3332 = vmatprep.subr.bf16.mxu0 0
    %3333 = vmatpush1.bf16.msra.mxu0 0
    %3334 = vmatprep.subr.bf16.mxu0 0
    %3335 = vmatpush1.bf16.msra.mxu0 0
    %3336 = vmatprep.subr.bf16.mxu0 0
    %3337 = vmatpush1.bf16.msra.mxu0 0
    %3338 = vmatprep.subr.bf16.mxu0 0
    %3339 = vmatpush1.bf16.msra.mxu0 0
    %3340 = vmatprep.mubr.bf16.mxu0 0
    %3341 = vmatmul.mubr.bf16.gmra.mrb[0].mxu0 %v3299
    %v3342 = vpop.f32.mrb[0].mxu0
    %v3343 = vadd.f32 0.0, %v3342
    %v3344 = vpop.f32.mrb[0].mxu0
    %v3345 = vpop.f32.mrb[0].mxu0
    %v3346 = vadd.f32 0.0, %v3345
    %v3347 = vpop.f32.mrb[0].mxu0
    %3348 = vdwg.mxu0
    %v3350 = vsel %vm3112, %v3291, 0
    %v3353 = vand.u32 %v2728, %v3304
    %3355 = vmatprep.subr.bf16.mxu0 0
    %3356 = vmatpush1.bf16.msra.mxu0 %v3353
    %3357 = vmatprep.subr.bf16.mxu0 0
    %3358 = vmatpush1.bf16.msra.mxu0 0
    %3359 = vmatprep.subr.bf16.mxu0 0
    %3360 = vmatpush1.bf16.msra.mxu0 0
    %3361 = vmatprep.subr.bf16.mxu0 0
    %3362 = vmatpush1.bf16.msra.mxu0 0
    %3363 = vmatprep.subr.bf16.mxu0 0
    %3364 = vmatpush1.bf16.msra.mxu0 0
    %3365 = vmatprep.subr.bf16.mxu0 0
    %3366 = vmatpush1.bf16.msra.mxu0 0
    %3367 = vmatprep.subr.bf16.mxu0 0
    %3368 = vmatpush1.bf16.msra.mxu0 0
    %3369 = vmatprep.subr.bf16.mxu0 0
    %3370 = vmatpush1.bf16.msra.mxu0 0
    %3371 = vmatprep.subr.bf16.mxu0 0
    %3372 = vmatpush1.bf16.msra.mxu0 0
    %3373 = vmatprep.subr.bf16.mxu0 0
    %3374 = vmatpush1.bf16.msra.mxu0 0
    %3375 = vmatprep.subr.bf16.mxu0 0
    %3376 = vmatpush1.bf16.msra.mxu0 0
    %3377 = vmatprep.subr.bf16.mxu0 0
    %3378 = vmatpush1.bf16.msra.mxu0 0
    %3379 = vmatprep.subr.bf16.mxu0 0
    %3380 = vmatpush1.bf16.msra.mxu0 0
    %3381 = vmatprep.subr.bf16.mxu0 0
    %3382 = vmatpush1.bf16.msra.mxu0 0
    %3383 = vmatprep.subr.bf16.mxu0 0
    %3384 = vmatpush1.bf16.msra.mxu0 0
    %3385 = vmatprep.subr.bf16.mxu0 0
    %3386 = vmatpush1.bf16.msra.mxu0 0
    %3387 = vmatprep.mubr.bf16.mxu0 0
    %3388 = vmatmul.mubr.bf16.gmra.mrb[0].mxu0 %v3350
    %v3389 = vpop.f32.mrb[0].mxu0
    %v3390 = vadd.f32 0.0, %v3389
    %v3391 = vpop.f32.mrb[0].mxu0
    %v3392 = vpop.f32.mrb[0].mxu0
    %v3393 = vadd.f32 0.0, %v3392
    %v3394 = vpop.f32.mrb[0].mxu0
    %3395 = vdwg.mxu0
    %v3397 = vsel %vm3112, %v3292, 0
    %v3400 = vand.u32 %v2729, %v3304
    %3402 = vmatprep.subr.bf16.mxu0 0
    %3403 = vmatpush1.bf16.msra.mxu0 %v3400
    %3404 = vmatprep.subr.bf16.mxu0 0
    %3405 = vmatpush1.bf16.msra.mxu0 0
    %3406 = vmatprep.subr.bf16.mxu0 0
    %3407 = vmatpush1.bf16.msra.mxu0 0
    %3408 = vmatprep.subr.bf16.mxu0 0
    %3409 = vmatpush1.bf16.msra.mxu0 0
    %3410 = vmatprep.subr.bf16.mxu0 0
    %3411 = vmatpush1.bf16.msra.mxu0 0
    %3412 = vmatprep.subr.bf16.mxu0 0
    %3413 = vmatpush1.bf16.msra.mxu0 0
    %3414 = vmatprep.subr.bf16.mxu0 0
    %3415 = vmatpush1.bf16.msra.mxu0 0
    %3416 = vmatprep.subr.bf16.mxu0 0
    %3417 = vmatpush1.bf16.msra.mxu0 0
    %3418 = vmatprep.subr.bf16.mxu0 0
    %3419 = vmatpush1.bf16.msra.mxu0 0
    %3420 = vmatprep.subr.bf16.mxu0 0
    %3421 = vmatpush1.bf16.msra.mxu0 0
    %3422 = vmatprep.subr.bf16.mxu0 0
    %3423 = vmatpush1.bf16.msra.mxu0 0
    %3424 = vmatprep.subr.bf16.mxu0 0
    %3425 = vmatpush1.bf16.msra.mxu0 0
    %3426 = vmatprep.subr.bf16.mxu0 0
    %3427 = vmatpush1.bf16.msra.mxu0 0
    %3428 = vmatprep.subr.bf16.mxu0 0
    %3429 = vmatpush1.bf16.msra.mxu0 0
    %3430 = vmatprep.subr.bf16.mxu0 0
    %3431 = vmatpush1.bf16.msra.mxu0 0
    %3432 = vmatprep.subr.bf16.mxu0 0
    %3433 = vmatpush1.bf16.msra.mxu0 0
    %3434 = vmatprep.mubr.bf16.mxu0 0
    %3435 = vmatmul.mubr.bf16.gmra.mrb[0].mxu0 %v3397
    %v3436 = vpop.f32.mrb[0].mxu0
    %v3437 = vadd.f32 0.0, %v3436
    %v3438 = vpop.f32.mrb[0].mxu0
    %v3439 = vpop.f32.mrb[0].mxu0
    %v3440 = vadd.f32 0.0, %v3439
    %v3441 = vpop.f32.mrb[0].mxu0
    %3442 = vdwg.mxu0
    %v3444 = vsel %vm3112, %v3293, 0
    %v3447 = vand.u32 %v2730, %v3304
    %3449 = vmatprep.subr.bf16.mxu0 0
    %3450 = vmatpush1.bf16.msra.mxu0 %v3447
    %3451 = vmatprep.subr.bf16.mxu0 0
    %3452 = vmatpush1.bf16.msra.mxu0 0
    %3453 = vmatprep.subr.bf16.mxu0 0
    %3454 = vmatpush1.bf16.msra.mxu0 0
    %3455 = vmatprep.subr.bf16.mxu0 0
    %3456 = vmatpush1.bf16.msra.mxu0 0
    %3457 = vmatprep.subr.bf16.mxu0 0
    %3458 = vmatpush1.bf16.msra.mxu0 0
    %3459 = vmatprep.subr.bf16.mxu0 0
    %3460 = vmatpush1.bf16.msra.mxu0 0
    %3461 = vmatprep.subr.bf16.mxu0 0
    %3462 = vmatpush1.bf16.msra.mxu0 0
    %3463 = vmatprep.subr.bf16.mxu0 0
    %3464 = vmatpush1.bf16.msra.mxu0 0
    %3465 = vmatprep.subr.bf16.mxu0 0
    %3466 = vmatpush1.bf16.msra.mxu0 0
    %3467 = vmatprep.subr.bf16.mxu0 0
    %3468 = vmatpush1.bf16.msra.mxu0 0
    %3469 = vmatprep.subr.bf16.mxu0 0
    %3470 = vmatpush1.bf16.msra.mxu0 0
    %3471 = vmatprep.subr.bf16.mxu0 0
    %3472 = vmatpush1.bf16.msra.mxu0 0
    %3473 = vmatprep.subr.bf16.mxu0 0
    %3474 = vmatpush1.bf16.msra.mxu0 0
    %3475 = vmatprep.subr.bf16.mxu0 0
    %3476 = vmatpush1.bf16.msra.mxu0 0
    %3477 = vmatprep.subr.bf16.mxu0 0
    %3478 = vmatpush1.bf16.msra.mxu0 0
    %3479 = vmatprep.subr.bf16.mxu0 0
    %3480 = vmatpush1.bf16.msra.mxu0 0
    %3481 = vmatprep.mubr.bf16.mxu0 0
    %3482 = vmatmul.mubr.bf16.gmra.mrb[0].mxu0 %v3444
    %v3483 = vpop.f32.mrb[0].mxu0
    %v3484 = vadd.f32 0.0, %v3483
    %v3485 = vpop.f32.mrb[0].mxu0
    %v3486 = vpop.f32.mrb[0].mxu0
    %v3487 = vadd.f32 0.0, %v3486
    %v3488 = vpop.f32.mrb[0].mxu0
    %3489 = vdwg.mxu0
    %v3491 = vsel %vm3112, %v3294, 0
    %v3494 = vand.u32 %v2731, %v3304
    %3496 = vmatprep.subr.bf16.mxu0 0
    %3497 = vmatpush1.bf16.msra.mxu0 %v3494
    %3498 = vmatprep.subr.bf16.mxu0 0
    %3499 = vmatpush1.bf16.msra.mxu0 0
    %3500 = vmatprep.subr.bf16.mxu0 0
    %3501 = vmatpush1.bf16.msra.mxu0 0
    %3502 = vmatprep.subr.bf16.mxu0 0
    %3503 = vmatpush1.bf16.msra.mxu0 0
    %3504 = vmatprep.subr.bf16.mxu0 0
    %3505 = vmatpush1.bf16.msra.mxu0 0
    %3506 = vmatprep.subr.bf16.mxu0 0
    %3507 = vmatpush1.bf16.msra.mxu0 0
    %3508 = vmatprep.subr.bf16.mxu0 0
    %3509 = vmatpush1.bf16.msra.mxu0 0
    %3510 = vmatprep.subr.bf16.mxu0 0
    %3511 = vmatpush1.bf16.msra.mxu0 0
    %3512 = vmatprep.subr.bf16.mxu0 0
    %3513 = vmatpush1.bf16.msra.mxu0 0
    %3514 = vmatprep.subr.bf16.mxu0 0
    %3515 = vmatpush1.bf16.msra.mxu0 0
    %3516 = vmatprep.subr.bf16.mxu0 0
    %3517 = vmatpush1.bf16.msra.mxu0 0
    %3518 = vmatprep.subr.bf16.mxu0 0
    %3519 = vmatpush1.bf16.msra.mxu0 0
    %3520 = vmatprep.subr.bf16.mxu0 0
    %3521 = vmatpush1.bf16.msra.mxu0 0
    %3522 = vmatprep.subr.bf16.mxu0 0
    %3523 = vmatpush1.bf16.msra.mxu0 0
    %3524 = vmatprep.subr.bf16.mxu0 0
    %3525 = vmatpush1.bf16.msra.mxu0 0
    %3526 = vmatprep.subr.bf16.mxu0 0
    %3527 = vmatpush1.bf16.msra.mxu0 0
    %3528 = vmatprep.mubr.bf16.mxu0 0
    %3529 = vmatmul.mubr.bf16.gmra.mrb[0].mxu0 %v3491
    %v3530 = vpop.f32.mrb[0].mxu0
    %v3531 = vadd.f32 0.0, %v3530
    %v3532 = vpop.f32.mrb[0].mxu0
    %v3533 = vpop.f32.mrb[0].mxu0
    %v3534 = vadd.f32 0.0, %v3533
    %v3535 = vpop.f32.mrb[0].mxu0
    %3536 = vdwg.mxu0
    %v3538 = vsel %vm3112, %v3295, 0
    %v3541 = vand.u32 %v2732, %v3304
    %3543 = vmatprep.subr.bf16.mxu0 0
    %3544 = vmatpush1.bf16.msra.mxu0 %v3541
    %3545 = vmatprep.subr.bf16.mxu0 0
    %3546 = vmatpush1.bf16.msra.mxu0 0
    %3547 = vmatprep.subr.bf16.mxu0 0
    %3548 = vmatpush1.bf16.msra.mxu0 0
    %3549 = vmatprep.subr.bf16.mxu0 0
    %3550 = vmatpush1.bf16.msra.mxu0 0
    %3551 = vmatprep.subr.bf16.mxu0 0
    %3552 = vmatpush1.bf16.msra.mxu0 0
    %3553 = vmatprep.subr.bf16.mxu0 0
    %3554 = vmatpush1.bf16.msra.mxu0 0
    %3555 = vmatprep.subr.bf16.mxu0 0
    %3556 = vmatpush1.bf16.msra.mxu0 0
    %3557 = vmatprep.subr.bf16.mxu0 0
    %3558 = vmatpush1.bf16.msra.mxu0 0
    %3559 = vmatprep.subr.bf16.mxu0 0
    %3560 = vmatpush1.bf16.msra.mxu0 0
    %3561 = vmatprep.subr.bf16.mxu0 0
    %3562 = vmatpush1.bf16.msra.mxu0 0
    %3563 = vmatprep.subr.bf16.mxu0 0
    %3564 = vmatpush1.bf16.msra.mxu0 0
    %3565 = vmatprep.subr.bf16.mxu0 0
    %3566 = vmatpush1.bf16.msra.mxu0 0
    %3567 = vmatprep.subr.bf16.mxu0 0
    %3568 = vmatpush1.bf16.msra.mxu0 0
    %3569 = vmatprep.subr.bf16.mxu0 0
    %3570 = vmatpush1.bf16.msra.mxu0 0
    %3571 = vmatprep.subr.bf16.mxu0 0
    %3572 = vmatpush1.bf16.msra.mxu0 0
    %3573 = vmatprep.subr.bf16.mxu0 0
    %3574 = vmatpush1.bf16.msra.mxu0 0
    %3575 = vmatprep.mubr.bf16.mxu0 0
    %3576 = vmatmul.mubr.bf16.gmra.mrb[0].mxu0 %v3538
    %v3577 = vpop.f32.mrb[0].mxu0
    %v3578 = vadd.f32 0.0, %v3577
    %v3579 = vpop.f32.mrb[0].mxu0
    %v3580 = vpop.f32.mrb[0].mxu0
    %v3581 = vadd.f32 0.0, %v3580
    %v3582 = vpop.f32.mrb[0].mxu0
    %3583 = vdwg.mxu0
    %v3585 = vsel %vm3112, %v3296, 0
    %v3588 = vand.u32 %v2733, %v3304
    %3590 = vmatprep.subr.bf16.mxu0 0
    %3591 = vmatpush1.bf16.msra.mxu0 %v3588
    %3592 = vmatprep.subr.bf16.mxu0 0
    %3593 = vmatpush1.bf16.msra.mxu0 0
    %3594 = vmatprep.subr.bf16.mxu0 0
    %3595 = vmatpush1.bf16.msra.mxu0 0
    %3596 = vmatprep.subr.bf16.mxu0 0
    %3597 = vmatpush1.bf16.msra.mxu0 0
    %3598 = vmatprep.subr.bf16.mxu0 0
    %3599 = vmatpush1.bf16.msra.mxu0 0
    %3600 = vmatprep.subr.bf16.mxu0 0
    %3601 = vmatpush1.bf16.msra.mxu0 0
    %3602 = vmatprep.subr.bf16.mxu0 0
    %3603 = vmatpush1.bf16.msra.mxu0 0
    %3604 = vmatprep.subr.bf16.mxu0 0
    %3605 = vmatpush1.bf16.msra.mxu0 0
    %3606 = vmatprep.subr.bf16.mxu0 0
    %3607 = vmatpush1.bf16.msra.mxu0 0
    %3608 = vmatprep.subr.bf16.mxu0 0
    %3609 = vmatpush1.bf16.msra.mxu0 0
    %3610 = vmatprep.subr.bf16.mxu0 0
    %3611 = vmatpush1.bf16.msra.mxu0 0
    %3612 = vmatprep.subr.bf16.mxu0 0
    %3613 = vmatpush1.bf16.msra.mxu0 0
    %3614 = vmatprep.subr.bf16.mxu0 0
    %3615 = vmatpush1.bf16.msra.mxu0 0
    %3616 = vmatprep.subr.bf16.mxu0 0
    %3617 = vmatpush1.bf16.msra.mxu0 0
    %3618 = vmatprep.subr.bf16.mxu0 0
    %3619 = vmatpush1.bf16.msra.mxu0 0
    %3620 = vmatprep.subr.bf16.mxu0 0
    %3621 = vmatpush1.bf16.msra.mxu0 0
    %3622 = vmatprep.mubr.bf16.mxu0 0
    %3623 = vmatmul.mubr.bf16.gmra.mrb[0].mxu0 %v3585
    %v3624 = vpop.f32.mrb[0].mxu0
    %v3625 = vadd.f32 0.0, %v3624
    %v3626 = vpop.f32.mrb[0].mxu0
    %v3627 = vpop.f32.mrb[0].mxu0
    %v3628 = vadd.f32 0.0, %v3627
    %v3629 = vpop.f32.mrb[0].mxu0
    %3630 = vdwg.mxu0
    %v3632 = vsel %vm3112, %v3297, 0
    %v3635 = vand.u32 %v2734, %v3304
    %3637 = vmatprep.subr.bf16.mxu0 0
    %3638 = vmatpush1.bf16.msra.mxu0 %v3635
    %3639 = vmatprep.subr.bf16.mxu0 0
    %3640 = vmatpush1.bf16.msra.mxu0 0
    %3641 = vmatprep.subr.bf16.mxu0 0
    %3642 = vmatpush1.bf16.msra.mxu0 0
    %3643 = vmatprep.subr.bf16.mxu0 0
    %3644 = vmatpush1.bf16.msra.mxu0 0
    %3645 = vmatprep.subr.bf16.mxu0 0
    %3646 = vmatpush1.bf16.msra.mxu0 0
    %3647 = vmatprep.subr.bf16.mxu0 0
    %3648 = vmatpush1.bf16.msra.mxu0 0
    %3649 = vmatprep.subr.bf16.mxu0 0
    %3650 = vmatpush1.bf16.msra.mxu0 0
    %3651 = vmatprep.subr.bf16.mxu0 0
    %3652 = vmatpush1.bf16.msra.mxu0 0
    %3653 = vmatprep.subr.bf16.mxu0 0
    %3654 = vmatpush1.bf16.msra.mxu0 0
    %3655 = vmatprep.subr.bf16.mxu0 0
    %3656 = vmatpush1.bf16.msra.mxu0 0
    %3657 = vmatprep.subr.bf16.mxu0 0
    %3658 = vmatpush1.bf16.msra.mxu0 0
    %3659 = vmatprep.subr.bf16.mxu0 0
    %3660 = vmatpush1.bf16.msra.mxu0 0
    %3661 = vmatprep.subr.bf16.mxu0 0
    %3662 = vmatpush1.bf16.msra.mxu0 0
    %3663 = vmatprep.subr.bf16.mxu0 0
    %3664 = vmatpush1.bf16.msra.mxu0 0
    %3665 = vmatprep.subr.bf16.mxu0 0
    %3666 = vmatpush1.bf16.msra.mxu0 0
    %3667 = vmatprep.subr.bf16.mxu0 0
    %3668 = vmatpush1.bf16.msra.mxu0 0
    %3669 = vmatprep.mubr.bf16.mxu0 0
    %3670 = vmatmul.mubr.bf16.gmra.mrb[0].mxu0 %v3632
    %v3671 = vpop.f32.mrb[0].mxu0
    %v3672 = vadd.f32 0.0, %v3671
    %v3673 = vpop.f32.mrb[0].mxu0
    %v3674 = vpop.f32.mrb[0].mxu0
    %v3675 = vadd.f32 0.0, %v3674
    %v3676 = vpop.f32.mrb[0].mxu0
    %3677 = vdwg.mxu0
    %3680 = vrot.lane.b32.xlu0 %v3390, 32
    %v3681 = vpop.permute.xlu0 %3680
    %3682 = vrot.lane.b32.xlu0 %v3393, 32
    %v3683 = vpop.permute.xlu0 %3682
    %3688 = vrot.lane.b32.xlu0 %v3437, 64
    %v3689 = vpop.permute.xlu0 %3688
    %3690 = vrot.lane.b32.xlu0 %v3440, 64
    %v3691 = vpop.permute.xlu0 %3690
    %3696 = vrot.lane.b32.xlu0 %v3484, 96
    %v3697 = vpop.permute.xlu0 %3696
    %3698 = vrot.lane.b32.xlu0 %v3487, 96
    %v3699 = vpop.permute.xlu0 %3698
    %v3702 = vsel %vm2735, %v3343, %v3681
    %v3703 = vsel %vm2735, %v3346, %v3683
    %vm3704 = vcmask 523264
    %v3705 = vsel %vm3704, %v3702, %v3689
    %v3706 = vsel %vm3704, %v3703, %v3691
    %vm3707 = vcmask 785408
    %v3708 = vsel %vm3707, %v3705, %v3697
    %v3709 = vsel %vm3707, %v3706, %v3699
    %3712 = vrot.lane.b32.xlu0 %v3578, 32
    %v3713 = vpop.permute.xlu0 %3712
    %3714 = vrot.lane.b32.xlu0 %v3581, 32
    %v3715 = vpop.permute.xlu0 %3714
    %3720 = vrot.lane.b32.xlu0 %v3625, 64
    %v3721 = vpop.permute.xlu0 %3720
    %3722 = vrot.lane.b32.xlu0 %v3628, 64
    %v3723 = vpop.permute.xlu0 %3722
    %3728 = vrot.lane.b32.xlu0 %v3672, 96
    %v3729 = vpop.permute.xlu0 %3728
    %3730 = vrot.lane.b32.xlu0 %v3675, 96
    %v3731 = vpop.permute.xlu0 %3730
    %v3734 = vsel %vm2735, %v3531, %v3713
    %v3735 = vsel %vm2735, %v3534, %v3715
    %v3736 = vsel %vm3704, %v3734, %v3721
    %v3737 = vsel %vm3704, %v3735, %v3723
    %v3738 = vsel %vm3707, %v3736, %v3729
    %v3739 = vsel %vm3707, %v3737, %v3731
    %v3742 = vrot.slane %v3738, 1
    %v3743 = vrot.slane %v3739, 1
    %v3744 = vsel %vm3301, %v3742, %v3743
    %v3748 = vsel %vm3301, %v3709, %v3742
    %v3749 = vpack.c.bf16 %v3748, %v3708
    %v3750 = vpack.c.bf16 %v3743, %v3744
    %v3751 = vld [vmem:[%s10] sm:$0xf]
    %v3752 = vld [vmem:[%s10 + $0x4] sm:$0xf]
    %v3753 = vld [vmem:[%s10 + $0x8] sm:$0xf]
    %v3754 = vld [vmem:[%s10 + $0xc] sm:$0xf]
    %v3755 = vld [vmem:[%s10 + $0x10] sm:$0xf]
    %v3756 = vld [vmem:[%s10 + $0x14] sm:$0xf]
    %v3757 = vld [vmem:[%s10 + $0x18] sm:$0xf]
    %v3758 = vld [vmem:[%s10 + $0x1c] sm:$0xf]
    %v3759 = vld [vmem:[%s10 + $0x20] sm:$0xf]
    %v3760 = vld [vmem:[%s10 + $0x24] sm:$0xf]
    %v3761 = vld [vmem:[%s10 + $0x28] sm:$0xf]
    %v3762 = vld [vmem:[%s10 + $0x2c] sm:$0xf]
    %v3763 = vld [vmem:[%s10 + $0x30] sm:$0xf]
    %v3764 = vld [vmem:[%s10 + $0x34] sm:$0xf]
    %v3765 = vld [vmem:[%s10 + $0x38] sm:$0xf]
    %v3766 = vld [vmem:[%s10 + $0x3c] sm:$0xf]
    %v3767 = vld [vmem:[%s11] sm:$0x1]
    %v3769 = vlaneseq
    %v3770 = vshrl.u32 %v3769, 7
    %v3771 = vsub.s32 0, %v3770
    %v3772 = vrot.slane %v3767, %v3771
    %v3790 = vunpack.c.l.b16 %v3751
    %v3791 = vunpack.c.l.b16 %v3752
    %v3792 = vunpack.c.l.b16 %v3753
    %v3793 = vunpack.c.l.b16 %v3754
    %v3794 = vunpack.c.l.b16 %v3755
    %v3795 = vunpack.c.l.b16 %v3756
    %v3796 = vunpack.c.l.b16 %v3757
    %v3797 = vunpack.c.l.b16 %v3758
    %v3798 = vunpack.c.l.b16 %v3759
    %v3799 = vunpack.c.l.b16 %v3760
    %v3800 = vunpack.c.l.b16 %v3761
    %v3801 = vunpack.c.l.b16 %v3762
    %v3802 = vunpack.c.l.b16 %v3763
    %v3803 = vunpack.c.l.b16 %v3764
    %v3804 = vunpack.c.l.b16 %v3765
    %v3805 = vunpack.c.l.b16 %v3766
    %v3806 = vpack.c.b16 %v3791, %v3790
    %v3807 = vpack.c.b16 %v3793, %v3792
    %v3808 = vpack.c.b16 %v3795, %v3794
    %v3809 = vpack.c.b16 %v3797, %v3796
    %v3810 = vpack.c.b16 %v3799, %v3798
    %v3811 = vpack.c.b16 %v3801, %v3800
    %v3812 = vpack.c.b16 %v3803, %v3802
    %v3813 = vpack.c.b16 %v3805, %v3804
    %3822 = vmatprep.subr.bf16.mxu0 0
    %3823 = vmatpush1.bf16.msra.mxu0 %v3806
    %3824 = vmatprep.subr.bf16.mxu0 0
    %3825 = vmatpush1.bf16.msra.mxu0 %v3807
    %3826 = vmatprep.subr.bf16.mxu0 0
    %3827 = vmatpush1.bf16.msra.mxu0 %v3808
    %3828 = vmatprep.subr.bf16.mxu0 0
    %3829 = vmatpush1.bf16.msra.mxu0 %v3809
    %3830 = vmatprep.subr.bf16.mxu0 0
    %3831 = vmatpush1.bf16.msra.mxu0 %v3810
    %3832 = vmatprep.subr.bf16.mxu0 0
    %3833 = vmatpush1.bf16.msra.mxu0 %v3811
    %3834 = vmatprep.subr.bf16.mxu0 0
    %3835 = vmatpush1.bf16.msra.mxu0 %v3812
    %3836 = vmatprep.subr.bf16.mxu0 0
    %3837 = vmatpush1.bf16.msra.mxu0 %v3813
    %3838 = vmatprep.subr.bf16.mxu0 0
    %3839 = vmatpush1.bf16.msra.mxu0 0
    %3840 = vmatprep.subr.bf16.mxu0 0
    %3841 = vmatpush1.bf16.msra.mxu0 0
    %3842 = vmatprep.subr.bf16.mxu0 0
    %3843 = vmatpush1.bf16.msra.mxu0 0
    %3844 = vmatprep.subr.bf16.mxu0 0
    %3845 = vmatpush1.bf16.msra.mxu0 0
    %3846 = vmatprep.subr.bf16.mxu0 0
    %3847 = vmatpush1.bf16.msra.mxu0 0
    %3848 = vmatprep.subr.bf16.mxu0 0
    %3849 = vmatpush1.bf16.msra.mxu0 0
    %3850 = vmatprep.subr.bf16.mxu0 0
    %3851 = vmatpush1.bf16.msra.mxu0 0
    %3852 = vmatprep.subr.bf16.mxu0 0
    %3853 = vmatpush1.bf16.msra.mxu0 0
    %3854 = vmatprep.mubr.bf16.mxu0 0
    %3855 = vmatmul.mubr.bf16.gmra.mrb[0].mxu0 %v3749
    %v3856 = vpop.f32.mrb[0].mxu0
    %v3857 = vadd.f32 %v3772, %v3856
    %v3858 = vpop.f32.mrb[0].mxu0
    %v3859 = vpop.f32.mrb[0].mxu0
    %v3860 = vadd.f32 %v3772, %v3859
    %v3861 = vpop.f32.mrb[0].mxu0
    %3862 = vmatprep.mubr.bf16.mxu0 0
    %3863 = vmatmul.mubr.bf16.gmra.mrb[0].mxu0 %v3750
    %v3864 = vpop.f32.mrb[0].mxu0
    %v3865 = vadd.f32 %v3772, %v3864
    %v3866 = vpop.f32.mrb[0].mxu0
    %v3867 = vpop.f32.mrb[0].mxu0
    %v3868 = vadd.f32 %v3772, %v3867
    %v3869 = vpop.f32.mrb[0].mxu0
    %3870 = vdwg.mxu0
    %v3871 = vadd.f32 %v2214, %v3857
    %v3872 = vadd.f32 %v2215, %v3860
    %v3873 = vadd.f32 %v2216, %v3865
    %v3874 = vadd.f32 %v2217, %v3868
    %v3875 = vld [vmem:[%s12] sm:$0x1]
    %v3876 = vld [vmem:[%s13] sm:$0x1]
    %3877 = vadd.xlane.f32.xlu0 %v3871
    %v3878 = vpop.xlane.xlu0 %3877
    %3879 = vadd.xlane.f32.xlu0 %v3872
    %v3880 = vpop.xlane.xlu0 %3879
    %3881 = vadd.xlane.f32.xlu0 %v3873
    %v3882 = vpop.xlane.xlu0 %3881
    %v3883 = vsel %vm2226, %v3874, 0.0
    %3884 = vadd.xlane.f32.xlu0 %v3883
    %v3885 = vpop.xlane.xlu0 %3884
    %v3886 = vmul.f32 %v3878, %v2230
    %v3887 = vmul.f32 %v3880, %v2230
    %v3888 = vmul.f32 %v3882, %v2230
    %v3889 = vmul.f32 %v3885, %v2230
    %v3890 = vsub.f32 %v3871, %v3886
    %v3891 = vsub.f32 %v3872, %v3887
    %v3892 = vsub.f32 %v3873, %v3888
    %v3893 = vsub.f32 %v3874, %v3889
    %v3894 = vmul.f32 %v3890, %v3890
    %v3895 = vmul.f32 %v3891, %v3891
    %v3896 = vmul.f32 %v3892, %v3892
    %v3897 = vmul.f32 %v3893, %v3893
    %3898 = vadd.xlane.f32.xlu0 %v3894
    %v3899 = vpop.xlane.xlu0 %3898
    %3900 = vadd.xlane.f32.xlu0 %v3895
    %v3901 = vpop.xlane.xlu0 %3900
    %3902 = vadd.xlane.f32.xlu0 %v3896
    %v3903 = vpop.xlane.xlu0 %3902
    %v3904 = vsel %vm2226, %v3897, 0.0
    %3905 = vadd.xlane.f32.xlu0 %v3904
    %v3906 = vpop.xlane.xlu0 %3905
    %v3907 = vmul.f32 %v3899, %v2230
    %v3908 = vmul.f32 %v3901, %v2230
    %v3909 = vmul.f32 %v3903, %v2230
    %v3910 = vmul.f32 %v3906, %v2230
    %v3911 = vadd.f32 %v3907, 1e-06
    %v3912 = vadd.f32 %v3908, 1e-06
    %v3913 = vadd.f32 %v3909, 1e-06
    %v3914 = vadd.f32 %v3910, 1e-06
    %v3915 = vrsqrt.pop %v3911
    %v3916 = vrsqrt.pop %v3912
    %v3917 = vrsqrt.pop %v3913
    %v3918 = vrsqrt.pop %v3914
    %v3919 = vmul.f32 %v3890, %v3915
    %v3920 = vmul.f32 %v3891, %v3916
    %v3921 = vmul.f32 %v3892, %v3917
    %v3922 = vmul.f32 %v3893, %v3918
    %v3924 = vlaneseq
    %v3925 = vshrl.u32 %v3924, 7
    %v3926 = vsub.s32 0, %v3925
    %v3927 = vrot.slane %v3875, %v3926
    %v3929 = vmul.f32 %v3919, %v3927
    %v3930 = vmul.f32 %v3920, %v3927
    %v3931 = vmul.f32 %v3921, %v3927
    %v3932 = vmul.f32 %v3922, %v3927
    %v3934 = vlaneseq
    %v3935 = vshrl.u32 %v3934, 7
    %v3936 = vsub.s32 0, %v3935
    %v3937 = vrot.slane %v3876, %v3936
    %v3939 = vadd.f32 %v3929, %v3937
    %v3940 = vadd.f32 %v3930, %v3937
    %v3941 = vadd.f32 %v3931, %v3937
    %v3942 = vadd.f32 %v3932, %v3937
    %v3943 = vpack.c.bf16 %v3940, %v3939
    %v3944 = vpack.c.bf16 %v3942, %v3941
    %v3945 = vld [vmem:[%s14] sm:$0xff]
    %v3946 = vld [vmem:[%s14 + $0x8] sm:$0xff]
    %v3947 = vld [vmem:[%s14 + $0x10] sm:$0xff]
    %v3948 = vld [vmem:[%s14 + $0x18] sm:$0xff]
    %v3949 = vld [vmem:[%s14 + $0x20] sm:$0xff]
    %v3950 = vld [vmem:[%s14 + $0x28] sm:$0xff]
    %v3951 = vld [vmem:[%s14 + $0x30] sm:$0xff]
    %v3952 = vld [vmem:[%s14 + $0x38] sm:$0xff]
    %v3953 = vld [vmem:[%s14 + $0x40] sm:$0xff]
    %v3954 = vld [vmem:[%s14 + $0x48] sm:$0xff]
    %v3955 = vld [vmem:[%s14 + $0x50] sm:$0xff]
    %v3956 = vld [vmem:[%s14 + $0x58] sm:$0xff]
    %v3957 = vld [vmem:[%s14 + $0x60] sm:$0xff]
    %v3958 = vld [vmem:[%s14 + $0x68] sm:$0xff]
    %v3959 = vld [vmem:[%s14 + $0x70] sm:$0xff]
    %v3960 = vld [vmem:[%s14 + $0x78] sm:$0xff]
    %v3961 = vld [vmem:[%s15] sm:$0x3]
    %v3963 = vlaneseq
    %v3964 = vshrl.u32 %v3963, 7
    %v3965 = vsub.s32 0, %v3964
    %v3966 = vrot.slane %v3961, %v3965
    %v3967 = vlaneseq
    %v3968 = vshrl.u32 %v3967, 7
    %v3969 = vsub.s32 1, %v3968
    %v3970 = vrot.slane %v3961, %v3969
    %v3989 = vunpack.c.l.b16 %v3945
    %v3990 = vunpack.c.h.b16 %v3945
    %v3991 = vunpack.c.l.b16 %v3946
    %v3992 = vunpack.c.h.b16 %v3946
    %v3993 = vunpack.c.l.b16 %v3947
    %v3994 = vunpack.c.h.b16 %v3947
    %v3995 = vunpack.c.l.b16 %v3948
    %v3996 = vunpack.c.h.b16 %v3948
    %v3997 = vunpack.c.l.b16 %v3949
    %v3998 = vunpack.c.h.b16 %v3949
    %v3999 = vunpack.c.l.b16 %v3950
    %v4000 = vunpack.c.h.b16 %v3950
    %v4001 = vunpack.c.l.b16 %v3951
    %v4002 = vunpack.c.h.b16 %v3951
    %v4003 = vunpack.c.l.b16 %v3952
    %v4004 = vunpack.c.h.b16 %v3952
    %v4005 = vunpack.c.l.b16 %v3953
    %v4006 = vunpack.c.h.b16 %v3953
    %v4007 = vunpack.c.l.b16 %v3954
    %v4008 = vunpack.c.h.b16 %v3954
    %v4009 = vunpack.c.l.b16 %v3955
    %v4010 = vunpack.c.h.b16 %v3955
    %v4011 = vunpack.c.l.b16 %v3956
    %v4012 = vunpack.c.h.b16 %v3956
    %v4013 = vunpack.c.l.b16 %v3957
    %v4014 = vunpack.c.h.b16 %v3957
    %v4015 = vunpack.c.l.b16 %v3958
    %v4016 = vunpack.c.h.b16 %v3958
    %v4017 = vunpack.c.l.b16 %v3959
    %v4018 = vunpack.c.h.b16 %v3959
    %v4019 = vunpack.c.l.b16 %v3960
    %v4020 = vunpack.c.h.b16 %v3960
    %v4021 = vpack.c.b16 %v3991, %v3989
    %v4022 = vpack.c.b16 %v3992, %v3990
    %v4023 = vpack.c.b16 %v3995, %v3993
    %v4024 = vpack.c.b16 %v3996, %v3994
    %v4025 = vpack.c.b16 %v3999, %v3997
    %v4026 = vpack.c.b16 %v4000, %v3998
    %v4027 = vpack.c.b16 %v4003, %v4001
    %v4028 = vpack.c.b16 %v4004, %v4002
    %v4029 = vpack.c.b16 %v4007, %v4005
    %v4030 = vpack.c.b16 %v4008, %v4006
    %v4031 = vpack.c.b16 %v4011, %v4009
    %v4032 = vpack.c.b16 %v4012, %v4010
    %v4033 = vpack.c.b16 %v4015, %v4013
    %v4034 = vpack.c.b16 %v4016, %v4014
    %v4035 = vpack.c.b16 %v4019, %v4017
    %v4036 = vpack.c.b16 %v4020, %v4018
    %4053 = vmatprep.subr.bf16.mxu0 %v4022
    %4054 = vmatpush1.bf16.msra.mxu0 %v4021
    %4055 = vmatprep.subr.bf16.mxu0 %v4024
    %4056 = vmatpush1.bf16.msra.mxu0 %v4023
    %4057 = vmatprep.subr.bf16.mxu0 %v4026
    %4058 = vmatpush1.bf16.msra.mxu0 %v4025
    %4059 = vmatprep.subr.bf16.mxu0 %v4028
    %4060 = vmatpush1.bf16.msra.mxu0 %v4027
    %4061 = vmatprep.subr.bf16.mxu0 %v4030
    %4062 = vmatpush1.bf16.msra.mxu0 %v4029
    %4063 = vmatprep.subr.bf16.mxu0 %v4032
    %4064 = vmatpush1.bf16.msra.mxu0 %v4031
    %4065 = vmatprep.subr.bf16.mxu0 %v4034
    %4066 = vmatpush1.bf16.msra.mxu0 %v4033
    %4067 = vmatprep.subr.bf16.mxu0 %v4036
    %4068 = vmatpush1.bf16.msra.mxu0 %v4035
    %4069 = vmatprep.subr.bf16.mxu0 0
    %4070 = vmatpush1.bf16.msra.mxu0 0
    %4071 = vmatprep.subr.bf16.mxu0 0
    %4072 = vmatpush1.bf16.msra.mxu0 0
    %4073 = vmatprep.subr.bf16.mxu0 0
    %4074 = vmatpush1.bf16.msra.mxu0 0
    %4075 = vmatprep.subr.bf16.mxu0 0
    %4076 = vmatpush1.bf16.msra.mxu0 0
    %4077 = vmatprep.subr.bf16.mxu0 0
    %4078 = vmatpush1.bf16.msra.mxu0 0
    %4079 = vmatprep.subr.bf16.mxu0 0
    %4080 = vmatpush1.bf16.msra.mxu0 0
    %4081 = vmatprep.subr.bf16.mxu0 0
    %4082 = vmatpush1.bf16.msra.mxu0 0
    %4083 = vmatprep.subr.bf16.mxu0 0
    %4084 = vmatpush1.bf16.msra.mxu0 0
    %4085 = vmatprep.mubr.bf16.mxu0 0
    %4086 = vmatmul.mubr.bf16.gmra.mrb[0].mxu0 %v3943
    %v4087 = vpop.f32.mrb[0].mxu0
    %v4088 = vadd.f32 %v3966, %v4087
    %v4089 = vpop.f32.mrb[0].mxu0
    %v4090 = vadd.f32 %v3970, %v4089
    %v4091 = vpop.f32.mrb[0].mxu0
    %v4092 = vadd.f32 %v3966, %v4091
    %v4093 = vpop.f32.mrb[0].mxu0
    %v4094 = vadd.f32 %v3970, %v4093
    %4095 = vmatprep.mubr.bf16.mxu0 0
    %4096 = vmatmul.mubr.bf16.gmra.mrb[0].mxu0 %v3944
    %v4097 = vpop.f32.mrb[0].mxu0
    %v4098 = vadd.f32 %v3966, %v4097
    %v4099 = vpop.f32.mrb[0].mxu0
    %v4100 = vadd.f32 %v3970, %v4099
    %v4101 = vpop.f32.mrb[0].mxu0
    %v4102 = vadd.f32 %v3966, %v4101
    %v4103 = vpop.f32.mrb[0].mxu0
    %v4104 = vadd.f32 %v3970, %v4103
    %4105 = vdwg.mxu0
    %v4106 = vmul.f32 %v4088, 0.5
    %v4107 = vmul.f32 %v4090, 0.5
    %v4108 = vmul.f32 %v4092, 0.5
    %v4109 = vmul.f32 %v4094, 0.5
    %v4110 = vmul.f32 %v4098, 0.5
    %v4111 = vmul.f32 %v4100, 0.5
    %v4112 = vmul.f32 %v4102, 0.5
    %v4113 = vmul.f32 %v4104, 0.5
    %v4114 = vmul.f32 %v4088, 0.70710677
    %v4115 = vmul.f32 %v4090, 0.70710677
    %v4116 = vmul.f32 %v4092, 0.70710677
    %v4117 = vmul.f32 %v4094, 0.70710677
    %v4118 = vmul.f32 %v4098, 0.70710677
    %v4119 = vmul.f32 %v4100, 0.70710677
    %v4120 = vmul.f32 %v4102, 0.70710677
    %v4121 = vmul.f32 %v4104, 0.70710677
    %v4122 = vand.u32 2147483647, %v4114
    %v4123 = vand.u32 2147483647, %v4115
    %v4124 = vand.u32 2147483647, %v4116
    %v4125 = vand.u32 2147483647, %v4117
    %v4126 = vand.u32 2147483647, %v4118
    %v4127 = vand.u32 2147483647, %v4119
    %v4128 = vand.u32 2147483647, %v4120
    %v4129 = vand.u32 2147483647, %v4121
    %v4130 = vmul.f32 %v4122, 0.3275911
    %v4131 = vmul.f32 %v4123, 0.3275911
    %v4132 = vmul.f32 %v4124, 0.3275911
    %v4133 = vmul.f32 %v4125, 0.3275911
    %v4134 = vmul.f32 %v4126, 0.3275911
    %v4135 = vmul.f32 %v4127, 0.3275911
    %v4136 = vmul.f32 %v4128, 0.3275911
    %v4137 = vmul.f32 %v4129, 0.3275911
    %v4138 = vadd.f32 %v4130, 1.0
    %v4139 = vadd.f32 %v4131, 1.0
    %v4140 = vadd.f32 %v4132, 1.0
    %v4141 = vadd.f32 %v4133, 1.0
    %v4142 = vadd.f32 %v4134, 1.0
    %v4143 = vadd.f32 %v4135, 1.0
    %v4144 = vadd.f32 %v4136, 1.0
    %v4145 = vadd.f32 %v4137, 1.0
    %v4146 = vrcp.pop %v4138
    %v4147 = vrcp.pop %v4139
    %v4148 = vrcp.pop %v4140
    %v4149 = vrcp.pop %v4141
    %v4150 = vrcp.pop %v4142
    %v4151 = vrcp.pop %v4143
    %v4152 = vrcp.pop %v4144
    %v4153 = vrcp.pop %v4145
    %v4154 = vmul.f32 %v4146, 1.0614054
    %v4155 = vmul.f32 %v4147, 1.0614054
    %v4156 = vmul.f32 %v4148, 1.0614054
    %v4157 = vmul.f32 %v4149, 1.0614054
    %v4158 = vmul.f32 %v4150, 1.0614054
    %v4159 = vmul.f32 %v4151, 1.0614054
    %v4160 = vmul.f32 %v4152, 1.0614054
    %v4161 = vmul.f32 %v4153, 1.0614054
    %v4162 = vadd.f32 %v4154, -1.4531521
    %v4163 = vadd.f32 %v4155, -1.4531521
    %v4164 = vadd.f32 %v4156, -1.4531521
    %v4165 = vadd.f32 %v4157, -1.4531521
    %v4166 = vadd.f32 %v4158, -1.4531521
    %v4167 = vadd.f32 %v4159, -1.4531521
    %v4168 = vadd.f32 %v4160, -1.4531521
    %v4169 = vadd.f32 %v4161, -1.4531521
    %v4170 = vmul.f32 %v4162, %v4146
    %v4171 = vmul.f32 %v4163, %v4147
    %v4172 = vmul.f32 %v4164, %v4148
    %v4173 = vmul.f32 %v4165, %v4149
    %v4174 = vmul.f32 %v4166, %v4150
    %v4175 = vmul.f32 %v4167, %v4151
    %v4176 = vmul.f32 %v4168, %v4152
    %v4177 = vmul.f32 %v4169, %v4153
    %v4178 = vadd.f32 %v4170, 1.4214138
    %v4179 = vadd.f32 %v4171, 1.4214138
    %v4180 = vadd.f32 %v4172, 1.4214138
    %v4181 = vadd.f32 %v4173, 1.4214138
    %v4182 = vadd.f32 %v4174, 1.4214138
    %v4183 = vadd.f32 %v4175, 1.4214138
    %v4184 = vadd.f32 %v4176, 1.4214138
    %v4185 = vadd.f32 %v4177, 1.4214138
    %v4186 = vmul.f32 %v4178, %v4146
    %v4187 = vmul.f32 %v4179, %v4147
    %v4188 = vmul.f32 %v4180, %v4148
    %v4189 = vmul.f32 %v4181, %v4149
    %v4190 = vmul.f32 %v4182, %v4150
    %v4191 = vmul.f32 %v4183, %v4151
    %v4192 = vmul.f32 %v4184, %v4152
    %v4193 = vmul.f32 %v4185, %v4153
    %v4194 = vadd.f32 %v4186, -0.28449672
    %v4195 = vadd.f32 %v4187, -0.28449672
    %v4196 = vadd.f32 %v4188, -0.28449672
    %v4197 = vadd.f32 %v4189, -0.28449672
    %v4198 = vadd.f32 %v4190, -0.28449672
    %v4199 = vadd.f32 %v4191, -0.28449672
    %v4200 = vadd.f32 %v4192, -0.28449672
    %v4201 = vadd.f32 %v4193, -0.28449672
    %v4202 = vmul.f32 %v4194, %v4146
    %v4203 = vmul.f32 %v4195, %v4147
    %v4204 = vmul.f32 %v4196, %v4148
    %v4205 = vmul.f32 %v4197, %v4149
    %v4206 = vmul.f32 %v4198, %v4150
    %v4207 = vmul.f32 %v4199, %v4151
    %v4208 = vmul.f32 %v4200, %v4152
    %v4209 = vmul.f32 %v4201, %v4153
    %v4210 = vadd.f32 %v4202, 0.2548296
    %v4211 = vadd.f32 %v4203, 0.2548296
    %v4212 = vadd.f32 %v4204, 0.2548296
    %v4213 = vadd.f32 %v4205, 0.2548296
    %v4214 = vadd.f32 %v4206, 0.2548296
    %v4215 = vadd.f32 %v4207, 0.2548296
    %v4216 = vadd.f32 %v4208, 0.2548296
    %v4217 = vadd.f32 %v4209, 0.2548296
    %v4218 = vmul.f32 %v4210, %v4146
    %v4219 = vmul.f32 %v4211, %v4147
    %v4220 = vmul.f32 %v4212, %v4148
    %v4221 = vmul.f32 %v4213, %v4149
    %v4222 = vmul.f32 %v4214, %v4150
    %v4223 = vmul.f32 %v4215, %v4151
    %v4224 = vmul.f32 %v4216, %v4152
    %v4225 = vmul.f32 %v4217, %v4153
    %v4226 = vmul.f32 %v4122, %v4122
    %v4227 = vmul.f32 %v4123, %v4123
    %v4228 = vmul.f32 %v4124, %v4124
    %v4229 = vmul.f32 %v4125, %v4125
    %v4230 = vmul.f32 %v4126, %v4126
    %v4231 = vmul.f32 %v4127, %v4127
    %v4232 = vmul.f32 %v4128, %v4128
    %v4233 = vmul.f32 %v4129, %v4129
    %v4234 = vsub.f32 0.0, %v4226
    %v4235 = vsub.f32 0.0, %v4227
    %v4236 = vsub.f32 0.0, %v4228
    %v4237 = vsub.f32 0.0, %v4229
    %v4238 = vsub.f32 0.0, %v4230
    %v4239 = vsub.f32 0.0, %v4231
    %v4240 = vsub.f32 0.0, %v4232
    %v4241 = vsub.f32 0.0, %v4233
    %v4242 = vmul.f32 %v4234, 1.442695
    %v4243 = vpow.pop %v4242
    %v4244 = vmul.f32 %v4235, 1.442695
    %v4245 = vpow.pop %v4244
    %v4246 = vmul.f32 %v4236, 1.442695
    %v4247 = vpow.pop %v4246
    %v4248 = vmul.f32 %v4237, 1.442695
    %v4249 = vpow.pop %v4248
    %v4250 = vmul.f32 %v4238, 1.442695
    %v4251 = vpow.pop %v4250
    %v4252 = vmul.f32 %v4239, 1.442695
    %v4253 = vpow.pop %v4252
    %v4254 = vmul.f32 %v4240, 1.442695
    %v4255 = vpow.pop %v4254
    %v4256 = vmul.f32 %v4241, 1.442695
    %v4257 = vpow.pop %v4256
    %v4258 = vmul.f32 %v4218, %v4243
    %v4259 = vmul.f32 %v4219, %v4245
    %v4260 = vmul.f32 %v4220, %v4247
    %v4261 = vmul.f32 %v4221, %v4249
    %v4262 = vmul.f32 %v4222, %v4251
    %v4263 = vmul.f32 %v4223, %v4253
    %v4264 = vmul.f32 %v4224, %v4255
    %v4265 = vmul.f32 %v4225, %v4257
    %v4266 = vsub.f32 1.0, %v4258
    %v4267 = vsub.f32 1.0, %v4259
    %v4268 = vsub.f32 1.0, %v4260
    %v4269 = vsub.f32 1.0, %v4261
    %v4270 = vsub.f32 1.0, %v4262
    %v4271 = vsub.f32 1.0, %v4263
    %v4272 = vsub.f32 1.0, %v4264
    %v4273 = vsub.f32 1.0, %v4265
    %vm4274 = vcmp.ge.f32.partialorder %v4114, 0.0
    %vm4275 = vcmp.ge.f32.partialorder %v4115, 0.0
    %vm4276 = vcmp.ge.f32.partialorder %v4116, 0.0
    %vm4277 = vcmp.ge.f32.partialorder %v4117, 0.0
    %vm4278 = vcmp.ge.f32.partialorder %v4118, 0.0
    %vm4279 = vcmp.ge.f32.partialorder %v4119, 0.0
    %vm4280 = vcmp.ge.f32.partialorder %v4120, 0.0
    %vm4281 = vcmp.ge.f32.partialorder %v4121, 0.0
    %v4282 = vsub.f32 0.0, %v4266
    %v4283 = vsub.f32 0.0, %v4267
    %v4284 = vsub.f32 0.0, %v4268
    %v4285 = vsub.f32 0.0, %v4269
    %v4286 = vsub.f32 0.0, %v4270
    %v4287 = vsub.f32 0.0, %v4271
    %v4288 = vsub.f32 0.0, %v4272
    %v4289 = vsub.f32 0.0, %v4273
    %v4290 = vsel %vm4274, %v4266, %v4282
    %v4291 = vsel %vm4275, %v4267, %v4283
    %v4292 = vsel %vm4276, %v4268, %v4284
    %v4293 = vsel %vm4277, %v4269, %v4285
    %v4294 = vsel %vm4278, %v4270, %v4286
    %v4295 = vsel %vm4279, %v4271, %v4287
    %v4296 = vsel %vm4280, %v4272, %v4288
    %v4297 = vsel %vm4281, %v4273, %v4289
    %v4298 = vadd.f32 %v4290, 1.0
    %v4299 = vadd.f32 %v4291, 1.0
    %v4300 = vadd.f32 %v4292, 1.0
    %v4301 = vadd.f32 %v4293, 1.0
    %v4302 = vadd.f32 %v4294, 1.0
    %v4303 = vadd.f32 %v4295, 1.0
    %v4304 = vadd.f32 %v4296, 1.0
    %v4305 = vadd.f32 %v4297, 1.0
    %v4306 = vmul.f32 %v4106, %v4298
    %v4307 = vmul.f32 %v4107, %v4299
    %v4308 = vmul.f32 %v4108, %v4300
    %v4309 = vmul.f32 %v4109, %v4301
    %v4310 = vmul.f32 %v4110, %v4302
    %v4311 = vmul.f32 %v4111, %v4303
    %v4312 = vmul.f32 %v4112, %v4304
    %v4313 = vmul.f32 %v4113, %v4305
    %v4314 = vpack.c.bf16 %v4308, %v4306
    %v4315 = vpack.c.bf16 %v4309, %v4307
    %v4316 = vpack.c.bf16 %v4312, %v4310
    %v4317 = vpack.c.bf16 %v4313, %v4311
    %v4318 = vld [vmem:[%s16] sm:$0xf]
    %v4319 = vld [vmem:[%s16 + $0x4] sm:$0xf]
    %v4320 = vld [vmem:[%s16 + $0x8] sm:$0xf]
    %v4321 = vld [vmem:[%s16 + $0xc] sm:$0xf]
    %v4322 = vld [vmem:[%s16 + $0x10] sm:$0xf]
    %v4323 = vld [vmem:[%s16 + $0x14] sm:$0xf]
    %v4324 = vld [vmem:[%s16 + $0x18] sm:$0xf]
    %v4325 = vld [vmem:[%s16 + $0x1c] sm:$0xf]
    %v4326 = vld [vmem:[%s16 + $0x20] sm:$0xf]
    %v4327 = vld [vmem:[%s16 + $0x24] sm:$0xf]
    %v4328 = vld [vmem:[%s16 + $0x28] sm:$0xf]
    %v4329 = vld [vmem:[%s16 + $0x2c] sm:$0xf]
    %v4330 = vld [vmem:[%s16 + $0x30] sm:$0xf]
    %v4331 = vld [vmem:[%s16 + $0x34] sm:$0xf]
    %v4332 = vld [vmem:[%s16 + $0x38] sm:$0xf]
    %v4333 = vld [vmem:[%s16 + $0x3c] sm:$0xf]
    %v4334 = vld [vmem:[%s16 + $0x40] sm:$0xf]
    %v4335 = vld [vmem:[%s16 + $0x44] sm:$0xf]
    %v4336 = vld [vmem:[%s16 + $0x48] sm:$0xf]
    %v4337 = vld [vmem:[%s16 + $0x4c] sm:$0xf]
    %v4338 = vld [vmem:[%s16 + $0x50] sm:$0xf]
    %v4339 = vld [vmem:[%s16 + $0x54] sm:$0xf]
    %v4340 = vld [vmem:[%s16 + $0x58] sm:$0xf]
    %v4341 = vld [vmem:[%s16 + $0x5c] sm:$0xf]
    %v4342 = vld [vmem:[%s16 + $0x60] sm:$0xf]
    %v4343 = vld [vmem:[%s16 + $0x64] sm:$0xf]
    %v4344 = vld [vmem:[%s16 + $0x68] sm:$0xf]
    %v4345 = vld [vmem:[%s16 + $0x6c] sm:$0xf]
    %v4346 = vld [vmem:[%s16 + $0x70] sm:$0xf]
    %v4347 = vld [vmem:[%s16 + $0x74] sm:$0xf]
    %v4348 = vld [vmem:[%s16 + $0x78] sm:$0xf]
    %v4349 = vld [vmem:[%s16 + $0x7c] sm:$0xf]
    %v4350 = vld [vmem:[%s17] sm:$0x1]
    %v4352 = vlaneseq
    %v4353 = vshrl.u32 %v4352, 7
    %v4354 = vsub.s32 0, %v4353
    %v4355 = vrot.slane %v4350, %v4354
    %v4389 = vunpack.c.l.b16 %v4318
    %v4390 = vunpack.c.l.b16 %v4319
    %v4391 = vunpack.c.l.b16 %v4320
    %v4392 = vunpack.c.l.b16 %v4321
    %v4393 = vunpack.c.l.b16 %v4322
    %v4394 = vunpack.c.l.b16 %v4323
    %v4395 = vunpack.c.l.b16 %v4324
    %v4396 = vunpack.c.l.b16 %v4325
    %v4397 = vunpack.c.l.b16 %v4326
    %v4398 = vunpack.c.l.b16 %v4327
    %v4399 = vunpack.c.l.b16 %v4328
    %v4400 = vunpack.c.l.b16 %v4329
    %v4401 = vunpack.c.l.b16 %v4330
    %v4402 = vunpack.c.l.b16 %v4331
    %v4403 = vunpack.c.l.b16 %v4332
    %v4404 = vunpack.c.l.b16 %v4333
    %v4405 = vunpack.c.l.b16 %v4334
    %v4406 = vunpack.c.l.b16 %v4335
    %v4407 = vunpack.c.l.b16 %v4336
    %v4408 = vunpack.c.l.b16 %v4337
    %v4409 = vunpack.c.l.b16 %v4338
    %v4410 = vunpack.c.l.b16 %v4339
    %v4411 = vunpack.c.l.b16 %v4340
    %v4412 = vunpack.c.l.b16 %v4341
    %v4413 = vunpack.c.l.b16 %v4342
    %v4414 = vunpack.c.l.b16 %v4343
    %v4415 = vunpack.c.l.b16 %v4344
    %v4416 = vunpack.c.l.b16 %v4345
    %v4417 = vunpack.c.l.b16 %v4346
    %v4418 = vunpack.c.l.b16 %v4347
    %v4419 = vunpack.c.l.b16 %v4348
    %v4420 = vunpack.c.l.b16 %v4349
    %v4421 = vpack.c.b16 %v4390, %v4389
    %v4422 = vpack.c.b16 %v4392, %v4391
    %v4423 = vpack.c.b16 %v4394, %v4393
    %v4424 = vpack.c.b16 %v4396, %v4395
    %v4425 = vpack.c.b16 %v4398, %v4397
    %v4426 = vpack.c.b16 %v4400, %v4399
    %v4427 = vpack.c.b16 %v4402, %v4401
    %v4428 = vpack.c.b16 %v4404, %v4403
    %v4429 = vpack.c.b16 %v4406, %v4405
    %v4430 = vpack.c.b16 %v4408, %v4407
    %v4431 = vpack.c.b16 %v4410, %v4409
    %v4432 = vpack.c.b16 %v4412, %v4411
    %v4433 = vpack.c.b16 %v4414, %v4413
    %v4434 = vpack.c.b16 %v4416, %v4415
    %v4435 = vpack.c.b16 %v4418, %v4417
    %v4436 = vpack.c.b16 %v4420, %v4419
    %4453 = vmatprep.subr.bf16.mxu0 0
    %4454 = vmatpush1.bf16.msra.mxu0 %v4421
    %4455 = vmatprep.subr.bf16.mxu0 0
    %4456 = vmatpush1.bf16.msra.mxu0 %v4422
    %4457 = vmatprep.subr.bf16.mxu0 0
    %4458 = vmatpush1.bf16.msra.mxu0 %v4423
    %4459 = vmatprep.subr.bf16.mxu0 0
    %4460 = vmatpush1.bf16.msra.mxu0 %v4424
    %4461 = vmatprep.subr.bf16.mxu0 0
    %4462 = vmatpush1.bf16.msra.mxu0 %v4425
    %4463 = vmatprep.subr.bf16.mxu0 0
    %4464 = vmatpush1.bf16.msra.mxu0 %v4426
    %4465 = vmatprep.subr.bf16.mxu0 0
    %4466 = vmatpush1.bf16.msra.mxu0 %v4427
    %4467 = vmatprep.subr.bf16.mxu0 0
    %4468 = vmatpush1.bf16.msra.mxu0 %v4428
    %4469 = vmatprep.subr.bf16.mxu0 0
    %4470 = vmatpush1.bf16.msra.mxu0 %v4429
    %4471 = vmatprep.subr.bf16.mxu0 0
    %4472 = vmatpush1.bf16.msra.mxu0 %v4430
    %4473 = vmatprep.subr.bf16.mxu0 0
    %4474 = vmatpush1.bf16.msra.mxu0 %v4431
    %4475 = vmatprep.subr.bf16.mxu0 0
    %4476 = vmatpush1.bf16.msra.mxu0 %v4432
    %4477 = vmatprep.subr.bf16.mxu0 0
    %4478 = vmatpush1.bf16.msra.mxu0 %v4433
    %4479 = vmatprep.subr.bf16.mxu0 0
    %4480 = vmatpush1.bf16.msra.mxu0 %v4434
    %4481 = vmatprep.subr.bf16.mxu0 0
    %4482 = vmatpush1.bf16.msra.mxu0 %v4435
    %4483 = vmatprep.subr.bf16.mxu0 0
    %4484 = vmatpush1.bf16.msra.mxu0 %v4436
    %4485 = vmatprep.mubr.bf16.mxu0 %v4315
    %4486 = vmatmul.mubr.bf16.gmra.mrb[0].mxu0 %v4314
    %v4487 = vpop.f32.mrb[0].mxu0
    %v4488 = vadd.f32 %v4355, %v4487
    %v4489 = vpop.f32.mrb[0].mxu0
    %v4490 = vpop.f32.mrb[0].mxu0
    %v4491 = vadd.f32 %v4355, %v4490
    %v4492 = vpop.f32.mrb[0].mxu0
    %4493 = vmatprep.mubr.bf16.mxu0 %v4317
    %4494 = vmatmul.mubr.bf16.gmra.mrb[0].mxu0 %v4316
    %v4495 = vpop.f32.mrb[0].mxu0
    %v4496 = vadd.f32 %v4355, %v4495
    %v4497 = vpop.f32.mrb[0].mxu0
    %v4498 = vpop.f32.mrb[0].mxu0
    %v4499 = vadd.f32 %v4355, %v4498
    %v4500 = vpop.f32.mrb[0].mxu0
    %4501 = vdwg.mxu0
    %v4502 = vadd.f32 %v3871, %v4488
    %v4503 = vadd.f32 %v3872, %v4491
    %v4504 = vadd.f32 %v3873, %v4496
    %v4505 = vadd.f32 %v3874, %v4499
    %4506 = vst [vmem:[#allocation2] sm:$0xff] %v4502
    %4507 = vst [vmem:[#allocation2 + $0x8] sm:$0xff] %v4503
    %4508 = vst [vmem:[#allocation2 + $0x10] sm:$0xff] %v4504
    %4509 = vst [vmem:[#allocation2 + $0x18] sm:$0x3f] %v4505
    %s4510 = scalar_lea.vmem %s5, 16
    %v4511 = vld [vmem:[%s4510] sm:$0xff]
    %v4512 = vld [vmem:[%s4510 + $0x8] sm:$0x3]
    %4513 = vst [vmem:[#allocation2 + $0x5] sm:$0xff] %v4511
    %4514 = vst [vmem:[#allocation2 + $0xd] sm:$0x3] %v4512
    %v4515 = vld [vmem:[%s4510] sm:$0xff]
    %v4516 = vld [vmem:[%s4510 + $0x8] sm:$0x3]
    %4517 = vst [vmem:[#allocation2 + $0x14] sm:$0xff] %v4515
    %4518 = vst [vmem:[#allocation2 + $0x1c] sm:$0x3] %v4516
    %v4519 = vld [vmem:[#allocation2] sm:$0xff]
    %v4520 = vld [vmem:[#allocation2 + $0x8] sm:$0xff]
    %v4521 = vld [vmem:[#allocation2 + $0x10] sm:$0xff]
    %v4522 = vld [vmem:[#allocation2 + $0x18] sm:$0x3f]
    %s4523 = scalar_lea.vmem %s6, 1
    %v4524 = vld [vmem:[%s4523] sm:$0x1]
    %s4525 = scalar_lea.vmem %s7, 1
    %v4526 = vld [vmem:[%s4525] sm:$0x1]
    %4527 = vadd.xlane.f32.xlu0 %v4519
    %v4528 = vpop.xlane.xlu0 %4527
    %4529 = vadd.xlane.f32.xlu0 %v4520
    %v4530 = vpop.xlane.xlu0 %4529
    %4531 = vadd.xlane.f32.xlu0 %v4521
    %v4532 = vpop.xlane.xlu0 %4531
    %v4533 = vsel %vm2226, %v4522, 0.0
    %4534 = vadd.xlane.f32.xlu0 %v4533
    %v4535 = vpop.xlane.xlu0 %4534
    %v4536 = vmul.f32 %v4528, %v2230
    %v4537 = vmul.f32 %v4530, %v2230
    %v4538 = vmul.f32 %v4532, %v2230
    %v4539 = vmul.f32 %v4535, %v2230
    %v4540 = vsub.f32 %v4519, %v4536
    %v4541 = vsub.f32 %v4520, %v4537
    %v4542 = vsub.f32 %v4521, %v4538
    %v4543 = vsub.f32 %v4522, %v4539
    %v4544 = vmul.f32 %v4540, %v4540
    %v4545 = vmul.f32 %v4541, %v4541
    %v4546 = vmul.f32 %v4542, %v4542
    %v4547 = vmul.f32 %v4543, %v4543
    %4548 = vadd.xlane.f32.xlu0 %v4544
    %v4549 = vpop.xlane.xlu0 %4548
    %4550 = vadd.xlane.f32.xlu0 %v4545
    %v4551 = vpop.xlane.xlu0 %4550
    %4552 = vadd.xlane.f32.xlu0 %v4546
    %v4553 = vpop.xlane.xlu0 %4552
    %v4554 = vsel %vm2226, %v4547, 0.0
    %4555 = vadd.xlane.f32.xlu0 %v4554
    %v4556 = vpop.xlane.xlu0 %4555
    %v4557 = vmul.f32 %v4549, %v2230
    %v4558 = vmul.f32 %v4551, %v2230
    %v4559 = vmul.f32 %v4553, %v2230
    %v4560 = vmul.f32 %v4556, %v2230
    %v4561 = vadd.f32 %v4557, 1e-06
    %v4562 = vadd.f32 %v4558, 1e-06
    %v4563 = vadd.f32 %v4559, 1e-06
    %v4564 = vadd.f32 %v4560, 1e-06
    %v4565 = vrsqrt.pop %v4561
    %v4566 = vrsqrt.pop %v4562
    %v4567 = vrsqrt.pop %v4563
    %v4568 = vrsqrt.pop %v4564
    %v4569 = vmul.f32 %v4540, %v4565
    %v4570 = vmul.f32 %v4541, %v4566
    %v4571 = vmul.f32 %v4542, %v4567
    %v4572 = vmul.f32 %v4543, %v4568
    %v4574 = vlaneseq
    %v4575 = vshrl.u32 %v4574, 7
    %v4576 = vsub.s32 0, %v4575
    %v4577 = vrot.slane %v4524, %v4576
    %v4579 = vmul.f32 %v4569, %v4577
    %v4580 = vmul.f32 %v4570, %v4577
    %v4581 = vmul.f32 %v4571, %v4577
    %v4582 = vmul.f32 %v4572, %v4577
    %v4584 = vlaneseq
    %v4585 = vshrl.u32 %v4584, 7
    %v4586 = vsub.s32 0, %v4585
    %v4587 = vrot.slane %v4526, %v4586
    %v4589 = vadd.f32 %v4579, %v4587
    %v4590 = vadd.f32 %v4580, %v4587
    %v4591 = vadd.f32 %v4581, %v4587
    %v4592 = vadd.f32 %v4582, %v4587
    %v4593 = vpack.c.bf16 %v4590, %v4589
    %v4594 = vpack.c.bf16 %v4592, %v4591
    %s4595 = scalar_lea.vmem %s8, 192
    %v4596 = vld [vmem:[%s4595] sm:$0xff]
    %v4597 = vld [vmem:[%s4595 + $0x8] sm:$0xf]
    %v4598 = vld [vmem:[%s4595 + $0xc] sm:$0xff]
    %v4599 = vld [vmem:[%s4595 + $0x14] sm:$0xf]
    %v4600 = vld [vmem:[%s4595 + $0x18] sm:$0xff]
    %v4601 = vld [vmem:[%s4595 + $0x20] sm:$0xf]
    %v4602 = vld [vmem:[%s4595 + $0x24] sm:$0xff]
    %v4603 = vld [vmem:[%s4595 + $0x2c] sm:$0xf]
    %v4604 = vld [vmem:[%s4595 + $0x30] sm:$0xff]
    %v4605 = vld [vmem:[%s4595 + $0x38] sm:$0xf]
    %v4606 = vld [vmem:[%s4595 + $0x3c] sm:$0xff]
    %v4607 = vld [vmem:[%s4595 + $0x44] sm:$0xf]
    %v4608 = vld [vmem:[%s4595 + $0x48] sm:$0xff]
    %v4609 = vld [vmem:[%s4595 + $0x50] sm:$0xf]
    %v4610 = vld [vmem:[%s4595 + $0x54] sm:$0xff]
    %v4611 = vld [vmem:[%s4595 + $0x5c] sm:$0xf]
    %v4612 = vld [vmem:[%s4595 + $0x60] sm:$0xff]
    %v4613 = vld [vmem:[%s4595 + $0x68] sm:$0xf]
    %v4614 = vld [vmem:[%s4595 + $0x6c] sm:$0xff]
    %v4615 = vld [vmem:[%s4595 + $0x74] sm:$0xf]
    %v4616 = vld [vmem:[%s4595 + $0x78] sm:$0xff]
    %v4617 = vld [vmem:[%s4595 + $0x80] sm:$0xf]
    %v4618 = vld [vmem:[%s4595 + $0x84] sm:$0xff]
    %v4619 = vld [vmem:[%s4595 + $0x8c] sm:$0xf]
    %v4620 = vld [vmem:[%s4595 + $0x90] sm:$0xff]
    %v4621 = vld [vmem:[%s4595 + $0x98] sm:$0xf]
    %v4622 = vld [vmem:[%s4595 + $0x9c] sm:$0xff]
    %v4623 = vld [vmem:[%s4595 + $0xa4] sm:$0xf]
    %v4624 = vld [vmem:[%s4595 + $0xa8] sm:$0xff]
    %v4625 = vld [vmem:[%s4595 + $0xb0] sm:$0xf]
    %v4626 = vld [vmem:[%s4595 + $0xb4] sm:$0xff]
    %v4627 = vld [vmem:[%s4595 + $0xbc] sm:$0xf]
    %s4628 = scalar_lea.vmem %s9, 3
    %v4629 = vld [vmem:[%s4628] sm:$0x7]
    %v4631 = vlaneseq
    %v4632 = vshrl.u32 %v4631, 7
    %v4633 = vsub.s32 0, %v4632
    %v4634 = vrot.slane %v4629, %v4633
    %v4635 = vlaneseq
    %v4636 = vshrl.u32 %v4635, 7
    %v4637 = vsub.s32 1, %v4636
    %v4638 = vrot.slane %v4629, %v4637
    %v4639 = vlaneseq
    %v4640 = vshrl.u32 %v4639, 7
    %v4641 = vsub.s32 2, %v4640
    %v4642 = vrot.slane %v4629, %v4641
    %v4678 = vunpack.c.l.b16 %v4596
    %v4679 = vunpack.c.h.b16 %v4596
    %v4680 = vunpack.c.l.b16 %v4597
    %v4681 = vunpack.c.l.b16 %v4598
    %v4682 = vunpack.c.h.b16 %v4598
    %v4683 = vunpack.c.l.b16 %v4599
    %v4684 = vunpack.c.l.b16 %v4600
    %v4685 = vunpack.c.h.b16 %v4600
    %v4686 = vunpack.c.l.b16 %v4601
    %v4687 = vunpack.c.l.b16 %v4602
    %v4688 = vunpack.c.h.b16 %v4602
    %v4689 = vunpack.c.l.b16 %v4603
    %v4690 = vunpack.c.l.b16 %v4604
    %v4691 = vunpack.c.h.b16 %v4604
    %v4692 = vunpack.c.l.b16 %v4605
    %v4693 = vunpack.c.l.b16 %v4606
    %v4694 = vunpack.c.h.b16 %v4606
    %v4695 = vunpack.c.l.b16 %v4607
    %v4696 = vunpack.c.l.b16 %v4608
    %v4697 = vunpack.c.h.b16 %v4608
    %v4698 = vunpack.c.l.b16 %v4609
    %v4699 = vunpack.c.l.b16 %v4610
    %v4700 = vunpack.c.h.b16 %v4610
    %v4701 = vunpack.c.l.b16 %v4611
    %v4702 = vunpack.c.l.b16 %v4612
    %v4703 = vunpack.c.h.b16 %v4612
    %v4704 = vunpack.c.l.b16 %v4613
    %v4705 = vunpack.c.l.b16 %v4614
    %v4706 = vunpack.c.h.b16 %v4614
    %v4707 = vunpack.c.l.b16 %v4615
    %v4708 = vunpack.c.l.b16 %v4616
    %v4709 = vunpack.c.h.b16 %v4616
    %v4710 = vunpack.c.l.b16 %v4617
    %v4711 = vunpack.c.l.b16 %v4618
    %v4712 = vunpack.c.h.b16 %v4618
    %v4713 = vunpack.c.l.b16 %v4619
    %v4714 = vunpack.c.l.b16 %v4620
    %v4715 = vunpack.c.h.b16 %v4620
    %v4716 = vunpack.c.l.b16 %v4621
    %v4717 = vunpack.c.l.b16 %v4622
    %v4718 = vunpack.c.h.b16 %v4622
    %v4719 = vunpack.c.l.b16 %v4623
    %v4720 = vunpack.c.l.b16 %v4624
    %v4721 = vunpack.c.h.b16 %v4624
    %v4722 = vunpack.c.l.b16 %v4625
    %v4723 = vunpack.c.l.b16 %v4626
    %v4724 = vunpack.c.h.b16 %v4626
    %v4725 = vunpack.c.l.b16 %v4627
    %v4726 = vpack.c.b16 %v4681, %v4678
    %v4727 = vpack.c.b16 %v4682, %v4679
    %v4728 = vpack.c.b16 %v4683, %v4680
    %v4729 = vpack.c.b16 %v4687, %v4684
    %v4730 = vpack.c.b16 %v4688, %v4685
    %v4731 = vpack.c.b16 %v4689, %v4686
    %v4732 = vpack.c.b16 %v4693, %v4690
    %v4733 = vpack.c.b16 %v4694, %v4691
    %v4734 = vpack.c.b16 %v4695, %v4692
    %v4735 = vpack.c.b16 %v4699, %v4696
    %v4736 = vpack.c.b16 %v4700, %v4697
    %v4737 = vpack.c.b16 %v4701, %v4698
    %v4738 = vpack.c.b16 %v4705, %v4702
    %v4739 = vpack.c.b16 %v4706, %v4703
    %v4740 = vpack.c.b16 %v4707, %v4704
    %v4741 = vpack.c.b16 %v4711, %v4708
    %v4742 = vpack.c.b16 %v4712, %v4709
    %v4743 = vpack.c.b16 %v4713, %v4710
    %v4744 = vpack.c.b16 %v4717, %v4714
    %v4745 = vpack.c.b16 %v4718, %v4715
    %v4746 = vpack.c.b16 %v4719, %v4716
    %v4747 = vpack.c.b16 %v4723, %v4720
    %v4748 = vpack.c.b16 %v4724, %v4721
    %v4749 = vpack.c.b16 %v4725, %v4722
    %4774 = vmatprep.subr.bf16.mxu0 %v4727
    %4775 = vmatpush1.bf16.msra.mxu0 %v4726
    %4776 = vmatprep.subr.bf16.mxu0 %v4730
    %4777 = vmatpush1.bf16.msra.mxu0 %v4729
    %4778 = vmatprep.subr.bf16.mxu0 %v4733
    %4779 = vmatpush1.bf16.msra.mxu0 %v4732
    %4780 = vmatprep.subr.bf16.mxu0 %v4736
    %4781 = vmatpush1.bf16.msra.mxu0 %v4735
    %4782 = vmatprep.subr.bf16.mxu0 %v4739
    %4783 = vmatpush1.bf16.msra.mxu0 %v4738
    %4784 = vmatprep.subr.bf16.mxu0 %v4742
    %4785 = vmatpush1.bf16.msra.mxu0 %v4741
    %4786 = vmatprep.subr.bf16.mxu0 %v4745
    %4787 = vmatpush1.bf16.msra.mxu0 %v4744
    %4788 = vmatprep.subr.bf16.mxu0 %v4748
    %4789 = vmatpush1.bf16.msra.mxu0 %v4747
    %4790 = vmatprep.subr.bf16.mxu0 0
    %4791 = vmatpush1.bf16.msra.mxu0 0
    %4792 = vmatprep.subr.bf16.mxu0 0
    %4793 = vmatpush1.bf16.msra.mxu0 0
    %4794 = vmatprep.subr.bf16.mxu0 0
    %4795 = vmatpush1.bf16.msra.mxu0 0
    %4796 = vmatprep.subr.bf16.mxu0 0
    %4797 = vmatpush1.bf16.msra.mxu0 0
    %4798 = vmatprep.subr.bf16.mxu0 0
    %4799 = vmatpush1.bf16.msra.mxu0 0
    %4800 = vmatprep.subr.bf16.mxu0 0
    %4801 = vmatpush1.bf16.msra.mxu0 0
    %4802 = vmatprep.subr.bf16.mxu0 0
    %4803 = vmatpush1.bf16.msra.mxu0 0
    %4804 = vmatprep.subr.bf16.mxu0 0
    %4805 = vmatpush1.bf16.msra.mxu0 0
    %4806 = vmatprep.mubr.bf16.mxu0 0
    %4807 = vmatmul.mubr.bf16.gmra.mrb[0].mxu0 %v4593
    %v4808 = vpop.f32.mrb[0].mxu0
    %v4809 = vadd.f32 %v4634, %v4808
    %v4810 = vpop.f32.mrb[0].mxu0
    %v4811 = vadd.f32 %v4638, %v4810
    %v4812 = vpop.f32.mrb[0].mxu0
    %v4813 = vadd.f32 %v4634, %v4812
    %v4814 = vpop.f32.mrb[0].mxu0
    %v4815 = vadd.f32 %v4638, %v4814
    %4816 = vmatprep.mubr.bf16.mxu0 0
    %4817 = vmatmul.mubr.bf16.gmra.mrb[0].mxu0 %v4594
    %v4818 = vpop.f32.mrb[0].mxu0
    %v4819 = vadd.f32 %v4634, %v4818
    %v4820 = vpop.f32.mrb[0].mxu0
    %v4821 = vadd.f32 %v4638, %v4820
    %v4822 = vpop.f32.mrb[0].mxu0
    %v4823 = vadd.f32 %v4634, %v4822
    %v4824 = vpop.f32.mrb[0].mxu0
    %v4825 = vadd.f32 %v4638, %v4824
    %4826 = vdwg.mxu0
    %4827 = vmatprep.subr.bf16.mxu0 0
    %4828 = vmatpush1.bf16.msra.mxu0 %v4728
    %4829 = vmatprep.subr.bf16.mxu0 0
    %4830 = vmatpush1.bf16.msra.mxu0 %v4731
    %4831 = vmatprep.subr.bf16.mxu0 0
    %4832 = vmatpush1.bf16.msra.mxu0 %v4734
    %4833 = vmatprep.subr.bf16.mxu0 0
    %4834 = vmatpush1.bf16.msra.mxu0 %v4737
    %4835 = vmatprep.subr.bf16.mxu0 0
    %4836 = vmatpush1.bf16.msra.mxu0 %v4740
    %4837 = vmatprep.subr.bf16.mxu0 0
    %4838 = vmatpush1.bf16.msra.mxu0 %v4743
    %4839 = vmatprep.subr.bf16.mxu0 0
    %4840 = vmatpush1.bf16.msra.mxu0 %v4746
    %4841 = vmatprep.subr.bf16.mxu0 0
    %4842 = vmatpush1.bf16.msra.mxu0 %v4749
    %4843 = vmatprep.subr.bf16.mxu0 0
    %4844 = vmatpush1.bf16.msra.mxu0 0
    %4845 = vmatprep.subr.bf16.mxu0 0
    %4846 = vmatpush1.bf16.msra.mxu0 0
    %4847 = vmatprep.subr.bf16.mxu0 0
    %4848 = vmatpush1.bf16.msra.mxu0 0
    %4849 = vmatprep.subr.bf16.mxu0 0
    %4850 = vmatpush1.bf16.msra.mxu0 0
    %4851 = vmatprep.subr.bf16.mxu0 0
    %4852 = vmatpush1.bf16.msra.mxu0 0
    %4853 = vmatprep.subr.bf16.mxu0 0
    %4854 = vmatpush1.bf16.msra.mxu0 0
    %4855 = vmatprep.subr.bf16.mxu0 0
    %4856 = vmatpush1.bf16.msra.mxu0 0
    %4857 = vmatprep.subr.bf16.mxu0 0
    %4858 = vmatpush1.bf16.msra.mxu0 0
    %4859 = vmatprep.mubr.bf16.mxu0 0
    %4860 = vmatmul.mubr.bf16.gmra.mrb[0].mxu0 %v4593
    %v4861 = vpop.f32.mrb[0].mxu0
    %v4862 = vadd.f32 %v4642, %v4861
    %v4863 = vpop.f32.mrb[0].mxu0
    %v4864 = vpop.f32.mrb[0].mxu0
    %v4865 = vadd.f32 %v4642, %v4864
    %v4866 = vpop.f32.mrb[0].mxu0
    %4867 = vmatprep.mubr.bf16.mxu0 0
    %4868 = vmatmul.mubr.bf16.gmra.mrb[0].mxu0 %v4594
    %v4869 = vpop.f32.mrb[0].mxu0
    %v4870 = vadd.f32 %v4642, %v4869
    %v4871 = vpop.f32.mrb[0].mxu0
    %v4872 = vpop.f32.mrb[0].mxu0
    %v4873 = vadd.f32 %v4642, %v4872
    %v4874 = vpop.f32.mrb[0].mxu0
    %4875 = vdwg.mxu0
    %4878 = vrot.lane.b32.xlu0 %v4809, 96
    %v4879 = vpop.permute.xlu0 %4878
    %4880 = vrot.lane.b32.xlu0 %v4813, 96
    %v4881 = vpop.permute.xlu0 %4880
    %4884 = vrot.lane.b32.xlu0 %v4809, 64
    %v4885 = vpop.permute.xlu0 %4884
    %4886 = vrot.lane.b32.xlu0 %v4813, 64
    %v4887 = vpop.permute.xlu0 %4886
    %4890 = vrot.lane.b32.xlu0 %v4809, 32
    %v4891 = vpop.permute.xlu0 %4890
    %4892 = vrot.lane.b32.xlu0 %v4813, 32
    %v4893 = vpop.permute.xlu0 %4892
    %v4898 = vrot.slane %v4813, 7
    %v4899 = vrot.slane %v4819, 7
    %v4900 = vsel %vm2591, %v4898, %v4899
    %v4901 = vrot.slane %v4823, 7
    %v4902 = vsel %vm2591, %v4899, %v4901
    %4905 = vrot.lane.b32.xlu0 %v4900, 96
    %v4906 = vpop.permute.xlu0 %4905
    %4907 = vrot.lane.b32.xlu0 %v4902, 96
    %v4908 = vpop.permute.xlu0 %4907
    %4911 = vrot.lane.b32.xlu0 %v4900, 64
    %v4912 = vpop.permute.xlu0 %4911
    %4913 = vrot.lane.b32.xlu0 %v4902, 64
    %v4914 = vpop.permute.xlu0 %4913
    %4917 = vrot.lane.b32.xlu0 %v4900, 32
    %v4918 = vpop.permute.xlu0 %4917
    %4919 = vrot.lane.b32.xlu0 %v4902, 32
    %v4920 = vpop.permute.xlu0 %4919
    %v4923 = vpack.c.bf16 %v4813, %v4809
    %v4924 = vpack.c.bf16 %v4881, %v4879
    %v4925 = vpack.c.bf16 %v4887, %v4885
    %v4926 = vpack.c.bf16 %v4893, %v4891
    %v4927 = vpack.c.bf16 %v4902, %v4900
    %v4928 = vpack.c.bf16 %v4908, %v4906
    %v4929 = vpack.c.bf16 %v4914, %v4912
    %v4930 = vpack.c.bf16 %v4920, %v4918
    %4933 = vrot.lane.b32.xlu0 %v4811, 96
    %v4934 = vpop.permute.xlu0 %4933
    %4935 = vrot.lane.b32.xlu0 %v4815, 96
    %v4936 = vpop.permute.xlu0 %4935
    %4939 = vrot.lane.b32.xlu0 %v4811, 64
    %v4940 = vpop.permute.xlu0 %4939
    %4941 = vrot.lane.b32.xlu0 %v4815, 64
    %v4942 = vpop.permute.xlu0 %4941
    %4945 = vrot.lane.b32.xlu0 %v4811, 32
    %v4946 = vpop.permute.xlu0 %4945
    %4947 = vrot.lane.b32.xlu0 %v4815, 32
    %v4948 = vpop.permute.xlu0 %4947
    %v4953 = vrot.slane %v4815, 7
    %v4954 = vrot.slane %v4821, 7
    %v4955 = vsel %vm2591, %v4953, %v4954
    %v4956 = vrot.slane %v4825, 7
    %v4957 = vsel %vm2591, %v4954, %v4956
    %4960 = vrot.lane.b32.xlu0 %v4955, 96
    %v4961 = vpop.permute.xlu0 %4960
    %4962 = vrot.lane.b32.xlu0 %v4957, 96
    %v4963 = vpop.permute.xlu0 %4962
    %4966 = vrot.lane.b32.xlu0 %v4955, 64
    %v4967 = vpop.permute.xlu0 %4966
    %4968 = vrot.lane.b32.xlu0 %v4957, 64
    %v4969 = vpop.permute.xlu0 %4968
    %4972 = vrot.lane.b32.xlu0 %v4955, 32
    %v4973 = vpop.permute.xlu0 %4972
    %4974 = vrot.lane.b32.xlu0 %v4957, 32
    %v4975 = vpop.permute.xlu0 %4974
    %v4978 = vpack.c.bf16 %v4815, %v4811
    %v4979 = vpack.c.bf16 %v4936, %v4934
    %v4980 = vpack.c.bf16 %v4942, %v4940
    %v4981 = vpack.c.bf16 %v4948, %v4946
    %v4982 = vpack.c.bf16 %v4957, %v4955
    %v4983 = vpack.c.bf16 %v4963, %v4961
    %v4984 = vpack.c.bf16 %v4969, %v4967
    %v4985 = vpack.c.bf16 %v4975, %v4973
    %4988 = vrot.lane.b32.xlu0 %v4862, 96
    %v4989 = vpop.permute.xlu0 %4988
    %4990 = vrot.lane.b32.xlu0 %v4865, 96
    %v4991 = vpop.permute.xlu0 %4990
    %4994 = vrot.lane.b32.xlu0 %v4862, 64
    %v4995 = vpop.permute.xlu0 %4994
    %4996 = vrot.lane.b32.xlu0 %v4865, 64
    %v4997 = vpop.permute.xlu0 %4996
    %5000 = vrot.lane.b32.xlu0 %v4862, 32
    %v5001 = vpop.permute.xlu0 %5000
    %5002 = vrot.lane.b32.xlu0 %v4865, 32
    %v5003 = vpop.permute.xlu0 %5002
    %v5008 = vrot.slane %v4865, 7
    %v5009 = vrot.slane %v4870, 7
    %v5010 = vsel %vm2591, %v5008, %v5009
    %v5011 = vrot.slane %v4873, 7
    %v5012 = vsel %vm2591, %v5009, %v5011
    %5015 = vrot.lane.b32.xlu0 %v5010, 96
    %v5016 = vpop.permute.xlu0 %5015
    %5017 = vrot.lane.b32.xlu0 %v5012, 96
    %v5018 = vpop.permute.xlu0 %5017
    %5021 = vrot.lane.b32.xlu0 %v5010, 64
    %v5022 = vpop.permute.xlu0 %5021
    %5023 = vrot.lane.b32.xlu0 %v5012, 64
    %v5024 = vpop.permute.xlu0 %5023
    %5027 = vrot.lane.b32.xlu0 %v5010, 32
    %v5028 = vpop.permute.xlu0 %5027
    %5029 = vrot.lane.b32.xlu0 %v5012, 32
    %v5030 = vpop.permute.xlu0 %5029
    %v5033 = vpack.c.bf16 %v4865, %v4862
    %v5034 = vpack.c.bf16 %v4991, %v4989
    %v5035 = vpack.c.bf16 %v4997, %v4995
    %v5036 = vpack.c.bf16 %v5003, %v5001
    %v5037 = vpack.c.bf16 %v5012, %v5010
    %v5038 = vpack.c.bf16 %v5018, %v5016
    %v5039 = vpack.c.bf16 %v5024, %v5022
    %v5040 = vpack.c.bf16 %v5030, %v5028
    %v5042 = vsel %vm2735, %v4923, 0
    %v5045 = vsel %vm2735, %v4978, 0
    %5047 = vmatprep.subr.bf16.mxu0 0
    %5048 = vmatpush1.bf16.xpose.msra.mxu0 %v5045
    %5049 = vmatprep.subr.bf16.mxu0 0
    %5050 = vmatpush1.bf16.xpose.msra.mxu0 0
    %5051 = vmatprep.subr.bf16.mxu0 0
    %5052 = vmatpush1.bf16.xpose.msra.mxu0 0
    %5053 = vmatprep.subr.bf16.mxu0 0
    %5054 = vmatpush1.bf16.xpose.msra.mxu0 0
    %5055 = vmatprep.subr.bf16.mxu0 0
    %5056 = vmatpush1.bf16.xpose.msra.mxu0 0
    %5057 = vmatprep.subr.bf16.mxu0 0
    %5058 = vmatpush1.bf16.xpose.msra.mxu0 0
    %5059 = vmatprep.subr.bf16.mxu0 0
    %5060 = vmatpush1.bf16.xpose.msra.mxu0 0
    %5061 = vmatprep.subr.bf16.mxu0 0
    %5062 = vmatpush1.bf16.xpose.msra.mxu0 0
    %5063 = vmatprep.subr.bf16.mxu0 0
    %5064 = vmatpush1.bf16.xpose.msra.mxu0 0
    %5065 = vmatprep.subr.bf16.mxu0 0
    %5066 = vmatpush1.bf16.xpose.msra.mxu0 0
    %5067 = vmatprep.subr.bf16.mxu0 0
    %5068 = vmatpush1.bf16.xpose.msra.mxu0 0
    %5069 = vmatprep.subr.bf16.mxu0 0
    %5070 = vmatpush1.bf16.xpose.msra.mxu0 0
    %5071 = vmatprep.subr.bf16.mxu0 0
    %5072 = vmatpush1.bf16.xpose.msra.mxu0 0
    %5073 = vmatprep.subr.bf16.mxu0 0
    %5074 = vmatpush1.bf16.xpose.msra.mxu0 0
    %5075 = vmatprep.subr.bf16.mxu0 0
    %5076 = vmatpush1.bf16.xpose.msra.mxu0 0
    %5077 = vmatprep.subr.bf16.mxu0 0
    %5078 = vmatpush1.bf16.xpose.msra.mxu0 0
    %5079 = vmatprep.mubr.bf16.mxu0 0
    %5080 = vmatmul.mubr.bf16.gmra.mrb[0].mxu0 %v5042
    %v5081 = vpop.f32.mrb[0].mxu0
    %v5082 = vadd.f32 0.0, %v5081
    %v5083 = vpop.f32.mrb[0].mxu0
    %v5084 = vpop.f32.mrb[0].mxu0
    %v5085 = vadd.f32 0.0, %v5084
    %v5086 = vpop.f32.mrb[0].mxu0
    %5087 = vdwg.mxu0
    %v5089 = vsel %vm2735, %v4924, 0
    %v5092 = vsel %vm2735, %v4979, 0
    %5094 = vmatprep.subr.bf16.mxu0 0
    %5095 = vmatpush1.bf16.xpose.msra.mxu0 %v5092
    %5096 = vmatprep.subr.bf16.mxu0 0
    %5097 = vmatpush1.bf16.xpose.msra.mxu0 0
    %5098 = vmatprep.subr.bf16.mxu0 0
    %5099 = vmatpush1.bf16.xpose.msra.mxu0 0
    %5100 = vmatprep.subr.bf16.mxu0 0
    %5101 = vmatpush1.bf16.xpose.msra.mxu0 0
    %5102 = vmatprep.subr.bf16.mxu0 0
    %5103 = vmatpush1.bf16.xpose.msra.mxu0 0
    %5104 = vmatprep.subr.bf16.mxu0 0
    %5105 = vmatpush1.bf16.xpose.msra.mxu0 0
    %5106 = vmatprep.subr.bf16.mxu0 0
    %5107 = vmatpush1.bf16.xpose.msra.mxu0 0
    %5108 = vmatprep.subr.bf16.mxu0 0
    %5109 = vmatpush1.bf16.xpose.msra.mxu0 0
    %5110 = vmatprep.subr.bf16.mxu0 0
    %5111 = vmatpush1.bf16.xpose.msra.mxu0 0
    %5112 = vmatprep.subr.bf16.mxu0 0
    %5113 = vmatpush1.bf16.xpose.msra.mxu0 0
    %5114 = vmatprep.subr.bf16.mxu0 0
    %5115 = vmatpush1.bf16.xpose.msra.mxu0 0
    %5116 = vmatprep.subr.bf16.mxu0 0
    %5117 = vmatpush1.bf16.xpose.msra.mxu0 0
    %5118 = vmatprep.subr.bf16.mxu0 0
    %5119 = vmatpush1.bf16.xpose.msra.mxu0 0
    %5120 = vmatprep.subr.bf16.mxu0 0
    %5121 = vmatpush1.bf16.xpose.msra.mxu0 0
    %5122 = vmatprep.subr.bf16.mxu0 0
    %5123 = vmatpush1.bf16.xpose.msra.mxu0 0
    %5124 = vmatprep.subr.bf16.mxu0 0
    %5125 = vmatpush1.bf16.xpose.msra.mxu0 0
    %5126 = vmatprep.mubr.bf16.mxu0 0
    %5127 = vmatmul.mubr.bf16.gmra.mrb[0].mxu0 %v5089
    %v5128 = vpop.f32.mrb[0].mxu0
    %v5129 = vadd.f32 0.0, %v5128
    %v5130 = vpop.f32.mrb[0].mxu0
    %v5131 = vpop.f32.mrb[0].mxu0
    %v5132 = vadd.f32 0.0, %v5131
    %v5133 = vpop.f32.mrb[0].mxu0
    %5134 = vdwg.mxu0
    %v5136 = vsel %vm2735, %v4925, 0
    %v5139 = vsel %vm2735, %v4980, 0
    %5141 = vmatprep.subr.bf16.mxu0 0
    %5142 = vmatpush1.bf16.xpose.msra.mxu0 %v5139
    %5143 = vmatprep.subr.bf16.mxu0 0
    %5144 = vmatpush1.bf16.xpose.msra.mxu0 0
    %5145 = vmatprep.subr.bf16.mxu0 0
    %5146 = vmatpush1.bf16.xpose.msra.mxu0 0
    %5147 = vmatprep.subr.bf16.mxu0 0
    %5148 = vmatpush1.bf16.xpose.msra.mxu0 0
    %5149 = vmatprep.subr.bf16.mxu0 0
    %5150 = vmatpush1.bf16.xpose.msra.mxu0 0
    %5151 = vmatprep.subr.bf16.mxu0 0
    %5152 = vmatpush1.bf16.xpose.msra.mxu0 0
    %5153 = vmatprep.subr.bf16.mxu0 0
    %5154 = vmatpush1.bf16.xpose.msra.mxu0 0
    %5155 = vmatprep.subr.bf16.mxu0 0
    %5156 = vmatpush1.bf16.xpose.msra.mxu0 0
    %5157 = vmatprep.subr.bf16.mxu0 0
    %5158 = vmatpush1.bf16.xpose.msra.mxu0 0
    %5159 = vmatprep.subr.bf16.mxu0 0
    %5160 = vmatpush1.bf16.xpose.msra.mxu0 0
    %5161 = vmatprep.subr.bf16.mxu0 0
    %5162 = vmatpush1.bf16.xpose.msra.mxu0 0
    %5163 = vmatprep.subr.bf16.mxu0 0
    %5164 = vmatpush1.bf16.xpose.msra.mxu0 0
    %5165 = vmatprep.subr.bf16.mxu0 0
    %5166 = vmatpush1.bf16.xpose.msra.mxu0 0
    %5167 = vmatprep.subr.bf16.mxu0 0
    %5168 = vmatpush1.bf16.xpose.msra.mxu0 0
    %5169 = vmatprep.subr.bf16.mxu0 0
    %5170 = vmatpush1.bf16.xpose.msra.mxu0 0
    %5171 = vmatprep.subr.bf16.mxu0 0
    %5172 = vmatpush1.bf16.xpose.msra.mxu0 0
    %5173 = vmatprep.mubr.bf16.mxu0 0
    %5174 = vmatmul.mubr.bf16.gmra.mrb[0].mxu0 %v5136
    %v5175 = vpop.f32.mrb[0].mxu0
    %v5176 = vadd.f32 0.0, %v5175
    %v5177 = vpop.f32.mrb[0].mxu0
    %v5178 = vpop.f32.mrb[0].mxu0
    %v5179 = vadd.f32 0.0, %v5178
    %v5180 = vpop.f32.mrb[0].mxu0
    %5181 = vdwg.mxu0
    %v5183 = vsel %vm2735, %v4926, 0
    %v5186 = vsel %vm2735, %v4981, 0
    %5188 = vmatprep.subr.bf16.mxu0 0
    %5189 = vmatpush1.bf16.xpose.msra.mxu0 %v5186
    %5190 = vmatprep.subr.bf16.mxu0 0
    %5191 = vmatpush1.bf16.xpose.msra.mxu0 0
    %5192 = vmatprep.subr.bf16.mxu0 0
    %5193 = vmatpush1.bf16.xpose.msra.mxu0 0
    %5194 = vmatprep.subr.bf16.mxu0 0
    %5195 = vmatpush1.bf16.xpose.msra.mxu0 0
    %5196 = vmatprep.subr.bf16.mxu0 0
    %5197 = vmatpush1.bf16.xpose.msra.mxu0 0
    %5198 = vmatprep.subr.bf16.mxu0 0
    %5199 = vmatpush1.bf16.xpose.msra.mxu0 0
    %5200 = vmatprep.subr.bf16.mxu0 0
    %5201 = vmatpush1.bf16.xpose.msra.mxu0 0
    %5202 = vmatprep.subr.bf16.mxu0 0
    %5203 = vmatpush1.bf16.xpose.msra.mxu0 0
    %5204 = vmatprep.subr.bf16.mxu0 0
    %5205 = vmatpush1.bf16.xpose.msra.mxu0 0
    %5206 = vmatprep.subr.bf16.mxu0 0
    %5207 = vmatpush1.bf16.xpose.msra.mxu0 0
    %5208 = vmatprep.subr.bf16.mxu0 0
    %5209 = vmatpush1.bf16.xpose.msra.mxu0 0
    %5210 = vmatprep.subr.bf16.mxu0 0
    %5211 = vmatpush1.bf16.xpose.msra.mxu0 0
    %5212 = vmatprep.subr.bf16.mxu0 0
    %5213 = vmatpush1.bf16.xpose.msra.mxu0 0
    %5214 = vmatprep.subr.bf16.mxu0 0
    %5215 = vmatpush1.bf16.xpose.msra.mxu0 0
    %5216 = vmatprep.subr.bf16.mxu0 0
    %5217 = vmatpush1.bf16.xpose.msra.mxu0 0
    %5218 = vmatprep.subr.bf16.mxu0 0
    %5219 = vmatpush1.bf16.xpose.msra.mxu0 0
    %5220 = vmatprep.mubr.bf16.mxu0 0
    %5221 = vmatmul.mubr.bf16.gmra.mrb[0].mxu0 %v5183
    %v5222 = vpop.f32.mrb[0].mxu0
    %v5223 = vadd.f32 0.0, %v5222
    %v5224 = vpop.f32.mrb[0].mxu0
    %v5225 = vpop.f32.mrb[0].mxu0
    %v5226 = vadd.f32 0.0, %v5225
    %v5227 = vpop.f32.mrb[0].mxu0
    %5228 = vdwg.mxu0
    %v5230 = vsel %vm2735, %v4927, 0
    %v5233 = vsel %vm2735, %v4982, 0
    %5235 = vmatprep.subr.bf16.mxu0 0
    %5236 = vmatpush1.bf16.xpose.msra.mxu0 %v5233
    %5237 = vmatprep.subr.bf16.mxu0 0
    %5238 = vmatpush1.bf16.xpose.msra.mxu0 0
    %5239 = vmatprep.subr.bf16.mxu0 0
    %5240 = vmatpush1.bf16.xpose.msra.mxu0 0
    %5241 = vmatprep.subr.bf16.mxu0 0
    %5242 = vmatpush1.bf16.xpose.msra.mxu0 0
    %5243 = vmatprep.subr.bf16.mxu0 0
    %5244 = vmatpush1.bf16.xpose.msra.mxu0 0
    %5245 = vmatprep.subr.bf16.mxu0 0
    %5246 = vmatpush1.bf16.xpose.msra.mxu0 0
    %5247 = vmatprep.subr.bf16.mxu0 0
    %5248 = vmatpush1.bf16.xpose.msra.mxu0 0
    %5249 = vmatprep.subr.bf16.mxu0 0
    %5250 = vmatpush1.bf16.xpose.msra.mxu0 0
    %5251 = vmatprep.subr.bf16.mxu0 0
    %5252 = vmatpush1.bf16.xpose.msra.mxu0 0
    %5253 = vmatprep.subr.bf16.mxu0 0
    %5254 = vmatpush1.bf16.xpose.msra.mxu0 0
    %5255 = vmatprep.subr.bf16.mxu0 0
    %5256 = vmatpush1.bf16.xpose.msra.mxu0 0
    %5257 = vmatprep.subr.bf16.mxu0 0
    %5258 = vmatpush1.bf16.xpose.msra.mxu0 0
    %5259 = vmatprep.subr.bf16.mxu0 0
    %5260 = vmatpush1.bf16.xpose.msra.mxu0 0
    %5261 = vmatprep.subr.bf16.mxu0 0
    %5262 = vmatpush1.bf16.xpose.msra.mxu0 0
    %5263 = vmatprep.subr.bf16.mxu0 0
    %5264 = vmatpush1.bf16.xpose.msra.mxu0 0
    %5265 = vmatprep.subr.bf16.mxu0 0
    %5266 = vmatpush1.bf16.xpose.msra.mxu0 0
    %5267 = vmatprep.mubr.bf16.mxu0 0
    %5268 = vmatmul.mubr.bf16.gmra.mrb[0].mxu0 %v5230
    %v5269 = vpop.f32.mrb[0].mxu0
    %v5270 = vadd.f32 0.0, %v5269
    %v5271 = vpop.f32.mrb[0].mxu0
    %v5272 = vpop.f32.mrb[0].mxu0
    %v5273 = vadd.f32 0.0, %v5272
    %v5274 = vpop.f32.mrb[0].mxu0
    %5275 = vdwg.mxu0
    %v5277 = vsel %vm2735, %v4928, 0
    %v5280 = vsel %vm2735, %v4983, 0
    %5282 = vmatprep.subr.bf16.mxu0 0
    %5283 = vmatpush1.bf16.xpose.msra.mxu0 %v5280
    %5284 = vmatprep.subr.bf16.mxu0 0
    %5285 = vmatpush1.bf16.xpose.msra.mxu0 0
    %5286 = vmatprep.subr.bf16.mxu0 0
    %5287 = vmatpush1.bf16.xpose.msra.mxu0 0
    %5288 = vmatprep.subr.bf16.mxu0 0
    %5289 = vmatpush1.bf16.xpose.msra.mxu0 0
    %5290 = vmatprep.subr.bf16.mxu0 0
    %5291 = vmatpush1.bf16.xpose.msra.mxu0 0
    %5292 = vmatprep.subr.bf16.mxu0 0
    %5293 = vmatpush1.bf16.xpose.msra.mxu0 0
    %5294 = vmatprep.subr.bf16.mxu0 0
    %5295 = vmatpush1.bf16.xpose.msra.mxu0 0
    %5296 = vmatprep.subr.bf16.mxu0 0
    %5297 = vmatpush1.bf16.xpose.msra.mxu0 0
    %5298 = vmatprep.subr.bf16.mxu0 0
    %5299 = vmatpush1.bf16.xpose.msra.mxu0 0
    %5300 = vmatprep.subr.bf16.mxu0 0
    %5301 = vmatpush1.bf16.xpose.msra.mxu0 0
    %5302 = vmatprep.subr.bf16.mxu0 0
    %5303 = vmatpush1.bf16.xpose.msra.mxu0 0
    %5304 = vmatprep.subr.bf16.mxu0 0
    %5305 = vmatpush1.bf16.xpose.msra.mxu0 0
    %5306 = vmatprep.subr.bf16.mxu0 0
    %5307 = vmatpush1.bf16.xpose.msra.mxu0 0
    %5308 = vmatprep.subr.bf16.mxu0 0
    %5309 = vmatpush1.bf16.xpose.msra.mxu0 0
    %5310 = vmatprep.subr.bf16.mxu0 0
    %5311 = vmatpush1.bf16.xpose.msra.mxu0 0
    %5312 = vmatprep.subr.bf16.mxu0 0
    %5313 = vmatpush1.bf16.xpose.msra.mxu0 0
    %5314 = vmatprep.mubr.bf16.mxu0 0
    %5315 = vmatmul.mubr.bf16.gmra.mrb[0].mxu0 %v5277
    %v5316 = vpop.f32.mrb[0].mxu0
    %v5317 = vadd.f32 0.0, %v5316
    %v5318 = vpop.f32.mrb[0].mxu0
    %v5319 = vpop.f32.mrb[0].mxu0
    %v5320 = vadd.f32 0.0, %v5319
    %v5321 = vpop.f32.mrb[0].mxu0
    %5322 = vdwg.mxu0
    %v5324 = vsel %vm2735, %v4929, 0
    %v5327 = vsel %vm2735, %v4984, 0
    %5329 = vmatprep.subr.bf16.mxu0 0
    %5330 = vmatpush1.bf16.xpose.msra.mxu0 %v5327
    %5331 = vmatprep.subr.bf16.mxu0 0
    %5332 = vmatpush1.bf16.xpose.msra.mxu0 0
    %5333 = vmatprep.subr.bf16.mxu0 0
    %5334 = vmatpush1.bf16.xpose.msra.mxu0 0
    %5335 = vmatprep.subr.bf16.mxu0 0
    %5336 = vmatpush1.bf16.xpose.msra.mxu0 0
    %5337 = vmatprep.subr.bf16.mxu0 0
    %5338 = vmatpush1.bf16.xpose.msra.mxu0 0
    %5339 = vmatprep.subr.bf16.mxu0 0
    %5340 = vmatpush1.bf16.xpose.msra.mxu0 0
    %5341 = vmatprep.subr.bf16.mxu0 0
    %5342 = vmatpush1.bf16.xpose.msra.mxu0 0
    %5343 = vmatprep.subr.bf16.mxu0 0
    %5344 = vmatpush1.bf16.xpose.msra.mxu0 0
    %5345 = vmatprep.subr.bf16.mxu0 0
    %5346 = vmatpush1.bf16.xpose.msra.mxu0 0
    %5347 = vmatprep.subr.bf16.mxu0 0
    %5348 = vmatpush1.bf16.xpose.msra.mxu0 0
    %5349 = vmatprep.subr.bf16.mxu0 0
    %5350 = vmatpush1.bf16.xpose.msra.mxu0 0
    %5351 = vmatprep.subr.bf16.mxu0 0
    %5352 = vmatpush1.bf16.xpose.msra.mxu0 0
    %5353 = vmatprep.subr.bf16.mxu0 0
    %5354 = vmatpush1.bf16.xpose.msra.mxu0 0
    %5355 = vmatprep.subr.bf16.mxu0 0
    %5356 = vmatpush1.bf16.xpose.msra.mxu0 0
    %5357 = vmatprep.subr.bf16.mxu0 0
    %5358 = vmatpush1.bf16.xpose.msra.mxu0 0
    %5359 = vmatprep.subr.bf16.mxu0 0
    %5360 = vmatpush1.bf16.xpose.msra.mxu0 0
    %5361 = vmatprep.mubr.bf16.mxu0 0
    %5362 = vmatmul.mubr.bf16.gmra.mrb[0].mxu0 %v5324
    %v5363 = vpop.f32.mrb[0].mxu0
    %v5364 = vadd.f32 0.0, %v5363
    %v5365 = vpop.f32.mrb[0].mxu0
    %v5366 = vpop.f32.mrb[0].mxu0
    %v5367 = vadd.f32 0.0, %v5366
    %v5368 = vpop.f32.mrb[0].mxu0
    %5369 = vdwg.mxu0
    %v5371 = vsel %vm2735, %v4930, 0
    %v5374 = vsel %vm2735, %v4985, 0
    %5376 = vmatprep.subr.bf16.mxu0 0
    %5377 = vmatpush1.bf16.xpose.msra.mxu0 %v5374
    %5378 = vmatprep.subr.bf16.mxu0 0
    %5379 = vmatpush1.bf16.xpose.msra.mxu0 0
    %5380 = vmatprep.subr.bf16.mxu0 0
    %5381 = vmatpush1.bf16.xpose.msra.mxu0 0
    %5382 = vmatprep.subr.bf16.mxu0 0
    %5383 = vmatpush1.bf16.xpose.msra.mxu0 0
    %5384 = vmatprep.subr.bf16.mxu0 0
    %5385 = vmatpush1.bf16.xpose.msra.mxu0 0
    %5386 = vmatprep.subr.bf16.mxu0 0
    %5387 = vmatpush1.bf16.xpose.msra.mxu0 0
    %5388 = vmatprep.subr.bf16.mxu0 0
    %5389 = vmatpush1.bf16.xpose.msra.mxu0 0
    %5390 = vmatprep.subr.bf16.mxu0 0
    %5391 = vmatpush1.bf16.xpose.msra.mxu0 0
    %5392 = vmatprep.subr.bf16.mxu0 0
    %5393 = vmatpush1.bf16.xpose.msra.mxu0 0
    %5394 = vmatprep.subr.bf16.mxu0 0
    %5395 = vmatpush1.bf16.xpose.msra.mxu0 0
    %5396 = vmatprep.subr.bf16.mxu0 0
    %5397 = vmatpush1.bf16.xpose.msra.mxu0 0
    %5398 = vmatprep.subr.bf16.mxu0 0
    %5399 = vmatpush1.bf16.xpose.msra.mxu0 0
    %5400 = vmatprep.subr.bf16.mxu0 0
    %5401 = vmatpush1.bf16.xpose.msra.mxu0 0
    %5402 = vmatprep.subr.bf16.mxu0 0
    %5403 = vmatpush1.bf16.xpose.msra.mxu0 0
    %5404 = vmatprep.subr.bf16.mxu0 0
    %5405 = vmatpush1.bf16.xpose.msra.mxu0 0
    %5406 = vmatprep.subr.bf16.mxu0 0
    %5407 = vmatpush1.bf16.xpose.msra.mxu0 0
    %5408 = vmatprep.mubr.bf16.mxu0 0
    %5409 = vmatmul.mubr.bf16.gmra.mrb[0].mxu0 %v5371
    %v5410 = vpop.f32.mrb[0].mxu0
    %v5411 = vadd.f32 0.0, %v5410
    %v5412 = vpop.f32.mrb[0].mxu0
    %v5413 = vpop.f32.mrb[0].mxu0
    %v5414 = vadd.f32 0.0, %v5413
    %v5415 = vpop.f32.mrb[0].mxu0
    %5416 = vdwg.mxu0
    %v5417 = vsel %vm3112, %v5082, -inf
    %5418 = vmax.xlane.f32.xlu0 %v5417
    %v5419 = vpop.xlane.xlu0 %5418
    %v5420 = vsel %vm3116, %v5085, -inf
    %5421 = vmax.xlane.f32.xlu0 %v5420
    %v5422 = vpop.xlane.xlu0 %5421
    %v5423 = vsel %vm3112, %v5129, -inf
    %5424 = vmax.xlane.f32.xlu0 %v5423
    %v5425 = vpop.xlane.xlu0 %5424
    %v5426 = vsel %vm3116, %v5132, -inf
    %5427 = vmax.xlane.f32.xlu0 %v5426
    %v5428 = vpop.xlane.xlu0 %5427
    %v5429 = vsel %vm3112, %v5176, -inf
    %5430 = vmax.xlane.f32.xlu0 %v5429
    %v5431 = vpop.xlane.xlu0 %5430
    %v5432 = vsel %vm3116, %v5179, -inf
    %5433 = vmax.xlane.f32.xlu0 %v5432
    %v5434 = vpop.xlane.xlu0 %5433
    %v5435 = vsel %vm3112, %v5223, -inf
    %5436 = vmax.xlane.f32.xlu0 %v5435
    %v5437 = vpop.xlane.xlu0 %5436
    %v5438 = vsel %vm3116, %v5226, -inf
    %5439 = vmax.xlane.f32.xlu0 %v5438
    %v5440 = vpop.xlane.xlu0 %5439
    %v5441 = vsel %vm3112, %v5270, -inf
    %5442 = vmax.xlane.f32.xlu0 %v5441
    %v5443 = vpop.xlane.xlu0 %5442
    %v5444 = vsel %vm3116, %v5273, -inf
    %5445 = vmax.xlane.f32.xlu0 %v5444
    %v5446 = vpop.xlane.xlu0 %5445
    %v5447 = vsel %vm3112, %v5317, -inf
    %5448 = vmax.xlane.f32.xlu0 %v5447
    %v5449 = vpop.xlane.xlu0 %5448
    %v5450 = vsel %vm3116, %v5320, -inf
    %5451 = vmax.xlane.f32.xlu0 %v5450
    %v5452 = vpop.xlane.xlu0 %5451
    %v5453 = vsel %vm3112, %v5364, -inf
    %5454 = vmax.xlane.f32.xlu0 %v5453
    %v5455 = vpop.xlane.xlu0 %5454
    %v5456 = vsel %vm3116, %v5367, -inf
    %5457 = vmax.xlane.f32.xlu0 %v5456
    %v5458 = vpop.xlane.xlu0 %5457
    %v5459 = vsel %vm3112, %v5411, -inf
    %5460 = vmax.xlane.f32.xlu0 %v5459
    %v5461 = vpop.xlane.xlu0 %5460
    %v5462 = vsel %vm3116, %v5414, -inf
    %5463 = vmax.xlane.f32.xlu0 %v5462
    %v5464 = vpop.xlane.xlu0 %5463
    %v5465 = vsub.f32 %v5082, %v5419
    %v5466 = vsub.f32 %v5085, %v5422
    %v5467 = vsub.f32 %v5129, %v5425
    %v5468 = vsub.f32 %v5132, %v5428
    %v5469 = vsub.f32 %v5176, %v5431
    %v5470 = vsub.f32 %v5179, %v5434
    %v5471 = vsub.f32 %v5223, %v5437
    %v5472 = vsub.f32 %v5226, %v5440
    %v5473 = vsub.f32 %v5270, %v5443
    %v5474 = vsub.f32 %v5273, %v5446
    %v5475 = vsub.f32 %v5317, %v5449
    %v5476 = vsub.f32 %v5320, %v5452
    %v5477 = vsub.f32 %v5364, %v5455
    %v5478 = vsub.f32 %v5367, %v5458
    %v5479 = vsub.f32 %v5411, %v5461
    %v5480 = vsub.f32 %v5414, %v5464
    %v5481 = vmul.f32 %v5465, 1.442695
    %v5482 = vpow.pop %v5481
    %v5483 = vmul.f32 %v5466, 1.442695
    %v5484 = vpow.pop %v5483
    %v5485 = vmul.f32 %v5467, 1.442695
    %v5486 = vpow.pop %v5485
    %v5487 = vmul.f32 %v5468, 1.442695
    %v5488 = vpow.pop %v5487
    %v5489 = vmul.f32 %v5469, 1.442695
    %v5490 = vpow.pop %v5489
    %v5491 = vmul.f32 %v5470, 1.442695
    %v5492 = vpow.pop %v5491
    %v5493 = vmul.f32 %v5471, 1.442695
    %v5494 = vpow.pop %v5493
    %v5495 = vmul.f32 %v5472, 1.442695
    %v5496 = vpow.pop %v5495
    %v5497 = vmul.f32 %v5473, 1.442695
    %v5498 = vpow.pop %v5497
    %v5499 = vmul.f32 %v5474, 1.442695
    %v5500 = vpow.pop %v5499
    %v5501 = vmul.f32 %v5475, 1.442695
    %v5502 = vpow.pop %v5501
    %v5503 = vmul.f32 %v5476, 1.442695
    %v5504 = vpow.pop %v5503
    %v5505 = vmul.f32 %v5477, 1.442695
    %v5506 = vpow.pop %v5505
    %v5507 = vmul.f32 %v5478, 1.442695
    %v5508 = vpow.pop %v5507
    %v5509 = vmul.f32 %v5479, 1.442695
    %v5510 = vpow.pop %v5509
    %v5511 = vmul.f32 %v5480, 1.442695
    %v5512 = vpow.pop %v5511
    %v5513 = vsel %vm3112, %v5482, 0.0
    %5514 = vadd.xlane.f32.xlu0 %v5513
    %v5515 = vpop.xlane.xlu0 %5514
    %v5516 = vsel %vm3116, %v5484, 0.0
    %5517 = vadd.xlane.f32.xlu0 %v5516
    %v5518 = vpop.xlane.xlu0 %5517
    %v5519 = vsel %vm3112, %v5486, 0.0
    %5520 = vadd.xlane.f32.xlu0 %v5519
    %v5521 = vpop.xlane.xlu0 %5520
    %v5522 = vsel %vm3116, %v5488, 0.0
    %5523 = vadd.xlane.f32.xlu0 %v5522
    %v5524 = vpop.xlane.xlu0 %5523
    %v5525 = vsel %vm3112, %v5490, 0.0
    %5526 = vadd.xlane.f32.xlu0 %v5525
    %v5527 = vpop.xlane.xlu0 %5526
    %v5528 = vsel %vm3116, %v5492, 0.0
    %5529 = vadd.xlane.f32.xlu0 %v5528
    %v5530 = vpop.xlane.xlu0 %5529
    %v5531 = vsel %vm3112, %v5494, 0.0
    %5532 = vadd.xlane.f32.xlu0 %v5531
    %v5533 = vpop.xlane.xlu0 %5532
    %v5534 = vsel %vm3116, %v5496, 0.0
    %5535 = vadd.xlane.f32.xlu0 %v5534
    %v5536 = vpop.xlane.xlu0 %5535
    %v5537 = vsel %vm3112, %v5498, 0.0
    %5538 = vadd.xlane.f32.xlu0 %v5537
    %v5539 = vpop.xlane.xlu0 %5538
    %v5540 = vsel %vm3116, %v5500, 0.0
    %5541 = vadd.xlane.f32.xlu0 %v5540
    %v5542 = vpop.xlane.xlu0 %5541
    %v5543 = vsel %vm3112, %v5502, 0.0
    %5544 = vadd.xlane.f32.xlu0 %v5543
    %v5545 = vpop.xlane.xlu0 %5544
    %v5546 = vsel %vm3116, %v5504, 0.0
    %5547 = vadd.xlane.f32.xlu0 %v5546
    %v5548 = vpop.xlane.xlu0 %5547
    %v5549 = vsel %vm3112, %v5506, 0.0
    %5550 = vadd.xlane.f32.xlu0 %v5549
    %v5551 = vpop.xlane.xlu0 %5550
    %v5552 = vsel %vm3116, %v5508, 0.0
    %5553 = vadd.xlane.f32.xlu0 %v5552
    %v5554 = vpop.xlane.xlu0 %5553
    %v5555 = vsel %vm3112, %v5510, 0.0
    %5556 = vadd.xlane.f32.xlu0 %v5555
    %v5557 = vpop.xlane.xlu0 %5556
    %v5558 = vsel %vm3116, %v5512, 0.0
    %5559 = vadd.xlane.f32.xlu0 %v5558
    %v5560 = vpop.xlane.xlu0 %5559
    %v5561 = vrcp.pop %v5515
    %v5562 = vrcp.pop %v5518
    %v5563 = vrcp.pop %v5521
    %v5564 = vrcp.pop %v5524
    %v5565 = vrcp.pop %v5527
    %v5566 = vrcp.pop %v5530
    %v5567 = vrcp.pop %v5533
    %v5568 = vrcp.pop %v5536
    %v5569 = vrcp.pop %v5539
    %v5570 = vrcp.pop %v5542
    %v5571 = vrcp.pop %v5545
    %v5572 = vrcp.pop %v5548
    %v5573 = vrcp.pop %v5551
    %v5574 = vrcp.pop %v5554
    %v5575 = vrcp.pop %v5557
    %v5576 = vrcp.pop %v5560
    %v5577 = vmul.f32 %v5482, %v5561
    %v5578 = vmul.f32 %v5484, %v5562
    %v5579 = vmul.f32 %v5486, %v5563
    %v5580 = vmul.f32 %v5488, %v5564
    %v5581 = vmul.f32 %v5490, %v5565
    %v5582 = vmul.f32 %v5492, %v5566
    %v5583 = vmul.f32 %v5494, %v5567
    %v5584 = vmul.f32 %v5496, %v5568
    %v5585 = vmul.f32 %v5498, %v5569
    %v5586 = vmul.f32 %v5500, %v5570
    %v5587 = vmul.f32 %v5502, %v5571
    %v5588 = vmul.f32 %v5504, %v5572
    %v5589 = vmul.f32 %v5506, %v5573
    %v5590 = vmul.f32 %v5508, %v5574
    %v5591 = vmul.f32 %v5510, %v5575
    %v5592 = vmul.f32 %v5512, %v5576
    %v5593 = vpack.c.bf16 %v5578, %v5577
    %v5594 = vpack.c.bf16 %v5580, %v5579
    %v5595 = vpack.c.bf16 %v5582, %v5581
    %v5596 = vpack.c.bf16 %v5584, %v5583
    %v5597 = vpack.c.bf16 %v5586, %v5585
    %v5598 = vpack.c.bf16 %v5588, %v5587
    %v5599 = vpack.c.bf16 %v5590, %v5589
    %v5600 = vpack.c.bf16 %v5592, %v5591
    %v5602 = vsel %vm3112, %v5593, 0
    %v5605 = vand.u32 %v5033, %v3304
    %5607 = vmatprep.subr.bf16.mxu0 0
    %5608 = vmatpush1.bf16.msra.mxu0 %v5605
    %5609 = vmatprep.subr.bf16.mxu0 0
    %5610 = vmatpush1.bf16.msra.mxu0 0
    %5611 = vmatprep.subr.bf16.mxu0 0
    %5612 = vmatpush1.bf16.msra.mxu0 0
    %5613 = vmatprep.subr.bf16.mxu0 0
    %5614 = vmatpush1.bf16.msra.mxu0 0
    %5615 = vmatprep.subr.bf16.mxu0 0
    %5616 = vmatpush1.bf16.msra.mxu0 0
    %5617 = vmatprep.subr.bf16.mxu0 0
    %5618 = vmatpush1.bf16.msra.mxu0 0
    %5619 = vmatprep.subr.bf16.mxu0 0
    %5620 = vmatpush1.bf16.msra.mxu0 0
    %5621 = vmatprep.subr.bf16.mxu0 0
    %5622 = vmatpush1.bf16.msra.mxu0 0
    %5623 = vmatprep.subr.bf16.mxu0 0
    %5624 = vmatpush1.bf16.msra.mxu0 0
    %5625 = vmatprep.subr.bf16.mxu0 0
    %5626 = vmatpush1.bf16.msra.mxu0 0
    %5627 = vmatprep.subr.bf16.mxu0 0
    %5628 = vmatpush1.bf16.msra.mxu0 0
    %5629 = vmatprep.subr.bf16.mxu0 0
    %5630 = vmatpush1.bf16.msra.mxu0 0
    %5631 = vmatprep.subr.bf16.mxu0 0
    %5632 = vmatpush1.bf16.msra.mxu0 0
    %5633 = vmatprep.subr.bf16.mxu0 0
    %5634 = vmatpush1.bf16.msra.mxu0 0
    %5635 = vmatprep.subr.bf16.mxu0 0
    %5636 = vmatpush1.bf16.msra.mxu0 0
    %5637 = vmatprep.subr.bf16.mxu0 0
    %5638 = vmatpush1.bf16.msra.mxu0 0
    %5639 = vmatprep.mubr.bf16.mxu0 0
    %5640 = vmatmul.mubr.bf16.gmra.mrb[0].mxu0 %v5602
    %v5641 = vpop.f32.mrb[0].mxu0
    %v5642 = vadd.f32 0.0, %v5641
    %v5643 = vpop.f32.mrb[0].mxu0
    %v5644 = vpop.f32.mrb[0].mxu0
    %v5645 = vadd.f32 0.0, %v5644
    %v5646 = vpop.f32.mrb[0].mxu0
    %5647 = vdwg.mxu0
    %v5649 = vsel %vm3112, %v5594, 0
    %v5652 = vand.u32 %v5034, %v3304
    %5654 = vmatprep.subr.bf16.mxu0 0
    %5655 = vmatpush1.bf16.msra.mxu0 %v5652
    %5656 = vmatprep.subr.bf16.mxu0 0
    %5657 = vmatpush1.bf16.msra.mxu0 0
    %5658 = vmatprep.subr.bf16.mxu0 0
    %5659 = vmatpush1.bf16.msra.mxu0 0
    %5660 = vmatprep.subr.bf16.mxu0 0
    %5661 = vmatpush1.bf16.msra.mxu0 0
    %5662 = vmatprep.subr.bf16.mxu0 0
    %5663 = vmatpush1.bf16.msra.mxu0 0
    %5664 = vmatprep.subr.bf16.mxu0 0
    %5665 = vmatpush1.bf16.msra.mxu0 0
    %5666 = vmatprep.subr.bf16.mxu0 0
    %5667 = vmatpush1.bf16.msra.mxu0 0
    %5668 = vmatprep.subr.bf16.mxu0 0
    %5669 = vmatpush1.bf16.msra.mxu0 0
    %5670 = vmatprep.subr.bf16.mxu0 0
    %5671 = vmatpush1.bf16.msra.mxu0 0
    %5672 = vmatprep.subr.bf16.mxu0 0
    %5673 = vmatpush1.bf16.msra.mxu0 0
    %5674 = vmatprep.subr.bf16.mxu0 0
    %5675 = vmatpush1.bf16.msra.mxu0 0
    %5676 = vmatprep.subr.bf16.mxu0 0
    %5677 = vmatpush1.bf16.msra.mxu0 0
    %5678 = vmatprep.subr.bf16.mxu0 0
    %5679 = vmatpush1.bf16.msra.mxu0 0
    %5680 = vmatprep.subr.bf16.mxu0 0
    %5681 = vmatpush1.bf16.msra.mxu0 0
    %5682 = vmatprep.subr.bf16.mxu0 0
    %5683 = vmatpush1.bf16.msra.mxu0 0
    %5684 = vmatprep.subr.bf16.mxu0 0
    %5685 = vmatpush1.bf16.msra.mxu0 0
    %5686 = vmatprep.mubr.bf16.mxu0 0
    %5687 = vmatmul.mubr.bf16.gmra.mrb[0].mxu0 %v5649
    %v5688 = vpop.f32.mrb[0].mxu0
    %v5689 = vadd.f32 0.0, %v5688
    %v5690 = vpop.f32.mrb[0].mxu0
    %v5691 = vpop.f32.mrb[0].mxu0
    %v5692 = vadd.f32 0.0, %v5691
    %v5693 = vpop.f32.mrb[0].mxu0
    %5694 = vdwg.mxu0
    %v5696 = vsel %vm3112, %v5595, 0
    %v5699 = vand.u32 %v5035, %v3304
    %5701 = vmatprep.subr.bf16.mxu0 0
    %5702 = vmatpush1.bf16.msra.mxu0 %v5699
    %5703 = vmatprep.subr.bf16.mxu0 0
    %5704 = vmatpush1.bf16.msra.mxu0 0
    %5705 = vmatprep.subr.bf16.mxu0 0
    %5706 = vmatpush1.bf16.msra.mxu0 0
    %5707 = vmatprep.subr.bf16.mxu0 0
    %5708 = vmatpush1.bf16.msra.mxu0 0
    %5709 = vmatprep.subr.bf16.mxu0 0
    %5710 = vmatpush1.bf16.msra.mxu0 0
    %5711 = vmatprep.subr.bf16.mxu0 0
    %5712 = vmatpush1.bf16.msra.mxu0 0
    %5713 = vmatprep.subr.bf16.mxu0 0
    %5714 = vmatpush1.bf16.msra.mxu0 0
    %5715 = vmatprep.subr.bf16.mxu0 0
    %5716 = vmatpush1.bf16.msra.mxu0 0
    %5717 = vmatprep.subr.bf16.mxu0 0
    %5718 = vmatpush1.bf16.msra.mxu0 0
    %5719 = vmatprep.subr.bf16.mxu0 0
    %5720 = vmatpush1.bf16.msra.mxu0 0
    %5721 = vmatprep.subr.bf16.mxu0 0
    %5722 = vmatpush1.bf16.msra.mxu0 0
    %5723 = vmatprep.subr.bf16.mxu0 0
    %5724 = vmatpush1.bf16.msra.mxu0 0
    %5725 = vmatprep.subr.bf16.mxu0 0
    %5726 = vmatpush1.bf16.msra.mxu0 0
    %5727 = vmatprep.subr.bf16.mxu0 0
    %5728 = vmatpush1.bf16.msra.mxu0 0
    %5729 = vmatprep.subr.bf16.mxu0 0
    %5730 = vmatpush1.bf16.msra.mxu0 0
    %5731 = vmatprep.subr.bf16.mxu0 0
    %5732 = vmatpush1.bf16.msra.mxu0 0
    %5733 = vmatprep.mubr.bf16.mxu0 0
    %5734 = vmatmul.mubr.bf16.gmra.mrb[0].mxu0 %v5696
    %v5735 = vpop.f32.mrb[0].mxu0
    %v5736 = vadd.f32 0.0, %v5735
    %v5737 = vpop.f32.mrb[0].mxu0
    %v5738 = vpop.f32.mrb[0].mxu0
    %v5739 = vadd.f32 0.0, %v5738
    %v5740 = vpop.f32.mrb[0].mxu0
    %5741 = vdwg.mxu0
    %v5743 = vsel %vm3112, %v5596, 0
    %v5746 = vand.u32 %v5036, %v3304
    %5748 = vmatprep.subr.bf16.mxu0 0
    %5749 = vmatpush1.bf16.msra.mxu0 %v5746
    %5750 = vmatprep.subr.bf16.mxu0 0
    %5751 = vmatpush1.bf16.msra.mxu0 0
    %5752 = vmatprep.subr.bf16.mxu0 0
    %5753 = vmatpush1.bf16.msra.mxu0 0
    %5754 = vmatprep.subr.bf16.mxu0 0
    %5755 = vmatpush1.bf16.msra.mxu0 0
    %5756 = vmatprep.subr.bf16.mxu0 0
    %5757 = vmatpush1.bf16.msra.mxu0 0
    %5758 = vmatprep.subr.bf16.mxu0 0
    %5759 = vmatpush1.bf16.msra.mxu0 0
    %5760 = vmatprep.subr.bf16.mxu0 0
    %5761 = vmatpush1.bf16.msra.mxu0 0
    %5762 = vmatprep.subr.bf16.mxu0 0
    %5763 = vmatpush1.bf16.msra.mxu0 0
    %5764 = vmatprep.subr.bf16.mxu0 0
    %5765 = vmatpush1.bf16.msra.mxu0 0
    %5766 = vmatprep.subr.bf16.mxu0 0
    %5767 = vmatpush1.bf16.msra.mxu0 0
    %5768 = vmatprep.subr.bf16.mxu0 0
    %5769 = vmatpush1.bf16.msra.mxu0 0
    %5770 = vmatprep.subr.bf16.mxu0 0
    %5771 = vmatpush1.bf16.msra.mxu0 0
    %5772 = vmatprep.subr.bf16.mxu0 0
    %5773 = vmatpush1.bf16.msra.mxu0 0
    %5774 = vmatprep.subr.bf16.mxu0 0
    %5775 = vmatpush1.bf16.msra.mxu0 0
    %5776 = vmatprep.subr.bf16.mxu0 0
    %5777 = vmatpush1.bf16.msra.mxu0 0
    %5778 = vmatprep.subr.bf16.mxu0 0
    %5779 = vmatpush1.bf16.msra.mxu0 0
    %5780 = vmatprep.mubr.bf16.mxu0 0
    %5781 = vmatmul.mubr.bf16.gmra.mrb[0].mxu0 %v5743
    %v5782 = vpop.f32.mrb[0].mxu0
    %v5783 = vadd.f32 0.0, %v5782
    %v5784 = vpop.f32.mrb[0].mxu0
    %v5785 = vpop.f32.mrb[0].mxu0
    %v5786 = vadd.f32 0.0, %v5785
    %v5787 = vpop.f32.mrb[0].mxu0
    %5788 = vdwg.mxu0
    %v5790 = vsel %vm3112, %v5597, 0
    %v5793 = vand.u32 %v5037, %v3304
    %5795 = vmatprep.subr.bf16.mxu0 0
    %5796 = vmatpush1.bf16.msra.mxu0 %v5793
    %5797 = vmatprep.subr.bf16.mxu0 0
    %5798 = vmatpush1.bf16.msra.mxu0 0
    %5799 = vmatprep.subr.bf16.mxu0 0
    %5800 = vmatpush1.bf16.msra.mxu0 0
    %5801 = vmatprep.subr.bf16.mxu0 0
    %5802 = vmatpush1.bf16.msra.mxu0 0
    %5803 = vmatprep.subr.bf16.mxu0 0
    %5804 = vmatpush1.bf16.msra.mxu0 0
    %5805 = vmatprep.subr.bf16.mxu0 0
    %5806 = vmatpush1.bf16.msra.mxu0 0
    %5807 = vmatprep.subr.bf16.mxu0 0
    %5808 = vmatpush1.bf16.msra.mxu0 0
    %5809 = vmatprep.subr.bf16.mxu0 0
    %5810 = vmatpush1.bf16.msra.mxu0 0
    %5811 = vmatprep.subr.bf16.mxu0 0
    %5812 = vmatpush1.bf16.msra.mxu0 0
    %5813 = vmatprep.subr.bf16.mxu0 0
    %5814 = vmatpush1.bf16.msra.mxu0 0
    %5815 = vmatprep.subr.bf16.mxu0 0
    %5816 = vmatpush1.bf16.msra.mxu0 0
    %5817 = vmatprep.subr.bf16.mxu0 0
    %5818 = vmatpush1.bf16.msra.mxu0 0
    %5819 = vmatprep.subr.bf16.mxu0 0
    %5820 = vmatpush1.bf16.msra.mxu0 0
    %5821 = vmatprep.subr.bf16.mxu0 0
    %5822 = vmatpush1.bf16.msra.mxu0 0
    %5823 = vmatprep.subr.bf16.mxu0 0
    %5824 = vmatpush1.bf16.msra.mxu0 0
    %5825 = vmatprep.subr.bf16.mxu0 0
    %5826 = vmatpush1.bf16.msra.mxu0 0
    %5827 = vmatprep.mubr.bf16.mxu0 0
    %5828 = vmatmul.mubr.bf16.gmra.mrb[0].mxu0 %v5790
    %v5829 = vpop.f32.mrb[0].mxu0
    %v5830 = vadd.f32 0.0, %v5829
    %v5831 = vpop.f32.mrb[0].mxu0
    %v5832 = vpop.f32.mrb[0].mxu0
    %v5833 = vadd.f32 0.0, %v5832
    %v5834 = vpop.f32.mrb[0].mxu0
    %5835 = vdwg.mxu0
    %v5837 = vsel %vm3112, %v5598, 0
    %v5840 = vand.u32 %v5038, %v3304
    %5842 = vmatprep.subr.bf16.mxu0 0
    %5843 = vmatpush1.bf16.msra.mxu0 %v5840
    %5844 = vmatprep.subr.bf16.mxu0 0
    %5845 = vmatpush1.bf16.msra.mxu0 0
    %5846 = vmatprep.subr.bf16.mxu0 0
    %5847 = vmatpush1.bf16.msra.mxu0 0
    %5848 = vmatprep.subr.bf16.mxu0 0
    %5849 = vmatpush1.bf16.msra.mxu0 0
    %5850 = vmatprep.subr.bf16.mxu0 0
    %5851 = vmatpush1.bf16.msra.mxu0 0
    %5852 = vmatprep.subr.bf16.mxu0 0
    %5853 = vmatpush1.bf16.msra.mxu0 0
    %5854 = vmatprep.subr.bf16.mxu0 0
    %5855 = vmatpush1.bf16.msra.mxu0 0
    %5856 = vmatprep.subr.bf16.mxu0 0
    %5857 = vmatpush1.bf16.msra.mxu0 0
    %5858 = vmatprep.subr.bf16.mxu0 0
    %5859 = vmatpush1.bf16.msra.mxu0 0
    %5860 = vmatprep.subr.bf16.mxu0 0
    %5861 = vmatpush1.bf16.msra.mxu0 0
    %5862 = vmatprep.subr.bf16.mxu0 0
    %5863 = vmatpush1.bf16.msra.mxu0 0
    %5864 = vmatprep.subr.bf16.mxu0 0
    %5865 = vmatpush1.bf16.msra.mxu0 0
    %5866 = vmatprep.subr.bf16.mxu0 0
    %5867 = vmatpush1.bf16.msra.mxu0 0
    %5868 = vmatprep.subr.bf16.mxu0 0
    %5869 = vmatpush1.bf16.msra.mxu0 0
    %5870 = vmatprep.subr.bf16.mxu0 0
    %5871 = vmatpush1.bf16.msra.mxu0 0
    %5872 = vmatprep.subr.bf16.mxu0 0
    %5873 = vmatpush1.bf16.msra.mxu0 0
    %5874 = vmatprep.mubr.bf16.mxu0 0
    %5875 = vmatmul.mubr.bf16.gmra.mrb[0].mxu0 %v5837
    %v5876 = vpop.f32.mrb[0].mxu0
    %v5877 = vadd.f32 0.0, %v5876
    %v5878 = vpop.f32.mrb[0].mxu0
    %v5879 = vpop.f32.mrb[0].mxu0
    %v5880 = vadd.f32 0.0, %v5879
    %v5881 = vpop.f32.mrb[0].mxu0
    %5882 = vdwg.mxu0
    %v5884 = vsel %vm3112, %v5599, 0
    %v5887 = vand.u32 %v5039, %v3304
    %5889 = vmatprep.subr.bf16.mxu0 0
    %5890 = vmatpush1.bf16.msra.mxu0 %v5887
    %5891 = vmatprep.subr.bf16.mxu0 0
    %5892 = vmatpush1.bf16.msra.mxu0 0
    %5893 = vmatprep.subr.bf16.mxu0 0
    %5894 = vmatpush1.bf16.msra.mxu0 0
    %5895 = vmatprep.subr.bf16.mxu0 0
    %5896 = vmatpush1.bf16.msra.mxu0 0
    %5897 = vmatprep.subr.bf16.mxu0 0
    %5898 = vmatpush1.bf16.msra.mxu0 0
    %5899 = vmatprep.subr.bf16.mxu0 0
    %5900 = vmatpush1.bf16.msra.mxu0 0
    %5901 = vmatprep.subr.bf16.mxu0 0
    %5902 = vmatpush1.bf16.msra.mxu0 0
    %5903 = vmatprep.subr.bf16.mxu0 0
    %5904 = vmatpush1.bf16.msra.mxu0 0
    %5905 = vmatprep.subr.bf16.mxu0 0
    %5906 = vmatpush1.bf16.msra.mxu0 0
    %5907 = vmatprep.subr.bf16.mxu0 0
    %5908 = vmatpush1.bf16.msra.mxu0 0
    %5909 = vmatprep.subr.bf16.mxu0 0
    %5910 = vmatpush1.bf16.msra.mxu0 0
    %5911 = vmatprep.subr.bf16.mxu0 0
    %5912 = vmatpush1.bf16.msra.mxu0 0
    %5913 = vmatprep.subr.bf16.mxu0 0
    %5914 = vmatpush1.bf16.msra.mxu0 0
    %5915 = vmatprep.subr.bf16.mxu0 0
    %5916 = vmatpush1.bf16.msra.mxu0 0
    %5917 = vmatprep.subr.bf16.mxu0 0
    %5918 = vmatpush1.bf16.msra.mxu0 0
    %5919 = vmatprep.subr.bf16.mxu0 0
    %5920 = vmatpush1.bf16.msra.mxu0 0
    %5921 = vmatprep.mubr.bf16.mxu0 0
    %5922 = vmatmul.mubr.bf16.gmra.mrb[0].mxu0 %v5884
    %v5923 = vpop.f32.mrb[0].mxu0
    %v5924 = vadd.f32 0.0, %v5923
    %v5925 = vpop.f32.mrb[0].mxu0
    %v5926 = vpop.f32.mrb[0].mxu0
    %v5927 = vadd.f32 0.0, %v5926
    %v5928 = vpop.f32.mrb[0].mxu0
    %5929 = vdwg.mxu0
    %v5931 = vsel %vm3112, %v5600, 0
    %v5934 = vand.u32 %v5040, %v3304
    %5936 = vmatprep.subr.bf16.mxu0 0
    %5937 = vmatpush1.bf16.msra.mxu0 %v5934
    %5938 = vmatprep.subr.bf16.mxu0 0
    %5939 = vmatpush1.bf16.msra.mxu0 0
    %5940 = vmatprep.subr.bf16.mxu0 0
    %5941 = vmatpush1.bf16.msra.mxu0 0
    %5942 = vmatprep.subr.bf16.mxu0 0
    %5943 = vmatpush1.bf16.msra.mxu0 0
    %5944 = vmatprep.subr.bf16.mxu0 0
    %5945 = vmatpush1.bf16.msra.mxu0 0
    %5946 = vmatprep.subr.bf16.mxu0 0
    %5947 = vmatpush1.bf16.msra.mxu0 0
    %5948 = vmatprep.subr.bf16.mxu0 0
    %5949 = vmatpush1.bf16.msra.mxu0 0
    %5950 = vmatprep.subr.bf16.mxu0 0
    %5951 = vmatpush1.bf16.msra.mxu0 0
    %5952 = vmatprep.subr.bf16.mxu0 0
    %5953 = vmatpush1.bf16.msra.mxu0 0
    %5954 = vmatprep.subr.bf16.mxu0 0
    %5955 = vmatpush1.bf16.msra.mxu0 0
    %5956 = vmatprep.subr.bf16.mxu0 0
    %5957 = vmatpush1.bf16.msra.mxu0 0
    %5958 = vmatprep.subr.bf16.mxu0 0
    %5959 = vmatpush1.bf16.msra.mxu0 0
    %5960 = vmatprep.subr.bf16.mxu0 0
    %5961 = vmatpush1.bf16.msra.mxu0 0
    %5962 = vmatprep.subr.bf16.mxu0 0
    %5963 = vmatpush1.bf16.msra.mxu0 0
    %5964 = vmatprep.subr.bf16.mxu0 0
    %5965 = vmatpush1.bf16.msra.mxu0 0
    %5966 = vmatprep.subr.bf16.mxu0 0
    %5967 = vmatpush1.bf16.msra.mxu0 0
    %5968 = vmatprep.mubr.bf16.mxu0 0
    %5969 = vmatmul.mubr.bf16.gmra.mrb[0].mxu0 %v5931
    %v5970 = vpop.f32.mrb[0].mxu0
    %v5971 = vadd.f32 0.0, %v5970
    %v5972 = vpop.f32.mrb[0].mxu0
    %v5973 = vpop.f32.mrb[0].mxu0
    %v5974 = vadd.f32 0.0, %v5973
    %v5975 = vpop.f32.mrb[0].mxu0
    %5976 = vdwg.mxu0
    %5979 = vrot.lane.b32.xlu0 %v5689, 32
    %v5980 = vpop.permute.xlu0 %5979
    %5981 = vrot.lane.b32.xlu0 %v5692, 32
    %v5982 = vpop.permute.xlu0 %5981
    %5987 = vrot.lane.b32.xlu0 %v5736, 64
    %v5988 = vpop.permute.xlu0 %5987
    %5989 = vrot.lane.b32.xlu0 %v5739, 64
    %v5990 = vpop.permute.xlu0 %5989
    %5995 = vrot.lane.b32.xlu0 %v5783, 96
    %v5996 = vpop.permute.xlu0 %5995
    %5997 = vrot.lane.b32.xlu0 %v5786, 96
    %v5998 = vpop.permute.xlu0 %5997
    %v6001 = vsel %vm2735, %v5642, %v5980
    %v6002 = vsel %vm2735, %v5645, %v5982
    %v6003 = vsel %vm3704, %v6001, %v5988
    %v6004 = vsel %vm3704, %v6002, %v5990
    %v6005 = vsel %vm3707, %v6003, %v5996
    %v6006 = vsel %vm3707, %v6004, %v5998
    %6009 = vrot.lane.b32.xlu0 %v5877, 32
    %v6010 = vpop.permute.xlu0 %6009
    %6011 = vrot.lane.b32.xlu0 %v5880, 32
    %v6012 = vpop.permute.xlu0 %6011
    %6017 = vrot.lane.b32.xlu0 %v5924, 64
    %v6018 = vpop.permute.xlu0 %6017
    %6019 = vrot.lane.b32.xlu0 %v5927, 64
    %v6020 = vpop.permute.xlu0 %6019
    %6025 = vrot.lane.b32.xlu0 %v5971, 96
    %v6026 = vpop.permute.xlu0 %6025
    %6027 = vrot.lane.b32.xlu0 %v5974, 96
    %v6028 = vpop.permute.xlu0 %6027
    %v6031 = vsel %vm2735, %v5830, %v6010
    %v6032 = vsel %vm2735, %v5833, %v6012
    %v6033 = vsel %vm3704, %v6031, %v6018
    %v6034 = vsel %vm3704, %v6032, %v6020
    %v6035 = vsel %vm3707, %v6033, %v6026
    %v6036 = vsel %vm3707, %v6034, %v6028
    %v6039 = vrot.slane %v6035, 1
    %v6040 = vrot.slane %v6036, 1
    %v6041 = vsel %vm3301, %v6039, %v6040
    %v6045 = vsel %vm3301, %v6006, %v6039
    %v6046 = vpack.c.bf16 %v6045, %v6005
    %v6047 = vpack.c.bf16 %v6040, %v6041
    %s6048 = scalar_lea.vmem %s10, 64
    %v6049 = vld [vmem:[%s6048] sm:$0xf]
    %v6050 = vld [vmem:[%s6048 + $0x4] sm:$0xf]
    %v6051 = vld [vmem:[%s6048 + $0x8] sm:$0xf]
    %v6052 = vld [vmem:[%s6048 + $0xc] sm:$0xf]
    %v6053 = vld [vmem:[%s6048 + $0x10] sm:$0xf]
    %v6054 = vld [vmem:[%s6048 + $0x14] sm:$0xf]
    %v6055 = vld [vmem:[%s6048 + $0x18] sm:$0xf]
    %v6056 = vld [vmem:[%s6048 + $0x1c] sm:$0xf]
    %v6057 = vld [vmem:[%s6048 + $0x20] sm:$0xf]
    %v6058 = vld [vmem:[%s6048 + $0x24] sm:$0xf]
    %v6059 = vld [vmem:[%s6048 + $0x28] sm:$0xf]
    %v6060 = vld [vmem:[%s6048 + $0x2c] sm:$0xf]
    %v6061 = vld [vmem:[%s6048 + $0x30] sm:$0xf]
    %v6062 = vld [vmem:[%s6048 + $0x34] sm:$0xf]
    %v6063 = vld [vmem:[%s6048 + $0x38] sm:$0xf]
    %v6064 = vld [vmem:[%s6048 + $0x3c] sm:$0xf]
    %s6065 = scalar_lea.vmem %s11, 1
    %v6066 = vld [vmem:[%s6065] sm:$0x1]
    %v6068 = vlaneseq
    %v6069 = vshrl.u32 %v6068, 7
    %v6070 = vsub.s32 0, %v6069
    %v6071 = vrot.slane %v6066, %v6070
    %v6089 = vunpack.c.l.b16 %v6049
    %v6090 = vunpack.c.l.b16 %v6050
    %v6091 = vunpack.c.l.b16 %v6051
    %v6092 = vunpack.c.l.b16 %v6052
    %v6093 = vunpack.c.l.b16 %v6053
    %v6094 = vunpack.c.l.b16 %v6054
    %v6095 = vunpack.c.l.b16 %v6055
    %v6096 = vunpack.c.l.b16 %v6056
    %v6097 = vunpack.c.l.b16 %v6057
    %v6098 = vunpack.c.l.b16 %v6058
    %v6099 = vunpack.c.l.b16 %v6059
    %v6100 = vunpack.c.l.b16 %v6060
    %v6101 = vunpack.c.l.b16 %v6061
    %v6102 = vunpack.c.l.b16 %v6062
    %v6103 = vunpack.c.l.b16 %v6063
    %v6104 = vunpack.c.l.b16 %v6064
    %v6105 = vpack.c.b16 %v6090, %v6089
    %v6106 = vpack.c.b16 %v6092, %v6091
    %v6107 = vpack.c.b16 %v6094, %v6093
    %v6108 = vpack.c.b16 %v6096, %v6095
    %v6109 = vpack.c.b16 %v6098, %v6097
    %v6110 = vpack.c.b16 %v6100, %v6099
    %v6111 = vpack.c.b16 %v6102, %v6101
    %v6112 = vpack.c.b16 %v6104, %v6103
    %6121 = vmatprep.subr.bf16.mxu0 0
    %6122 = vmatpush1.bf16.msra.mxu0 %v6105
    %6123 = vmatprep.subr.bf16.mxu0 0
    %6124 = vmatpush1.bf16.msra.mxu0 %v6106
    %6125 = vmatprep.subr.bf16.mxu0 0
    %6126 = vmatpush1.bf16.msra.mxu0 %v6107
    %6127 = vmatprep.subr.bf16.mxu0 0
    %6128 = vmatpush1.bf16.msra.mxu0 %v6108
    %6129 = vmatprep.subr.bf16.mxu0 0
    %6130 = vmatpush1.bf16.msra.mxu0 %v6109
    %6131 = vmatprep.subr.bf16.mxu0 0
    %6132 = vmatpush1.bf16.msra.mxu0 %v6110
    %6133 = vmatprep.subr.bf16.mxu0 0
    %6134 = vmatpush1.bf16.msra.mxu0 %v6111
    %6135 = vmatprep.subr.bf16.mxu0 0
    %6136 = vmatpush1.bf16.msra.mxu0 %v6112
    %6137 = vmatprep.subr.bf16.mxu0 0
    %6138 = vmatpush1.bf16.msra.mxu0 0
    %6139 = vmatprep.subr.bf16.mxu0 0
    %6140 = vmatpush1.bf16.msra.mxu0 0
    %6141 = vmatprep.subr.bf16.mxu0 0
    %6142 = vmatpush1.bf16.msra.mxu0 0
    %6143 = vmatprep.subr.bf16.mxu0 0
    %6144 = vmatpush1.bf16.msra.mxu0 0
    %6145 = vmatprep.subr.bf16.mxu0 0
    %6146 = vmatpush1.bf16.msra.mxu0 0
    %6147 = vmatprep.subr.bf16.mxu0 0
    %6148 = vmatpush1.bf16.msra.mxu0 0
    %6149 = vmatprep.subr.bf16.mxu0 0
    %6150 = vmatpush1.bf16.msra.mxu0 0
    %6151 = vmatprep.subr.bf16.mxu0 0
    %6152 = vmatpush1.bf16.msra.mxu0 0
    %6153 = vmatprep.mubr.bf16.mxu0 0
    %6154 = vmatmul.mubr.bf16.gmra.mrb[0].mxu0 %v6046
    %v6155 = vpop.f32.mrb[0].mxu0
    %v6156 = vadd.f32 %v6071, %v6155
    %v6157 = vpop.f32.mrb[0].mxu0
    %v6158 = vpop.f32.mrb[0].mxu0
    %v6159 = vadd.f32 %v6071, %v6158
    %v6160 = vpop.f32.mrb[0].mxu0
    %6161 = vmatprep.mubr.bf16.mxu0 0
    %6162 = vmatmul.mubr.bf16.gmra.mrb[0].mxu0 %v6047
    %v6163 = vpop.f32.mrb[0].mxu0
    %v6164 = vadd.f32 %v6071, %v6163
    %v6165 = vpop.f32.mrb[0].mxu0
    %v6166 = vpop.f32.mrb[0].mxu0
    %v6167 = vadd.f32 %v6071, %v6166
    %v6168 = vpop.f32.mrb[0].mxu0
    %6169 = vdwg.mxu0
    %v6170 = vadd.f32 %v4519, %v6156
    %v6171 = vadd.f32 %v4520, %v6159
    %v6172 = vadd.f32 %v4521, %v6164
    %v6173 = vadd.f32 %v4522, %v6167
    %s6174 = scalar_lea.vmem %s12, 1
    %v6175 = vld [vmem:[%s6174] sm:$0x1]
    %s6176 = scalar_lea.vmem %s13, 1
    %v6177 = vld [vmem:[%s6176] sm:$0x1]
    %6178 = vadd.xlane.f32.xlu0 %v6170
    %v6179 = vpop.xlane.xlu0 %6178
    %6180 = vadd.xlane.f32.xlu0 %v6171
    %v6181 = vpop.xlane.xlu0 %6180
    %6182 = vadd.xlane.f32.xlu0 %v6172
    %v6183 = vpop.xlane.xlu0 %6182
    %v6184 = vsel %vm2226, %v6173, 0.0
    %6185 = vadd.xlane.f32.xlu0 %v6184
    %v6186 = vpop.xlane.xlu0 %6185
    %v6187 = vmul.f32 %v6179, %v2230
    %v6188 = vmul.f32 %v6181, %v2230
    %v6189 = vmul.f32 %v6183, %v2230
    %v6190 = vmul.f32 %v6186, %v2230
    %v6191 = vsub.f32 %v6170, %v6187
    %v6192 = vsub.f32 %v6171, %v6188
    %v6193 = vsub.f32 %v6172, %v6189
    %v6194 = vsub.f32 %v6173, %v6190
    %v6195 = vmul.f32 %v6191, %v6191
    %v6196 = vmul.f32 %v6192, %v6192
    %v6197 = vmul.f32 %v6193, %v6193
    %v6198 = vmul.f32 %v6194, %v6194
    %6199 = vadd.xlane.f32.xlu0 %v6195
    %v6200 = vpop.xlane.xlu0 %6199
    %6201 = vadd.xlane.f32.xlu0 %v6196
    %v6202 = vpop.xlane.xlu0 %6201
    %6203 = vadd.xlane.f32.xlu0 %v6197
    %v6204 = vpop.xlane.xlu0 %6203
    %v6205 = vsel %vm2226, %v6198, 0.0
    %6206 = vadd.xlane.f32.xlu0 %v6205
    %v6207 = vpop.xlane.xlu0 %6206
    %v6208 = vmul.f32 %v6200, %v2230
    %v6209 = vmul.f32 %v6202, %v2230
    %v6210 = vmul.f32 %v6204, %v2230
    %v6211 = vmul.f32 %v6207, %v2230
    %v6212 = vadd.f32 %v6208, 1e-06
    %v6213 = vadd.f32 %v6209, 1e-06
    %v6214 = vadd.f32 %v6210, 1e-06
    %v6215 = vadd.f32 %v6211, 1e-06
    %v6216 = vrsqrt.pop %v6212
    %v6217 = vrsqrt.pop %v6213
    %v6218 = vrsqrt.pop %v6214
    %v6219 = vrsqrt.pop %v6215
    %v6220 = vmul.f32 %v6191, %v6216
    %v6221 = vmul.f32 %v6192, %v6217
    %v6222 = vmul.f32 %v6193, %v6218
    %v6223 = vmul.f32 %v6194, %v6219
    %v6225 = vlaneseq
    %v6226 = vshrl.u32 %v6225, 7
    %v6227 = vsub.s32 0, %v6226
    %v6228 = vrot.slane %v6175, %v6227
    %v6230 = vmul.f32 %v6220, %v6228
    %v6231 = vmul.f32 %v6221, %v6228
    %v6232 = vmul.f32 %v6222, %v6228
    %v6233 = vmul.f32 %v6223, %v6228
    %v6235 = vlaneseq
    %v6236 = vshrl.u32 %v6235, 7
    %v6237 = vsub.s32 0, %v6236
    %v6238 = vrot.slane %v6177, %v6237
    %v6240 = vadd.f32 %v6230, %v6238
    %v6241 = vadd.f32 %v6231, %v6238
    %v6242 = vadd.f32 %v6232, %v6238
    %v6243 = vadd.f32 %v6233, %v6238
    %v6244 = vpack.c.bf16 %v6241, %v6240
    %v6245 = vpack.c.bf16 %v6243, %v6242
    %s6246 = scalar_lea.vmem %s14, 128
    %v6247 = vld [vmem:[%s6246] sm:$0xff]
    %v6248 = vld [vmem:[%s6246 + $0x8] sm:$0xff]
    %v6249 = vld [vmem:[%s6246 + $0x10] sm:$0xff]
    %v6250 = vld [vmem:[%s6246 + $0x18] sm:$0xff]
    %v6251 = vld [vmem:[%s6246 + $0x20] sm:$0xff]
    %v6252 = vld [vmem:[%s6246 + $0x28] sm:$0xff]
    %v6253 = vld [vmem:[%s6246 + $0x30] sm:$0xff]
    %v6254 = vld [vmem:[%s6246 + $0x38] sm:$0xff]
    %v6255 = vld [vmem:[%s6246 + $0x40] sm:$0xff]
    %v6256 = vld [vmem:[%s6246 + $0x48] sm:$0xff]
    %v6257 = vld [vmem:[%s6246 + $0x50] sm:$0xff]
    %v6258 = vld [vmem:[%s6246 + $0x58] sm:$0xff]
    %v6259 = vld [vmem:[%s6246 + $0x60] sm:$0xff]
    %v6260 = vld [vmem:[%s6246 + $0x68] sm:$0xff]
    %v6261 = vld [vmem:[%s6246 + $0x70] sm:$0xff]
    %v6262 = vld [vmem:[%s6246 + $0x78] sm:$0xff]
    %s6263 = scalar_lea.vmem %s15, 2
    %v6264 = vld [vmem:[%s6263] sm:$0x3]
    %v6266 = vlaneseq
    %v6267 = vshrl.u32 %v6266, 7
    %v6268 = vsub.s32 0, %v6267
    %v6269 = vrot.slane %v6264, %v6268
    %v6270 = vlaneseq
    %v6271 = vshrl.u32 %v6270, 7
    %v6272 = vsub.s32 1, %v6271
    %v6273 = vrot.slane %v6264, %v6272
    %v6292 = vunpack.c.l.b16 %v6247
    %v6293 = vunpack.c.h.b16 %v6247
    %v6294 = vunpack.c.l.b16 %v6248
    %v6295 = vunpack.c.h.b16 %v6248
    %v6296 = vunpack.c.l.b16 %v6249
    %v6297 = vunpack.c.h.b16 %v6249
    %v6298 = vunpack.c.l.b16 %v6250
    %v6299 = vunpack.c.h.b16 %v6250
    %v6300 = vunpack.c.l.b16 %v6251
    %v6301 = vunpack.c.h.b16 %v6251
    %v6302 = vunpack.c.l.b16 %v6252
    %v6303 = vunpack.c.h.b16 %v6252
    %v6304 = vunpack.c.l.b16 %v6253
    %v6305 = vunpack.c.h.b16 %v6253
    %v6306 = vunpack.c.l.b16 %v6254
    %v6307 = vunpack.c.h.b16 %v6254
    %v6308 = vunpack.c.l.b16 %v6255
    %v6309 = vunpack.c.h.b16 %v6255
    %v6310 = vunpack.c.l.b16 %v6256
    %v6311 = vunpack.c.h.b16 %v6256
    %v6312 = vunpack.c.l.b16 %v6257
    %v6313 = vunpack.c.h.b16 %v6257
    %v6314 = vunpack.c.l.b16 %v6258
    %v6315 = vunpack.c.h.b16 %v6258
    %v6316 = vunpack.c.l.b16 %v6259
    %v6317 = vunpack.c.h.b16 %v6259
    %v6318 = vunpack.c.l.b16 %v6260
    %v6319 = vunpack.c.h.b16 %v6260
    %v6320 = vunpack.c.l.b16 %v6261
    %v6321 = vunpack.c.h.b16 %v6261
    %v6322 = vunpack.c.l.b16 %v6262
    %v6323 = vunpack.c.h.b16 %v6262
    %v6324 = vpack.c.b16 %v6294, %v6292
    %v6325 = vpack.c.b16 %v6295, %v6293
    %v6326 = vpack.c.b16 %v6298, %v6296
    %v6327 = vpack.c.b16 %v6299, %v6297
    %v6328 = vpack.c.b16 %v6302, %v6300
    %v6329 = vpack.c.b16 %v6303, %v6301
    %v6330 = vpack.c.b16 %v6306, %v6304
    %v6331 = vpack.c.b16 %v6307, %v6305
    %v6332 = vpack.c.b16 %v6310, %v6308
    %v6333 = vpack.c.b16 %v6311, %v6309
    %v6334 = vpack.c.b16 %v6314, %v6312
    %v6335 = vpack.c.b16 %v6315, %v6313
    %v6336 = vpack.c.b16 %v6318, %v6316
    %v6337 = vpack.c.b16 %v6319, %v6317
    %v6338 = vpack.c.b16 %v6322, %v6320
    %v6339 = vpack.c.b16 %v6323, %v6321
    %6356 = vmatprep.subr.bf16.mxu0 %v6325
    %6357 = vmatpush1.bf16.msra.mxu0 %v6324
    %6358 = vmatprep.subr.bf16.mxu0 %v6327
    %6359 = vmatpush1.bf16.msra.mxu0 %v6326
    %6360 = vmatprep.subr.bf16.mxu0 %v6329
    %6361 = vmatpush1.bf16.msra.mxu0 %v6328
    %6362 = vmatprep.subr.bf16.mxu0 %v6331
    %6363 = vmatpush1.bf16.msra.mxu0 %v6330
    %6364 = vmatprep.subr.bf16.mxu0 %v6333
    %6365 = vmatpush1.bf16.msra.mxu0 %v6332
    %6366 = vmatprep.subr.bf16.mxu0 %v6335
    %6367 = vmatpush1.bf16.msra.mxu0 %v6334
    %6368 = vmatprep.subr.bf16.mxu0 %v6337
    %6369 = vmatpush1.bf16.msra.mxu0 %v6336
    %6370 = vmatprep.subr.bf16.mxu0 %v6339
    %6371 = vmatpush1.bf16.msra.mxu0 %v6338
    %6372 = vmatprep.subr.bf16.mxu0 0
    %6373 = vmatpush1.bf16.msra.mxu0 0
    %6374 = vmatprep.subr.bf16.mxu0 0
    %6375 = vmatpush1.bf16.msra.mxu0 0
    %6376 = vmatprep.subr.bf16.mxu0 0
    %6377 = vmatpush1.bf16.msra.mxu0 0
    %6378 = vmatprep.subr.bf16.mxu0 0
    %6379 = vmatpush1.bf16.msra.mxu0 0
    %6380 = vmatprep.subr.bf16.mxu0 0
    %6381 = vmatpush1.bf16.msra.mxu0 0
    %6382 = vmatprep.subr.bf16.mxu0 0
    %6383 = vmatpush1.bf16.msra.mxu0 0
    %6384 = vmatprep.subr.bf16.mxu0 0
    %6385 = vmatpush1.bf16.msra.mxu0 0
    %6386 = vmatprep.subr.bf16.mxu0 0
    %6387 = vmatpush1.bf16.msra.mxu0 0
    %6388 = vmatprep.mubr.bf16.mxu0 0
    %6389 = vmatmul.mubr.bf16.gmra.mrb[0].mxu0 %v6244
    %v6390 = vpop.f32.mrb[0].mxu0
    %v6391 = vadd.f32 %v6269, %v6390
    %v6392 = vpop.f32.mrb[0].mxu0
    %v6393 = vadd.f32 %v6273, %v6392
    %v6394 = vpop.f32.mrb[0].mxu0
    %v6395 = vadd.f32 %v6269, %v6394
    %v6396 = vpop.f32.mrb[0].mxu0
    %v6397 = vadd.f32 %v6273, %v6396
    %6398 = vmatprep.mubr.bf16.mxu0 0
    %6399 = vmatmul.mubr.bf16.gmra.mrb[0].mxu0 %v6245
    %v6400 = vpop.f32.mrb[0].mxu0
    %v6401 = vadd.f32 %v6269, %v6400
    %v6402 = vpop.f32.mrb[0].mxu0
    %v6403 = vadd.f32 %v6273, %v6402
    %v6404 = vpop.f32.mrb[0].mxu0
    %v6405 = vadd.f32 %v6269, %v6404
    %v6406 = vpop.f32.mrb[0].mxu0
    %v6407 = vadd.f32 %v6273, %v6406
    %6408 = vdwg.mxu0
    %v6409 = vmul.f32 %v6391, 0.5
    %v6410 = vmul.f32 %v6393, 0.5
    %v6411 = vmul.f32 %v6395, 0.5
    %v6412 = vmul.f32 %v6397, 0.5
    %v6413 = vmul.f32 %v6401, 0.5
    %v6414 = vmul.f32 %v6403, 0.5
    %v6415 = vmul.f32 %v6405, 0.5
    %v6416 = vmul.f32 %v6407, 0.5
    %v6417 = vmul.f32 %v6391, 0.70710677
    %v6418 = vmul.f32 %v6393, 0.70710677
    %v6419 = vmul.f32 %v6395, 0.70710677
    %v6420 = vmul.f32 %v6397, 0.70710677
    %v6421 = vmul.f32 %v6401, 0.70710677
    %v6422 = vmul.f32 %v6403, 0.70710677
    %v6423 = vmul.f32 %v6405, 0.70710677
    %v6424 = vmul.f32 %v6407, 0.70710677
    %v6425 = vand.u32 2147483647, %v6417
    %v6426 = vand.u32 2147483647, %v6418
    %v6427 = vand.u32 2147483647, %v6419
    %v6428 = vand.u32 2147483647, %v6420
    %v6429 = vand.u32 2147483647, %v6421
    %v6430 = vand.u32 2147483647, %v6422
    %v6431 = vand.u32 2147483647, %v6423
    %v6432 = vand.u32 2147483647, %v6424
    %v6433 = vmul.f32 %v6425, 0.3275911
    %v6434 = vmul.f32 %v6426, 0.3275911
    %v6435 = vmul.f32 %v6427, 0.3275911
    %v6436 = vmul.f32 %v6428, 0.3275911
    %v6437 = vmul.f32 %v6429, 0.3275911
    %v6438 = vmul.f32 %v6430, 0.3275911
    %v6439 = vmul.f32 %v6431, 0.3275911
    %v6440 = vmul.f32 %v6432, 0.3275911
    %v6441 = vadd.f32 %v6433, 1.0
    %v6442 = vadd.f32 %v6434, 1.0
    %v6443 = vadd.f32 %v6435, 1.0
    %v6444 = vadd.f32 %v6436, 1.0
    %v6445 = vadd.f32 %v6437, 1.0
    %v6446 = vadd.f32 %v6438, 1.0
    %v6447 = vadd.f32 %v6439, 1.0
    %v6448 = vadd.f32 %v6440, 1.0
    %v6449 = vrcp.pop %v6441
    %v6450 = vrcp.pop %v6442
    %v6451 = vrcp.pop %v6443
    %v6452 = vrcp.pop %v6444
    %v6453 = vrcp.pop %v6445
    %v6454 = vrcp.pop %v6446
    %v6455 = vrcp.pop %v6447
    %v6456 = vrcp.pop %v6448
    %v6457 = vmul.f32 %v6449, 1.0614054
    %v6458 = vmul.f32 %v6450, 1.0614054
    %v6459 = vmul.f32 %v6451, 1.0614054
    %v6460 = vmul.f32 %v6452, 1.0614054
    %v6461 = vmul.f32 %v6453, 1.0614054
    %v6462 = vmul.f32 %v6454, 1.0614054
    %v6463 = vmul.f32 %v6455, 1.0614054
    %v6464 = vmul.f32 %v6456, 1.0614054
    %v6465 = vadd.f32 %v6457, -1.4531521
    %v6466 = vadd.f32 %v6458, -1.4531521
    %v6467 = vadd.f32 %v6459, -1.4531521
    %v6468 = vadd.f32 %v6460, -1.4531521
    %v6469 = vadd.f32 %v6461, -1.4531521
    %v6470 = vadd.f32 %v6462, -1.4531521
    %v6471 = vadd.f32 %v6463, -1.4531521
    %v6472 = vadd.f32 %v6464, -1.4531521
    %v6473 = vmul.f32 %v6465, %v6449
    %v6474 = vmul.f32 %v6466, %v6450
    %v6475 = vmul.f32 %v6467, %v6451
    %v6476 = vmul.f32 %v6468, %v6452
    %v6477 = vmul.f32 %v6469, %v6453
    %v6478 = vmul.f32 %v6470, %v6454
    %v6479 = vmul.f32 %v6471, %v6455
    %v6480 = vmul.f32 %v6472, %v6456
    %v6481 = vadd.f32 %v6473, 1.4214138
    %v6482 = vadd.f32 %v6474, 1.4214138
    %v6483 = vadd.f32 %v6475, 1.4214138
    %v6484 = vadd.f32 %v6476, 1.4214138
    %v6485 = vadd.f32 %v6477, 1.4214138
    %v6486 = vadd.f32 %v6478, 1.4214138
    %v6487 = vadd.f32 %v6479, 1.4214138
    %v6488 = vadd.f32 %v6480, 1.4214138
    %v6489 = vmul.f32 %v6481, %v6449
    %v6490 = vmul.f32 %v6482, %v6450
    %v6491 = vmul.f32 %v6483, %v6451
    %v6492 = vmul.f32 %v6484, %v6452
    %v6493 = vmul.f32 %v6485, %v6453
    %v6494 = vmul.f32 %v6486, %v6454
    %v6495 = vmul.f32 %v6487, %v6455
    %v6496 = vmul.f32 %v6488, %v6456
    %v6497 = vadd.f32 %v6489, -0.28449672
    %v6498 = vadd.f32 %v6490, -0.28449672
    %v6499 = vadd.f32 %v6491, -0.28449672
    %v6500 = vadd.f32 %v6492, -0.28449672
    %v6501 = vadd.f32 %v6493, -0.28449672
    %v6502 = vadd.f32 %v6494, -0.28449672
    %v6503 = vadd.f32 %v6495, -0.28449672
    %v6504 = vadd.f32 %v6496, -0.28449672
    %v6505 = vmul.f32 %v6497, %v6449
    %v6506 = vmul.f32 %v6498, %v6450
    %v6507 = vmul.f32 %v6499, %v6451
    %v6508 = vmul.f32 %v6500, %v6452
    %v6509 = vmul.f32 %v6501, %v6453
    %v6510 = vmul.f32 %v6502, %v6454
    %v6511 = vmul.f32 %v6503, %v6455
    %v6512 = vmul.f32 %v6504, %v6456
    %v6513 = vadd.f32 %v6505, 0.2548296
    %v6514 = vadd.f32 %v6506, 0.2548296
    %v6515 = vadd.f32 %v6507, 0.2548296
    %v6516 = vadd.f32 %v6508, 0.2548296
    %v6517 = vadd.f32 %v6509, 0.2548296
    %v6518 = vadd.f32 %v6510, 0.2548296
    %v6519 = vadd.f32 %v6511, 0.2548296
    %v6520 = vadd.f32 %v6512, 0.2548296
    %v6521 = vmul.f32 %v6513, %v6449
    %v6522 = vmul.f32 %v6514, %v6450
    %v6523 = vmul.f32 %v6515, %v6451
    %v6524 = vmul.f32 %v6516, %v6452
    %v6525 = vmul.f32 %v6517, %v6453
    %v6526 = vmul.f32 %v6518, %v6454
    %v6527 = vmul.f32 %v6519, %v6455
    %v6528 = vmul.f32 %v6520, %v6456
    %v6529 = vmul.f32 %v6425, %v6425
    %v6530 = vmul.f32 %v6426, %v6426
    %v6531 = vmul.f32 %v6427, %v6427
    %v6532 = vmul.f32 %v6428, %v6428
    %v6533 = vmul.f32 %v6429, %v6429
    %v6534 = vmul.f32 %v6430, %v6430
    %v6535 = vmul.f32 %v6431, %v6431
    %v6536 = vmul.f32 %v6432, %v6432
    %v6537 = vsub.f32 0.0, %v6529
    %v6538 = vsub.f32 0.0, %v6530
    %v6539 = vsub.f32 0.0, %v6531
    %v6540 = vsub.f32 0.0, %v6532
    %v6541 = vsub.f32 0.0, %v6533
    %v6542 = vsub.f32 0.0, %v6534
    %v6543 = vsub.f32 0.0, %v6535
    %v6544 = vsub.f32 0.0, %v6536
    %v6545 = vmul.f32 %v6537, 1.442695
    %v6546 = vpow.pop %v6545
    %v6547 = vmul.f32 %v6538, 1.442695
    %v6548 = vpow.pop %v6547
    %v6549 = vmul.f32 %v6539, 1.442695
    %v6550 = vpow.pop %v6549
    %v6551 = vmul.f32 %v6540, 1.442695
    %v6552 = vpow.pop %v6551
    %v6553 = vmul.f32 %v6541, 1.442695
    %v6554 = vpow.pop %v6553
    %v6555 = vmul.f32 %v6542, 1.442695
    %v6556 = vpow.pop %v6555
    %v6557 = vmul.f32 %v6543, 1.442695
    %v6558 = vpow.pop %v6557
    %v6559 = vmul.f32 %v6544, 1.442695
    %v6560 = vpow.pop %v6559
    %v6561 = vmul.f32 %v6521, %v6546
    %v6562 = vmul.f32 %v6522, %v6548
    %v6563 = vmul.f32 %v6523, %v6550
    %v6564 = vmul.f32 %v6524, %v6552
    %v6565 = vmul.f32 %v6525, %v6554
    %v6566 = vmul.f32 %v6526, %v6556
    %v6567 = vmul.f32 %v6527, %v6558
    %v6568 = vmul.f32 %v6528, %v6560
    %v6569 = vsub.f32 1.0, %v6561
    %v6570 = vsub.f32 1.0, %v6562
    %v6571 = vsub.f32 1.0, %v6563
    %v6572 = vsub.f32 1.0, %v6564
    %v6573 = vsub.f32 1.0, %v6565
    %v6574 = vsub.f32 1.0, %v6566
    %v6575 = vsub.f32 1.0, %v6567
    %v6576 = vsub.f32 1.0, %v6568
    %vm6577 = vcmp.ge.f32.partialorder %v6417, 0.0
    %vm6578 = vcmp.ge.f32.partialorder %v6418, 0.0
    %vm6579 = vcmp.ge.f32.partialorder %v6419, 0.0
    %vm6580 = vcmp.ge.f32.partialorder %v6420, 0.0
    %vm6581 = vcmp.ge.f32.partialorder %v6421, 0.0
    %vm6582 = vcmp.ge.f32.partialorder %v6422, 0.0
    %vm6583 = vcmp.ge.f32.partialorder %v6423, 0.0
    %vm6584 = vcmp.ge.f32.partialorder %v6424, 0.0
    %v6585 = vsub.f32 0.0, %v6569
    %v6586 = vsub.f32 0.0, %v6570
    %v6587 = vsub.f32 0.0, %v6571
    %v6588 = vsub.f32 0.0, %v6572
    %v6589 = vsub.f32 0.0, %v6573
    %v6590 = vsub.f32 0.0, %v6574
    %v6591 = vsub.f32 0.0, %v6575
    %v6592 = vsub.f32 0.0, %v6576
    %v6593 = vsel %vm6577, %v6569, %v6585
    %v6594 = vsel %vm6578, %v6570, %v6586
    %v6595 = vsel %vm6579, %v6571, %v6587
    %v6596 = vsel %vm6580, %v6572, %v6588
    %v6597 = vsel %vm6581, %v6573, %v6589
    %v6598 = vsel %vm6582, %v6574, %v6590
    %v6599 = vsel %vm6583, %v6575, %v6591
    %v6600 = vsel %vm6584, %v6576, %v6592
    %v6601 = vadd.f32 %v6593, 1.0
    %v6602 = vadd.f32 %v6594, 1.0
    %v6603 = vadd.f32 %v6595, 1.0
    %v6604 = vadd.f32 %v6596, 1.0
    %v6605 = vadd.f32 %v6597, 1.0
    %v6606 = vadd.f32 %v6598, 1.0
    %v6607 = vadd.f32 %v6599, 1.0
    %v6608 = vadd.f32 %v6600, 1.0
    %v6609 = vmul.f32 %v6409, %v6601
    %v6610 = vmul.f32 %v6410, %v6602
    %v6611 = vmul.f32 %v6411, %v6603
    %v6612 = vmul.f32 %v6412, %v6604
    %v6613 = vmul.f32 %v6413, %v6605
    %v6614 = vmul.f32 %v6414, %v6606
    %v6615 = vmul.f32 %v6415, %v6607
    %v6616 = vmul.f32 %v6416, %v6608
    %v6617 = vpack.c.bf16 %v6611, %v6609
    %v6618 = vpack.c.bf16 %v6612, %v6610
    %v6619 = vpack.c.bf16 %v6615, %v6613
    %v6620 = vpack.c.bf16 %v6616, %v6614
    %s6621 = scalar_lea.vmem %s16, 128
    %v6622 = vld [vmem:[%s6621] sm:$0xf]
    %v6623 = vld [vmem:[%s6621 + $0x4] sm:$0xf]
    %v6624 = vld [vmem:[%s6621 + $0x8] sm:$0xf]
    %v6625 = vld [vmem:[%s6621 + $0xc] sm:$0xf]
    %v6626 = vld [vmem:[%s6621 + $0x10] sm:$0xf]
    %v6627 = vld [vmem:[%s6621 + $0x14] sm:$0xf]
    %v6628 = vld [vmem:[%s6621 + $0x18] sm:$0xf]
    %v6629 = vld [vmem:[%s6621 + $0x1c] sm:$0xf]
    %v6630 = vld [vmem:[%s6621 + $0x20] sm:$0xf]
    %v6631 = vld [vmem:[%s6621 + $0x24] sm:$0xf]
    %v6632 = vld [vmem:[%s6621 + $0x28] sm:$0xf]
    %v6633 = vld [vmem:[%s6621 + $0x2c] sm:$0xf]
    %v6634 = vld [vmem:[%s6621 + $0x30] sm:$0xf]
    %v6635 = vld [vmem:[%s6621 + $0x34] sm:$0xf]
    %v6636 = vld [vmem:[%s6621 + $0x38] sm:$0xf]
    %v6637 = vld [vmem:[%s6621 + $0x3c] sm:$0xf]
    %v6638 = vld [vmem:[%s6621 + $0x40] sm:$0xf]
    %v6639 = vld [vmem:[%s6621 + $0x44] sm:$0xf]
    %v6640 = vld [vmem:[%s6621 + $0x48] sm:$0xf]
    %v6641 = vld [vmem:[%s6621 + $0x4c] sm:$0xf]
    %v6642 = vld [vmem:[%s6621 + $0x50] sm:$0xf]
    %v6643 = vld [vmem:[%s6621 + $0x54] sm:$0xf]
    %v6644 = vld [vmem:[%s6621 + $0x58] sm:$0xf]
    %v6645 = vld [vmem:[%s6621 + $0x5c] sm:$0xf]
    %v6646 = vld [vmem:[%s6621 + $0x60] sm:$0xf]
    %v6647 = vld [vmem:[%s6621 + $0x64] sm:$0xf]
    %v6648 = vld [vmem:[%s6621 + $0x68] sm:$0xf]
    %v6649 = vld [vmem:[%s6621 + $0x6c] sm:$0xf]
    %v6650 = vld [vmem:[%s6621 + $0x70] sm:$0xf]
    %v6651 = vld [vmem:[%s6621 + $0x74] sm:$0xf]
    %v6652 = vld [vmem:[%s6621 + $0x78] sm:$0xf]
    %v6653 = vld [vmem:[%s6621 + $0x7c] sm:$0xf]
    %s6654 = scalar_lea.vmem %s17, 1
    %v6655 = vld [vmem:[%s6654] sm:$0x1]
    %v6657 = vlaneseq
    %v6658 = vshrl.u32 %v6657, 7
    %v6659 = vsub.s32 0, %v6658
    %v6660 = vrot.slane %v6655, %v6659
    %v6694 = vunpack.c.l.b16 %v6622
    %v6695 = vunpack.c.l.b16 %v6623
    %v6696 = vunpack.c.l.b16 %v6624
    %v6697 = vunpack.c.l.b16 %v6625
    %v6698 = vunpack.c.l.b16 %v6626
    %v6699 = vunpack.c.l.b16 %v6627
    %v6700 = vunpack.c.l.b16 %v6628
    %v6701 = vunpack.c.l.b16 %v6629
    %v6702 = vunpack.c.l.b16 %v6630
    %v6703 = vunpack.c.l.b16 %v6631
    %v6704 = vunpack.c.l.b16 %v6632
    %v6705 = vunpack.c.l.b16 %v6633
    %v6706 = vunpack.c.l.b16 %v6634
    %v6707 = vunpack.c.l.b16 %v6635
    %v6708 = vunpack.c.l.b16 %v6636
    %v6709 = vunpack.c.l.b16 %v6637
    %v6710 = vunpack.c.l.b16 %v6638
    %v6711 = vunpack.c.l.b16 %v6639
    %v6712 = vunpack.c.l.b16 %v6640
    %v6713 = vunpack.c.l.b16 %v6641
    %v6714 = vunpack.c.l.b16 %v6642
    %v6715 = vunpack.c.l.b16 %v6643
    %v6716 = vunpack.c.l.b16 %v6644
    %v6717 = vunpack.c.l.b16 %v6645
    %v6718 = vunpack.c.l.b16 %v6646
    %v6719 = vunpack.c.l.b16 %v6647
    %v6720 = vunpack.c.l.b16 %v6648
    %v6721 = vunpack.c.l.b16 %v6649
    %v6722 = vunpack.c.l.b16 %v6650
    %v6723 = vunpack.c.l.b16 %v6651
    %v6724 = vunpack.c.l.b16 %v6652
    %v6725 = vunpack.c.l.b16 %v6653
    %v6726 = vpack.c.b16 %v6695, %v6694
    %v6727 = vpack.c.b16 %v6697, %v6696
    %v6728 = vpack.c.b16 %v6699, %v6698
    %v6729 = vpack.c.b16 %v6701, %v6700
    %v6730 = vpack.c.b16 %v6703, %v6702
    %v6731 = vpack.c.b16 %v6705, %v6704
    %v6732 = vpack.c.b16 %v6707, %v6706
    %v6733 = vpack.c.b16 %v6709, %v6708
    %v6734 = vpack.c.b16 %v6711, %v6710
    %v6735 = vpack.c.b16 %v6713, %v6712
    %v6736 = vpack.c.b16 %v6715, %v6714
    %v6737 = vpack.c.b16 %v6717, %v6716
    %v6738 = vpack.c.b16 %v6719, %v6718
    %v6739 = vpack.c.b16 %v6721, %v6720
    %v6740 = vpack.c.b16 %v6723, %v6722
    %v6741 = vpack.c.b16 %v6725, %v6724
    %6758 = vmatprep.subr.bf16.mxu0 0
    %6759 = vmatpush1.bf16.msra.mxu0 %v6726
    %6760 = vmatprep.subr.bf16.mxu0 0
    %6761 = vmatpush1.bf16.msra.mxu0 %v6727
    %6762 = vmatprep.subr.bf16.mxu0 0
    %6763 = vmatpush1.bf16.msra.mxu0 %v6728
    %6764 = vmatprep.subr.bf16.mxu0 0
    %6765 = vmatpush1.bf16.msra.mxu0 %v6729
    %6766 = vmatprep.subr.bf16.mxu0 0
    %6767 = vmatpush1.bf16.msra.mxu0 %v6730
    %6768 = vmatprep.subr.bf16.mxu0 0
    %6769 = vmatpush1.bf16.msra.mxu0 %v6731
    %6770 = vmatprep.subr.bf16.mxu0 0
    %6771 = vmatpush1.bf16.msra.mxu0 %v6732
    %6772 = vmatprep.subr.bf16.mxu0 0
    %6773 = vmatpush1.bf16.msra.mxu0 %v6733
    %6774 = vmatprep.subr.bf16.mxu0 0
    %6775 = vmatpush1.bf16.msra.mxu0 %v6734
    %6776 = vmatprep.subr.bf16.mxu0 0
    %6777 = vmatpush1.bf16.msra.mxu0 %v6735
    %6778 = vmatprep.subr.bf16.mxu0 0
    %6779 = vmatpush1.bf16.msra.mxu0 %v6736
    %6780 = vmatprep.subr.bf16.mxu0 0
    %6781 = vmatpush1.bf16.msra.mxu0 %v6737
    %6782 = vmatprep.subr.bf16.mxu0 0
    %6783 = vmatpush1.bf16.msra.mxu0 %v6738
    %6784 = vmatprep.subr.bf16.mxu0 0
    %6785 = vmatpush1.bf16.msra.mxu0 %v6739
    %6786 = vmatprep.subr.bf16.mxu0 0
    %6787 = vmatpush1.bf16.msra.mxu0 %v6740
    %6788 = vmatprep.subr.bf16.mxu0 0
    %6789 = vmatpush1.bf16.msra.mxu0 %v6741
    %6790 = vmatprep.mubr.bf16.mxu0 %v6618
    %6791 = vmatmul.mubr.bf16.gmra.mrb[0].mxu0 %v6617
    %v6792 = vpop.f32.mrb[0].mxu0
    %v6793 = vadd.f32 %v6660, %v6792
    %v6794 = vpop.f32.mrb[0].mxu0
    %v6795 = vpop.f32.mrb[0].mxu0
    %v6796 = vadd.f32 %v6660, %v6795
    %v6797 = vpop.f32.mrb[0].mxu0
    %6798 = vmatprep.mubr.bf16.mxu0 %v6620
    %6799 = vmatmul.mubr.bf16.gmra.mrb[0].mxu0 %v6619
    %v6800 = vpop.f32.mrb[0].mxu0
    %v6801 = vpop.f32.mrb[0].mxu0
    %v6802 = vpop.f32.mrb[0].mxu0
    %v6803 = vpop.f32.mrb[0].mxu0
    %6804 = vdwg.mxu0
    %v6805 = vadd.f32 %v6170, %v6793
    %v6806 = vadd.f32 %v6171, %v6796
    %v6808 = vrot.slane %v6806, 6
    %v6810 = vsel %vm2591, %v6805, %v6808
    %v6811 = vld [vmem:[%s18] sm:$0x1]
    %v6812 = vld [vmem:[%s19] sm:$0x1]
    %vm6813 = vcmask 1041408
    %v6814 = vsel %vm6813, %v6810, 0.0
    %6815 = vadd.xlane.f32.xlu0 %v6814
    %v6816 = vpop.xlane.xlu0 %6815
    %v6817 = vmul.f32 %v6816, %v2230
    %v6818 = vsub.f32 %v6810, %v6817
    %v6819 = vmul.f32 %v6818, %v6818
    %v6820 = vsel %vm6813, %v6819, 0.0
    %6821 = vadd.xlane.f32.xlu0 %v6820
    %v6822 = vpop.xlane.xlu0 %6821
    %v6823 = vmul.f32 %v6822, %v2230
    %v6824 = vadd.f32 %v6823, 1e-06
    %v6825 = vrsqrt.pop %v6824
    %v6826 = vmul.f32 %v6818, %v6825
    %v6828 = vlaneseq
    %v6829 = vshrl.u32 %v6828, 7
    %v6830 = vsub.s32 0, %v6829
    %v6831 = vrot.slane %v6811, %v6830
    %v6833 = vmul.f32 %v6826, %v6831
    %v6835 = vlaneseq
    %v6836 = vshrl.u32 %v6835, 7
    %v6837 = vsub.s32 0, %v6836
    %v6838 = vrot.slane %v6812, %v6837
    %v6840 = vadd.f32 %v6833, %v6838
    %v6841 = vpack.c.bf16 %v6840, %v6840
    %v6842 = vld [vmem:[%s20] sm:$0xf]
    %v6843 = vld [vmem:[%s20 + $0x4] sm:$0xf]
    %v6844 = vld [vmem:[%s20 + $0x8] sm:$0xf]
    %v6845 = vld [vmem:[%s20 + $0xc] sm:$0xf]
    %v6846 = vld [vmem:[%s20 + $0x10] sm:$0xf]
    %v6847 = vld [vmem:[%s20 + $0x14] sm:$0xf]
    %v6848 = vld [vmem:[%s20 + $0x18] sm:$0xf]
    %v6849 = vld [vmem:[%s20 + $0x1c] sm:$0xf]
    %v6850 = vld [vmem:[%s20 + $0x20] sm:$0xf]
    %v6851 = vld [vmem:[%s20 + $0x24] sm:$0xf]
    %v6852 = vld [vmem:[%s20 + $0x28] sm:$0xf]
    %v6853 = vld [vmem:[%s20 + $0x2c] sm:$0xf]
    %v6854 = vld [vmem:[%s20 + $0x30] sm:$0xf]
    %v6855 = vld [vmem:[%s20 + $0x34] sm:$0xf]
    %v6856 = vld [vmem:[%s20 + $0x38] sm:$0xf]
    %v6857 = vld [vmem:[%s20 + $0x3c] sm:$0xf]
    %v6858 = vld [vmem:[%s21] sm:$0x1]
    %v6860 = vlaneseq
    %v6861 = vshrl.u32 %v6860, 7
    %v6862 = vsub.s32 0, %v6861
    %v6863 = vrot.slane %v6858, %v6862
    %v6881 = vunpack.c.l.b16 %v6842
    %v6882 = vunpack.c.l.b16 %v6843
    %v6883 = vunpack.c.l.b16 %v6844
    %v6884 = vunpack.c.l.b16 %v6845
    %v6885 = vunpack.c.l.b16 %v6846
    %v6886 = vunpack.c.l.b16 %v6847
    %v6887 = vunpack.c.l.b16 %v6848
    %v6888 = vunpack.c.l.b16 %v6849
    %v6889 = vunpack.c.l.b16 %v6850
    %v6890 = vunpack.c.l.b16 %v6851
    %v6891 = vunpack.c.l.b16 %v6852
    %v6892 = vunpack.c.l.b16 %v6853
    %v6893 = vunpack.c.l.b16 %v6854
    %v6894 = vunpack.c.l.b16 %v6855
    %v6895 = vunpack.c.l.b16 %v6856
    %v6896 = vunpack.c.l.b16 %v6857
    %v6897 = vpack.c.b16 %v6882, %v6881
    %v6898 = vpack.c.b16 %v6884, %v6883
    %v6899 = vpack.c.b16 %v6886, %v6885
    %v6900 = vpack.c.b16 %v6888, %v6887
    %v6901 = vpack.c.b16 %v6890, %v6889
    %v6902 = vpack.c.b16 %v6892, %v6891
    %v6903 = vpack.c.b16 %v6894, %v6893
    %v6904 = vpack.c.b16 %v6896, %v6895
    %6913 = vmatprep.subr.bf16.mxu0 0
    %6914 = vmatpush1.bf16.msra.mxu0 %v6897
    %6915 = vmatprep.subr.bf16.mxu0 0
    %6916 = vmatpush1.bf16.msra.mxu0 %v6898
    %6917 = vmatprep.subr.bf16.mxu0 0
    %6918 = vmatpush1.bf16.msra.mxu0 %v6899
    %6919 = vmatprep.subr.bf16.mxu0 0
    %6920 = vmatpush1.bf16.msra.mxu0 %v6900
    %6921 = vmatprep.subr.bf16.mxu0 0
    %6922 = vmatpush1.bf16.msra.mxu0 %v6901
    %6923 = vmatprep.subr.bf16.mxu0 0
    %6924 = vmatpush1.bf16.msra.mxu0 %v6902
    %6925 = vmatprep.subr.bf16.mxu0 0
    %6926 = vmatpush1.bf16.msra.mxu0 %v6903
    %6927 = vmatprep.subr.bf16.mxu0 0
    %6928 = vmatpush1.bf16.msra.mxu0 %v6904
    %6929 = vmatprep.subr.bf16.mxu0 0
    %6930 = vmatpush1.bf16.msra.mxu0 0
    %6931 = vmatprep.subr.bf16.mxu0 0
    %6932 = vmatpush1.bf16.msra.mxu0 0
    %6933 = vmatprep.subr.bf16.mxu0 0
    %6934 = vmatpush1.bf16.msra.mxu0 0
    %6935 = vmatprep.subr.bf16.mxu0 0
    %6936 = vmatpush1.bf16.msra.mxu0 0
    %6937 = vmatprep.subr.bf16.mxu0 0
    %6938 = vmatpush1.bf16.msra.mxu0 0
    %6939 = vmatprep.subr.bf16.mxu0 0
    %6940 = vmatpush1.bf16.msra.mxu0 0
    %6941 = vmatprep.subr.bf16.mxu0 0
    %6942 = vmatpush1.bf16.msra.mxu0 0
    %6943 = vmatprep.subr.bf16.mxu0 0
    %6944 = vmatpush1.bf16.msra.mxu0 0
    %6945 = vmatprep.mubr.bf16.mxu0 0
    %6946 = vmatmul.mubr.bf16.gmra.mrb[0].mxu0 %v6841
    %v6947 = vpop.f32.mrb[0].mxu0
    %v6948 = vadd.f32 %v6863, %v6947
    %v6949 = vpop.f32.mrb[0].mxu0
    %v6950 = vpop.f32.mrb[0].mxu0
    %v6951 = vpop.f32.mrb[0].mxu0
    %6952 = vdwg.mxu0
    %6953 = vst [vmem:[#allocation3] sm:$0x3] %v6948
    // Predicated region
    $region90: #{vit_prompt_forward.1} parent=1 // pred_check
      _
    $region91: #{vit_prompt_forward.1} parent=1 // pred_check_branch
      %6955 = sbr.rel (0) target = $region93
    $region92: #{vit_prompt_forward.1} parent=1 // pred_region
      %s6957 = ssub.s32 32, 32
      %6958 = vsyncadd [#allocation4], %s6957
      %s6960 = sshll.u32 [#allocation3], 4
      %s6961 = int_to_ptr.vmem [resolvable:$true] %s6960
      %6963 = dma.vmem_to_hbm [thread:$0]  %s6961, 32, %s22, [#allocation4]
    $region93: #{vit_prompt_forward.1} parent=1 // pred_fallthru
      _
    // Predicated region
    $region94: #{vit_prompt_forward.1} parent=1 // pred_check
      _
    $region95: #{vit_prompt_forward.1} parent=1 // pred_check_branch
      %6965 = sbr.rel (0) target = $region97
    $region96: #{vit_prompt_forward.1} parent=1 // pred_region
      %6966 = dma.done [#allocation4], 32
    $region97: #{vit_prompt_forward.1} parent=1 // pred_fallthru
      _
    %6967 = vsyncpa [#allocation4], 1

</llo_original>
